<compile_context>
chip_gen: v7x
topology: tpu7x:2x2x1
jax: 0.10.0
libtpu: 0.0.40
codegen_flags: <defaults>
</compile_context>

<pallas_src>
import functools

import jax
import jax.numpy as jnp
from jax.experimental import pallas as pl
from jax.experimental.pallas import tpu as pltpu

LN_EPS = 1e-12  # BERT LayerNorm eps


def _layernorm(x, gamma, beta):
    mean = jnp.mean(x, axis=-1, keepdims=True)
    var = jnp.mean((x - mean) ** 2, axis=-1, keepdims=True)
    return (x - mean) * jax.lax.rsqrt(var + LN_EPS) * gamma + beta


# ---------------------------------------------------------------------------
# Fused kernel: encode + CLS prepend/pad + (L-1) full BertLayers + CLS-only layer
# ---------------------------------------------------------------------------
def fused_forward_kernel(
        emb_ref, amask_ref, cls_ref, ln_g_ref, ln_b_ref, align_w_ref, align_b_ref,
        wq_ref, bq_ref, wk_ref, bk_ref, wv_ref, bv_ref, wo_ref, bo_ref,
        ln1_g_ref, ln1_b_ref, w1_ref, b1_ref, w2_ref, b2_ref,
        ln2_g_ref, ln2_b_ref,
        out_ref,
        *, num_layers, num_heads, seq_len, seq_pad, batch_tile):
    S, Sp, TB = seq_len, seq_pad, batch_tile
    H = emb_ref.shape[-1]
    dH = H // num_heads
    M = TB * Sp
    scale = 1.0 / float(dH) ** 0.5

    key_bias = amask_ref[...]                                  # [TB, 1, Sp] additive

    # ---- TransTabFeatureProcessor hot path: LayerNorm + align Linear --------
    e = emb_ref[...].astype(jnp.float32).reshape(TB * S, H)
    e = _layernorm(e, ln_g_ref[...], ln_b_ref[...])
    enc = jnp.dot(e.astype(jnp.bfloat16), align_w_ref[...],
                  preferred_element_type=jnp.float32) + align_b_ref[...]
    enc = enc.reshape(TB, S, H)

    # ---- TransTabCLSToken: [CLS; tokens; zero pad], assembled in vregs ------
    cls = jnp.broadcast_to(cls_ref[...][None], (TB, 1, H)).astype(jnp.float32)
    pieces = [cls, enc]
    if Sp > S + 1:
        pieces.append(jnp.zeros((TB, Sp - S - 1, H), jnp.float32))
    h = jnp.concatenate(pieces, axis=1).reshape(M, H)          # [M, H] f32

    def load_layer(l):
        return (wq_ref[l], bq_ref[l], wk_ref[l], bk_ref[l], wv_ref[l], bv_ref[l],
                wo_ref[l], bo_ref[l], ln1_g_ref[l], ln1_b_ref[l],
                w1_ref[l], b1_ref[l], w2_ref[l], b2_ref[l],
                ln2_g_ref[l], ln2_b_ref[l])

    def mha(q3, k3, v3, bias):
        # q3: [TB, Q, H]; k3/v3: [TB, Sp, H]  ->  ctx [TB*Q, H]
        Q = q3.shape[1]
        ctx_heads = []
        for hd in range(num_heads):                            # small static unroll
            lo = hd * dH
            qh = q3[:, :, lo:lo + dH].astype(jnp.bfloat16)
            kh = k3[:, :, lo:lo + dH].astype(jnp.bfloat16)
            vh = v3[:, :, lo:lo + dH].astype(jnp.bfloat16)
            s = jax.lax.dot_general(                           # q @ k^T, batched over TB
                qh, kh, (((2,), (2,)), ((0,), (0,))),
                preferred_element_type=jnp.float32) * scale    # [TB, Q, Sp]
            s = s + bias
            s = s - jnp.max(s, axis=-1, keepdims=True)
            p = jnp.exp(s)
            p = p * pl.reciprocal(jnp.sum(p, axis=-1, keepdims=True), approx=True)
            ctx_heads.append(jax.lax.dot_general(              # p @ v, batched over TB
                p.astype(jnp.bfloat16), vh, (((2,), (1,)), ((0,), (0,))),
                preferred_element_type=jnp.float32))           # [TB, Q, dH]
        return jnp.concatenate(ctx_heads, axis=-1).reshape(TB * Q, H)

    def layer_full(h_in, wts):
        (wq, bq, wk, bk, wv, bv, wo, bo, g1, be1, w1, b1, w2, b2, g2, be2) = wts
        hb = h_in.astype(jnp.bfloat16)
        q = jnp.dot(hb, wq, preferred_element_type=jnp.float32) + bq   # [M, H]
        k = jnp.dot(hb, wk, preferred_element_type=jnp.float32) + bk
        v = jnp.dot(hb, wv, preferred_element_type=jnp.float32) + bv
        ctx = mha(q.reshape(TB, Sp, H), k.reshape(TB, Sp, H),
                  v.reshape(TB, Sp, H), key_bias)                       # [M, H]
        attn = jnp.dot(ctx.astype(jnp.bfloat16), wo,
                       preferred_element_type=jnp.float32) + bo
        x = _layernorm(attn + h_in, g1, be1)
        f = jnp.dot(x.astype(jnp.bfloat16), w1,
                    preferred_element_type=jnp.float32) + b1
        f = jnp.maximum(f, 0.0)                                         # relu
        f = jnp.dot(f.astype(jnp.bfloat16), w2,
                    preferred_element_type=jnp.float32) + b2
        return _layernorm(f + x, g2, be2)

    def layer_cls(h_in, wts):
        # Last layer: only the CLS query rows are ever read downstream.
        (wq, bq, wk, bk, wv, bv, wo, bo, g1, be1, w1, b1, w2, b2, g2, be2) = wts
        hb = h_in.astype(jnp.bfloat16)
        k = jnp.dot(hb, wk, preferred_element_type=jnp.float32) + bk    # full keys
        v = jnp.dot(hb, wv, preferred_element_type=jnp.float32) + bv    # full values
        h_cls = h_in.reshape(TB, Sp, H)[:, 0:1, :].reshape(TB, H)       # CLS rows
        q = jnp.dot(h_cls.astype(jnp.bfloat16), wq,
                    preferred_element_type=jnp.float32) + bq            # [TB, H]
        ctx = mha(q.reshape(TB, 1, H), k.reshape(TB, Sp, H),
                  v.reshape(TB, Sp, H), key_bias)                       # [TB, H]
        attn = jnp.dot(ctx.astype(jnp.bfloat16), wo,
                       preferred_element_type=jnp.float32) + bo
        x = _layernorm(attn + h_cls, g1, be1)
        f = jnp.dot(x.astype(jnp.bfloat16), w1,
                    preferred_element_type=jnp.float32) + b1
        f = jnp.maximum(f, 0.0)
        f = jnp.dot(f.astype(jnp.bfloat16), w2,
                    preferred_element_type=jnp.float32) + b2
        return _layernorm(f + x, g2, be2)                               # [TB, H]

    # ---- BertEncoder: fori_loop over first L-1 layers, peeled CLS-only last --
    h = jax.lax.fori_loop(0, num_layers - 1,
                          lambda l, carry: layer_full(carry, load_layer(l)), h)
    h_cls = layer_cls(h, load_layer(num_layers - 1))
    out_ref[...] = h_cls.reshape(TB, 1, H).astype(out_ref.dtype)


# ---------------------------------------------------------------------------
# pallas_call wrapper
# ---------------------------------------------------------------------------
def _full_spec(shape):
    nd = len(shape)
    return pl.BlockSpec(shape, lambda b, nd=nd: (0,) * nd)


def _pick_batch_tile(B, max_tile=8):
    # Largest divisor of B <= max_tile that keeps >= 2 grid steps (v7x: 2 TCs).
    best = 1
    for t in range(1, min(B, max_tile) + 1):
        if B % t == 0 and (B // t >= 2 or B == 1):
            best = t
    return best


def berttab_forward(params, input_ids, attention_mask, num_heads, batch_tile=None):
    # TODO(synk): TransTabFeatureExtractor tokenizes raw pandas/tabular data; that
    # step has no Pallas equivalent, so inputs here are pre-tokenized ids.
    B, S = input_ids.shape
    H = params["word_emb"].shape[1]
    L = params["wq"].shape[0]
    Sp = ((S + 1 + 7) // 8) * 8                             # pad S+1 to sublane mult
    TB = batch_tile if batch_tile is not None else _pick_batch_tile(B)
    assert B % TB == 0

    # TODO(synk): fold this gather into the kernel (scalar-prefetch ids) at real H.
    emb = jnp.take(params["word_emb"], input_ids, axis=0)   # [B, S, H] glue gather

    # extended additive key mask: CLS always attended, padded rows always masked
    mask_ext = jnp.concatenate(
        [jnp.ones((B, 1), jnp.float32),
         attention_mask.astype(jnp.float32),
         jnp.zeros((B, Sp - S - 1), jnp.float32)], axis=1)   # [B, Sp]
    add_mask = ((1.0 - mask_ext) * -10000.0)[:, None, :]     # [B, 1, Sp]

    stacked = [params[k] for k in (
        "wq", "bq", "wk", "bk", "wv", "bv", "wo", "bo",
        "ln1_g", "ln1_b", "w1", "b1", "w2", "b2", "ln2_g", "ln2_b")]

    in_specs = [pl.BlockSpec((TB, S, H), lambda b: (b, 0, 0)),
                pl.BlockSpec((TB, 1, Sp), lambda b: (b, 0, 0)),
                _full_spec(params["cls_tok"].shape),
                _full_spec(params["ln_g"].shape),
                _full_spec(params["ln_b"].shape),
                _full_spec(params["align_w"].shape),
                _full_spec(params["align_b"].shape)]
    in_specs += [_full_spec(p.shape) for p in stacked]

    kernel = functools.partial(fused_forward_kernel, num_layers=L,
                               num_heads=num_heads, seq_len=S, seq_pad=Sp,
                               batch_tile=TB)

    out = pl.pallas_call(
        kernel,
        out_shape=jax.ShapeDtypeStruct((B, 1, H), jnp.float32),
        grid=(B // TB,),
        in_specs=in_specs,
        out_specs=pl.BlockSpec((TB, 1, H), lambda b: (b, 0, 0)),
        compiler_params=pltpu.CompilerParams(dimension_semantics=("parallel",)),
    )(emb, add_mask, params["cls_tok"], params["ln_g"], params["ln_b"],
      params["align_w"], params["align_b"], *stacked)
    return out[:, 0, :]                                      # [B, H] final CLS


# ---------------------------------------------------------------------------
# Deterministic parameter init (shapes implied by the PyTorch __init__);
# per-layer weights stacked along a leading L axis, matmul weights in bf16.
# ---------------------------------------------------------------------------
def init_params(key, vocab_size, hidden, ffn, num_layers):
    keys = jax.random.split(key, 3 + num_layers)

    def w(k, shape):
        return jax.random.normal(k, shape, jnp.float32) * 0.02

    word_emb = w(keys[0], (vocab_size, hidden)).at[0].set(0.0)   # padding_idx = 0
    align_w = w(keys[1], (hidden, hidden)).astype(jnp.bfloat16)  # stored [in, out]
    cls_tok = w(keys[2], (1, hidden))

    wq, wk, wv, wo, w1, w2 = [], [], [], [], [], []
    for l in range(num_layers):
        lk = jax.random.split(keys[3 + l], 6)
        wq.append(w(lk[0], (hidden, hidden)))
        wk.append(w(lk[1], (hidden, hidden)))
        wv.append(w(lk[2], (hidden, hidden)))
        wo.append(w(lk[3], (hidden, hidden)))
        w1.append(w(lk[4], (hidden, ffn)))
        w2.append(w(lk[5], (ffn, hidden)))

    L = num_layers
    zH = jnp.zeros((L, 1, hidden), jnp.float32)
    oH = jnp.ones((L, 1, hidden), jnp.float32)
    return dict(
        word_emb=word_emb,
        ln_g=jnp.ones((1, hidden), jnp.float32),
        ln_b=jnp.zeros((1, hidden), jnp.float32),
        align_w=align_w,
        align_b=jnp.zeros((1, hidden), jnp.float32),   # zero bias (bias-free align)
        cls_tok=cls_tok,
        wq=jnp.stack(wq).astype(jnp.bfloat16), bq=zH,
        wk=jnp.stack(wk).astype(jnp.bfloat16), bk=zH,
        wv=jnp.stack(wv).astype(jnp.bfloat16), bv=zH,
        wo=jnp.stack(wo).astype(jnp.bfloat16), bo=zH,
        ln1_g=oH, ln1_b=zH,
        w1=jnp.stack(w1).astype(jnp.bfloat16), b1=jnp.zeros((L, 1, ffn), jnp.float32),
        w2=jnp.stack(w2).astype(jnp.bfloat16), b2=zH,
        ln2_g=oH, ln2_b=zH,
    )


if __name__ == "__main__":
    # batch, seq, hidden, ffn, layers, heads, vocab
    B, S, H, F, L, NH, V = 8, 8, 32, 64, 2, 4, 100

    key = jax.random.PRNGKey(0)
    pk, ik = jax.random.split(key)
    params = init_params(pk, V, H, F, L)

    input_ids = jax.random.randint(ik, (B, S), 1, V, dtype=jnp.int32)
    attention_mask = jnp.ones((B, S), jnp.float32)

    out = berttab_forward(params, input_ids, attention_mask, NH)
    jax.block_until_ready(out)
    assert out.shape == (B, H) and out.dtype == jnp.float32
    assert bool(jnp.all(jnp.isfinite(out)))
    print("KERNEL_OK")
</pallas_src>

<mosaic_0001>
module attributes {stable_mosaic.version = 11 : i64} {
  func.func @fused_forward_kernel(%arg0: i32, %arg1: memref<4x8x32xf32, #tpu.memory_space<vmem>>, %arg2: memref<4x1x16xf32, #tpu.memory_space<vmem>>, %arg3: memref<1x32xf32, #tpu.memory_space<vmem>>, %arg4: memref<1x32xf32, #tpu.memory_space<vmem>>, %arg5: memref<1x32xf32, #tpu.memory_space<vmem>>, %arg6: memref<32x32xbf16, #tpu.memory_space<vmem>>, %arg7: memref<1x32xf32, #tpu.memory_space<vmem>>, %arg8: memref<2x32x32xbf16, #tpu.memory_space<vmem>>, %arg9: memref<2x1x32xf32, #tpu.memory_space<vmem>>, %arg10: memref<2x32x32xbf16, #tpu.memory_space<vmem>>, %arg11: memref<2x1x32xf32, #tpu.memory_space<vmem>>, %arg12: memref<2x32x32xbf16, #tpu.memory_space<vmem>>, %arg13: memref<2x1x32xf32, #tpu.memory_space<vmem>>, %arg14: memref<2x32x32xbf16, #tpu.memory_space<vmem>>, %arg15: memref<2x1x32xf32, #tpu.memory_space<vmem>>, %arg16: memref<2x1x32xf32, #tpu.memory_space<vmem>>, %arg17: memref<2x1x32xf32, #tpu.memory_space<vmem>>, %arg18: memref<2x32x64xbf16, #tpu.memory_space<vmem>>, %arg19: memref<2x1x64xf32, #tpu.memory_space<vmem>>, %arg20: memref<2x64x32xbf16, #tpu.memory_space<vmem>>, %arg21: memref<2x1x32xf32, #tpu.memory_space<vmem>>, %arg22: memref<2x1x32xf32, #tpu.memory_space<vmem>>, %arg23: memref<2x1x32xf32, #tpu.memory_space<vmem>>, %arg24: memref<4x1x32xf32, #tpu.memory_space<vmem>>) attributes {dimension_semantics = [#tpu.dimension_semantics<parallel>], iteration_bounds = array<i64: 2>, scalar_prefetch = 0 : i64, scratch_operands = 0 : i64, tpu.core_type = #tpu.core_type<tc>, window_params = [{transform_indices = @transform_0, window_bounds = array<i64: 4, 8, 32>}, {transform_indices = @transform_1, window_bounds = array<i64: 4, 1, 16>}, {pipeline_mode = #tpu.pipeline_mode<synchronous>, transform_indices = @transform_2, window_bounds = array<i64: 1, 32>}, {pipeline_mode = #tpu.pipeline_mode<synchronous>, transform_indices = @transform_3, window_bounds = array<i64: 1, 32>}, {pipeline_mode = #tpu.pipeline_mode<synchronous>, transform_indices = @transform_4, window_bounds = array<i64: 1, 32>}, {pipeline_mode = #tpu.pipeline_mode<synchronous>, transform_indices = @transform_5, window_bounds = array<i64: 32, 32>}, {pipeline_mode = #tpu.pipeline_mode<synchronous>, transform_indices = @transform_6, window_bounds = array<i64: 1, 32>}, {pipeline_mode = #tpu.pipeline_mode<synchronous>, transform_indices = @transform_7, window_bounds = array<i64: 2, 32, 32>}, {pipeline_mode = #tpu.pipeline_mode<synchronous>, transform_indices = @transform_8, window_bounds = array<i64: 2, 1, 32>}, {pipeline_mode = #tpu.pipeline_mode<synchronous>, transform_indices = @transform_9, window_bounds = array<i64: 2, 32, 32>}, {pipeline_mode = #tpu.pipeline_mode<synchronous>, transform_indices = @transform_10, window_bounds = array<i64: 2, 1, 32>}, {pipeline_mode = #tpu.pipeline_mode<synchronous>, transform_indices = @transform_11, window_bounds = array<i64: 2, 32, 32>}, {pipeline_mode = #tpu.pipeline_mode<synchronous>, transform_indices = @transform_12, window_bounds = array<i64: 2, 1, 32>}, {pipeline_mode = #tpu.pipeline_mode<synchronous>, transform_indices = @transform_13, window_bounds = array<i64: 2, 32, 32>}, {pipeline_mode = #tpu.pipeline_mode<synchronous>, transform_indices = @transform_14, window_bounds = array<i64: 2, 1, 32>}, {pipeline_mode = #tpu.pipeline_mode<synchronous>, transform_indices = @transform_15, window_bounds = array<i64: 2, 1, 32>}, {pipeline_mode = #tpu.pipeline_mode<synchronous>, transform_indices = @transform_16, window_bounds = array<i64: 2, 1, 32>}, {pipeline_mode = #tpu.pipeline_mode<synchronous>, transform_indices = @transform_17, window_bounds = array<i64: 2, 32, 64>}, {pipeline_mode = #tpu.pipeline_mode<synchronous>, transform_indices = @transform_18, window_bounds = array<i64: 2, 1, 64>}, {pipeline_mode = #tpu.pipeline_mode<synchronous>, transform_indices = @transform_19, window_bounds = array<i64: 2, 64, 32>}, {pipeline_mode = #tpu.pipeline_mode<synchronous>, transform_indices = @transform_20, window_bounds = array<i64: 2, 1, 32>}, {pipeline_mode = #tpu.pipeline_mode<synchronous>, transform_indices = @transform_21, window_bounds = array<i64: 2, 1, 32>}, {pipeline_mode = #tpu.pipeline_mode<synchronous>, transform_indices = @transform_22, window_bounds = array<i64: 2, 1, 32>}, {transform_indices = @transform_23, window_bounds = array<i64: 4, 1, 32>}]} {
    %c0 = arith.constant 0 : index
    %c0_0 = arith.constant 0 : index
    %c0_1 = arith.constant 0 : index
    %0 = vector.load %arg2[%c0, %c0_0, %c0_1] : memref<4x1x16xf32, #tpu.memory_space<vmem>>, vector<4x1x16xf32>
    %c0_2 = arith.constant 0 : index
    %c0_3 = arith.constant 0 : index
    %c0_4 = arith.constant 0 : index
    %1 = vector.load %arg1[%c0_2, %c0_3, %c0_4] : memref<4x8x32xf32, #tpu.memory_space<vmem>>, vector<4x8x32xf32>
    %2 = vector.shape_cast %1 : vector<4x8x32xf32> to vector<32x32xf32>
    %c0_5 = arith.constant 0 : index
    %c0_6 = arith.constant 0 : index
    %3 = vector.load %arg4[%c0_5, %c0_6] : memref<1x32xf32, #tpu.memory_space<vmem>>, vector<1x32xf32>
    %c0_7 = arith.constant 0 : index
    %c0_8 = arith.constant 0 : index
    %4 = vector.load %arg5[%c0_7, %c0_8] : memref<1x32xf32, #tpu.memory_space<vmem>>, vector<1x32xf32>
    %cst = arith.constant dense<0.000000e+00> : vector<32xf32>
    %5 = vector.multi_reduction <add>, %2, %cst [1] : vector<32x32xf32> to vector<32xf32>
    %6 = vector.shape_cast %5 : vector<32xf32> to vector<32x1xf32>
    %cst_9 = arith.constant 3.200000e+01 : f32
    %7 = vector.broadcast %cst_9 : f32 to vector<32x1xf32>
    %8 = arith.divf %6, %7 : vector<32x1xf32>
    %9 = vector.broadcast %8 : vector<32x1xf32> to vector<32x32xf32>
    %10 = arith.subf %2, %9 : vector<32x32xf32>
    %11 = arith.mulf %10, %10 : vector<32x32xf32>
    %cst_10 = arith.constant dense<0.000000e+00> : vector<32xf32>
    %12 = vector.multi_reduction <add>, %11, %cst_10 [1] : vector<32x32xf32> to vector<32xf32>
    %13 = vector.shape_cast %12 : vector<32xf32> to vector<32x1xf32>
    %cst_11 = arith.constant 3.200000e+01 : f32
    %14 = vector.broadcast %cst_11 : f32 to vector<32x1xf32>
    %15 = arith.divf %13, %14 : vector<32x1xf32>
    %16 = vector.broadcast %8 : vector<32x1xf32> to vector<32x32xf32>
    %17 = arith.subf %2, %16 : vector<32x32xf32>
    %cst_12 = arith.constant 9.99999996E-13 : f32
    %18 = vector.broadcast %cst_12 : f32 to vector<32x1xf32>
    %19 = arith.addf %15, %18 : vector<32x1xf32>
    %20 = math.rsqrt %19 : vector<32x1xf32>
    %21 = vector.broadcast %20 : vector<32x1xf32> to vector<32x32xf32>
    %22 = arith.mulf %17, %21 : vector<32x32xf32>
    %23 = vector.broadcast %3 : vector<1x32xf32> to vector<32x32xf32>
    %24 = arith.mulf %22, %23 : vector<32x32xf32>
    %25 = vector.broadcast %4 : vector<1x32xf32> to vector<32x32xf32>
    %26 = arith.addf %24, %25 : vector<32x32xf32>
    %27 = arith.truncf %26 : vector<32x32xf32> to vector<32x32xbf16>
    %c0_13 = arith.constant 0 : index
    %c0_14 = arith.constant 0 : index
    %28 = vector.load %arg6[%c0_13, %c0_14] : memref<32x32xbf16, #tpu.memory_space<vmem>>, vector<32x32xbf16>
    %cst_15 = arith.constant dense<0.000000e+00> : vector<32x32xf32>
    %29 = tpu.matmul %27, %28, %cst_15 {dimension_numbers = #tpu.dot_dimension_numbers<[1], [0], [0], [1], [0, 0, 1, 1], [], []>} : vector<32x32xbf16>, vector<32x32xbf16>, vector<32x32xf32> -> vector<32x32xf32>
    %c0_16 = arith.constant 0 : index
    %c0_17 = arith.constant 0 : index
    %30 = vector.load %arg7[%c0_16, %c0_17] : memref<1x32xf32, #tpu.memory_space<vmem>>, vector<1x32xf32>
    %31 = vector.broadcast %30 : vector<1x32xf32> to vector<32x32xf32>
    %32 = arith.addf %29, %31 : vector<32x32xf32>
    %33 = vector.shape_cast %32 : vector<32x32xf32> to vector<4x8x32xf32>
    %c0_18 = arith.constant 0 : index
    %c0_19 = arith.constant 0 : index
    %34 = vector.load %arg3[%c0_18, %c0_19] : memref<1x32xf32, #tpu.memory_space<vmem>>, vector<1x32xf32>
    %35 = vector.shape_cast %34 : vector<1x32xf32> to vector<1x1x32xf32>
    %36 = vector.shape_cast %35 : vector<1x1x32xf32> to vector<1x1x32xf32>
    %37 = vector.broadcast %36 : vector<1x1x32xf32> to vector<4x1x32xf32>
    %cst_20 = arith.constant 0.000000e+00 : f32
    %38 = vector.broadcast %cst_20 : f32 to vector<4x7x32xf32>
    %39 = tpu.concatenate %37, %33, %38 in 1 : vector<4x1x32xf32>, vector<4x8x32xf32>, vector<4x7x32xf32> -> vector<4x16x32xf32>
    %40 = vector.shape_cast %39 : vector<4x16x32xf32> to vector<64x32xf32>
    %c0_i32 = arith.constant 0 : i32
    %41 = arith.index_cast %c0_i32 : i32 to index
    %c0_21 = arith.constant 0 : index
    %c0_22 = arith.constant 0 : index
    %42 = vector.load %arg8[%41, %c0_21, %c0_22] : memref<2x32x32xbf16, #tpu.memory_space<vmem>>, vector<1x32x32xbf16>
    %43 = vector.shape_cast %42 : vector<1x32x32xbf16> to vector<32x32xbf16>
    %44 = arith.index_cast %c0_i32 : i32 to index
    %c0_23 = arith.constant 0 : index
    %c0_24 = arith.constant 0 : index
    %45 = vector.load %arg9[%44, %c0_23, %c0_24] : memref<2x1x32xf32, #tpu.memory_space<vmem>>, vector<1x1x32xf32>
    %46 = vector.shape_cast %45 : vector<1x1x32xf32> to vector<1x32xf32>
    %47 = arith.index_cast %c0_i32 : i32 to index
    %c0_25 = arith.constant 0 : index
    %c0_26 = arith.constant 0 : index
    %48 = vector.load %arg10[%47, %c0_25, %c0_26] : memref<2x32x32xbf16, #tpu.memory_space<vmem>>, vector<1x32x32xbf16>
    %49 = vector.shape_cast %48 : vector<1x32x32xbf16> to vector<32x32xbf16>
    %50 = arith.index_cast %c0_i32 : i32 to index
    %c0_27 = arith.constant 0 : index
    %c0_28 = arith.constant 0 : index
    %51 = vector.load %arg11[%50, %c0_27, %c0_28] : memref<2x1x32xf32, #tpu.memory_space<vmem>>, vector<1x1x32xf32>
    %52 = vector.shape_cast %51 : vector<1x1x32xf32> to vector<1x32xf32>
    %53 = arith.index_cast %c0_i32 : i32 to index
    %c0_29 = arith.constant 0 : index
    %c0_30 = arith.constant 0 : index
    %54 = vector.load %arg12[%53, %c0_29, %c0_30] : memref<2x32x32xbf16, #tpu.memory_space<vmem>>, vector<1x32x32xbf16>
    %55 = vector.shape_cast %54 : vector<1x32x32xbf16> to vector<32x32xbf16>
    %56 = arith.index_cast %c0_i32 : i32 to index
    %c0_31 = arith.constant 0 : index
    %c0_32 = arith.constant 0 : index
    %57 = vector.load %arg13[%56, %c0_31, %c0_32] : memref<2x1x32xf32, #tpu.memory_space<vmem>>, vector<1x1x32xf32>
    %58 = vector.shape_cast %57 : vector<1x1x32xf32> to vector<1x32xf32>
    %59 = arith.index_cast %c0_i32 : i32 to index
    %c0_33 = arith.constant 0 : index
    %c0_34 = arith.constant 0 : index
    %60 = vector.load %arg14[%59, %c0_33, %c0_34] : memref<2x32x32xbf16, #tpu.memory_space<vmem>>, vector<1x32x32xbf16>
    %61 = vector.shape_cast %60 : vector<1x32x32xbf16> to vector<32x32xbf16>
    %62 = arith.index_cast %c0_i32 : i32 to index
    %c0_35 = arith.constant 0 : index
    %c0_36 = arith.constant 0 : index
    %63 = vector.load %arg15[%62, %c0_35, %c0_36] : memref<2x1x32xf32, #tpu.memory_space<vmem>>, vector<1x1x32xf32>
    %64 = vector.shape_cast %63 : vector<1x1x32xf32> to vector<1x32xf32>
    %65 = arith.index_cast %c0_i32 : i32 to index
    %c0_37 = arith.constant 0 : index
    %c0_38 = arith.constant 0 : index
    %66 = vector.load %arg16[%65, %c0_37, %c0_38] : memref<2x1x32xf32, #tpu.memory_space<vmem>>, vector<1x1x32xf32>
    %67 = vector.shape_cast %66 : vector<1x1x32xf32> to vector<1x32xf32>
    %68 = arith.index_cast %c0_i32 : i32 to index
    %c0_39 = arith.constant 0 : index
    %c0_40 = arith.constant 0 : index
    %69 = vector.load %arg17[%68, %c0_39, %c0_40] : memref<2x1x32xf32, #tpu.memory_space<vmem>>, vector<1x1x32xf32>
    %70 = vector.shape_cast %69 : vector<1x1x32xf32> to vector<1x32xf32>
    %71 = arith.index_cast %c0_i32 : i32 to index
    %c0_41 = arith.constant 0 : index
    %c0_42 = arith.constant 0 : index
    %72 = vector.load %arg18[%71, %c0_41, %c0_42] : memref<2x32x64xbf16, #tpu.memory_space<vmem>>, vector<1x32x64xbf16>
    %73 = vector.shape_cast %72 : vector<1x32x64xbf16> to vector<32x64xbf16>
    %74 = arith.index_cast %c0_i32 : i32 to index
    %c0_43 = arith.constant 0 : index
    %c0_44 = arith.constant 0 : index
    %75 = vector.load %arg19[%74, %c0_43, %c0_44] : memref<2x1x64xf32, #tpu.memory_space<vmem>>, vector<1x1x64xf32>
    %76 = vector.shape_cast %75 : vector<1x1x64xf32> to vector<1x64xf32>
    %77 = arith.index_cast %c0_i32 : i32 to index
    %c0_45 = arith.constant 0 : index
    %c0_46 = arith.constant 0 : index
    %78 = vector.load %arg20[%77, %c0_45, %c0_46] : memref<2x64x32xbf16, #tpu.memory_space<vmem>>, vector<1x64x32xbf16>
    %79 = vector.shape_cast %78 : vector<1x64x32xbf16> to vector<64x32xbf16>
    %80 = arith.index_cast %c0_i32 : i32 to index
    %c0_47 = arith.constant 0 : index
    %c0_48 = arith.constant 0 : index
    %81 = vector.load %arg21[%80, %c0_47, %c0_48] : memref<2x1x32xf32, #tpu.memory_space<vmem>>, vector<1x1x32xf32>
    %82 = vector.shape_cast %81 : vector<1x1x32xf32> to vector<1x32xf32>
    %83 = arith.index_cast %c0_i32 : i32 to index
    %c0_49 = arith.constant 0 : index
    %c0_50 = arith.constant 0 : index
    %84 = vector.load %arg22[%83, %c0_49, %c0_50] : memref<2x1x32xf32, #tpu.memory_space<vmem>>, vector<1x1x32xf32>
    %85 = vector.shape_cast %84 : vector<1x1x32xf32> to vector<1x32xf32>
    %86 = arith.index_cast %c0_i32 : i32 to index
    %c0_51 = arith.constant 0 : index
    %c0_52 = arith.constant 0 : index
    %87 = vector.load %arg23[%86, %c0_51, %c0_52] : memref<2x1x32xf32, #tpu.memory_space<vmem>>, vector<1x1x32xf32>
    %88 = vector.shape_cast %87 : vector<1x1x32xf32> to vector<1x32xf32>
    %89 = arith.truncf %40 : vector<64x32xf32> to vector<64x32xbf16>
    %cst_53 = arith.constant dense<0.000000e+00> : vector<64x32xf32>
    %90 = tpu.matmul %89, %43, %cst_53 {dimension_numbers = #tpu.dot_dimension_numbers<[1], [0], [0], [1], [0, 0, 1, 1], [], []>} : vector<64x32xbf16>, vector<32x32xbf16>, vector<64x32xf32> -> vector<64x32xf32>
    %91 = vector.broadcast %46 : vector<1x32xf32> to vector<64x32xf32>
    %92 = arith.addf %90, %91 : vector<64x32xf32>
    %cst_54 = arith.constant dense<0.000000e+00> : vector<64x32xf32>
    %93 = tpu.matmul %89, %49, %cst_54 {dimension_numbers = #tpu.dot_dimension_numbers<[1], [0], [0], [1], [0, 0, 1, 1], [], []>} : vector<64x32xbf16>, vector<32x32xbf16>, vector<64x32xf32> -> vector<64x32xf32>
    %94 = vector.broadcast %52 : vector<1x32xf32> to vector<64x32xf32>
    %95 = arith.addf %93, %94 : vector<64x32xf32>
    %cst_55 = arith.constant dense<0.000000e+00> : vector<64x32xf32>
    %96 = tpu.matmul %89, %55, %cst_55 {dimension_numbers = #tpu.dot_dimension_numbers<[1], [0], [0], [1], [0, 0, 1, 1], [], []>} : vector<64x32xbf16>, vector<32x32xbf16>, vector<64x32xf32> -> vector<64x32xf32>
    %97 = vector.broadcast %58 : vector<1x32xf32> to vector<64x32xf32>
    %98 = arith.addf %96, %97 : vector<64x32xf32>
    %99 = vector.shape_cast %92 : vector<64x32xf32> to vector<4x16x32xf32>
    %100 = vector.shape_cast %95 : vector<64x32xf32> to vector<4x16x32xf32>
    %101 = vector.shape_cast %98 : vector<64x32xf32> to vector<4x16x32xf32>
    %102 = vector.extract_strided_slice %99 {offsets = [0, 0, 0], sizes = [4, 16, 8], strides = [1, 1, 1]} : vector<4x16x32xf32> to vector<4x16x8xf32>
    %103 = arith.truncf %102 : vector<4x16x8xf32> to vector<4x16x8xbf16>
    %104 = vector.extract_strided_slice %100 {offsets = [0, 0, 0], sizes = [4, 16, 8], strides = [1, 1, 1]} : vector<4x16x32xf32> to vector<4x16x8xf32>
    %105 = arith.truncf %104 : vector<4x16x8xf32> to vector<4x16x8xbf16>
    %106 = vector.extract_strided_slice %101 {offsets = [0, 0, 0], sizes = [4, 16, 8], strides = [1, 1, 1]} : vector<4x16x32xf32> to vector<4x16x8xf32>
    %107 = arith.truncf %106 : vector<4x16x8xf32> to vector<4x16x8xbf16>
    %cst_56 = arith.constant dense<0.000000e+00> : vector<4x16x16xf32>
    %108 = tpu.matmul %103, %105, %cst_56 {dimension_numbers = #tpu.dot_dimension_numbers<[2], [2], [1], [1], [0, 0, 0, 1, 1, 1], [0], [0]>} : vector<4x16x8xbf16>, vector<4x16x8xbf16>, vector<4x16x16xf32> -> vector<4x16x16xf32>
    %cst_57 = arith.constant 0.353553385 : f32
    %109 = vector.broadcast %cst_57 : f32 to vector<4x16x16xf32>
    %110 = arith.mulf %108, %109 : vector<4x16x16xf32>
    %111 = vector.broadcast %0 : vector<4x1x16xf32> to vector<4x16x16xf32>
    %112 = arith.addf %110, %111 : vector<4x16x16xf32>
    %cst_58 = arith.constant dense<0xFF800000> : vector<4x16xf32>
    %113 = vector.multi_reduction <maximumf>, %112, %cst_58 [2] : vector<4x16x16xf32> to vector<4x16xf32>
    %114 = vector.shape_cast %113 : vector<4x16xf32> to vector<4x16x1xf32>
    %115 = vector.broadcast %114 : vector<4x16x1xf32> to vector<4x16x16xf32>
    %116 = arith.subf %112, %115 : vector<4x16x16xf32>
    %117 = math.exp %116 : vector<4x16x16xf32>
    %cst_59 = arith.constant dense<0.000000e+00> : vector<4x16xf32>
    %118 = vector.multi_reduction <add>, %117, %cst_59 [2] : vector<4x16x16xf32> to vector<4x16xf32>
    %119 = vector.shape_cast %118 : vector<4x16xf32> to vector<4x16x1xf32>
    %120 = tpu.reciprocal %119 {approx = true} : vector<4x16x1xf32> -> vector<4x16x1xf32>
    %121 = vector.broadcast %120 : vector<4x16x1xf32> to vector<4x16x16xf32>
    %122 = arith.mulf %117, %121 : vector<4x16x16xf32>
    %123 = arith.truncf %122 : vector<4x16x16xf32> to vector<4x16x16xbf16>
    %cst_60 = arith.constant dense<0.000000e+00> : vector<4x16x8xf32>
    %124 = tpu.matmul %123, %107, %cst_60 {dimension_numbers = #tpu.dot_dimension_numbers<[2], [1], [1], [2], [0, 0, 0, 1, 1, 2], [0], [0]>} : vector<4x16x16xbf16>, vector<4x16x8xbf16>, vector<4x16x8xf32> -> vector<4x16x8xf32>
    %125 = vector.extract_strided_slice %99 {offsets = [0, 0, 8], sizes = [4, 16, 8], strides = [1, 1, 1]} : vector<4x16x32xf32> to vector<4x16x8xf32>
    %126 = arith.truncf %125 : vector<4x16x8xf32> to vector<4x16x8xbf16>
    %127 = vector.extract_strided_slice %100 {offsets = [0, 0, 8], sizes = [4, 16, 8], strides = [1, 1, 1]} : vector<4x16x32xf32> to vector<4x16x8xf32>
    %128 = arith.truncf %127 : vector<4x16x8xf32> to vector<4x16x8xbf16>
    %129 = vector.extract_strided_slice %101 {offsets = [0, 0, 8], sizes = [4, 16, 8], strides = [1, 1, 1]} : vector<4x16x32xf32> to vector<4x16x8xf32>
    %130 = arith.truncf %129 : vector<4x16x8xf32> to vector<4x16x8xbf16>
    %cst_61 = arith.constant dense<0.000000e+00> : vector<4x16x16xf32>
    %131 = tpu.matmul %126, %128, %cst_61 {dimension_numbers = #tpu.dot_dimension_numbers<[2], [2], [1], [1], [0, 0, 0, 1, 1, 1], [0], [0]>} : vector<4x16x8xbf16>, vector<4x16x8xbf16>, vector<4x16x16xf32> -> vector<4x16x16xf32>
    %cst_62 = arith.constant 0.353553385 : f32
    %132 = vector.broadcast %cst_62 : f32 to vector<4x16x16xf32>
    %133 = arith.mulf %131, %132 : vector<4x16x16xf32>
    %134 = vector.broadcast %0 : vector<4x1x16xf32> to vector<4x16x16xf32>
    %135 = arith.addf %133, %134 : vector<4x16x16xf32>
    %cst_63 = arith.constant dense<0xFF800000> : vector<4x16xf32>
    %136 = vector.multi_reduction <maximumf>, %135, %cst_63 [2] : vector<4x16x16xf32> to vector<4x16xf32>
    %137 = vector.shape_cast %136 : vector<4x16xf32> to vector<4x16x1xf32>
    %138 = vector.broadcast %137 : vector<4x16x1xf32> to vector<4x16x16xf32>
    %139 = arith.subf %135, %138 : vector<4x16x16xf32>
    %140 = math.exp %139 : vector<4x16x16xf32>
    %cst_64 = arith.constant dense<0.000000e+00> : vector<4x16xf32>
    %141 = vector.multi_reduction <add>, %140, %cst_64 [2] : vector<4x16x16xf32> to vector<4x16xf32>
    %142 = vector.shape_cast %141 : vector<4x16xf32> to vector<4x16x1xf32>
    %143 = tpu.reciprocal %142 {approx = true} : vector<4x16x1xf32> -> vector<4x16x1xf32>
    %144 = vector.broadcast %143 : vector<4x16x1xf32> to vector<4x16x16xf32>
    %145 = arith.mulf %140, %144 : vector<4x16x16xf32>
    %146 = arith.truncf %145 : vector<4x16x16xf32> to vector<4x16x16xbf16>
    %cst_65 = arith.constant dense<0.000000e+00> : vector<4x16x8xf32>
    %147 = tpu.matmul %146, %130, %cst_65 {dimension_numbers = #tpu.dot_dimension_numbers<[2], [1], [1], [2], [0, 0, 0, 1, 1, 2], [0], [0]>} : vector<4x16x16xbf16>, vector<4x16x8xbf16>, vector<4x16x8xf32> -> vector<4x16x8xf32>
    %148 = vector.extract_strided_slice %99 {offsets = [0, 0, 16], sizes = [4, 16, 8], strides = [1, 1, 1]} : vector<4x16x32xf32> to vector<4x16x8xf32>
    %149 = arith.truncf %148 : vector<4x16x8xf32> to vector<4x16x8xbf16>
    %150 = vector.extract_strided_slice %100 {offsets = [0, 0, 16], sizes = [4, 16, 8], strides = [1, 1, 1]} : vector<4x16x32xf32> to vector<4x16x8xf32>
    %151 = arith.truncf %150 : vector<4x16x8xf32> to vector<4x16x8xbf16>
    %152 = vector.extract_strided_slice %101 {offsets = [0, 0, 16], sizes = [4, 16, 8], strides = [1, 1, 1]} : vector<4x16x32xf32> to vector<4x16x8xf32>
    %153 = arith.truncf %152 : vector<4x16x8xf32> to vector<4x16x8xbf16>
    %cst_66 = arith.constant dense<0.000000e+00> : vector<4x16x16xf32>
    %154 = tpu.matmul %149, %151, %cst_66 {dimension_numbers = #tpu.dot_dimension_numbers<[2], [2], [1], [1], [0, 0, 0, 1, 1, 1], [0], [0]>} : vector<4x16x8xbf16>, vector<4x16x8xbf16>, vector<4x16x16xf32> -> vector<4x16x16xf32>
    %cst_67 = arith.constant 0.353553385 : f32
    %155 = vector.broadcast %cst_67 : f32 to vector<4x16x16xf32>
    %156 = arith.mulf %154, %155 : vector<4x16x16xf32>
    %157 = vector.broadcast %0 : vector<4x1x16xf32> to vector<4x16x16xf32>
    %158 = arith.addf %156, %157 : vector<4x16x16xf32>
    %cst_68 = arith.constant dense<0xFF800000> : vector<4x16xf32>
    %159 = vector.multi_reduction <maximumf>, %158, %cst_68 [2] : vector<4x16x16xf32> to vector<4x16xf32>
    %160 = vector.shape_cast %159 : vector<4x16xf32> to vector<4x16x1xf32>
    %161 = vector.broadcast %160 : vector<4x16x1xf32> to vector<4x16x16xf32>
    %162 = arith.subf %158, %161 : vector<4x16x16xf32>
    %163 = math.exp %162 : vector<4x16x16xf32>
    %cst_69 = arith.constant dense<0.000000e+00> : vector<4x16xf32>
    %164 = vector.multi_reduction <add>, %163, %cst_69 [2] : vector<4x16x16xf32> to vector<4x16xf32>
    %165 = vector.shape_cast %164 : vector<4x16xf32> to vector<4x16x1xf32>
    %166 = tpu.reciprocal %165 {approx = true} : vector<4x16x1xf32> -> vector<4x16x1xf32>
    %167 = vector.broadcast %166 : vector<4x16x1xf32> to vector<4x16x16xf32>
    %168 = arith.mulf %163, %167 : vector<4x16x16xf32>
    %169 = arith.truncf %168 : vector<4x16x16xf32> to vector<4x16x16xbf16>
    %cst_70 = arith.constant dense<0.000000e+00> : vector<4x16x8xf32>
    %170 = tpu.matmul %169, %153, %cst_70 {dimension_numbers = #tpu.dot_dimension_numbers<[2], [1], [1], [2], [0, 0, 0, 1, 1, 2], [0], [0]>} : vector<4x16x16xbf16>, vector<4x16x8xbf16>, vector<4x16x8xf32> -> vector<4x16x8xf32>
    %171 = vector.extract_strided_slice %99 {offsets = [0, 0, 24], sizes = [4, 16, 8], strides = [1, 1, 1]} : vector<4x16x32xf32> to vector<4x16x8xf32>
    %172 = arith.truncf %171 : vector<4x16x8xf32> to vector<4x16x8xbf16>
    %173 = vector.extract_strided_slice %100 {offsets = [0, 0, 24], sizes = [4, 16, 8], strides = [1, 1, 1]} : vector<4x16x32xf32> to vector<4x16x8xf32>
    %174 = arith.truncf %173 : vector<4x16x8xf32> to vector<4x16x8xbf16>
    %175 = vector.extract_strided_slice %101 {offsets = [0, 0, 24], sizes = [4, 16, 8], strides = [1, 1, 1]} : vector<4x16x32xf32> to vector<4x16x8xf32>
    %176 = arith.truncf %175 : vector<4x16x8xf32> to vector<4x16x8xbf16>
    %cst_71 = arith.constant dense<0.000000e+00> : vector<4x16x16xf32>
    %177 = tpu.matmul %172, %174, %cst_71 {dimension_numbers = #tpu.dot_dimension_numbers<[2], [2], [1], [1], [0, 0, 0, 1, 1, 1], [0], [0]>} : vector<4x16x8xbf16>, vector<4x16x8xbf16>, vector<4x16x16xf32> -> vector<4x16x16xf32>
    %cst_72 = arith.constant 0.353553385 : f32
    %178 = vector.broadcast %cst_72 : f32 to vector<4x16x16xf32>
    %179 = arith.mulf %177, %178 : vector<4x16x16xf32>
    %180 = vector.broadcast %0 : vector<4x1x16xf32> to vector<4x16x16xf32>
    %181 = arith.addf %179, %180 : vector<4x16x16xf32>
    %cst_73 = arith.constant dense<0xFF800000> : vector<4x16xf32>
    %182 = vector.multi_reduction <maximumf>, %181, %cst_73 [2] : vector<4x16x16xf32> to vector<4x16xf32>
    %183 = vector.shape_cast %182 : vector<4x16xf32> to vector<4x16x1xf32>
    %184 = vector.broadcast %183 : vector<4x16x1xf32> to vector<4x16x16xf32>
    %185 = arith.subf %181, %184 : vector<4x16x16xf32>
    %186 = math.exp %185 : vector<4x16x16xf32>
    %cst_74 = arith.constant dense<0.000000e+00> : vector<4x16xf32>
    %187 = vector.multi_reduction <add>, %186, %cst_74 [2] : vector<4x16x16xf32> to vector<4x16xf32>
    %188 = vector.shape_cast %187 : vector<4x16xf32> to vector<4x16x1xf32>
    %189 = tpu.reciprocal %188 {approx = true} : vector<4x16x1xf32> -> vector<4x16x1xf32>
    %190 = vector.broadcast %189 : vector<4x16x1xf32> to vector<4x16x16xf32>
    %191 = arith.mulf %186, %190 : vector<4x16x16xf32>
    %192 = arith.truncf %191 : vector<4x16x16xf32> to vector<4x16x16xbf16>
    %cst_75 = arith.constant dense<0.000000e+00> : vector<4x16x8xf32>
    %193 = tpu.matmul %192, %176, %cst_75 {dimension_numbers = #tpu.dot_dimension_numbers<[2], [1], [1], [2], [0, 0, 0, 1, 1, 2], [0], [0]>} : vector<4x16x16xbf16>, vector<4x16x8xbf16>, vector<4x16x8xf32> -> vector<4x16x8xf32>
    %194 = tpu.concatenate %124, %147, %170, %193 in 2 : vector<4x16x8xf32>, vector<4x16x8xf32>, vector<4x16x8xf32>, vector<4x16x8xf32> -> vector<4x16x32xf32>
    %195 = vector.shape_cast %194 : vector<4x16x32xf32> to vector<64x32xf32>
    %196 = arith.truncf %195 : vector<64x32xf32> to vector<64x32xbf16>
    %cst_76 = arith.constant dense<0.000000e+00> : vector<64x32xf32>
    %197 = tpu.matmul %196, %61, %cst_76 {dimension_numbers = #tpu.dot_dimension_numbers<[1], [0], [0], [1], [0, 0, 1, 1], [], []>} : vector<64x32xbf16>, vector<32x32xbf16>, vector<64x32xf32> -> vector<64x32xf32>
    %198 = vector.broadcast %64 : vector<1x32xf32> to vector<64x32xf32>
    %199 = arith.addf %197, %198 : vector<64x32xf32>
    %200 = arith.addf %199, %40 : vector<64x32xf32>
    %cst_77 = arith.constant dense<0.000000e+00> : vector<64xf32>
    %201 = vector.multi_reduction <add>, %200, %cst_77 [1] : vector<64x32xf32> to vector<64xf32>
    %202 = vector.shape_cast %201 : vector<64xf32> to vector<64x1xf32>
    %cst_78 = arith.constant 3.200000e+01 : f32
    %203 = vector.broadcast %cst_78 : f32 to vector<64x1xf32>
    %204 = arith.divf %202, %203 : vector<64x1xf32>
    %205 = vector.broadcast %204 : vector<64x1xf32> to vector<64x32xf32>
    %206 = arith.subf %200, %205 : vector<64x32xf32>
    %207 = arith.mulf %206, %206 : vector<64x32xf32>
    %cst_79 = arith.constant dense<0.000000e+00> : vector<64xf32>
    %208 = vector.multi_reduction <add>, %207, %cst_79 [1] : vector<64x32xf32> to vector<64xf32>
    %209 = vector.shape_cast %208 : vector<64xf32> to vector<64x1xf32>
    %cst_80 = arith.constant 3.200000e+01 : f32
    %210 = vector.broadcast %cst_80 : f32 to vector<64x1xf32>
    %211 = arith.divf %209, %210 : vector<64x1xf32>
    %212 = vector.broadcast %204 : vector<64x1xf32> to vector<64x32xf32>
    %213 = arith.subf %200, %212 : vector<64x32xf32>
    %cst_81 = arith.constant 9.99999996E-13 : f32
    %214 = vector.broadcast %cst_81 : f32 to vector<64x1xf32>
    %215 = arith.addf %211, %214 : vector<64x1xf32>
    %216 = math.rsqrt %215 : vector<64x1xf32>
    %217 = vector.broadcast %216 : vector<64x1xf32> to vector<64x32xf32>
    %218 = arith.mulf %213, %217 : vector<64x32xf32>
    %219 = vector.broadcast %67 : vector<1x32xf32> to vector<64x32xf32>
    %220 = arith.mulf %218, %219 : vector<64x32xf32>
    %221 = vector.broadcast %70 : vector<1x32xf32> to vector<64x32xf32>
    %222 = arith.addf %220, %221 : vector<64x32xf32>
    %223 = arith.truncf %222 : vector<64x32xf32> to vector<64x32xbf16>
    %cst_82 = arith.constant dense<0.000000e+00> : vector<64x64xf32>
    %224 = tpu.matmul %223, %73, %cst_82 {dimension_numbers = #tpu.dot_dimension_numbers<[1], [0], [0], [1], [0, 0, 1, 1], [], []>} : vector<64x32xbf16>, vector<32x64xbf16>, vector<64x64xf32> -> vector<64x64xf32>
    %225 = vector.broadcast %76 : vector<1x64xf32> to vector<64x64xf32>
    %226 = arith.addf %224, %225 : vector<64x64xf32>
    %cst_83 = arith.constant 0.000000e+00 : f32
    %227 = vector.broadcast %cst_83 : f32 to vector<64x64xf32>
    %228 = arith.maximumf %226, %227 : vector<64x64xf32>
    %229 = arith.truncf %228 : vector<64x64xf32> to vector<64x64xbf16>
    %cst_84 = arith.constant dense<0.000000e+00> : vector<64x32xf32>
    %230 = tpu.matmul %229, %79, %cst_84 {dimension_numbers = #tpu.dot_dimension_numbers<[1], [0], [0], [1], [0, 0, 1, 1], [], []>} : vector<64x64xbf16>, vector<64x32xbf16>, vector<64x32xf32> -> vector<64x32xf32>
    %231 = vector.broadcast %82 : vector<1x32xf32> to vector<64x32xf32>
    %232 = arith.addf %230, %231 : vector<64x32xf32>
    %233 = arith.addf %232, %222 : vector<64x32xf32>
    %cst_85 = arith.constant dense<0.000000e+00> : vector<64xf32>
    %234 = vector.multi_reduction <add>, %233, %cst_85 [1] : vector<64x32xf32> to vector<64xf32>
    %235 = vector.shape_cast %234 : vector<64xf32> to vector<64x1xf32>
    %cst_86 = arith.constant 3.200000e+01 : f32
    %236 = vector.broadcast %cst_86 : f32 to vector<64x1xf32>
    %237 = arith.divf %235, %236 : vector<64x1xf32>
    %238 = vector.broadcast %237 : vector<64x1xf32> to vector<64x32xf32>
    %239 = arith.subf %233, %238 : vector<64x32xf32>
    %240 = arith.mulf %239, %239 : vector<64x32xf32>
    %cst_87 = arith.constant dense<0.000000e+00> : vector<64xf32>
    %241 = vector.multi_reduction <add>, %240, %cst_87 [1] : vector<64x32xf32> to vector<64xf32>
    %242 = vector.shape_cast %241 : vector<64xf32> to vector<64x1xf32>
    %cst_88 = arith.constant 3.200000e+01 : f32
    %243 = vector.broadcast %cst_88 : f32 to vector<64x1xf32>
    %244 = arith.divf %242, %243 : vector<64x1xf32>
    %245 = vector.broadcast %237 : vector<64x1xf32> to vector<64x32xf32>
    %246 = arith.subf %233, %245 : vector<64x32xf32>
    %cst_89 = arith.constant 9.99999996E-13 : f32
    %247 = vector.broadcast %cst_89 : f32 to vector<64x1xf32>
    %248 = arith.addf %244, %247 : vector<64x1xf32>
    %249 = math.rsqrt %248 : vector<64x1xf32>
    %250 = vector.broadcast %249 : vector<64x1xf32> to vector<64x32xf32>
    %251 = arith.mulf %246, %250 : vector<64x32xf32>
    %252 = vector.broadcast %85 : vector<1x32xf32> to vector<64x32xf32>
    %253 = arith.mulf %251, %252 : vector<64x32xf32>
    %254 = vector.broadcast %88 : vector<1x32xf32> to vector<64x32xf32>
    %255 = arith.addf %253, %254 : vector<64x32xf32>
    %c1_i32 = arith.constant 1 : i32
    %c1 = arith.constant 1 : index
    %c0_90 = arith.constant 0 : index
    %c0_91 = arith.constant 0 : index
    %256 = vector.load %arg8[%c1, %c0_90, %c0_91] : memref<2x32x32xbf16, #tpu.memory_space<vmem>>, vector<1x32x32xbf16>
    %257 = vector.shape_cast %256 : vector<1x32x32xbf16> to vector<32x32xbf16>
    %c1_92 = arith.constant 1 : index
    %c0_93 = arith.constant 0 : index
    %c0_94 = arith.constant 0 : index
    %258 = vector.load %arg9[%c1_92, %c0_93, %c0_94] : memref<2x1x32xf32, #tpu.memory_space<vmem>>, vector<1x1x32xf32>
    %259 = vector.shape_cast %258 : vector<1x1x32xf32> to vector<1x32xf32>
    %c1_95 = arith.constant 1 : index
    %c0_96 = arith.constant 0 : index
    %c0_97 = arith.constant 0 : index
    %260 = vector.load %arg10[%c1_95, %c0_96, %c0_97] : memref<2x32x32xbf16, #tpu.memory_space<vmem>>, vector<1x32x32xbf16>
    %261 = vector.shape_cast %260 : vector<1x32x32xbf16> to vector<32x32xbf16>
    %c1_98 = arith.constant 1 : index
    %c0_99 = arith.constant 0 : index
    %c0_100 = arith.constant 0 : index
    %262 = vector.load %arg11[%c1_98, %c0_99, %c0_100] : memref<2x1x32xf32, #tpu.memory_space<vmem>>, vector<1x1x32xf32>
    %263 = vector.shape_cast %262 : vector<1x1x32xf32> to vector<1x32xf32>
    %c1_101 = arith.constant 1 : index
    %c0_102 = arith.constant 0 : index
    %c0_103 = arith.constant 0 : index
    %264 = vector.load %arg12[%c1_101, %c0_102, %c0_103] : memref<2x32x32xbf16, #tpu.memory_space<vmem>>, vector<1x32x32xbf16>
    %265 = vector.shape_cast %264 : vector<1x32x32xbf16> to vector<32x32xbf16>
    %c1_104 = arith.constant 1 : index
    %c0_105 = arith.constant 0 : index
    %c0_106 = arith.constant 0 : index
    %266 = vector.load %arg13[%c1_104, %c0_105, %c0_106] : memref<2x1x32xf32, #tpu.memory_space<vmem>>, vector<1x1x32xf32>
    %267 = vector.shape_cast %266 : vector<1x1x32xf32> to vector<1x32xf32>
    %c1_107 = arith.constant 1 : index
    %c0_108 = arith.constant 0 : index
    %c0_109 = arith.constant 0 : index
    %268 = vector.load %arg14[%c1_107, %c0_108, %c0_109] : memref<2x32x32xbf16, #tpu.memory_space<vmem>>, vector<1x32x32xbf16>
    %269 = vector.shape_cast %268 : vector<1x32x32xbf16> to vector<32x32xbf16>
    %c1_110 = arith.constant 1 : index
    %c0_111 = arith.constant 0 : index
    %c0_112 = arith.constant 0 : index
    %270 = vector.load %arg15[%c1_110, %c0_111, %c0_112] : memref<2x1x32xf32, #tpu.memory_space<vmem>>, vector<1x1x32xf32>
    %271 = vector.shape_cast %270 : vector<1x1x32xf32> to vector<1x32xf32>
    %c1_113 = arith.constant 1 : index
    %c0_114 = arith.constant 0 : index
    %c0_115 = arith.constant 0 : index
    %272 = vector.load %arg16[%c1_113, %c0_114, %c0_115] : memref<2x1x32xf32, #tpu.memory_space<vmem>>, vector<1x1x32xf32>
    %273 = vector.shape_cast %272 : vector<1x1x32xf32> to vector<1x32xf32>
    %c1_116 = arith.constant 1 : index
    %c0_117 = arith.constant 0 : index
    %c0_118 = arith.constant 0 : index
    %274 = vector.load %arg17[%c1_116, %c0_117, %c0_118] : memref<2x1x32xf32, #tpu.memory_space<vmem>>, vector<1x1x32xf32>
    %275 = vector.shape_cast %274 : vector<1x1x32xf32> to vector<1x32xf32>
    %c1_119 = arith.constant 1 : index
    %c0_120 = arith.constant 0 : index
    %c0_121 = arith.constant 0 : index
    %276 = vector.load %arg18[%c1_119, %c0_120, %c0_121] : memref<2x32x64xbf16, #tpu.memory_space<vmem>>, vector<1x32x64xbf16>
    %277 = vector.shape_cast %276 : vector<1x32x64xbf16> to vector<32x64xbf16>
    %c1_122 = arith.constant 1 : index
    %c0_123 = arith.constant 0 : index
    %c0_124 = arith.constant 0 : index
    %278 = vector.load %arg19[%c1_122, %c0_123, %c0_124] : memref<2x1x64xf32, #tpu.memory_space<vmem>>, vector<1x1x64xf32>
    %279 = vector.shape_cast %278 : vector<1x1x64xf32> to vector<1x64xf32>
    %c1_125 = arith.constant 1 : index
    %c0_126 = arith.constant 0 : index
    %c0_127 = arith.constant 0 : index
    %280 = vector.load %arg20[%c1_125, %c0_126, %c0_127] : memref<2x64x32xbf16, #tpu.memory_space<vmem>>, vector<1x64x32xbf16>
    %281 = vector.shape_cast %280 : vector<1x64x32xbf16> to vector<64x32xbf16>
    %c1_128 = arith.constant 1 : index
    %c0_129 = arith.constant 0 : index
    %c0_130 = arith.constant 0 : index
    %282 = vector.load %arg21[%c1_128, %c0_129, %c0_130] : memref<2x1x32xf32, #tpu.memory_space<vmem>>, vector<1x1x32xf32>
    %283 = vector.shape_cast %282 : vector<1x1x32xf32> to vector<1x32xf32>
    %c1_131 = arith.constant 1 : index
    %c0_132 = arith.constant 0 : index
    %c0_133 = arith.constant 0 : index
    %284 = vector.load %arg22[%c1_131, %c0_132, %c0_133] : memref<2x1x32xf32, #tpu.memory_space<vmem>>, vector<1x1x32xf32>
    %285 = vector.shape_cast %284 : vector<1x1x32xf32> to vector<1x32xf32>
    %c1_134 = arith.constant 1 : index
    %c0_135 = arith.constant 0 : index
    %c0_136 = arith.constant 0 : index
    %286 = vector.load %arg23[%c1_134, %c0_135, %c0_136] : memref<2x1x32xf32, #tpu.memory_space<vmem>>, vector<1x1x32xf32>
    %287 = vector.shape_cast %286 : vector<1x1x32xf32> to vector<1x32xf32>
    %288 = arith.truncf %255 : vector<64x32xf32> to vector<64x32xbf16>
    %cst_137 = arith.constant dense<0.000000e+00> : vector<64x32xf32>
    %289 = tpu.matmul %288, %261, %cst_137 {dimension_numbers = #tpu.dot_dimension_numbers<[1], [0], [0], [1], [0, 0, 1, 1], [], []>} : vector<64x32xbf16>, vector<32x32xbf16>, vector<64x32xf32> -> vector<64x32xf32>
    %290 = vector.broadcast %263 : vector<1x32xf32> to vector<64x32xf32>
    %291 = arith.addf %289, %290 : vector<64x32xf32>
    %cst_138 = arith.constant dense<0.000000e+00> : vector<64x32xf32>
    %292 = tpu.matmul %288, %265, %cst_138 {dimension_numbers = #tpu.dot_dimension_numbers<[1], [0], [0], [1], [0, 0, 1, 1], [], []>} : vector<64x32xbf16>, vector<32x32xbf16>, vector<64x32xf32> -> vector<64x32xf32>
    %293 = vector.broadcast %267 : vector<1x32xf32> to vector<64x32xf32>
    %294 = arith.addf %292, %293 : vector<64x32xf32>
    %295 = vector.shape_cast %255 : vector<64x32xf32> to vector<4x16x32xf32>
    %296 = vector.extract_strided_slice %295 {offsets = [0, 0, 0], sizes = [4, 1, 32], strides = [1, 1, 1]} : vector<4x16x32xf32> to vector<4x1x32xf32>
    %297 = vector.shape_cast %296 : vector<4x1x32xf32> to vector<4x32xf32>
    %298 = arith.truncf %297 : vector<4x32xf32> to vector<4x32xbf16>
    %cst_139 = arith.constant dense<0.000000e+00> : vector<4x32xf32>
    %299 = tpu.matmul %298, %257, %cst_139 {dimension_numbers = #tpu.dot_dimension_numbers<[1], [0], [0], [1], [0, 0, 1, 1], [], []>} : vector<4x32xbf16>, vector<32x32xbf16>, vector<4x32xf32> -> vector<4x32xf32>
    %300 = vector.broadcast %259 : vector<1x32xf32> to vector<4x32xf32>
    %301 = arith.addf %299, %300 : vector<4x32xf32>
    %302 = vector.shape_cast %301 : vector<4x32xf32> to vector<4x1x32xf32>
    %303 = vector.shape_cast %291 : vector<64x32xf32> to vector<4x16x32xf32>
    %304 = vector.shape_cast %294 : vector<64x32xf32> to vector<4x16x32xf32>
    %305 = vector.extract_strided_slice %302 {offsets = [0, 0, 0], sizes = [4, 1, 8], strides = [1, 1, 1]} : vector<4x1x32xf32> to vector<4x1x8xf32>
    %306 = arith.truncf %305 : vector<4x1x8xf32> to vector<4x1x8xbf16>
    %307 = vector.extract_strided_slice %303 {offsets = [0, 0, 0], sizes = [4, 16, 8], strides = [1, 1, 1]} : vector<4x16x32xf32> to vector<4x16x8xf32>
    %308 = arith.truncf %307 : vector<4x16x8xf32> to vector<4x16x8xbf16>
    %309 = vector.extract_strided_slice %304 {offsets = [0, 0, 0], sizes = [4, 16, 8], strides = [1, 1, 1]} : vector<4x16x32xf32> to vector<4x16x8xf32>
    %310 = arith.truncf %309 : vector<4x16x8xf32> to vector<4x16x8xbf16>
    %cst_140 = arith.constant dense<0.000000e+00> : vector<4x1x16xf32>
    %311 = tpu.matmul %306, %308, %cst_140 {dimension_numbers = #tpu.dot_dimension_numbers<[2], [2], [1], [1], [0, 0, 0, 1, 1, 1], [0], [0]>} : vector<4x1x8xbf16>, vector<4x16x8xbf16>, vector<4x1x16xf32> -> vector<4x1x16xf32>
    %cst_141 = arith.constant 0.353553385 : f32
    %312 = vector.broadcast %cst_141 : f32 to vector<4x1x16xf32>
    %313 = arith.mulf %311, %312 : vector<4x1x16xf32>
    %314 = arith.addf %313, %0 : vector<4x1x16xf32>
    %cst_142 = arith.constant dense<0xFF800000> : vector<4x1xf32>
    %315 = vector.multi_reduction <maximumf>, %314, %cst_142 [2] : vector<4x1x16xf32> to vector<4x1xf32>
    %316 = vector.shape_cast %315 : vector<4x1xf32> to vector<4x1x1xf32>
    %317 = vector.broadcast %316 : vector<4x1x1xf32> to vector<4x1x16xf32>
    %318 = arith.subf %314, %317 : vector<4x1x16xf32>
    %319 = math.exp %318 : vector<4x1x16xf32>
    %cst_143 = arith.constant dense<0.000000e+00> : vector<4x1xf32>
    %320 = vector.multi_reduction <add>, %319, %cst_143 [2] : vector<4x1x16xf32> to vector<4x1xf32>
    %321 = vector.shape_cast %320 : vector<4x1xf32> to vector<4x1x1xf32>
    %322 = tpu.reciprocal %321 {approx = true} : vector<4x1x1xf32> -> vector<4x1x1xf32>
    %323 = vector.broadcast %322 : vector<4x1x1xf32> to vector<4x1x16xf32>
    %324 = arith.mulf %319, %323 : vector<4x1x16xf32>
    %325 = arith.truncf %324 : vector<4x1x16xf32> to vector<4x1x16xbf16>
    %cst_144 = arith.constant dense<0.000000e+00> : vector<4x1x8xf32>
    %326 = tpu.matmul %325, %310, %cst_144 {dimension_numbers = #tpu.dot_dimension_numbers<[2], [1], [1], [2], [0, 0, 0, 1, 1, 2], [0], [0]>} : vector<4x1x16xbf16>, vector<4x16x8xbf16>, vector<4x1x8xf32> -> vector<4x1x8xf32>
    %327 = vector.extract_strided_slice %302 {offsets = [0, 0, 8], sizes = [4, 1, 8], strides = [1, 1, 1]} : vector<4x1x32xf32> to vector<4x1x8xf32>
    %328 = arith.truncf %327 : vector<4x1x8xf32> to vector<4x1x8xbf16>
    %329 = vector.extract_strided_slice %303 {offsets = [0, 0, 8], sizes = [4, 16, 8], strides = [1, 1, 1]} : vector<4x16x32xf32> to vector<4x16x8xf32>
    %330 = arith.truncf %329 : vector<4x16x8xf32> to vector<4x16x8xbf16>
    %331 = vector.extract_strided_slice %304 {offsets = [0, 0, 8], sizes = [4, 16, 8], strides = [1, 1, 1]} : vector<4x16x32xf32> to vector<4x16x8xf32>
    %332 = arith.truncf %331 : vector<4x16x8xf32> to vector<4x16x8xbf16>
    %cst_145 = arith.constant dense<0.000000e+00> : vector<4x1x16xf32>
    %333 = tpu.matmul %328, %330, %cst_145 {dimension_numbers = #tpu.dot_dimension_numbers<[2], [2], [1], [1], [0, 0, 0, 1, 1, 1], [0], [0]>} : vector<4x1x8xbf16>, vector<4x16x8xbf16>, vector<4x1x16xf32> -> vector<4x1x16xf32>
    %cst_146 = arith.constant 0.353553385 : f32
    %334 = vector.broadcast %cst_146 : f32 to vector<4x1x16xf32>
    %335 = arith.mulf %333, %334 : vector<4x1x16xf32>
    %336 = arith.addf %335, %0 : vector<4x1x16xf32>
    %cst_147 = arith.constant dense<0xFF800000> : vector<4x1xf32>
    %337 = vector.multi_reduction <maximumf>, %336, %cst_147 [2] : vector<4x1x16xf32> to vector<4x1xf32>
    %338 = vector.shape_cast %337 : vector<4x1xf32> to vector<4x1x1xf32>
    %339 = vector.broadcast %338 : vector<4x1x1xf32> to vector<4x1x16xf32>
    %340 = arith.subf %336, %339 : vector<4x1x16xf32>
    %341 = math.exp %340 : vector<4x1x16xf32>
    %cst_148 = arith.constant dense<0.000000e+00> : vector<4x1xf32>
    %342 = vector.multi_reduction <add>, %341, %cst_148 [2] : vector<4x1x16xf32> to vector<4x1xf32>
    %343 = vector.shape_cast %342 : vector<4x1xf32> to vector<4x1x1xf32>
    %344 = tpu.reciprocal %343 {approx = true} : vector<4x1x1xf32> -> vector<4x1x1xf32>
    %345 = vector.broadcast %344 : vector<4x1x1xf32> to vector<4x1x16xf32>
    %346 = arith.mulf %341, %345 : vector<4x1x16xf32>
    %347 = arith.truncf %346 : vector<4x1x16xf32> to vector<4x1x16xbf16>
    %cst_149 = arith.constant dense<0.000000e+00> : vector<4x1x8xf32>
    %348 = tpu.matmul %347, %332, %cst_149 {dimension_numbers = #tpu.dot_dimension_numbers<[2], [1], [1], [2], [0, 0, 0, 1, 1, 2], [0], [0]>} : vector<4x1x16xbf16>, vector<4x16x8xbf16>, vector<4x1x8xf32> -> vector<4x1x8xf32>
    %349 = vector.extract_strided_slice %302 {offsets = [0, 0, 16], sizes = [4, 1, 8], strides = [1, 1, 1]} : vector<4x1x32xf32> to vector<4x1x8xf32>
    %350 = arith.truncf %349 : vector<4x1x8xf32> to vector<4x1x8xbf16>
    %351 = vector.extract_strided_slice %303 {offsets = [0, 0, 16], sizes = [4, 16, 8], strides = [1, 1, 1]} : vector<4x16x32xf32> to vector<4x16x8xf32>
    %352 = arith.truncf %351 : vector<4x16x8xf32> to vector<4x16x8xbf16>
    %353 = vector.extract_strided_slice %304 {offsets = [0, 0, 16], sizes = [4, 16, 8], strides = [1, 1, 1]} : vector<4x16x32xf32> to vector<4x16x8xf32>
    %354 = arith.truncf %353 : vector<4x16x8xf32> to vector<4x16x8xbf16>
    %cst_150 = arith.constant dense<0.000000e+00> : vector<4x1x16xf32>
    %355 = tpu.matmul %350, %352, %cst_150 {dimension_numbers = #tpu.dot_dimension_numbers<[2], [2], [1], [1], [0, 0, 0, 1, 1, 1], [0], [0]>} : vector<4x1x8xbf16>, vector<4x16x8xbf16>, vector<4x1x16xf32> -> vector<4x1x16xf32>
    %cst_151 = arith.constant 0.353553385 : f32
    %356 = vector.broadcast %cst_151 : f32 to vector<4x1x16xf32>
    %357 = arith.mulf %355, %356 : vector<4x1x16xf32>
    %358 = arith.addf %357, %0 : vector<4x1x16xf32>
    %cst_152 = arith.constant dense<0xFF800000> : vector<4x1xf32>
    %359 = vector.multi_reduction <maximumf>, %358, %cst_152 [2] : vector<4x1x16xf32> to vector<4x1xf32>
    %360 = vector.shape_cast %359 : vector<4x1xf32> to vector<4x1x1xf32>
    %361 = vector.broadcast %360 : vector<4x1x1xf32> to vector<4x1x16xf32>
    %362 = arith.subf %358, %361 : vector<4x1x16xf32>
    %363 = math.exp %362 : vector<4x1x16xf32>
    %cst_153 = arith.constant dense<0.000000e+00> : vector<4x1xf32>
    %364 = vector.multi_reduction <add>, %363, %cst_153 [2] : vector<4x1x16xf32> to vector<4x1xf32>
    %365 = vector.shape_cast %364 : vector<4x1xf32> to vector<4x1x1xf32>
    %366 = tpu.reciprocal %365 {approx = true} : vector<4x1x1xf32> -> vector<4x1x1xf32>
    %367 = vector.broadcast %366 : vector<4x1x1xf32> to vector<4x1x16xf32>
    %368 = arith.mulf %363, %367 : vector<4x1x16xf32>
    %369 = arith.truncf %368 : vector<4x1x16xf32> to vector<4x1x16xbf16>
    %cst_154 = arith.constant dense<0.000000e+00> : vector<4x1x8xf32>
    %370 = tpu.matmul %369, %354, %cst_154 {dimension_numbers = #tpu.dot_dimension_numbers<[2], [1], [1], [2], [0, 0, 0, 1, 1, 2], [0], [0]>} : vector<4x1x16xbf16>, vector<4x16x8xbf16>, vector<4x1x8xf32> -> vector<4x1x8xf32>
    %371 = vector.extract_strided_slice %302 {offsets = [0, 0, 24], sizes = [4, 1, 8], strides = [1, 1, 1]} : vector<4x1x32xf32> to vector<4x1x8xf32>
    %372 = arith.truncf %371 : vector<4x1x8xf32> to vector<4x1x8xbf16>
    %373 = vector.extract_strided_slice %303 {offsets = [0, 0, 24], sizes = [4, 16, 8], strides = [1, 1, 1]} : vector<4x16x32xf32> to vector<4x16x8xf32>
    %374 = arith.truncf %373 : vector<4x16x8xf32> to vector<4x16x8xbf16>
    %375 = vector.extract_strided_slice %304 {offsets = [0, 0, 24], sizes = [4, 16, 8], strides = [1, 1, 1]} : vector<4x16x32xf32> to vector<4x16x8xf32>
    %376 = arith.truncf %375 : vector<4x16x8xf32> to vector<4x16x8xbf16>
    %cst_155 = arith.constant dense<0.000000e+00> : vector<4x1x16xf32>
    %377 = tpu.matmul %372, %374, %cst_155 {dimension_numbers = #tpu.dot_dimension_numbers<[2], [2], [1], [1], [0, 0, 0, 1, 1, 1], [0], [0]>} : vector<4x1x8xbf16>, vector<4x16x8xbf16>, vector<4x1x16xf32> -> vector<4x1x16xf32>
    %cst_156 = arith.constant 0.353553385 : f32
    %378 = vector.broadcast %cst_156 : f32 to vector<4x1x16xf32>
    %379 = arith.mulf %377, %378 : vector<4x1x16xf32>
    %380 = arith.addf %379, %0 : vector<4x1x16xf32>
    %cst_157 = arith.constant dense<0xFF800000> : vector<4x1xf32>
    %381 = vector.multi_reduction <maximumf>, %380, %cst_157 [2] : vector<4x1x16xf32> to vector<4x1xf32>
    %382 = vector.shape_cast %381 : vector<4x1xf32> to vector<4x1x1xf32>
    %383 = vector.broadcast %382 : vector<4x1x1xf32> to vector<4x1x16xf32>
    %384 = arith.subf %380, %383 : vector<4x1x16xf32>
    %385 = math.exp %384 : vector<4x1x16xf32>
    %cst_158 = arith.constant dense<0.000000e+00> : vector<4x1xf32>
    %386 = vector.multi_reduction <add>, %385, %cst_158 [2] : vector<4x1x16xf32> to vector<4x1xf32>
    %387 = vector.shape_cast %386 : vector<4x1xf32> to vector<4x1x1xf32>
    %388 = tpu.reciprocal %387 {approx = true} : vector<4x1x1xf32> -> vector<4x1x1xf32>
    %389 = vector.broadcast %388 : vector<4x1x1xf32> to vector<4x1x16xf32>
    %390 = arith.mulf %385, %389 : vector<4x1x16xf32>
    %391 = arith.truncf %390 : vector<4x1x16xf32> to vector<4x1x16xbf16>
    %cst_159 = arith.constant dense<0.000000e+00> : vector<4x1x8xf32>
    %392 = tpu.matmul %391, %376, %cst_159 {dimension_numbers = #tpu.dot_dimension_numbers<[2], [1], [1], [2], [0, 0, 0, 1, 1, 2], [0], [0]>} : vector<4x1x16xbf16>, vector<4x16x8xbf16>, vector<4x1x8xf32> -> vector<4x1x8xf32>
    %393 = tpu.concatenate %326, %348, %370, %392 in 2 : vector<4x1x8xf32>, vector<4x1x8xf32>, vector<4x1x8xf32>, vector<4x1x8xf32> -> vector<4x1x32xf32>
    %394 = vector.shape_cast %393 : vector<4x1x32xf32> to vector<4x32xf32>
    %395 = arith.truncf %394 : vector<4x32xf32> to vector<4x32xbf16>
    %cst_160 = arith.constant dense<0.000000e+00> : vector<4x32xf32>
    %396 = tpu.matmul %395, %269, %cst_160 {dimension_numbers = #tpu.dot_dimension_numbers<[1], [0], [0], [1], [0, 0, 1, 1], [], []>} : vector<4x32xbf16>, vector<32x32xbf16>, vector<4x32xf32> -> vector<4x32xf32>
    %397 = vector.broadcast %271 : vector<1x32xf32> to vector<4x32xf32>
    %398 = arith.addf %396, %397 : vector<4x32xf32>
    %399 = arith.addf %398, %297 : vector<4x32xf32>
    %cst_161 = arith.constant dense<0.000000e+00> : vector<4xf32>
    %400 = vector.multi_reduction <add>, %399, %cst_161 [1] : vector<4x32xf32> to vector<4xf32>
    %401 = vector.shape_cast %400 : vector<4xf32> to vector<4x1xf32>
    %cst_162 = arith.constant 3.200000e+01 : f32
    %402 = vector.broadcast %cst_162 : f32 to vector<4x1xf32>
    %403 = arith.divf %401, %402 : vector<4x1xf32>
    %404 = vector.broadcast %403 : vector<4x1xf32> to vector<4x32xf32>
    %405 = arith.subf %399, %404 : vector<4x32xf32>
    %406 = arith.mulf %405, %405 : vector<4x32xf32>
    %cst_163 = arith.constant dense<0.000000e+00> : vector<4xf32>
    %407 = vector.multi_reduction <add>, %406, %cst_163 [1] : vector<4x32xf32> to vector<4xf32>
    %408 = vector.shape_cast %407 : vector<4xf32> to vector<4x1xf32>
    %cst_164 = arith.constant 3.200000e+01 : f32
    %409 = vector.broadcast %cst_164 : f32 to vector<4x1xf32>
    %410 = arith.divf %408, %409 : vector<4x1xf32>
    %411 = vector.broadcast %403 : vector<4x1xf32> to vector<4x32xf32>
    %412 = arith.subf %399, %411 : vector<4x32xf32>
    %cst_165 = arith.constant 9.99999996E-13 : f32
    %413 = vector.broadcast %cst_165 : f32 to vector<4x1xf32>
    %414 = arith.addf %410, %413 : vector<4x1xf32>
    %415 = math.rsqrt %414 : vector<4x1xf32>
    %416 = vector.broadcast %415 : vector<4x1xf32> to vector<4x32xf32>
    %417 = arith.mulf %412, %416 : vector<4x32xf32>
    %418 = vector.broadcast %273 : vector<1x32xf32> to vector<4x32xf32>
    %419 = arith.mulf %417, %418 : vector<4x32xf32>
    %420 = vector.broadcast %275 : vector<1x32xf32> to vector<4x32xf32>
    %421 = arith.addf %419, %420 : vector<4x32xf32>
    %422 = arith.truncf %421 : vector<4x32xf32> to vector<4x32xbf16>
    %cst_166 = arith.constant dense<0.000000e+00> : vector<4x64xf32>
    %423 = tpu.matmul %422, %277, %cst_166 {dimension_numbers = #tpu.dot_dimension_numbers<[1], [0], [0], [1], [0, 0, 1, 1], [], []>} : vector<4x32xbf16>, vector<32x64xbf16>, vector<4x64xf32> -> vector<4x64xf32>
    %424 = vector.broadcast %279 : vector<1x64xf32> to vector<4x64xf32>
    %425 = arith.addf %423, %424 : vector<4x64xf32>
    %cst_167 = arith.constant 0.000000e+00 : f32
    %426 = vector.broadcast %cst_167 : f32 to vector<4x64xf32>
    %427 = arith.maximumf %425, %426 : vector<4x64xf32>
    %428 = arith.truncf %427 : vector<4x64xf32> to vector<4x64xbf16>
    %cst_168 = arith.constant dense<0.000000e+00> : vector<4x32xf32>
    %429 = tpu.matmul %428, %281, %cst_168 {dimension_numbers = #tpu.dot_dimension_numbers<[1], [0], [0], [1], [0, 0, 1, 1], [], []>} : vector<4x64xbf16>, vector<64x32xbf16>, vector<4x32xf32> -> vector<4x32xf32>
    %430 = vector.broadcast %283 : vector<1x32xf32> to vector<4x32xf32>
    %431 = arith.addf %429, %430 : vector<4x32xf32>
    %432 = arith.addf %431, %421 : vector<4x32xf32>
    %cst_169 = arith.constant dense<0.000000e+00> : vector<4xf32>
    %433 = vector.multi_reduction <add>, %432, %cst_169 [1] : vector<4x32xf32> to vector<4xf32>
    %434 = vector.shape_cast %433 : vector<4xf32> to vector<4x1xf32>
    %cst_170 = arith.constant 3.200000e+01 : f32
    %435 = vector.broadcast %cst_170 : f32 to vector<4x1xf32>
    %436 = arith.divf %434, %435 : vector<4x1xf32>
    %437 = vector.broadcast %436 : vector<4x1xf32> to vector<4x32xf32>
    %438 = arith.subf %432, %437 : vector<4x32xf32>
    %439 = arith.mulf %438, %438 : vector<4x32xf32>
    %cst_171 = arith.constant dense<0.000000e+00> : vector<4xf32>
    %440 = vector.multi_reduction <add>, %439, %cst_171 [1] : vector<4x32xf32> to vector<4xf32>
    %441 = vector.shape_cast %440 : vector<4xf32> to vector<4x1xf32>
    %cst_172 = arith.constant 3.200000e+01 : f32
    %442 = vector.broadcast %cst_172 : f32 to vector<4x1xf32>
    %443 = arith.divf %441, %442 : vector<4x1xf32>
    %444 = vector.broadcast %436 : vector<4x1xf32> to vector<4x32xf32>
    %445 = arith.subf %432, %444 : vector<4x32xf32>
    %cst_173 = arith.constant 9.99999996E-13 : f32
    %446 = vector.broadcast %cst_173 : f32 to vector<4x1xf32>
    %447 = arith.addf %443, %446 : vector<4x1xf32>
    %448 = math.rsqrt %447 : vector<4x1xf32>
    %449 = vector.broadcast %448 : vector<4x1xf32> to vector<4x32xf32>
    %450 = arith.mulf %445, %449 : vector<4x32xf32>
    %451 = vector.broadcast %285 : vector<1x32xf32> to vector<4x32xf32>
    %452 = arith.mulf %450, %451 : vector<4x32xf32>
    %453 = vector.broadcast %287 : vector<1x32xf32> to vector<4x32xf32>
    %454 = arith.addf %452, %453 : vector<4x32xf32>
    %455 = vector.shape_cast %454 : vector<4x32xf32> to vector<4x1x32xf32>
    %c0_174 = arith.constant 0 : index
    %c0_175 = arith.constant 0 : index
    %c0_176 = arith.constant 0 : index
    %456 = vector.load %arg24[%c0_174, %c0_175, %c0_176] : memref<4x1x32xf32, #tpu.memory_space<vmem>>, vector<4x1x32xf32>
    tpu.vector_store %arg24[%c0_174, %c0_175, %c0_176], %455 {strides = array<i32>} : memref<4x1x32xf32, #tpu.memory_space<vmem>>, vector<4x1x32xf32>,
    return
  }
  func.func @transform_0(%arg0: i32) -> (i32, i32, i32) {
    %c0_i32 = arith.constant 0 : i32
    %c0_i32_0 = arith.constant 0 : i32
    %c0_i32_1 = arith.constant 0 : i32
    return %arg0, %c0_i32, %c0_i32_0 : i32, i32, i32
  }
  func.func @transform_1(%arg0: i32) -> (i32, i32, i32) {
    %c0_i32 = arith.constant 0 : i32
    %c0_i32_0 = arith.constant 0 : i32
    %c0_i32_1 = arith.constant 0 : i32
    return %arg0, %c0_i32, %c0_i32_0 : i32, i32, i32
  }
  func.func @transform_2(%arg0: i32) -> (i32, i32) {
    %c0_i32 = arith.constant 0 : i32
    %c0_i32_0 = arith.constant 0 : i32
    %c0_i32_1 = arith.constant 0 : i32
    return %c0_i32, %c0_i32_0 : i32, i32
  }
  func.func @transform_3(%arg0: i32) -> (i32, i32) {
    %c0_i32 = arith.constant 0 : i32
    %c0_i32_0 = arith.constant 0 : i32
    %c0_i32_1 = arith.constant 0 : i32
    return %c0_i32, %c0_i32_0 : i32, i32
  }
  func.func @transform_4(%arg0: i32) -> (i32, i32) {
    %c0_i32 = arith.constant 0 : i32
    %c0_i32_0 = arith.constant 0 : i32
    %c0_i32_1 = arith.constant 0 : i32
    return %c0_i32, %c0_i32_0 : i32, i32
  }
  func.func @transform_5(%arg0: i32) -> (i32, i32) {
    %c0_i32 = arith.constant 0 : i32
    %c0_i32_0 = arith.constant 0 : i32
    %c0_i32_1 = arith.constant 0 : i32
    return %c0_i32, %c0_i32_0 : i32, i32
  }
  func.func @transform_6(%arg0: i32) -> (i32, i32) {
    %c0_i32 = arith.constant 0 : i32
    %c0_i32_0 = arith.constant 0 : i32
    %c0_i32_1 = arith.constant 0 : i32
    return %c0_i32, %c0_i32_0 : i32, i32
  }
  func.func @transform_7(%arg0: i32) -> (i32, i32, i32) {
    %c0_i32 = arith.constant 0 : i32
    %c0_i32_0 = arith.constant 0 : i32
    %c0_i32_1 = arith.constant 0 : i32
    %c0_i32_2 = arith.constant 0 : i32
    return %c0_i32, %c0_i32_0, %c0_i32_1 : i32, i32, i32
  }
  func.func @transform_8(%arg0: i32) -> (i32, i32, i32) {
    %c0_i32 = arith.constant 0 : i32
    %c0_i32_0 = arith.constant 0 : i32
    %c0_i32_1 = arith.constant 0 : i32
    %c0_i32_2 = arith.constant 0 : i32
    return %c0_i32, %c0_i32_0, %c0_i32_1 : i32, i32, i32
  }
  func.func @transform_9(%arg0: i32) -> (i32, i32, i32) {
    %c0_i32 = arith.constant 0 : i32
    %c0_i32_0 = arith.constant 0 : i32
    %c0_i32_1 = arith.constant 0 : i32
    %c0_i32_2 = arith.constant 0 : i32
    return %c0_i32, %c0_i32_0, %c0_i32_1 : i32, i32, i32
  }
  func.func @transform_10(%arg0: i32) -> (i32, i32, i32) {
    %c0_i32 = arith.constant 0 : i32
    %c0_i32_0 = arith.constant 0 : i32
    %c0_i32_1 = arith.constant 0 : i32
    %c0_i32_2 = arith.constant 0 : i32
    return %c0_i32, %c0_i32_0, %c0_i32_1 : i32, i32, i32
  }
  func.func @transform_11(%arg0: i32) -> (i32, i32, i32) {
    %c0_i32 = arith.constant 0 : i32
    %c0_i32_0 = arith.constant 0 : i32
    %c0_i32_1 = arith.constant 0 : i32
    %c0_i32_2 = arith.constant 0 : i32
    return %c0_i32, %c0_i32_0, %c0_i32_1 : i32, i32, i32
  }
  func.func @transform_12(%arg0: i32) -> (i32, i32, i32) {
    %c0_i32 = arith.constant 0 : i32
    %c0_i32_0 = arith.constant 0 : i32
    %c0_i32_1 = arith.constant 0 : i32
    %c0_i32_2 = arith.constant 0 : i32
    return %c0_i32, %c0_i32_0, %c0_i32_1 : i32, i32, i32
  }
  func.func @transform_13(%arg0: i32) -> (i32, i32, i32) {
    %c0_i32 = arith.constant 0 : i32
    %c0_i32_0 = arith.constant 0 : i32
    %c0_i32_1 = arith.constant 0 : i32
    %c0_i32_2 = arith.constant 0 : i32
    return %c0_i32, %c0_i32_0, %c0_i32_1 : i32, i32, i32
  }
  func.func @transform_14(%arg0: i32) -> (i32, i32, i32) {
    %c0_i32 = arith.constant 0 : i32
    %c0_i32_0 = arith.constant 0 : i32
    %c0_i32_1 = arith.constant 0 : i32
    %c0_i32_2 = arith.constant 0 : i32
    return %c0_i32, %c0_i32_0, %c0_i32_1 : i32, i32, i32
  }
  func.func @transform_15(%arg0: i32) -> (i32, i32, i32) {
    %c0_i32 = arith.constant 0 : i32
    %c0_i32_0 = arith.constant 0 : i32
    %c0_i32_1 = arith.constant 0 : i32
    %c0_i32_2 = arith.constant 0 : i32
    return %c0_i32, %c0_i32_0, %c0_i32_1 : i32, i32, i32
  }
  func.func @transform_16(%arg0: i32) -> (i32, i32, i32) {
    %c0_i32 = arith.constant 0 : i32
    %c0_i32_0 = arith.constant 0 : i32
    %c0_i32_1 = arith.constant 0 : i32
    %c0_i32_2 = arith.constant 0 : i32
    return %c0_i32, %c0_i32_0, %c0_i32_1 : i32, i32, i32
  }
  func.func @transform_17(%arg0: i32) -> (i32, i32, i32) {
    %c0_i32 = arith.constant 0 : i32
    %c0_i32_0 = arith.constant 0 : i32
    %c0_i32_1 = arith.constant 0 : i32
    %c0_i32_2 = arith.constant 0 : i32
    return %c0_i32, %c0_i32_0, %c0_i32_1 : i32, i32, i32
  }
  func.func @transform_18(%arg0: i32) -> (i32, i32, i32) {
    %c0_i32 = arith.constant 0 : i32
    %c0_i32_0 = arith.constant 0 : i32
    %c0_i32_1 = arith.constant 0 : i32
    %c0_i32_2 = arith.constant 0 : i32
    return %c0_i32, %c0_i32_0, %c0_i32_1 : i32, i32, i32
  }
  func.func @transform_19(%arg0: i32) -> (i32, i32, i32) {
    %c0_i32 = arith.constant 0 : i32
    %c0_i32_0 = arith.constant 0 : i32
    %c0_i32_1 = arith.constant 0 : i32
    %c0_i32_2 = arith.constant 0 : i32
    return %c0_i32, %c0_i32_0, %c0_i32_1 : i32, i32, i32
  }
  func.func @transform_20(%arg0: i32) -> (i32, i32, i32) {
    %c0_i32 = arith.constant 0 : i32
    %c0_i32_0 = arith.constant 0 : i32
    %c0_i32_1 = arith.constant 0 : i32
    %c0_i32_2 = arith.constant 0 : i32
    return %c0_i32, %c0_i32_0, %c0_i32_1 : i32, i32, i32
  }
  func.func @transform_21(%arg0: i32) -> (i32, i32, i32) {
    %c0_i32 = arith.constant 0 : i32
    %c0_i32_0 = arith.constant 0 : i32
    %c0_i32_1 = arith.constant 0 : i32
    %c0_i32_2 = arith.constant 0 : i32
    return %c0_i32, %c0_i32_0, %c0_i32_1 : i32, i32, i32
  }
  func.func @transform_22(%arg0: i32) -> (i32, i32, i32) {
    %c0_i32 = arith.constant 0 : i32
    %c0_i32_0 = arith.constant 0 : i32
    %c0_i32_1 = arith.constant 0 : i32
    %c0_i32_2 = arith.constant 0 : i32
    return %c0_i32, %c0_i32_0, %c0_i32_1 : i32, i32, i32
  }
  func.func @transform_23(%arg0: i32) -> (i32, i32, i32) {
    %c0_i32 = arith.constant 0 : i32
    %c0_i32_0 = arith.constant 0 : i32
    %c0_i32_1 = arith.constant 0 : i32
    return %arg0, %c0_i32, %c0_i32_0 : i32, i32, i32
  }
}

</mosaic_0001>

<llo_original>
// kernel: tpu_custom_call.1
$region0: #{tpu_custom_call.1}
  #allocation0 [shape = 'u32[]', space=smem, size = 0x4, offset = 0x4, fixed_abs, tag = 'smem constant byte address 0x4 - core index']
  #allocation1 [shape = 'u32[144,128]{1,0:T(1,128)}', space=vmem, size = 0x12000, scoped, tag = 'internal scratch']
  %s0 = inlined_call_operand.vmem [shape: f32[8,8,32], index: 0, kind: input, shape index: {}]
  %s1 = inlined_call_operand.hbm [shape: f32[8,1,16], index: 1, kind: input, shape index: {}]
  %s2 = inlined_call_operand.hbm [shape: f32[1,32], index: 2, kind: input, shape index: {}]
  %s3 = inlined_call_operand.hbm [shape: f32[1,32], index: 3, kind: input, shape index: {}]
  %s4 = inlined_call_operand.hbm [shape: f32[1,32], index: 4, kind: input, shape index: {}]
  %s5 = inlined_call_operand.hbm [shape: bf16[32,32], index: 5, kind: input, shape index: {}]
  %s6 = inlined_call_operand.hbm [shape: f32[1,32], index: 6, kind: input, shape index: {}]
  %s7 = inlined_call_operand.vmem [shape: bf16[2,32,32], index: 7, kind: input, shape index: {}]
  %s8 = inlined_call_operand.hbm [shape: f32[2,1,32], index: 8, kind: input, shape index: {}]
  %s9 = inlined_call_operand.vmem [shape: bf16[2,32,32], index: 9, kind: input, shape index: {}]
  %s10 = inlined_call_operand.hbm [shape: f32[2,1,32], index: 10, kind: input, shape index: {}]
  %s11 = inlined_call_operand.hbm [shape: bf16[2,32,32], index: 11, kind: input, shape index: {}]
  %s12 = inlined_call_operand.hbm [shape: f32[2,1,32], index: 12, kind: input, shape index: {}]
  %s13 = inlined_call_operand.hbm [shape: bf16[2,32,32], index: 13, kind: input, shape index: {}]
  %s14 = inlined_call_operand.hbm [shape: f32[2,1,32], index: 14, kind: input, shape index: {}]
  %s15 = inlined_call_operand.hbm [shape: f32[2,1,32], index: 15, kind: input, shape index: {}]
  %s16 = inlined_call_operand.hbm [shape: f32[2,1,32], index: 16, kind: input, shape index: {}]
  %s17 = inlined_call_operand.hbm [shape: bf16[2,32,64], index: 17, kind: input, shape index: {}]
  %s18 = inlined_call_operand.vmem [shape: f32[2,1,64], index: 18, kind: input, shape index: {}]
  %s19 = inlined_call_operand.vmem [shape: bf16[2,64,32], index: 19, kind: input, shape index: {}]
  %s20 = inlined_call_operand.vmem [shape: f32[2,1,32], index: 20, kind: input, shape index: {}]
  %s21 = inlined_call_operand.vmem [shape: f32[2,1,32], index: 21, kind: input, shape index: {}]
  %s22 = inlined_call_operand.vmem [shape: f32[2,1,32], index: 22, kind: input, shape index: {}]
  %s23 = inlined_call_operand.hbm [shape: f32[8,1,32], index: 23, kind: output, shape index: {}]
  %s24 = sld [smem:[#allocation0]]
  $region185: #{tpu_custom_call.1} parent=0
    _
  %s26 = ssub.s32 1, %s24
  %s27 = scalar_select 0, %s26, %s24
  $region1: #{tpu_custom_call.1} parent=0
    #allocation2 [shape = 'u8[4096]{0}', space=vmem, size = 0x1000, scoped, tag = 'input window, operand 1']
    #allocation3 [shape = 's32[2]{0}', space=sflag, size = 0x8, scoped, tag = 'scoped memory for tpu_custom_call.1']
    #allocation4 [shape = 's32[2]{0}', space=sflag, size = 0x8, scoped, tag = 'scoped memory for tpu_custom_call.1']
    #allocation5 [shape = 'u8[512]{0}', space=vmem, size = 0x400, scoped, tag = 'input window, operand 2, single buffered']
    #allocation6 [shape = 's32[1]{0}', space=sflag, size = 0x4, scoped, tag = 'scoped memory for tpu_custom_call.1']
    #allocation7 [shape = 'u8[512]{0}', space=vmem, size = 0x400, scoped, tag = 'input window, operand 3, single buffered']
    #allocation8 [shape = 'u8[512]{0}', space=vmem, size = 0x400, scoped, tag = 'input window, operand 4, single buffered']
    #allocation9 [shape = 's32[1]{0}', space=sflag, size = 0x4, scoped, tag = 'scoped memory for tpu_custom_call.1']
    #allocation10 [shape = 'u8[8192]{0}', space=vmem, size = 0x2000, scoped, tag = 'input window, operand 5, single buffered']
    #allocation11 [shape = 'u8[512]{0}', space=vmem, size = 0x400, scoped, tag = 'input window, operand 6, single buffered']
    #allocation12 [shape = 's32[1]{0}', space=sflag, size = 0x4, scoped, tag = 'scoped memory for tpu_custom_call.1']
    #allocation13 [shape = 'u8[1024]{0}', space=vmem, size = 0x400, scoped, tag = 'input window, operand 8, single buffered']
    #allocation14 [shape = 'u8[1024]{0}', space=vmem, size = 0x400, scoped, tag = 'input window, operand 10, single buffered']
    #allocation15 [shape = 's32[1]{0}', space=sflag, size = 0x4, scoped, tag = 'scoped memory for tpu_custom_call.1']
    #allocation16 [shape = 'u8[16384]{0}', space=vmem, size = 0x4000, scoped, tag = 'input window, operand 11, single buffered']
    #allocation17 [shape = 'u8[1024]{0}', space=vmem, size = 0x400, scoped, tag = 'input window, operand 12, single buffered']
    #allocation18 [shape = 's32[1]{0}', space=sflag, size = 0x4, scoped, tag = 'scoped memory for tpu_custom_call.1']
    #allocation19 [shape = 'u8[16384]{0}', space=vmem, size = 0x4000, scoped, tag = 'input window, operand 13, single buffered']
    #allocation20 [shape = 'u8[1024]{0}', space=vmem, size = 0x400, scoped, tag = 'input window, operand 14, single buffered']
    #allocation21 [shape = 's32[1]{0}', space=sflag, size = 0x4, scoped, tag = 'scoped memory for tpu_custom_call.1']
    #allocation22 [shape = 'u8[1024]{0}', space=vmem, size = 0x400, scoped, tag = 'input window, operand 15, single buffered']
    #allocation23 [shape = 'u8[1024]{0}', space=vmem, size = 0x400, scoped, tag = 'input window, operand 16, single buffered']
    #allocation24 [shape = 's32[1]{0}', space=sflag, size = 0x4, scoped, tag = 'scoped memory for tpu_custom_call.1']
    #allocation25 [shape = 'u8[16384]{0}', space=vmem, size = 0x4000, scoped, tag = 'input window, operand 17, single buffered']
    #allocation26 [shape = 'u8[4096]{0}', space=vmem, size = 0x1000, scoped, tag = 'output window, operand 0']
    %28 = vsyncpa [#allocation3], 0
    %s29 = scalar_lea.sflag [#allocation3], 1
    %30 = vsyncpa %s29, 0
    %31 = vsyncpa [#allocation6], 0
    %32 = vsyncpa [#allocation9], 0
    %33 = vsyncpa [#allocation12], 0
    %34 = vsyncpa [#allocation15], 0
    %35 = vsyncpa [#allocation18], 0
    %36 = vsyncpa [#allocation21], 0
    %37 = vsyncpa [#allocation24], 0
    %38 = vsyncpa [#allocation4], 0
    %s39 = scalar_lea.sflag [#allocation4], 1
    %40 = vsyncpa %s39, 0
    loop: start=0, step=1, limit=4
    $region2: #{tpu_custom_call.1} parent=1 // loop_pre_header
      _
    $region3: #{tpu_custom_call.1} parent=1 // loop_header
      %s42 = sphi 0, %s46
      %p43 = scmp.ge.s32.totalorder %s42, 4
      %s52 = sphi 0, %s54
      %s55 = sphi 0, %s52
      %s56 = sphi 0, %s55
      %s72 = sphi 0, %s56
      %s78 = sphi 0, %s80
      %s81 = sphi 0, %s78
      %s82 = sphi 0, %s81
      %s98 = sphi 0, %s82
      %s102 = sphi 0, %s102
      %s104 = sphi 0, %s102
      %s105 = sphi 0, %s104
      %s119 = sphi 0, %s105
      %s123 = sphi 0, %s123
      %s125 = sphi 0, %s123
      %s126 = sphi 0, %s125
      %s140 = sphi 0, %s126
      %s144 = sphi 0, %s144
      %s146 = sphi 0, %s144
      %s147 = sphi 0, %s146
      %s161 = sphi 0, %s147
      %s165 = sphi 0, %s165
      %s167 = sphi 0, %s165
      %s168 = sphi 0, %s167
      %s182 = sphi 0, %s168
      %s186 = sphi 0, %s186
      %s188 = sphi 0, %s186
      %s189 = sphi 0, %s188
      %s203 = sphi 0, %s189
      %s207 = sphi 0, %s207
      %s209 = sphi 0, %s207
      %s210 = sphi 0, %s209
      %s224 = sphi 0, %s210
      %s228 = sphi 0, %s228
      %s230 = sphi 0, %s228
      %s231 = sphi 0, %s230
      %s245 = sphi 0, %s231
      %s249 = sphi 0, %s249
      %s251 = sphi 0, %s249
      %s252 = sphi 0, %s251
      %s266 = sphi 0, %s252
      %s270 = sphi 0, %s270
      %s272 = sphi 0, %s270
      %s273 = sphi 0, %s272
      %s287 = sphi 0, %s273
      %s291 = sphi 0, %s291
      %s293 = sphi 0, %s291
      %s294 = sphi 0, %s293
      %s308 = sphi 0, %s294
      %s312 = sphi 0, %s312
      %s314 = sphi 0, %s312
      %s315 = sphi 0, %s314
      %s329 = sphi 0, %s315
      %s333 = sphi 0, %s333
      %s335 = sphi 0, %s333
      %s336 = sphi 0, %s335
      %s350 = sphi 0, %s336
      %s354 = sphi 0, %s354
      %s356 = sphi 0, %s354
      %s357 = sphi 0, %s356
      %s371 = sphi 0, %s357
      %s375 = sphi 0, %s375
      %s377 = sphi 0, %s375
      %s378 = sphi 0, %s377
      %s392 = sphi 0, %s378
      %s396 = sphi 0, %s396
      %s398 = sphi 0, %s396
      %s399 = sphi 0, %s398
      %s413 = sphi 0, %s399
      %s417 = sphi 0, %s417
      %s419 = sphi 0, %s417
      %s420 = sphi 0, %s419
      %s434 = sphi 0, %s420
      %s438 = sphi 0, %s438
      %s440 = sphi 0, %s438
      %s441 = sphi 0, %s440
      %s455 = sphi 0, %s441
      %s459 = sphi 0, %s459
      %s461 = sphi 0, %s459
      %s462 = sphi 0, %s461
      %s476 = sphi 0, %s462
      %s480 = sphi 0, %s480
      %s482 = sphi 0, %s480
      %s483 = sphi 0, %s482
      %s497 = sphi 0, %s483
      %s501 = sphi 0, %s501
      %s503 = sphi 0, %s501
      %s504 = sphi 0, %s503
      %s518 = sphi 0, %s504
      %s522 = sphi 0, %s522
      %s524 = sphi 0, %s522
      %s525 = sphi 0, %s524
      %s539 = sphi 0, %s525
      %s545 = sphi 0, %s547
      %s548 = sphi 0, %s545
      %s549 = sphi 0, %s548
      %s565 = sphi 0, %s549
    $region4: #{tpu_custom_call.1} parent=1 // loop_header_branch
      %45 = sbr.rel (%p43) target = $region8
    $region5: #{tpu_custom_call.1} parent=1 // loop_body
      %s47 = ssub.s32 %s42, 1
      %s48 = ssub.s32 %s42, 2
      %s49 = sadd.s32 %s42, 1
      %s50 = ssub.s32 %s42, %s49
      %p51 = scmp.eq.s32.totalorder %s50, 0
      %s53 = sadd.s32 %s52, 1
      %s54 = scalar_select %p51, %s52, %s53
      %p57 = pneg %p51
      %p58 = scmp.eq.s32.totalorder %s42, 1
      %p59 = por %p57, %p58
      %p60 = scmp.ne.s32.totalorder %s52, %s55
      %p61 = scmp.eq.s32.totalorder %s42, 0
      %p62 = por %p60, %p61
      %p63 = scmp.ne.s32.totalorder %s52, %s55
      %p64 = scmp.eq.s32.totalorder %s47, 1
      %p65 = por %p63, %p64
      %p66 = scmp.ne.s32.totalorder %s55, %s56
      %p67 = scmp.eq.s32.totalorder %s47, 0
      %p68 = por %p66, %p67
      %p69 = scmp.ne.s32.totalorder %s55, %s56
      %p70 = scmp.eq.s32.totalorder %s48, 1
      %p71 = por %p69, %p70
      %p73 = scmp.ne.s32.totalorder %s56, %s72
      %p74 = scmp.eq.s32.totalorder %s48, 0
      %p75 = por %p73, %p74
      %s76 = ssub.s32 %s42, %s49
      %p77 = scmp.eq.s32.totalorder %s76, 0
      %s79 = sadd.s32 %s78, 1
      %s80 = scalar_select %p77, %s78, %s79
      %p83 = pneg %p77
      %p84 = scmp.eq.s32.totalorder %s42, 1
      %p85 = por %p83, %p84
      %p86 = scmp.ne.s32.totalorder %s78, %s81
      %p87 = scmp.eq.s32.totalorder %s42, 0
      %p88 = por %p86, %p87
      %p89 = scmp.ne.s32.totalorder %s78, %s81
      %p90 = scmp.eq.s32.totalorder %s47, 1
      %p91 = por %p89, %p90
      %p92 = scmp.ne.s32.totalorder %s81, %s82
      %p93 = scmp.eq.s32.totalorder %s47, 0
      %p94 = por %p92, %p93
      %p95 = scmp.ne.s32.totalorder %s81, %s82
      %p96 = scmp.eq.s32.totalorder %s48, 1
      %p97 = por %p95, %p96
      %p99 = scmp.ne.s32.totalorder %s82, %s98
      %p100 = scmp.eq.s32.totalorder %s48, 0
      %p101 = por %p99, %p100
      %s103 = sadd.s32 %s102, 1
      %p106 = scmp.eq.s32.totalorder %s42, 1
      %p107 = scmp.ne.s32.totalorder %s102, %s104
      %p108 = scmp.eq.s32.totalorder %s42, 0
      %p109 = por %p107, %p108
      %p110 = scmp.ne.s32.totalorder %s102, %s104
      %p111 = scmp.eq.s32.totalorder %s47, 1
      %p112 = por %p110, %p111
      %p113 = scmp.ne.s32.totalorder %s104, %s105
      %p114 = scmp.eq.s32.totalorder %s47, 0
      %p115 = por %p113, %p114
      %p116 = scmp.ne.s32.totalorder %s104, %s105
      %p117 = scmp.eq.s32.totalorder %s48, 1
      %p118 = por %p116, %p117
      %p120 = scmp.ne.s32.totalorder %s105, %s119
      %p121 = scmp.eq.s32.totalorder %s48, 0
      %p122 = por %p120, %p121
      %s124 = sadd.s32 %s123, 1
      %p127 = scmp.eq.s32.totalorder %s42, 1
      %p128 = scmp.ne.s32.totalorder %s123, %s125
      %p129 = scmp.eq.s32.totalorder %s42, 0
      %p130 = por %p128, %p129
      %p131 = scmp.ne.s32.totalorder %s123, %s125
      %p132 = scmp.eq.s32.totalorder %s47, 1
      %p133 = por %p131, %p132
      %p134 = scmp.ne.s32.totalorder %s125, %s126
      %p135 = scmp.eq.s32.totalorder %s47, 0
      %p136 = por %p134, %p135
      %p137 = scmp.ne.s32.totalorder %s125, %s126
      %p138 = scmp.eq.s32.totalorder %s48, 1
      %p139 = por %p137, %p138
      %p141 = scmp.ne.s32.totalorder %s126, %s140
      %p142 = scmp.eq.s32.totalorder %s48, 0
      %p143 = por %p141, %p142
      %s145 = sadd.s32 %s144, 1
      %p148 = scmp.eq.s32.totalorder %s42, 1
      %p149 = scmp.ne.s32.totalorder %s144, %s146
      %p150 = scmp.eq.s32.totalorder %s42, 0
      %p151 = por %p149, %p150
      %p152 = scmp.ne.s32.totalorder %s144, %s146
      %p153 = scmp.eq.s32.totalorder %s47, 1
      %p154 = por %p152, %p153
      %p155 = scmp.ne.s32.totalorder %s146, %s147
      %p156 = scmp.eq.s32.totalorder %s47, 0
      %p157 = por %p155, %p156
      %p158 = scmp.ne.s32.totalorder %s146, %s147
      %p159 = scmp.eq.s32.totalorder %s48, 1
      %p160 = por %p158, %p159
      %p162 = scmp.ne.s32.totalorder %s147, %s161
      %p163 = scmp.eq.s32.totalorder %s48, 0
      %p164 = por %p162, %p163
      %s166 = sadd.s32 %s165, 1
      %p169 = scmp.eq.s32.totalorder %s42, 1
      %p170 = scmp.ne.s32.totalorder %s165, %s167
      %p171 = scmp.eq.s32.totalorder %s42, 0
      %p172 = por %p170, %p171
      %p173 = scmp.ne.s32.totalorder %s165, %s167
      %p174 = scmp.eq.s32.totalorder %s47, 1
      %p175 = por %p173, %p174
      %p176 = scmp.ne.s32.totalorder %s167, %s168
      %p177 = scmp.eq.s32.totalorder %s47, 0
      %p178 = por %p176, %p177
      %p179 = scmp.ne.s32.totalorder %s167, %s168
      %p180 = scmp.eq.s32.totalorder %s48, 1
      %p181 = por %p179, %p180
      %p183 = scmp.ne.s32.totalorder %s168, %s182
      %p184 = scmp.eq.s32.totalorder %s48, 0
      %p185 = por %p183, %p184
      %s187 = sadd.s32 %s186, 1
      %p190 = scmp.eq.s32.totalorder %s42, 1
      %p191 = scmp.ne.s32.totalorder %s186, %s188
      %p192 = scmp.eq.s32.totalorder %s42, 0
      %p193 = por %p191, %p192
      %p194 = scmp.ne.s32.totalorder %s186, %s188
      %p195 = scmp.eq.s32.totalorder %s47, 1
      %p196 = por %p194, %p195
      %p197 = scmp.ne.s32.totalorder %s188, %s189
      %p198 = scmp.eq.s32.totalorder %s47, 0
      %p199 = por %p197, %p198
      %p200 = scmp.ne.s32.totalorder %s188, %s189
      %p201 = scmp.eq.s32.totalorder %s48, 1
      %p202 = por %p200, %p201
      %p204 = scmp.ne.s32.totalorder %s189, %s203
      %p205 = scmp.eq.s32.totalorder %s48, 0
      %p206 = por %p204, %p205
      %s208 = sadd.s32 %s207, 1
      %p211 = scmp.eq.s32.totalorder %s42, 1
      %p212 = scmp.ne.s32.totalorder %s207, %s209
      %p213 = scmp.eq.s32.totalorder %s42, 0
      %p214 = por %p212, %p213
      %p215 = scmp.ne.s32.totalorder %s207, %s209
      %p216 = scmp.eq.s32.totalorder %s47, 1
      %p217 = por %p215, %p216
      %p218 = scmp.ne.s32.totalorder %s209, %s210
      %p219 = scmp.eq.s32.totalorder %s47, 0
      %p220 = por %p218, %p219
      %p221 = scmp.ne.s32.totalorder %s209, %s210
      %p222 = scmp.eq.s32.totalorder %s48, 1
      %p223 = por %p221, %p222
      %p225 = scmp.ne.s32.totalorder %s210, %s224
      %p226 = scmp.eq.s32.totalorder %s48, 0
      %p227 = por %p225, %p226
      %s229 = sadd.s32 %s228, 1
      %p232 = scmp.eq.s32.totalorder %s42, 1
      %p233 = scmp.ne.s32.totalorder %s228, %s230
      %p234 = scmp.eq.s32.totalorder %s42, 0
      %p235 = por %p233, %p234
      %p236 = scmp.ne.s32.totalorder %s228, %s230
      %p237 = scmp.eq.s32.totalorder %s47, 1
      %p238 = por %p236, %p237
      %p239 = scmp.ne.s32.totalorder %s230, %s231
      %p240 = scmp.eq.s32.totalorder %s47, 0
      %p241 = por %p239, %p240
      %p242 = scmp.ne.s32.totalorder %s230, %s231
      %p243 = scmp.eq.s32.totalorder %s48, 1
      %p244 = por %p242, %p243
      %p246 = scmp.ne.s32.totalorder %s231, %s245
      %p247 = scmp.eq.s32.totalorder %s48, 0
      %p248 = por %p246, %p247
      %s250 = sadd.s32 %s249, 1
      %p253 = scmp.eq.s32.totalorder %s42, 1
      %p254 = scmp.ne.s32.totalorder %s249, %s251
      %p255 = scmp.eq.s32.totalorder %s42, 0
      %p256 = por %p254, %p255
      %p257 = scmp.ne.s32.totalorder %s249, %s251
      %p258 = scmp.eq.s32.totalorder %s47, 1
      %p259 = por %p257, %p258
      %p260 = scmp.ne.s32.totalorder %s251, %s252
      %p261 = scmp.eq.s32.totalorder %s47, 0
      %p262 = por %p260, %p261
      %p263 = scmp.ne.s32.totalorder %s251, %s252
      %p264 = scmp.eq.s32.totalorder %s48, 1
      %p265 = por %p263, %p264
      %p267 = scmp.ne.s32.totalorder %s252, %s266
      %p268 = scmp.eq.s32.totalorder %s48, 0
      %p269 = por %p267, %p268
      %s271 = sadd.s32 %s270, 1
      %p274 = scmp.eq.s32.totalorder %s42, 1
      %p275 = scmp.ne.s32.totalorder %s270, %s272
      %p276 = scmp.eq.s32.totalorder %s42, 0
      %p277 = por %p275, %p276
      %p278 = scmp.ne.s32.totalorder %s270, %s272
      %p279 = scmp.eq.s32.totalorder %s47, 1
      %p280 = por %p278, %p279
      %p281 = scmp.ne.s32.totalorder %s272, %s273
      %p282 = scmp.eq.s32.totalorder %s47, 0
      %p283 = por %p281, %p282
      %p284 = scmp.ne.s32.totalorder %s272, %s273
      %p285 = scmp.eq.s32.totalorder %s48, 1
      %p286 = por %p284, %p285
      %p288 = scmp.ne.s32.totalorder %s273, %s287
      %p289 = scmp.eq.s32.totalorder %s48, 0
      %p290 = por %p288, %p289
      %s292 = sadd.s32 %s291, 1
      %p295 = scmp.eq.s32.totalorder %s42, 1
      %p296 = scmp.ne.s32.totalorder %s291, %s293
      %p297 = scmp.eq.s32.totalorder %s42, 0
      %p298 = por %p296, %p297
      %p299 = scmp.ne.s32.totalorder %s291, %s293
      %p300 = scmp.eq.s32.totalorder %s47, 1
      %p301 = por %p299, %p300
      %p302 = scmp.ne.s32.totalorder %s293, %s294
      %p303 = scmp.eq.s32.totalorder %s47, 0
      %p304 = por %p302, %p303
      %p305 = scmp.ne.s32.totalorder %s293, %s294
      %p306 = scmp.eq.s32.totalorder %s48, 1
      %p307 = por %p305, %p306
      %p309 = scmp.ne.s32.totalorder %s294, %s308
      %p310 = scmp.eq.s32.totalorder %s48, 0
      %p311 = por %p309, %p310
      %s313 = sadd.s32 %s312, 1
      %p316 = scmp.eq.s32.totalorder %s42, 1
      %p317 = scmp.ne.s32.totalorder %s312, %s314
      %p318 = scmp.eq.s32.totalorder %s42, 0
      %p319 = por %p317, %p318
      %p320 = scmp.ne.s32.totalorder %s312, %s314
      %p321 = scmp.eq.s32.totalorder %s47, 1
      %p322 = por %p320, %p321
      %p323 = scmp.ne.s32.totalorder %s314, %s315
      %p324 = scmp.eq.s32.totalorder %s47, 0
      %p325 = por %p323, %p324
      %p326 = scmp.ne.s32.totalorder %s314, %s315
      %p327 = scmp.eq.s32.totalorder %s48, 1
      %p328 = por %p326, %p327
      %p330 = scmp.ne.s32.totalorder %s315, %s329
      %p331 = scmp.eq.s32.totalorder %s48, 0
      %p332 = por %p330, %p331
      %s334 = sadd.s32 %s333, 1
      %p337 = scmp.eq.s32.totalorder %s42, 1
      %p338 = scmp.ne.s32.totalorder %s333, %s335
      %p339 = scmp.eq.s32.totalorder %s42, 0
      %p340 = por %p338, %p339
      %p341 = scmp.ne.s32.totalorder %s333, %s335
      %p342 = scmp.eq.s32.totalorder %s47, 1
      %p343 = por %p341, %p342
      %p344 = scmp.ne.s32.totalorder %s335, %s336
      %p345 = scmp.eq.s32.totalorder %s47, 0
      %p346 = por %p344, %p345
      %p347 = scmp.ne.s32.totalorder %s335, %s336
      %p348 = scmp.eq.s32.totalorder %s48, 1
      %p349 = por %p347, %p348
      %p351 = scmp.ne.s32.totalorder %s336, %s350
      %p352 = scmp.eq.s32.totalorder %s48, 0
      %p353 = por %p351, %p352
      %s355 = sadd.s32 %s354, 1
      %p358 = scmp.eq.s32.totalorder %s42, 1
      %p359 = scmp.ne.s32.totalorder %s354, %s356
      %p360 = scmp.eq.s32.totalorder %s42, 0
      %p361 = por %p359, %p360
      %p362 = scmp.ne.s32.totalorder %s354, %s356
      %p363 = scmp.eq.s32.totalorder %s47, 1
      %p364 = por %p362, %p363
      %p365 = scmp.ne.s32.totalorder %s356, %s357
      %p366 = scmp.eq.s32.totalorder %s47, 0
      %p367 = por %p365, %p366
      %p368 = scmp.ne.s32.totalorder %s356, %s357
      %p369 = scmp.eq.s32.totalorder %s48, 1
      %p370 = por %p368, %p369
      %p372 = scmp.ne.s32.totalorder %s357, %s371
      %p373 = scmp.eq.s32.totalorder %s48, 0
      %p374 = por %p372, %p373
      %s376 = sadd.s32 %s375, 1
      %p379 = scmp.eq.s32.totalorder %s42, 1
      %p380 = scmp.ne.s32.totalorder %s375, %s377
      %p381 = scmp.eq.s32.totalorder %s42, 0
      %p382 = por %p380, %p381
      %p383 = scmp.ne.s32.totalorder %s375, %s377
      %p384 = scmp.eq.s32.totalorder %s47, 1
      %p385 = por %p383, %p384
      %p386 = scmp.ne.s32.totalorder %s377, %s378
      %p387 = scmp.eq.s32.totalorder %s47, 0
      %p388 = por %p386, %p387
      %p389 = scmp.ne.s32.totalorder %s377, %s378
      %p390 = scmp.eq.s32.totalorder %s48, 1
      %p391 = por %p389, %p390
      %p393 = scmp.ne.s32.totalorder %s378, %s392
      %p394 = scmp.eq.s32.totalorder %s48, 0
      %p395 = por %p393, %p394
      %s397 = sadd.s32 %s396, 1
      %p400 = scmp.eq.s32.totalorder %s42, 1
      %p401 = scmp.ne.s32.totalorder %s396, %s398
      %p402 = scmp.eq.s32.totalorder %s42, 0
      %p403 = por %p401, %p402
      %p404 = scmp.ne.s32.totalorder %s396, %s398
      %p405 = scmp.eq.s32.totalorder %s47, 1
      %p406 = por %p404, %p405
      %p407 = scmp.ne.s32.totalorder %s398, %s399
      %p408 = scmp.eq.s32.totalorder %s47, 0
      %p409 = por %p407, %p408
      %p410 = scmp.ne.s32.totalorder %s398, %s399
      %p411 = scmp.eq.s32.totalorder %s48, 1
      %p412 = por %p410, %p411
      %p414 = scmp.ne.s32.totalorder %s399, %s413
      %p415 = scmp.eq.s32.totalorder %s48, 0
      %p416 = por %p414, %p415
      %s418 = sadd.s32 %s417, 1
      %p421 = scmp.eq.s32.totalorder %s42, 1
      %p422 = scmp.ne.s32.totalorder %s417, %s419
      %p423 = scmp.eq.s32.totalorder %s42, 0
      %p424 = por %p422, %p423
      %p425 = scmp.ne.s32.totalorder %s417, %s419
      %p426 = scmp.eq.s32.totalorder %s47, 1
      %p427 = por %p425, %p426
      %p428 = scmp.ne.s32.totalorder %s419, %s420
      %p429 = scmp.eq.s32.totalorder %s47, 0
      %p430 = por %p428, %p429
      %p431 = scmp.ne.s32.totalorder %s419, %s420
      %p432 = scmp.eq.s32.totalorder %s48, 1
      %p433 = por %p431, %p432
      %p435 = scmp.ne.s32.totalorder %s420, %s434
      %p436 = scmp.eq.s32.totalorder %s48, 0
      %p437 = por %p435, %p436
      %s439 = sadd.s32 %s438, 1
      %p442 = scmp.eq.s32.totalorder %s42, 1
      %p443 = scmp.ne.s32.totalorder %s438, %s440
      %p444 = scmp.eq.s32.totalorder %s42, 0
      %p445 = por %p443, %p444
      %p446 = scmp.ne.s32.totalorder %s438, %s440
      %p447 = scmp.eq.s32.totalorder %s47, 1
      %p448 = por %p446, %p447
      %p449 = scmp.ne.s32.totalorder %s440, %s441
      %p450 = scmp.eq.s32.totalorder %s47, 0
      %p451 = por %p449, %p450
      %p452 = scmp.ne.s32.totalorder %s440, %s441
      %p453 = scmp.eq.s32.totalorder %s48, 1
      %p454 = por %p452, %p453
      %p456 = scmp.ne.s32.totalorder %s441, %s455
      %p457 = scmp.eq.s32.totalorder %s48, 0
      %p458 = por %p456, %p457
      %s460 = sadd.s32 %s459, 1
      %p463 = scmp.eq.s32.totalorder %s42, 1
      %p464 = scmp.ne.s32.totalorder %s459, %s461
      %p465 = scmp.eq.s32.totalorder %s42, 0
      %p466 = por %p464, %p465
      %p467 = scmp.ne.s32.totalorder %s459, %s461
      %p468 = scmp.eq.s32.totalorder %s47, 1
      %p469 = por %p467, %p468
      %p470 = scmp.ne.s32.totalorder %s461, %s462
      %p471 = scmp.eq.s32.totalorder %s47, 0
      %p472 = por %p470, %p471
      %p473 = scmp.ne.s32.totalorder %s461, %s462
      %p474 = scmp.eq.s32.totalorder %s48, 1
      %p475 = por %p473, %p474
      %p477 = scmp.ne.s32.totalorder %s462, %s476
      %p478 = scmp.eq.s32.totalorder %s48, 0
      %p479 = por %p477, %p478
      %s481 = sadd.s32 %s480, 1
      %p484 = scmp.eq.s32.totalorder %s42, 1
      %p485 = scmp.ne.s32.totalorder %s480, %s482
      %p486 = scmp.eq.s32.totalorder %s42, 0
      %p487 = por %p485, %p486
      %p488 = scmp.ne.s32.totalorder %s480, %s482
      %p489 = scmp.eq.s32.totalorder %s47, 1
      %p490 = por %p488, %p489
      %p491 = scmp.ne.s32.totalorder %s482, %s483
      %p492 = scmp.eq.s32.totalorder %s47, 0
      %p493 = por %p491, %p492
      %p494 = scmp.ne.s32.totalorder %s482, %s483
      %p495 = scmp.eq.s32.totalorder %s48, 1
      %p496 = por %p494, %p495
      %p498 = scmp.ne.s32.totalorder %s483, %s497
      %p499 = scmp.eq.s32.totalorder %s48, 0
      %p500 = por %p498, %p499
      %s502 = sadd.s32 %s501, 1
      %p505 = scmp.eq.s32.totalorder %s42, 1
      %p506 = scmp.ne.s32.totalorder %s501, %s503
      %p507 = scmp.eq.s32.totalorder %s42, 0
      %p508 = por %p506, %p507
      %p509 = scmp.ne.s32.totalorder %s501, %s503
      %p510 = scmp.eq.s32.totalorder %s47, 1
      %p511 = por %p509, %p510
      %p512 = scmp.ne.s32.totalorder %s503, %s504
      %p513 = scmp.eq.s32.totalorder %s47, 0
      %p514 = por %p512, %p513
      %p515 = scmp.ne.s32.totalorder %s503, %s504
      %p516 = scmp.eq.s32.totalorder %s48, 1
      %p517 = por %p515, %p516
      %p519 = scmp.ne.s32.totalorder %s504, %s518
      %p520 = scmp.eq.s32.totalorder %s48, 0
      %p521 = por %p519, %p520
      %s523 = sadd.s32 %s522, 1
      %p526 = scmp.eq.s32.totalorder %s42, 1
      %p527 = scmp.ne.s32.totalorder %s522, %s524
      %p528 = scmp.eq.s32.totalorder %s42, 0
      %p529 = por %p527, %p528
      %p530 = scmp.ne.s32.totalorder %s522, %s524
      %p531 = scmp.eq.s32.totalorder %s47, 1
      %p532 = por %p530, %p531
      %p533 = scmp.ne.s32.totalorder %s524, %s525
      %p534 = scmp.eq.s32.totalorder %s47, 0
      %p535 = por %p533, %p534
      %p536 = scmp.ne.s32.totalorder %s524, %s525
      %p537 = scmp.eq.s32.totalorder %s48, 1
      %p538 = por %p536, %p537
      %p540 = scmp.ne.s32.totalorder %s525, %s539
      %p541 = scmp.eq.s32.totalorder %s48, 0
      %p542 = por %p540, %p541
      %s543 = ssub.s32 %s42, %s49
      %p544 = scmp.eq.s32.totalorder %s543, 0
      %s546 = sadd.s32 %s545, 1
      %s547 = scalar_select %p544, %s545, %s546
      %p550 = pneg %p544
      %p551 = scmp.eq.s32.totalorder %s42, 1
      %p552 = por %p550, %p551
      %p553 = scmp.ne.s32.totalorder %s545, %s548
      %p554 = scmp.eq.s32.totalorder %s42, 0
      %p555 = por %p553, %p554
      %p556 = scmp.ne.s32.totalorder %s545, %s548
      %p557 = scmp.eq.s32.totalorder %s47, 1
      %p558 = por %p556, %p557
      %p559 = scmp.ne.s32.totalorder %s548, %s549
      %p560 = scmp.eq.s32.totalorder %s47, 0
      %p561 = por %p559, %p560
      %p562 = scmp.ne.s32.totalorder %s548, %s549
      %p563 = scmp.eq.s32.totalorder %s48, 1
      %p564 = por %p562, %p563
      %p566 = scmp.ne.s32.totalorder %s549, %s565
      %p567 = scmp.eq.s32.totalorder %s48, 0
      %p568 = por %p566, %p567
      %p569 = scmp.le.s32.totalorder 1, %s42
      %p570 = scmp.lt.s32.totalorder %s42, 3
      %p571 = pnand %p569, %p570
      %p572 = pneg %p571
      // Predicated region
      $region9: #{tpu_custom_call.1} parent=5 // pred_check
        _
      $region10: #{tpu_custom_call.1} parent=5 // pred_check_branch
        %574 = sbr.rel (%p571) target = $region12
      $region11: #{tpu_custom_call.1} parent=5 // pred_region
        %s575 = ssub.s32 %s42, 1
        // Predicated region
        $region13: #{tpu_custom_call.1} parent=11 // pred_check
          %p576 = pneg %p115
        $region14: #{tpu_custom_call.1} parent=11 // pred_check_branch
          %578 = sbr.rel (%p576) target = $region16
        $region15: #{tpu_custom_call.1} parent=11 // pred_region
          %s580 = ssub.s32 16, 16
          %581 = vsyncadd [#allocation6], %s580
          %s583 = sshll.u32 [#allocation5], 4
          %s584 = int_to_ptr.vmem [resolvable:$true] %s583
          %586 = dma.hbm_to_vmem [thread:$0]  %s2, 16, %s584, [#allocation6]
        $region16: #{tpu_custom_call.1} parent=11 // pred_fallthru
          _
        // Predicated region
        $region17: #{tpu_custom_call.1} parent=11 // pred_check
          %p587 = pneg %p136
        $region18: #{tpu_custom_call.1} parent=11 // pred_check_branch
          %589 = sbr.rel (%p587) target = $region20
        $region19: #{tpu_custom_call.1} parent=11 // pred_region
          %s591 = ssub.s32 16, 16
          %592 = vsyncadd [#allocation6], %s591
          %s594 = sshll.u32 [#allocation7], 4
          %s595 = int_to_ptr.vmem [resolvable:$true] %s594
          %597 = dma.hbm_to_vmem [thread:$0]  %s3, 16, %s595, [#allocation6]
        $region20: #{tpu_custom_call.1} parent=11 // pred_fallthru
          _
        // Predicated region
        $region21: #{tpu_custom_call.1} parent=11 // pred_check
          %p598 = pneg %p157
        $region22: #{tpu_custom_call.1} parent=11 // pred_check_branch
          %600 = sbr.rel (%p598) target = $region24
        $region23: #{tpu_custom_call.1} parent=11 // pred_region
          %s602 = ssub.s32 16, 16
          %603 = vsyncadd [#allocation9], %s602
          %s605 = sshll.u32 [#allocation8], 4
          %s606 = int_to_ptr.vmem [resolvable:$true] %s605
          %608 = dma.hbm_to_vmem [thread:$0]  %s4, 16, %s606, [#allocation9]
        $region24: #{tpu_custom_call.1} parent=11 // pred_fallthru
          _
        // Predicated region
        $region25: #{tpu_custom_call.1} parent=11 // pred_check
          %p609 = pneg %p178
        $region26: #{tpu_custom_call.1} parent=11 // pred_check_branch
          %611 = sbr.rel (%p609) target = $region28
        $region27: #{tpu_custom_call.1} parent=11 // pred_region
          %s613 = ssub.s32 256, 256
          %614 = vsyncadd [#allocation9], %s613
          %s615 = sshll.u32 [#allocation10], 4
          %s616 = int_to_ptr.vmem [resolvable:$true] %s615
          %621 = dma.hbm_to_vmem [thread:$0]  %s5, 256, %s616, [#allocation9], 64, 64, 4
        $region28: #{tpu_custom_call.1} parent=11 // pred_fallthru
          _
        // Predicated region
        $region29: #{tpu_custom_call.1} parent=11 // pred_check
          %p622 = pneg %p199
        $region30: #{tpu_custom_call.1} parent=11 // pred_check_branch
          %624 = sbr.rel (%p622) target = $region32
        $region31: #{tpu_custom_call.1} parent=11 // pred_region
          %s626 = ssub.s32 16, 16
          %627 = vsyncadd [#allocation12], %s626
          %s629 = sshll.u32 [#allocation11], 4
          %s630 = int_to_ptr.vmem [resolvable:$true] %s629
          %632 = dma.hbm_to_vmem [thread:$0]  %s6, 16, %s630, [#allocation12]
        $region32: #{tpu_custom_call.1} parent=11 // pred_fallthru
          _
        // Predicated region
        $region33: #{tpu_custom_call.1} parent=11 // pred_check
          %p633 = pneg %p220
        $region34: #{tpu_custom_call.1} parent=11 // pred_check_branch
          %635 = sbr.rel (%p633) target = $region36
        $region35: #{tpu_custom_call.1} parent=11 // pred_region
          _
        $region36: #{tpu_custom_call.1} parent=11 // pred_fallthru
          _
        // Predicated region
        $region37: #{tpu_custom_call.1} parent=11 // pred_check
          %p636 = pneg %p241
        $region38: #{tpu_custom_call.1} parent=11 // pred_check_branch
          %638 = sbr.rel (%p636) target = $region40
        $region39: #{tpu_custom_call.1} parent=11 // pred_region
          %s640 = ssub.s32 32, 32
          %641 = vsyncadd [#allocation12], %s640
          %s642 = sshll.u32 [#allocation13], 4
          %s643 = int_to_ptr.vmem [resolvable:$true] %s642
          %648 = dma.hbm_to_vmem [thread:$0]  %s8, 32, %s643, [#allocation12], 16, 16, 1
        $region40: #{tpu_custom_call.1} parent=11 // pred_fallthru
          _
        // Predicated region
        $region41: #{tpu_custom_call.1} parent=11 // pred_check
          %p649 = pneg %p262
        $region42: #{tpu_custom_call.1} parent=11 // pred_check_branch
          %651 = sbr.rel (%p649) target = $region44
        $region43: #{tpu_custom_call.1} parent=11 // pred_region
          _
        $region44: #{tpu_custom_call.1} parent=11 // pred_fallthru
          _
        // Predicated region
        $region45: #{tpu_custom_call.1} parent=11 // pred_check
          %p652 = pneg %p283
        $region46: #{tpu_custom_call.1} parent=11 // pred_check_branch
          %654 = sbr.rel (%p652) target = $region48
        $region47: #{tpu_custom_call.1} parent=11 // pred_region
          %s656 = ssub.s32 32, 32
          %657 = vsyncadd [#allocation15], %s656
          %s658 = sshll.u32 [#allocation14], 4
          %s659 = int_to_ptr.vmem [resolvable:$true] %s658
          %664 = dma.hbm_to_vmem [thread:$0]  %s10, 32, %s659, [#allocation15], 16, 16, 1
        $region48: #{tpu_custom_call.1} parent=11 // pred_fallthru
          _
        // Predicated region
        $region49: #{tpu_custom_call.1} parent=11 // pred_check
          %p665 = pneg %p304
        $region50: #{tpu_custom_call.1} parent=11 // pred_check_branch
          %667 = sbr.rel (%p665) target = $region52
        $region51: #{tpu_custom_call.1} parent=11 // pred_region
          %s669 = ssub.s32 512, 512
          %670 = vsyncadd [#allocation15], %s669
          %s671 = sshll.u32 [#allocation16], 4
          %s672 = int_to_ptr.vmem [resolvable:$true] %s671
          %677 = dma.hbm_to_vmem [thread:$0]  %s11, 512, %s672, [#allocation15], 64, 64, 4
        $region52: #{tpu_custom_call.1} parent=11 // pred_fallthru
          _
        // Predicated region
        $region53: #{tpu_custom_call.1} parent=11 // pred_check
          %p678 = pneg %p325
        $region54: #{tpu_custom_call.1} parent=11 // pred_check_branch
          %680 = sbr.rel (%p678) target = $region56
        $region55: #{tpu_custom_call.1} parent=11 // pred_region
          %s682 = ssub.s32 32, 32
          %683 = vsyncadd [#allocation18], %s682
          %s684 = sshll.u32 [#allocation17], 4
          %s685 = int_to_ptr.vmem [resolvable:$true] %s684
          %690 = dma.hbm_to_vmem [thread:$0]  %s12, 32, %s685, [#allocation18], 16, 16, 1
        $region56: #{tpu_custom_call.1} parent=11 // pred_fallthru
          _
        // Predicated region
        $region57: #{tpu_custom_call.1} parent=11 // pred_check
          %p691 = pneg %p346
        $region58: #{tpu_custom_call.1} parent=11 // pred_check_branch
          %693 = sbr.rel (%p691) target = $region60
        $region59: #{tpu_custom_call.1} parent=11 // pred_region
          %s695 = ssub.s32 512, 512
          %696 = vsyncadd [#allocation18], %s695
          %s697 = sshll.u32 [#allocation19], 4
          %s698 = int_to_ptr.vmem [resolvable:$true] %s697
          %703 = dma.hbm_to_vmem [thread:$0]  %s13, 512, %s698, [#allocation18], 64, 64, 4
        $region60: #{tpu_custom_call.1} parent=11 // pred_fallthru
          _
        // Predicated region
        $region61: #{tpu_custom_call.1} parent=11 // pred_check
          %p704 = pneg %p367
        $region62: #{tpu_custom_call.1} parent=11 // pred_check_branch
          %706 = sbr.rel (%p704) target = $region64
        $region63: #{tpu_custom_call.1} parent=11 // pred_region
          %s708 = ssub.s32 32, 32
          %709 = vsyncadd [#allocation21], %s708
          %s710 = sshll.u32 [#allocation20], 4
          %s711 = int_to_ptr.vmem [resolvable:$true] %s710
          %716 = dma.hbm_to_vmem [thread:$0]  %s14, 32, %s711, [#allocation21], 16, 16, 1
        $region64: #{tpu_custom_call.1} parent=11 // pred_fallthru
          _
        // Predicated region
        $region65: #{tpu_custom_call.1} parent=11 // pred_check
          %p717 = pneg %p388
        $region66: #{tpu_custom_call.1} parent=11 // pred_check_branch
          %719 = sbr.rel (%p717) target = $region68
        $region67: #{tpu_custom_call.1} parent=11 // pred_region
          %s721 = ssub.s32 32, 32
          %722 = vsyncadd [#allocation21], %s721
          %s723 = sshll.u32 [#allocation22], 4
          %s724 = int_to_ptr.vmem [resolvable:$true] %s723
          %729 = dma.hbm_to_vmem [thread:$0]  %s15, 32, %s724, [#allocation21], 16, 16, 1
        $region68: #{tpu_custom_call.1} parent=11 // pred_fallthru
          _
        // Predicated region
        $region69: #{tpu_custom_call.1} parent=11 // pred_check
          %p730 = pneg %p409
        $region70: #{tpu_custom_call.1} parent=11 // pred_check_branch
          %732 = sbr.rel (%p730) target = $region72
        $region71: #{tpu_custom_call.1} parent=11 // pred_region
          %s734 = ssub.s32 32, 32
          %735 = vsyncadd [#allocation24], %s734
          %s736 = sshll.u32 [#allocation23], 4
          %s737 = int_to_ptr.vmem [resolvable:$true] %s736
          %742 = dma.hbm_to_vmem [thread:$0]  %s16, 32, %s737, [#allocation24], 16, 16, 1
        $region72: #{tpu_custom_call.1} parent=11 // pred_fallthru
          _
        // Predicated region
        $region73: #{tpu_custom_call.1} parent=11 // pred_check
          %p743 = pneg %p430
        $region74: #{tpu_custom_call.1} parent=11 // pred_check_branch
          %745 = sbr.rel (%p743) target = $region76
        $region75: #{tpu_custom_call.1} parent=11 // pred_region
          %s747 = ssub.s32 512, 512
          %748 = vsyncadd [#allocation24], %s747
          %s749 = sshll.u32 [#allocation25], 4
          %s750 = int_to_ptr.vmem [resolvable:$true] %s749
          %755 = dma.hbm_to_vmem [thread:$0]  %s17, 512, %s750, [#allocation24], 64, 64, 4
        $region76: #{tpu_custom_call.1} parent=11 // pred_fallthru
          _
        // Predicated region
        $region77: #{tpu_custom_call.1} parent=11 // pred_check
          %p756 = pneg %p451
        $region78: #{tpu_custom_call.1} parent=11 // pred_check_branch
          %758 = sbr.rel (%p756) target = $region80
        $region79: #{tpu_custom_call.1} parent=11 // pred_region
          _
        $region80: #{tpu_custom_call.1} parent=11 // pred_fallthru
          _
        // Predicated region
        $region81: #{tpu_custom_call.1} parent=11 // pred_check
          %p759 = pneg %p472
        $region82: #{tpu_custom_call.1} parent=11 // pred_check_branch
          %761 = sbr.rel (%p759) target = $region84
        $region83: #{tpu_custom_call.1} parent=11 // pred_region
          _
        $region84: #{tpu_custom_call.1} parent=11 // pred_fallthru
          _
        // Predicated region
        $region85: #{tpu_custom_call.1} parent=11 // pred_check
          %p762 = pneg %p493
        $region86: #{tpu_custom_call.1} parent=11 // pred_check_branch
          %764 = sbr.rel (%p762) target = $region88
        $region87: #{tpu_custom_call.1} parent=11 // pred_region
          _
        $region88: #{tpu_custom_call.1} parent=11 // pred_fallthru
          _
        // Predicated region
        $region89: #{tpu_custom_call.1} parent=11 // pred_check
          %p765 = pneg %p514
        $region90: #{tpu_custom_call.1} parent=11 // pred_check_branch
          %767 = sbr.rel (%p765) target = $region92
        $region91: #{tpu_custom_call.1} parent=11 // pred_region
          _
        $region92: #{tpu_custom_call.1} parent=11 // pred_fallthru
          _
        // Predicated region
        $region93: #{tpu_custom_call.1} parent=11 // pred_check
          %p768 = pneg %p535
        $region94: #{tpu_custom_call.1} parent=11 // pred_check_branch
          %770 = sbr.rel (%p768) target = $region96
        $region95: #{tpu_custom_call.1} parent=11 // pred_region
          _
        $region96: #{tpu_custom_call.1} parent=11 // pred_fallthru
          _
      $region12: #{tpu_custom_call.1} parent=5 // pred_fallthru
        _
      %p771 = scmp.lt.s32.totalorder %s42, 2
      // Predicated region
      $region97: #{tpu_custom_call.1} parent=5 // pred_check
        %p772 = pneg %p771
      $region98: #{tpu_custom_call.1} parent=5 // pred_check_branch
        %774 = sbr.rel (%p772) target = $region100
      $region99: #{tpu_custom_call.1} parent=5 // pred_region
        // Predicated region
        $region101: #{tpu_custom_call.1} parent=99 // pred_check
          %p775 = pneg %p62
        $region102: #{tpu_custom_call.1} parent=99 // pred_check_branch
          %777 = sbr.rel (%p775) target = $region104
        $region103: #{tpu_custom_call.1} parent=99 // pred_region
          %s778 = smul.u32 4, %s42
          %p779 = scmp.lt.s32.totalorder %s778, 7
          %s780 = scalar_select %p779, %s778, 7
          %s781 = smul.addr %s780, 8
          %s782 = scalar_lea.vmem %s0, %s781
          %s783 = smul.u32 4, %s42
        $region104: #{tpu_custom_call.1} parent=99 // pred_fallthru
          _
        // Predicated region
        $region105: #{tpu_custom_call.1} parent=99 // pred_check
          %p784 = pneg %p88
        $region106: #{tpu_custom_call.1} parent=99 // pred_check_branch
          %786 = sbr.rel (%p784) target = $region108
        $region107: #{tpu_custom_call.1} parent=99 // pred_region
          %s787 = sand.u32 %s78, 1
          %s788 = scalar_lea.sflag [#allocation3], %s787
          %s789 = sand.u32 %s78, 1
          %s790 = smul.addr %s789, 4
          %s791 = scalar_lea.vmem [#allocation2], %s790
          %s792 = smul.u32 4, %s42
          %s794 = ssub.s32 64, 64
          %795 = vsyncadd %s788, %s794
          %s796 = smul.addr %s792, 16
          %s797 = scalar_lea.hbm %s1, %s796
          %s798 = sshll.u32 %s791, 4
          %s799 = int_to_ptr.vmem [resolvable:$true] %s798
          %804 = dma.hbm_to_vmem [thread:$0]  %s797, 64, %s799, %s788, 16, 16, 1
        $region108: #{tpu_custom_call.1} parent=99 // pred_fallthru
          _
      $region100: #{tpu_custom_call.1} parent=5 // pred_fallthru
        _
      %p805 = scmp.le.s32.totalorder 1, %s42
      %p806 = scmp.lt.s32.totalorder %s42, 3
      %p807 = pnand %p805, %p806
      %p808 = pneg %p807
      // Predicated region
      $region109: #{tpu_custom_call.1} parent=5 // pred_check
        _
      $region110: #{tpu_custom_call.1} parent=5 // pred_check_branch
        %810 = sbr.rel (%p807) target = $region112
      $region111: #{tpu_custom_call.1} parent=5 // pred_region
        %s811 = ssub.s32 %s42, 1
        %s812 = sand.u32 %s81, 1
        %s813 = scalar_lea.sflag [#allocation3], %s812
        %s814 = sand.u32 %s81, 1
        %s815 = smul.addr %s814, 4
        %s816 = scalar_lea.vmem [#allocation2], %s815
        // Predicated region
        $region113: #{tpu_custom_call.1} parent=111 // pred_check
          %p817 = pneg %p94
        $region114: #{tpu_custom_call.1} parent=111 // pred_check_branch
          %819 = sbr.rel (%p817) target = $region116
        $region115: #{tpu_custom_call.1} parent=111 // pred_region
          %820 = dma.done %s813, 64
        $region116: #{tpu_custom_call.1} parent=111 // pred_fallthru
          _
        // Predicated region
        $region117: #{tpu_custom_call.1} parent=111 // pred_check
          %p821 = pneg %p115
        $region118: #{tpu_custom_call.1} parent=111 // pred_check_branch
          %823 = sbr.rel (%p821) target = $region120
        $region119: #{tpu_custom_call.1} parent=111 // pred_region
          %824 = dma.done [#allocation6], 16
        $region120: #{tpu_custom_call.1} parent=111 // pred_fallthru
          _
        // Predicated region
        $region121: #{tpu_custom_call.1} parent=111 // pred_check
          %p825 = pneg %p136
        $region122: #{tpu_custom_call.1} parent=111 // pred_check_branch
          %827 = sbr.rel (%p825) target = $region124
        $region123: #{tpu_custom_call.1} parent=111 // pred_region
          %828 = dma.done [#allocation6], 16
        $region124: #{tpu_custom_call.1} parent=111 // pred_fallthru
          _
        // Predicated region
        $region125: #{tpu_custom_call.1} parent=111 // pred_check
          %p829 = pneg %p157
        $region126: #{tpu_custom_call.1} parent=111 // pred_check_branch
          %831 = sbr.rel (%p829) target = $region128
        $region127: #{tpu_custom_call.1} parent=111 // pred_region
          %832 = dma.done [#allocation9], 16
        $region128: #{tpu_custom_call.1} parent=111 // pred_fallthru
          _
        // Predicated region
        $region129: #{tpu_custom_call.1} parent=111 // pred_check
          %p833 = pneg %p178
        $region130: #{tpu_custom_call.1} parent=111 // pred_check_branch
          %835 = sbr.rel (%p833) target = $region132
        $region131: #{tpu_custom_call.1} parent=111 // pred_region
          %836 = dma.done [#allocation9], 256
        $region132: #{tpu_custom_call.1} parent=111 // pred_fallthru
          _
        // Predicated region
        $region133: #{tpu_custom_call.1} parent=111 // pred_check
          %p837 = pneg %p199
        $region134: #{tpu_custom_call.1} parent=111 // pred_check_branch
          %839 = sbr.rel (%p837) target = $region136
        $region135: #{tpu_custom_call.1} parent=111 // pred_region
          %840 = dma.done [#allocation12], 16
        $region136: #{tpu_custom_call.1} parent=111 // pred_fallthru
          _
        // Predicated region
        $region137: #{tpu_custom_call.1} parent=111 // pred_check
          %p841 = pneg %p241
        $region138: #{tpu_custom_call.1} parent=111 // pred_check_branch
          %843 = sbr.rel (%p841) target = $region140
        $region139: #{tpu_custom_call.1} parent=111 // pred_region
          %844 = dma.done [#allocation12], 32
        $region140: #{tpu_custom_call.1} parent=111 // pred_fallthru
          _
        // Predicated region
        $region141: #{tpu_custom_call.1} parent=111 // pred_check
          %p845 = pneg %p283
        $region142: #{tpu_custom_call.1} parent=111 // pred_check_branch
          %847 = sbr.rel (%p845) target = $region144
        $region143: #{tpu_custom_call.1} parent=111 // pred_region
          %848 = dma.done [#allocation15], 32
        $region144: #{tpu_custom_call.1} parent=111 // pred_fallthru
          _
        // Predicated region
        $region145: #{tpu_custom_call.1} parent=111 // pred_check
          %p849 = pneg %p304
        $region146: #{tpu_custom_call.1} parent=111 // pred_check_branch
          %851 = sbr.rel (%p849) target = $region148
        $region147: #{tpu_custom_call.1} parent=111 // pred_region
          %852 = dma.done [#allocation15], 512
        $region148: #{tpu_custom_call.1} parent=111 // pred_fallthru
          _
        // Predicated region
        $region149: #{tpu_custom_call.1} parent=111 // pred_check
          %p853 = pneg %p325
        $region150: #{tpu_custom_call.1} parent=111 // pred_check_branch
          %855 = sbr.rel (%p853) target = $region152
        $region151: #{tpu_custom_call.1} parent=111 // pred_region
          %856 = dma.done [#allocation18], 32
        $region152: #{tpu_custom_call.1} parent=111 // pred_fallthru
          _
        // Predicated region
        $region153: #{tpu_custom_call.1} parent=111 // pred_check
          %p857 = pneg %p346
        $region154: #{tpu_custom_call.1} parent=111 // pred_check_branch
          %859 = sbr.rel (%p857) target = $region156
        $region155: #{tpu_custom_call.1} parent=111 // pred_region
          %860 = dma.done [#allocation18], 512
        $region156: #{tpu_custom_call.1} parent=111 // pred_fallthru
          _
        // Predicated region
        $region157: #{tpu_custom_call.1} parent=111 // pred_check
          %p861 = pneg %p367
        $region158: #{tpu_custom_call.1} parent=111 // pred_check_branch
          %863 = sbr.rel (%p861) target = $region160
        $region159: #{tpu_custom_call.1} parent=111 // pred_region
          %864 = dma.done [#allocation21], 32
        $region160: #{tpu_custom_call.1} parent=111 // pred_fallthru
          _
        // Predicated region
        $region161: #{tpu_custom_call.1} parent=111 // pred_check
          %p865 = pneg %p388
        $region162: #{tpu_custom_call.1} parent=111 // pred_check_branch
          %867 = sbr.rel (%p865) target = $region164
        $region163: #{tpu_custom_call.1} parent=111 // pred_region
          %868 = dma.done [#allocation21], 32
        $region164: #{tpu_custom_call.1} parent=111 // pred_fallthru
          _
        // Predicated region
        $region165: #{tpu_custom_call.1} parent=111 // pred_check
          %p869 = pneg %p409
        $region166: #{tpu_custom_call.1} parent=111 // pred_check_branch
          %871 = sbr.rel (%p869) target = $region168
        $region167: #{tpu_custom_call.1} parent=111 // pred_region
          %872 = dma.done [#allocation24], 32
        $region168: #{tpu_custom_call.1} parent=111 // pred_fallthru
          _
        // Predicated region
        $region169: #{tpu_custom_call.1} parent=111 // pred_check
          %p873 = pneg %p430
        $region170: #{tpu_custom_call.1} parent=111 // pred_check_branch
          %875 = sbr.rel (%p873) target = $region172
        $region171: #{tpu_custom_call.1} parent=111 // pred_region
          %876 = dma.done [#allocation24], 512
        $region172: #{tpu_custom_call.1} parent=111 // pred_fallthru
          _
        %s877 = smul.u32 4, %s47
        %p878 = scmp.lt.s32.totalorder %s877, 7
        %s879 = scalar_select %p878, %s877, 7
        %s880 = smul.addr %s879, 8
        %s881 = scalar_lea.vmem %s0, %s880
        %p882 = pneg %p68
        %p883 = pneg %p65
        %s884 = sand.u32 %s81, 1
        %s885 = scalar_lea.sflag [#allocation3], %s884
        %s886 = sand.u32 %s81, 1
        %s887 = smul.addr %s886, 4
        %s888 = scalar_lea.vmem [#allocation2], %s887
        %p889 = pneg %p94
        %p890 = pneg %p91
        %p891 = pneg %p115
        %p892 = pneg %p112
        %p893 = pneg %p136
        %p894 = pneg %p133
        %p895 = pneg %p157
        %p896 = pneg %p154
        %p897 = pneg %p178
        %p898 = pneg %p175
        %p899 = pneg %p199
        %p900 = pneg %p196
        %p901 = pneg %p220
        %p902 = pneg %p217
        %p903 = pneg %p241
        %p904 = pneg %p238
        %p905 = pneg %p262
        %p906 = pneg %p259
        %p907 = pneg %p283
        %p908 = pneg %p280
        %p909 = pneg %p304
        %p910 = pneg %p301
        %p911 = pneg %p325
        %p912 = pneg %p322
        %p913 = pneg %p346
        %p914 = pneg %p343
        %p915 = pneg %p367
        %p916 = pneg %p364
        %p917 = pneg %p388
        %p918 = pneg %p385
        %p919 = pneg %p409
        %p920 = pneg %p406
        %p921 = pneg %p430
        %p922 = pneg %p427
        %p923 = pneg %p451
        %p924 = pneg %p448
        %p925 = pneg %p472
        %p926 = pneg %p469
        %p927 = pneg %p493
        %p928 = pneg %p490
        %p929 = pneg %p514
        %p930 = pneg %p511
        %p931 = pneg %p535
        %p932 = pneg %p532
        %p933 = pneg %p561
        %p934 = pneg %p558
        %s935 = sand.u32 %s548, 1
        %s936 = scalar_lea.sflag [#allocation4], %s935
        %s937 = sand.u32 %s548, 1
        %s938 = smul.addr %s937, 4
        %s939 = scalar_lea.vmem [#allocation26], %s938
        %s940 = smul.u32 4, %s47
        %p941 = scmp.lt.s32.totalorder %s940, 7
        %s942 = scalar_select %p941, %s940, 7
        %s943 = smul.addr %s942, 8
        %s944 = scalar_lea.vmem %s0, %s943
        %s945 = smul.u32 4, %s47
        %s946 = smul.u32 4, %s47
        %s947 = smul.u32 4, %s47
        %v949 = vld [vmem:[%s816] sm:$0x1]
        %v950 = vld [vmem:[%s816 + $0x1] sm:$0x1]
        %v951 = vld [vmem:[%s816 + $0x2] sm:$0x1]
        %v952 = vld [vmem:[%s816 + $0x3] sm:$0x1]
        %v953 = vld [vmem:[%s944] sm:$0xff]
        %v954 = vld [vmem:[%s944 + $0x8] sm:$0xff]
        %v955 = vld [vmem:[%s944 + $0x10] sm:$0xff]
        %v956 = vld [vmem:[%s944 + $0x18] sm:$0xff]
        %v957 = vld [vmem:[#allocation7] sm:$0x1]
        %v958 = vld [vmem:[#allocation8] sm:$0x1]
        %vm959 = vcmask 261120
        %v960 = vsel %vm959, %v953, 0.0
        %961 = vadd.xlane.f32.xlu0 %v960
        %v962 = vpop.xlane.xlu0 %961
        %v963 = vsel %vm959, %v954, 0.0
        %964 = vadd.xlane.f32.xlu0 %v963
        %v965 = vpop.xlane.xlu0 %964
        %v966 = vsel %vm959, %v955, 0.0
        %967 = vadd.xlane.f32.xlu0 %v966
        %v968 = vpop.xlane.xlu0 %967
        %v969 = vsel %vm959, %v956, 0.0
        %970 = vadd.xlane.f32.xlu0 %v969
        %v971 = vpop.xlane.xlu0 %970
        %v972 = vrcp.pop 32.0
        %v973 = vmul.f32 %v962, %v972
        %v974 = vmul.f32 %v965, %v972
        %v975 = vmul.f32 %v968, %v972
        %v976 = vmul.f32 %v971, %v972
        %v977 = vsub.f32 %v953, %v973
        %v978 = vsub.f32 %v954, %v974
        %v979 = vsub.f32 %v955, %v975
        %v980 = vsub.f32 %v956, %v976
        %v981 = vmul.f32 %v977, %v977
        %v982 = vmul.f32 %v978, %v978
        %v983 = vmul.f32 %v979, %v979
        %v984 = vmul.f32 %v980, %v980
        %v985 = vsel %vm959, %v981, 0.0
        %986 = vadd.xlane.f32.xlu0 %v985
        %v987 = vpop.xlane.xlu0 %986
        %v988 = vsel %vm959, %v982, 0.0
        %989 = vadd.xlane.f32.xlu0 %v988
        %v990 = vpop.xlane.xlu0 %989
        %v991 = vsel %vm959, %v983, 0.0
        %992 = vadd.xlane.f32.xlu0 %v991
        %v993 = vpop.xlane.xlu0 %992
        %v994 = vsel %vm959, %v984, 0.0
        %995 = vadd.xlane.f32.xlu0 %v994
        %v996 = vpop.xlane.xlu0 %995
        %v997 = vmul.f32 %v987, %v972
        %v998 = vmul.f32 %v990, %v972
        %v999 = vmul.f32 %v993, %v972
        %v1000 = vmul.f32 %v996, %v972
        %v1001 = vadd.f32 %v997, 1e-12
        %v1002 = vadd.f32 %v998, 1e-12
        %v1003 = vadd.f32 %v999, 1e-12
        %v1004 = vadd.f32 %v1000, 1e-12
        %v1005 = vrsqrt.pop %v1001
        %v1006 = vrsqrt.pop %v1002
        %v1007 = vrsqrt.pop %v1003
        %v1008 = vrsqrt.pop %v1004
        %v1009 = vmul.f32 %v977, %v1005
        %v1010 = vmul.f32 %v978, %v1006
        %v1011 = vmul.f32 %v979, %v1007
        %v1012 = vmul.f32 %v980, %v1008
        %v1014 = vlaneseq
        %v1015 = vshrl.u32 %v1014, 7
        %v1016 = vsub.s32 0, %v1015
        %v1017 = vrot.slane %v957, %v1016
        %v1019 = vmul.f32 %v1009, %v1017
        %v1020 = vmul.f32 %v1010, %v1017
        %v1021 = vmul.f32 %v1011, %v1017
        %v1022 = vmul.f32 %v1012, %v1017
        %v1024 = vlaneseq
        %v1025 = vshrl.u32 %v1024, 7
        %v1026 = vsub.s32 0, %v1025
        %v1027 = vrot.slane %v958, %v1026
        %v1029 = vadd.f32 %v1019, %v1027
        %v1030 = vadd.f32 %v1020, %v1027
        %v1031 = vadd.f32 %v1021, %v1027
        %v1032 = vadd.f32 %v1022, %v1027
        %v1033 = vpack.c.bf16 %v1030, %v1029
        %v1034 = vpack.c.bf16 %v1032, %v1031
        %v1035 = vld [vmem:[#allocation10] sm:$0xf]
        %v1036 = vld [vmem:[#allocation10 + $0x4] sm:$0xf]
        %v1037 = vld [vmem:[#allocation10 + $0x8] sm:$0xf]
        %v1038 = vld [vmem:[#allocation10 + $0xc] sm:$0xf]
        %v1039 = vld [vmem:[#allocation11] sm:$0x1]
        %v1041 = vlaneseq
        %v1042 = vshrl.u32 %v1041, 7
        %v1043 = vsub.s32 0, %v1042
        %v1044 = vrot.slane %v1039, %v1043
        %v1050 = vunpack.c.l.b16 %v1035
        %v1051 = vunpack.c.l.b16 %v1036
        %v1052 = vunpack.c.l.b16 %v1037
        %v1053 = vunpack.c.l.b16 %v1038
        %v1054 = vpack.c.b16 %v1051, %v1050
        %v1055 = vpack.c.b16 %v1053, %v1052
        %v1059 = vsel %vm959, %v1033, 0
        %v1062 = vsel %vm959, %v1034, 0
        %1064 = vmatprep.subr.bf16.mxu0 0
        %1065 = vmatpush1.bf16.msra.mxu0 %v1054
        %1066 = vmatprep.subr.bf16.mxu0 0
        %1067 = vmatpush1.bf16.msra.mxu0 %v1055
        %1068 = vmatprep.subr.bf16.mxu0 0
        %1069 = vmatpush1.bf16.msra.mxu0 0
        %1070 = vmatprep.subr.bf16.mxu0 0
        %1071 = vmatpush1.bf16.msra.mxu0 0
        %1072 = vmatprep.subr.bf16.mxu0 0
        %1073 = vmatpush1.bf16.msra.mxu0 0
        %1074 = vmatprep.subr.bf16.mxu0 0
        %1075 = vmatpush1.bf16.msra.mxu0 0
        %1076 = vmatprep.subr.bf16.mxu0 0
        %1077 = vmatpush1.bf16.msra.mxu0 0
        %1078 = vmatprep.subr.bf16.mxu0 0
        %1079 = vmatpush1.bf16.msra.mxu0 0
        %1080 = vmatprep.subr.bf16.mxu0 0
        %1081 = vmatpush1.bf16.msra.mxu0 0
        %1082 = vmatprep.subr.bf16.mxu0 0
        %1083 = vmatpush1.bf16.msra.mxu0 0
        %1084 = vmatprep.subr.bf16.mxu0 0
        %1085 = vmatpush1.bf16.msra.mxu0 0
        %1086 = vmatprep.subr.bf16.mxu0 0
        %1087 = vmatpush1.bf16.msra.mxu0 0
        %1088 = vmatprep.subr.bf16.mxu0 0
        %1089 = vmatpush1.bf16.msra.mxu0 0
        %1090 = vmatprep.subr.bf16.mxu0 0
        %1091 = vmatpush1.bf16.msra.mxu0 0
        %1092 = vmatprep.subr.bf16.mxu0 0
        %1093 = vmatpush1.bf16.msra.mxu0 0
        %1094 = vmatprep.subr.bf16.mxu0 0
        %1095 = vmatpush1.bf16.msra.mxu0 0
        %1096 = vmatprep.mubr.bf16.mxu0 0
        %1097 = vmatmul.mubr.bf16.gmra.mrb[0].mxu0 %v1059
        %v1098 = vpop.f32.mrb[0].mxu0
        %v1099 = vadd.f32 %v1044, %v1098
        %v1100 = vpop.f32.mrb[0].mxu0
        %v1101 = vpop.f32.mrb[0].mxu0
        %v1102 = vadd.f32 %v1044, %v1101
        %v1103 = vpop.f32.mrb[0].mxu0
        %1104 = vmatprep.mubr.bf16.mxu0 0
        %1105 = vmatmul.mubr.bf16.gmra.mrb[0].mxu0 %v1062
        %v1106 = vpop.f32.mrb[0].mxu0
        %v1107 = vadd.f32 %v1044, %v1106
        %v1108 = vpop.f32.mrb[0].mxu0
        %v1109 = vpop.f32.mrb[0].mxu0
        %v1110 = vadd.f32 %v1044, %v1109
        %v1111 = vpop.f32.mrb[0].mxu0
        %1112 = vdwg.mxu0
        %v1113 = vld [vmem:[#allocation5] sm:$0x1]
        %v1118 = vrot.slane %v1099, 7
        %v1119 = vrot.slane %v1102, 7
        %v1120 = vrot.slane %v1107, 7
        %v1121 = vrot.slane %v1110, 7
        %vm1126 = vcmask 1040384
        %v1127 = vsel %vm1126, %v1113, %v1118
        %v1128 = vsel %vm1126, %v1113, %v1119
        %v1129 = vsel %vm1126, %v1113, %v1120
        %v1130 = vsel %vm1126, %v1113, %v1121
        %v1131 = vsel %vm1126, %v1118, 0.0
        %v1132 = vsel %vm1126, %v1119, 0.0
        %v1133 = vsel %vm1126, %v1120, 0.0
        %v1134 = vsel %vm1126, %v1121, 0.0
        %v1135 = vld [vmem:[%s7] sm:$0xf]
        %v1136 = vld [vmem:[%s7 + $0x4] sm:$0xf]
        %v1137 = vld [vmem:[%s7 + $0x8] sm:$0xf]
        %v1138 = vld [vmem:[%s7 + $0xc] sm:$0xf]
        %v1139 = vld [vmem:[#allocation13] sm:$0x1]
        %v1140 = vld [vmem:[%s9] sm:$0xf]
        %v1141 = vld [vmem:[%s9 + $0x4] sm:$0xf]
        %v1142 = vld [vmem:[%s9 + $0x8] sm:$0xf]
        %v1143 = vld [vmem:[%s9 + $0xc] sm:$0xf]
        %v1144 = vld [vmem:[#allocation14] sm:$0x1]
        %v1145 = vld [vmem:[#allocation16] sm:$0xf]
        %v1146 = vld [vmem:[#allocation16 + $0x4] sm:$0xf]
        %v1147 = vld [vmem:[#allocation16 + $0x8] sm:$0xf]
        %v1148 = vld [vmem:[#allocation16 + $0xc] sm:$0xf]
        %v1149 = vld [vmem:[#allocation17] sm:$0x1]
        %v1150 = vld [vmem:[#allocation19] sm:$0xf]
        %v1151 = vld [vmem:[#allocation19 + $0x4] sm:$0xf]
        %v1152 = vld [vmem:[#allocation19 + $0x8] sm:$0xf]
        %v1153 = vld [vmem:[#allocation19 + $0xc] sm:$0xf]
        %v1154 = vld [vmem:[#allocation20] sm:$0x1]
        %v1155 = vld [vmem:[#allocation22] sm:$0x1]
        %v1156 = vld [vmem:[#allocation23] sm:$0x1]
        %v1157 = vld [vmem:[#allocation25] sm:$0xf]
        %v1158 = vld [vmem:[#allocation25 + $0x4] sm:$0xf]
        %v1159 = vld [vmem:[#allocation25 + $0x8] sm:$0xf]
        %v1160 = vld [vmem:[#allocation25 + $0xc] sm:$0xf]
        %v1161 = vld [vmem:[%s18] sm:$0x1]
        %v1162 = vld [vmem:[%s19] sm:$0xf]
        %v1163 = vld [vmem:[%s19 + $0x4] sm:$0xf]
        %v1164 = vld [vmem:[%s19 + $0x8] sm:$0xf]
        %v1165 = vld [vmem:[%s19 + $0xc] sm:$0xf]
        %v1166 = vld [vmem:[%s19 + $0x10] sm:$0xf]
        %v1167 = vld [vmem:[%s19 + $0x14] sm:$0xf]
        %v1168 = vld [vmem:[%s19 + $0x18] sm:$0xf]
        %v1169 = vld [vmem:[%s19 + $0x1c] sm:$0xf]
        %v1170 = vld [vmem:[%s20] sm:$0x1]
        %v1171 = vld [vmem:[%s21] sm:$0x1]
        %v1172 = vld [vmem:[%s22] sm:$0x1]
        %v1173 = vpack.c.bf16 %v1131, %v1127
        %v1174 = vpack.c.bf16 %v1132, %v1128
        %v1175 = vpack.c.bf16 %v1133, %v1129
        %v1176 = vpack.c.bf16 %v1134, %v1130
        %v1178 = vlaneseq
        %v1179 = vshrl.u32 %v1178, 7
        %v1180 = vsub.s32 0, %v1179
        %v1181 = vrot.slane %v1139, %v1180
        %v1187 = vunpack.c.l.b16 %v1135
        %v1188 = vunpack.c.l.b16 %v1136
        %v1189 = vunpack.c.l.b16 %v1137
        %v1190 = vunpack.c.l.b16 %v1138
        %v1191 = vpack.c.b16 %v1188, %v1187
        %v1192 = vpack.c.b16 %v1190, %v1189
        %v1196 = vsel %vm959, %v1173, 0
        %v1199 = vsel %vm959, %v1174, 0
        %v1202 = vsel %vm959, %v1175, 0
        %v1205 = vsel %vm959, %v1176, 0
        %1207 = vmatprep.subr.bf16.mxu0 0
        %1208 = vmatpush1.bf16.msra.mxu0 %v1191
        %1209 = vmatprep.subr.bf16.mxu0 0
        %1210 = vmatpush1.bf16.msra.mxu0 %v1192
        %1211 = vmatprep.subr.bf16.mxu0 0
        %1212 = vmatpush1.bf16.msra.mxu0 0
        %1213 = vmatprep.subr.bf16.mxu0 0
        %1214 = vmatpush1.bf16.msra.mxu0 0
        %1215 = vmatprep.subr.bf16.mxu0 0
        %1216 = vmatpush1.bf16.msra.mxu0 0
        %1217 = vmatprep.subr.bf16.mxu0 0
        %1218 = vmatpush1.bf16.msra.mxu0 0
        %1219 = vmatprep.subr.bf16.mxu0 0
        %1220 = vmatpush1.bf16.msra.mxu0 0
        %1221 = vmatprep.subr.bf16.mxu0 0
        %1222 = vmatpush1.bf16.msra.mxu0 0
        %1223 = vmatprep.subr.bf16.mxu0 0
        %1224 = vmatpush1.bf16.msra.mxu0 0
        %1225 = vmatprep.subr.bf16.mxu0 0
        %1226 = vmatpush1.bf16.msra.mxu0 0
        %1227 = vmatprep.subr.bf16.mxu0 0
        %1228 = vmatpush1.bf16.msra.mxu0 0
        %1229 = vmatprep.subr.bf16.mxu0 0
        %1230 = vmatpush1.bf16.msra.mxu0 0
        %1231 = vmatprep.subr.bf16.mxu0 0
        %1232 = vmatpush1.bf16.msra.mxu0 0
        %1233 = vmatprep.subr.bf16.mxu0 0
        %1234 = vmatpush1.bf16.msra.mxu0 0
        %1235 = vmatprep.subr.bf16.mxu0 0
        %1236 = vmatpush1.bf16.msra.mxu0 0
        %1237 = vmatprep.subr.bf16.mxu0 0
        %1238 = vmatpush1.bf16.msra.mxu0 0
        %1239 = vmatprep.mubr.bf16.mxu0 0
        %1240 = vmatmul.mubr.bf16.gmra.mrb[0].mxu0 %v1196
        %v1241 = vpop.f32.mrb[0].mxu0
        %v1242 = vadd.f32 %v1181, %v1241
        %v1243 = vpop.f32.mrb[0].mxu0
        %v1244 = vpop.f32.mrb[0].mxu0
        %v1245 = vadd.f32 %v1181, %v1244
        %v1246 = vpop.f32.mrb[0].mxu0
        %1247 = vmatprep.mubr.bf16.mxu0 0
        %1248 = vmatmul.mubr.bf16.gmra.mrb[0].mxu0 %v1199
        %v1249 = vpop.f32.mrb[0].mxu0
        %v1250 = vadd.f32 %v1181, %v1249
        %v1251 = vpop.f32.mrb[0].mxu0
        %v1252 = vpop.f32.mrb[0].mxu0
        %v1253 = vadd.f32 %v1181, %v1252
        %v1254 = vpop.f32.mrb[0].mxu0
        %1255 = vmatprep.mubr.bf16.mxu0 0
        %1256 = vmatmul.mubr.bf16.gmra.mrb[0].mxu0 %v1202
        %v1257 = vpop.f32.mrb[0].mxu0
        %v1258 = vadd.f32 %v1181, %v1257
        %v1259 = vpop.f32.mrb[0].mxu0
        %v1260 = vpop.f32.mrb[0].mxu0
        %v1261 = vadd.f32 %v1181, %v1260
        %v1262 = vpop.f32.mrb[0].mxu0
        %1263 = vmatprep.mubr.bf16.mxu0 0
        %1264 = vmatmul.mubr.bf16.gmra.mrb[0].mxu0 %v1205
        %v1265 = vpop.f32.mrb[0].mxu0
        %v1266 = vadd.f32 %v1181, %v1265
        %v1267 = vpop.f32.mrb[0].mxu0
        %v1268 = vpop.f32.mrb[0].mxu0
        %v1269 = vadd.f32 %v1181, %v1268
        %v1270 = vpop.f32.mrb[0].mxu0
        %1271 = vdwg.mxu0
        %v1273 = vlaneseq
        %v1274 = vshrl.u32 %v1273, 7
        %v1275 = vsub.s32 0, %v1274
        %v1276 = vrot.slane %v1144, %v1275
        %v1282 = vunpack.c.l.b16 %v1140
        %v1283 = vunpack.c.l.b16 %v1141
        %v1284 = vunpack.c.l.b16 %v1142
        %v1285 = vunpack.c.l.b16 %v1143
        %v1286 = vpack.c.b16 %v1283, %v1282
        %v1287 = vpack.c.b16 %v1285, %v1284
        %1290 = vmatprep.subr.bf16.mxu0 0
        %1291 = vmatpush1.bf16.msra.mxu0 %v1286
        %1292 = vmatprep.subr.bf16.mxu0 0
        %1293 = vmatpush1.bf16.msra.mxu0 %v1287
        %1294 = vmatprep.subr.bf16.mxu0 0
        %1295 = vmatpush1.bf16.msra.mxu0 0
        %1296 = vmatprep.subr.bf16.mxu0 0
        %1297 = vmatpush1.bf16.msra.mxu0 0
        %1298 = vmatprep.subr.bf16.mxu0 0
        %1299 = vmatpush1.bf16.msra.mxu0 0
        %1300 = vmatprep.subr.bf16.mxu0 0
        %1301 = vmatpush1.bf16.msra.mxu0 0
        %1302 = vmatprep.subr.bf16.mxu0 0
        %1303 = vmatpush1.bf16.msra.mxu0 0
        %1304 = vmatprep.subr.bf16.mxu0 0
        %1305 = vmatpush1.bf16.msra.mxu0 0
        %1306 = vmatprep.subr.bf16.mxu0 0
        %1307 = vmatpush1.bf16.msra.mxu0 0
        %1308 = vmatprep.subr.bf16.mxu0 0
        %1309 = vmatpush1.bf16.msra.mxu0 0
        %1310 = vmatprep.subr.bf16.mxu0 0
        %1311 = vmatpush1.bf16.msra.mxu0 0
        %1312 = vmatprep.subr.bf16.mxu0 0
        %1313 = vmatpush1.bf16.msra.mxu0 0
        %1314 = vmatprep.subr.bf16.mxu0 0
        %1315 = vmatpush1.bf16.msra.mxu0 0
        %1316 = vmatprep.subr.bf16.mxu0 0
        %1317 = vmatpush1.bf16.msra.mxu0 0
        %1318 = vmatprep.subr.bf16.mxu0 0
        %1319 = vmatpush1.bf16.msra.mxu0 0
        %1320 = vmatprep.subr.bf16.mxu0 0
        %1321 = vmatpush1.bf16.msra.mxu0 0
        %1322 = vmatprep.mubr.bf16.mxu0 0
        %1323 = vmatmul.mubr.bf16.gmra.mrb[0].mxu0 %v1196
        %v1324 = vpop.f32.mrb[0].mxu0
        %v1325 = vadd.f32 %v1276, %v1324
        %v1326 = vpop.f32.mrb[0].mxu0
        %v1327 = vpop.f32.mrb[0].mxu0
        %v1328 = vadd.f32 %v1276, %v1327
        %v1329 = vpop.f32.mrb[0].mxu0
        %1330 = vmatprep.mubr.bf16.mxu0 0
        %1331 = vmatmul.mubr.bf16.gmra.mrb[0].mxu0 %v1199
        %v1332 = vpop.f32.mrb[0].mxu0
        %v1333 = vadd.f32 %v1276, %v1332
        %v1334 = vpop.f32.mrb[0].mxu0
        %v1335 = vpop.f32.mrb[0].mxu0
        %v1336 = vadd.f32 %v1276, %v1335
        %v1337 = vpop.f32.mrb[0].mxu0
        %1338 = vmatprep.mubr.bf16.mxu0 0
        %1339 = vmatmul.mubr.bf16.gmra.mrb[0].mxu0 %v1202
        %v1340 = vpop.f32.mrb[0].mxu0
        %v1341 = vadd.f32 %v1276, %v1340
        %v1342 = vpop.f32.mrb[0].mxu0
        %v1343 = vpop.f32.mrb[0].mxu0
        %v1344 = vadd.f32 %v1276, %v1343
        %v1345 = vpop.f32.mrb[0].mxu0
        %1346 = vmatprep.mubr.bf16.mxu0 0
        %1347 = vmatmul.mubr.bf16.gmra.mrb[0].mxu0 %v1205
        %v1348 = vpop.f32.mrb[0].mxu0
        %v1349 = vadd.f32 %v1276, %v1348
        %v1350 = vpop.f32.mrb[0].mxu0
        %v1351 = vpop.f32.mrb[0].mxu0
        %v1352 = vadd.f32 %v1276, %v1351
        %v1353 = vpop.f32.mrb[0].mxu0
        %1354 = vdwg.mxu0
        %v1356 = vlaneseq
        %v1357 = vshrl.u32 %v1356, 7
        %v1358 = vsub.s32 0, %v1357
        %v1359 = vrot.slane %v1149, %v1358
        %v1365 = vunpack.c.l.b16 %v1145
        %v1366 = vunpack.c.l.b16 %v1146
        %v1367 = vunpack.c.l.b16 %v1147
        %v1368 = vunpack.c.l.b16 %v1148
        %v1369 = vpack.c.b16 %v1366, %v1365
        %v1370 = vpack.c.b16 %v1368, %v1367
        %1373 = vmatprep.subr.bf16.mxu0 0
        %1374 = vmatpush1.bf16.msra.mxu0 %v1369
        %1375 = vmatprep.subr.bf16.mxu0 0
        %1376 = vmatpush1.bf16.msra.mxu0 %v1370
        %1377 = vmatprep.subr.bf16.mxu0 0
        %1378 = vmatpush1.bf16.msra.mxu0 0
        %1379 = vmatprep.subr.bf16.mxu0 0
        %1380 = vmatpush1.bf16.msra.mxu0 0
        %1381 = vmatprep.subr.bf16.mxu0 0
        %1382 = vmatpush1.bf16.msra.mxu0 0
        %1383 = vmatprep.subr.bf16.mxu0 0
        %1384 = vmatpush1.bf16.msra.mxu0 0
        %1385 = vmatprep.subr.bf16.mxu0 0
        %1386 = vmatpush1.bf16.msra.mxu0 0
        %1387 = vmatprep.subr.bf16.mxu0 0
        %1388 = vmatpush1.bf16.msra.mxu0 0
        %1389 = vmatprep.subr.bf16.mxu0 0
        %1390 = vmatpush1.bf16.msra.mxu0 0
        %1391 = vmatprep.subr.bf16.mxu0 0
        %1392 = vmatpush1.bf16.msra.mxu0 0
        %1393 = vmatprep.subr.bf16.mxu0 0
        %1394 = vmatpush1.bf16.msra.mxu0 0
        %1395 = vmatprep.subr.bf16.mxu0 0
        %1396 = vmatpush1.bf16.msra.mxu0 0
        %1397 = vmatprep.subr.bf16.mxu0 0
        %1398 = vmatpush1.bf16.msra.mxu0 0
        %1399 = vmatprep.subr.bf16.mxu0 0
        %1400 = vmatpush1.bf16.msra.mxu0 0
        %1401 = vmatprep.subr.bf16.mxu0 0
        %1402 = vmatpush1.bf16.msra.mxu0 0
        %1403 = vmatprep.subr.bf16.mxu0 0
        %1404 = vmatpush1.bf16.msra.mxu0 0
        %1405 = vmatprep.mubr.bf16.mxu0 0
        %1406 = vmatmul.mubr.bf16.gmra.mrb[0].mxu0 %v1196
        %v1407 = vpop.f32.mrb[0].mxu0
        %v1408 = vadd.f32 %v1359, %v1407
        %v1409 = vpop.f32.mrb[0].mxu0
        %v1410 = vpop.f32.mrb[0].mxu0
        %v1411 = vadd.f32 %v1359, %v1410
        %v1412 = vpop.f32.mrb[0].mxu0
        %1413 = vmatprep.mubr.bf16.mxu0 0
        %1414 = vmatmul.mubr.bf16.gmra.mrb[0].mxu0 %v1199
        %v1415 = vpop.f32.mrb[0].mxu0
        %v1416 = vadd.f32 %v1359, %v1415
        %v1417 = vpop.f32.mrb[0].mxu0
        %v1418 = vpop.f32.mrb[0].mxu0
        %v1419 = vadd.f32 %v1359, %v1418
        %v1420 = vpop.f32.mrb[0].mxu0
        %1421 = vmatprep.mubr.bf16.mxu0 0
        %1422 = vmatmul.mubr.bf16.gmra.mrb[0].mxu0 %v1202
        %v1423 = vpop.f32.mrb[0].mxu0
        %v1424 = vadd.f32 %v1359, %v1423
        %v1425 = vpop.f32.mrb[0].mxu0
        %v1426 = vpop.f32.mrb[0].mxu0
        %v1427 = vadd.f32 %v1359, %v1426
        %v1428 = vpop.f32.mrb[0].mxu0
        %1429 = vmatprep.mubr.bf16.mxu0 0
        %1430 = vmatmul.mubr.bf16.gmra.mrb[0].mxu0 %v1205
        %v1431 = vpop.f32.mrb[0].mxu0
        %v1432 = vadd.f32 %v1359, %v1431
        %v1433 = vpop.f32.mrb[0].mxu0
        %v1434 = vpop.f32.mrb[0].mxu0
        %v1435 = vadd.f32 %v1359, %v1434
        %v1436 = vpop.f32.mrb[0].mxu0
        %1437 = vdwg.mxu0
        %v1438 = vpack.c.bf16 %v1245, %v1242
        %v1439 = vpack.c.bf16 %v1253, %v1250
        %v1440 = vpack.c.bf16 %v1261, %v1258
        %v1441 = vpack.c.bf16 %v1269, %v1266
        %v1442 = vpack.c.bf16 %v1328, %v1325
        %v1443 = vpack.c.bf16 %v1336, %v1333
        %v1444 = vpack.c.bf16 %v1344, %v1341
        %v1445 = vpack.c.bf16 %v1352, %v1349
        %v1446 = vpack.c.bf16 %v1411, %v1408
        %v1447 = vpack.c.bf16 %v1419, %v1416
        %v1448 = vpack.c.bf16 %v1427, %v1424
        %v1449 = vpack.c.bf16 %v1435, %v1432
        %vm1450 = vcmask 64512
        %v1452 = vsel %vm1450, %v1438, 0
        %v1455 = vsel %vm1450, %v1442, 0
        %1457 = vmatprep.subr.bf16.mxu0 0
        %1458 = vmatpush1.bf16.xpose.msra.mxu0 %v1455
        %1459 = vmatprep.subr.bf16.mxu0 0
        %1460 = vmatpush1.bf16.xpose.msra.mxu0 0
        %1461 = vmatprep.subr.bf16.mxu0 0
        %1462 = vmatpush1.bf16.xpose.msra.mxu0 0
        %1463 = vmatprep.subr.bf16.mxu0 0
        %1464 = vmatpush1.bf16.xpose.msra.mxu0 0
        %1465 = vmatprep.subr.bf16.mxu0 0
        %1466 = vmatpush1.bf16.xpose.msra.mxu0 0
        %1467 = vmatprep.subr.bf16.mxu0 0
        %1468 = vmatpush1.bf16.xpose.msra.mxu0 0
        %1469 = vmatprep.subr.bf16.mxu0 0
        %1470 = vmatpush1.bf16.xpose.msra.mxu0 0
        %1471 = vmatprep.subr.bf16.mxu0 0
        %1472 = vmatpush1.bf16.xpose.msra.mxu0 0
        %1473 = vmatprep.subr.bf16.mxu0 0
        %1474 = vmatpush1.bf16.xpose.msra.mxu0 0
        %1475 = vmatprep.subr.bf16.mxu0 0
        %1476 = vmatpush1.bf16.xpose.msra.mxu0 0
        %1477 = vmatprep.subr.bf16.mxu0 0
        %1478 = vmatpush1.bf16.xpose.msra.mxu0 0
        %1479 = vmatprep.subr.bf16.mxu0 0
        %1480 = vmatpush1.bf16.xpose.msra.mxu0 0
        %1481 = vmatprep.subr.bf16.mxu0 0
        %1482 = vmatpush1.bf16.xpose.msra.mxu0 0
        %1483 = vmatprep.subr.bf16.mxu0 0
        %1484 = vmatpush1.bf16.xpose.msra.mxu0 0
        %1485 = vmatprep.subr.bf16.mxu0 0
        %1486 = vmatpush1.bf16.xpose.msra.mxu0 0
        %1487 = vmatprep.subr.bf16.mxu0 0
        %1488 = vmatpush1.bf16.xpose.msra.mxu0 0
        %1489 = vmatprep.mubr.bf16.mxu0 0
        %1490 = vmatmul.mubr.bf16.gmra.mrb[0].mxu0 %v1452
        %v1491 = vpop.f32.mrb[0].mxu0
        %v1492 = vadd.f32 0.0, %v1491
        %v1493 = vpop.f32.mrb[0].mxu0
        %v1494 = vpop.f32.mrb[0].mxu0
        %v1495 = vadd.f32 0.0, %v1494
        %v1496 = vpop.f32.mrb[0].mxu0
        %1497 = vdwg.mxu0
        %v1499 = vsel %vm1450, %v1439, 0
        %v1502 = vsel %vm1450, %v1443, 0
        %1504 = vmatprep.subr.bf16.mxu0 0
        %1505 = vmatpush1.bf16.xpose.msra.mxu0 %v1502
        %1506 = vmatprep.subr.bf16.mxu0 0
        %1507 = vmatpush1.bf16.xpose.msra.mxu0 0
        %1508 = vmatprep.subr.bf16.mxu0 0
        %1509 = vmatpush1.bf16.xpose.msra.mxu0 0
        %1510 = vmatprep.subr.bf16.mxu0 0
        %1511 = vmatpush1.bf16.xpose.msra.mxu0 0
        %1512 = vmatprep.subr.bf16.mxu0 0
        %1513 = vmatpush1.bf16.xpose.msra.mxu0 0
        %1514 = vmatprep.subr.bf16.mxu0 0
        %1515 = vmatpush1.bf16.xpose.msra.mxu0 0
        %1516 = vmatprep.subr.bf16.mxu0 0
        %1517 = vmatpush1.bf16.xpose.msra.mxu0 0
        %1518 = vmatprep.subr.bf16.mxu0 0
        %1519 = vmatpush1.bf16.xpose.msra.mxu0 0
        %1520 = vmatprep.subr.bf16.mxu0 0
        %1521 = vmatpush1.bf16.xpose.msra.mxu0 0
        %1522 = vmatprep.subr.bf16.mxu0 0
        %1523 = vmatpush1.bf16.xpose.msra.mxu0 0
        %1524 = vmatprep.subr.bf16.mxu0 0
        %1525 = vmatpush1.bf16.xpose.msra.mxu0 0
        %1526 = vmatprep.subr.bf16.mxu0 0
        %1527 = vmatpush1.bf16.xpose.msra.mxu0 0
        %1528 = vmatprep.subr.bf16.mxu0 0
        %1529 = vmatpush1.bf16.xpose.msra.mxu0 0
        %1530 = vmatprep.subr.bf16.mxu0 0
        %1531 = vmatpush1.bf16.xpose.msra.mxu0 0
        %1532 = vmatprep.subr.bf16.mxu0 0
        %1533 = vmatpush1.bf16.xpose.msra.mxu0 0
        %1534 = vmatprep.subr.bf16.mxu0 0
        %1535 = vmatpush1.bf16.xpose.msra.mxu0 0
        %1536 = vmatprep.mubr.bf16.mxu0 0
        %1537 = vmatmul.mubr.bf16.gmra.mrb[0].mxu0 %v1499
        %v1538 = vpop.f32.mrb[0].mxu0
        %v1539 = vadd.f32 0.0, %v1538
        %v1540 = vpop.f32.mrb[0].mxu0
        %v1541 = vpop.f32.mrb[0].mxu0
        %v1542 = vadd.f32 0.0, %v1541
        %v1543 = vpop.f32.mrb[0].mxu0
        %1544 = vdwg.mxu0
        %v1546 = vsel %vm1450, %v1440, 0
        %v1549 = vsel %vm1450, %v1444, 0
        %1551 = vmatprep.subr.bf16.mxu0 0
        %1552 = vmatpush1.bf16.xpose.msra.mxu0 %v1549
        %1553 = vmatprep.subr.bf16.mxu0 0
        %1554 = vmatpush1.bf16.xpose.msra.mxu0 0
        %1555 = vmatprep.subr.bf16.mxu0 0
        %1556 = vmatpush1.bf16.xpose.msra.mxu0 0
        %1557 = vmatprep.subr.bf16.mxu0 0
        %1558 = vmatpush1.bf16.xpose.msra.mxu0 0
        %1559 = vmatprep.subr.bf16.mxu0 0
        %1560 = vmatpush1.bf16.xpose.msra.mxu0 0
        %1561 = vmatprep.subr.bf16.mxu0 0
        %1562 = vmatpush1.bf16.xpose.msra.mxu0 0
        %1563 = vmatprep.subr.bf16.mxu0 0
        %1564 = vmatpush1.bf16.xpose.msra.mxu0 0
        %1565 = vmatprep.subr.bf16.mxu0 0
        %1566 = vmatpush1.bf16.xpose.msra.mxu0 0
        %1567 = vmatprep.subr.bf16.mxu0 0
        %1568 = vmatpush1.bf16.xpose.msra.mxu0 0
        %1569 = vmatprep.subr.bf16.mxu0 0
        %1570 = vmatpush1.bf16.xpose.msra.mxu0 0
        %1571 = vmatprep.subr.bf16.mxu0 0
        %1572 = vmatpush1.bf16.xpose.msra.mxu0 0
        %1573 = vmatprep.subr.bf16.mxu0 0
        %1574 = vmatpush1.bf16.xpose.msra.mxu0 0
        %1575 = vmatprep.subr.bf16.mxu0 0
        %1576 = vmatpush1.bf16.xpose.msra.mxu0 0
        %1577 = vmatprep.subr.bf16.mxu0 0
        %1578 = vmatpush1.bf16.xpose.msra.mxu0 0
        %1579 = vmatprep.subr.bf16.mxu0 0
        %1580 = vmatpush1.bf16.xpose.msra.mxu0 0
        %1581 = vmatprep.subr.bf16.mxu0 0
        %1582 = vmatpush1.bf16.xpose.msra.mxu0 0
        %1583 = vmatprep.mubr.bf16.mxu0 0
        %1584 = vmatmul.mubr.bf16.gmra.mrb[0].mxu0 %v1546
        %v1585 = vpop.f32.mrb[0].mxu0
        %v1586 = vadd.f32 0.0, %v1585
        %v1587 = vpop.f32.mrb[0].mxu0
        %v1588 = vpop.f32.mrb[0].mxu0
        %v1589 = vadd.f32 0.0, %v1588
        %v1590 = vpop.f32.mrb[0].mxu0
        %1591 = vdwg.mxu0
        %v1593 = vsel %vm1450, %v1441, 0
        %v1596 = vsel %vm1450, %v1445, 0
        %1598 = vmatprep.subr.bf16.mxu0 0
        %1599 = vmatpush1.bf16.xpose.msra.mxu0 %v1596
        %1600 = vmatprep.subr.bf16.mxu0 0
        %1601 = vmatpush1.bf16.xpose.msra.mxu0 0
        %1602 = vmatprep.subr.bf16.mxu0 0
        %1603 = vmatpush1.bf16.xpose.msra.mxu0 0
        %1604 = vmatprep.subr.bf16.mxu0 0
        %1605 = vmatpush1.bf16.xpose.msra.mxu0 0
        %1606 = vmatprep.subr.bf16.mxu0 0
        %1607 = vmatpush1.bf16.xpose.msra.mxu0 0
        %1608 = vmatprep.subr.bf16.mxu0 0
        %1609 = vmatpush1.bf16.xpose.msra.mxu0 0
        %1610 = vmatprep.subr.bf16.mxu0 0
        %1611 = vmatpush1.bf16.xpose.msra.mxu0 0
        %1612 = vmatprep.subr.bf16.mxu0 0
        %1613 = vmatpush1.bf16.xpose.msra.mxu0 0
        %1614 = vmatprep.subr.bf16.mxu0 0
        %1615 = vmatpush1.bf16.xpose.msra.mxu0 0
        %1616 = vmatprep.subr.bf16.mxu0 0
        %1617 = vmatpush1.bf16.xpose.msra.mxu0 0
        %1618 = vmatprep.subr.bf16.mxu0 0
        %1619 = vmatpush1.bf16.xpose.msra.mxu0 0
        %1620 = vmatprep.subr.bf16.mxu0 0
        %1621 = vmatpush1.bf16.xpose.msra.mxu0 0
        %1622 = vmatprep.subr.bf16.mxu0 0
        %1623 = vmatpush1.bf16.xpose.msra.mxu0 0
        %1624 = vmatprep.subr.bf16.mxu0 0
        %1625 = vmatpush1.bf16.xpose.msra.mxu0 0
        %1626 = vmatprep.subr.bf16.mxu0 0
        %1627 = vmatpush1.bf16.xpose.msra.mxu0 0
        %1628 = vmatprep.subr.bf16.mxu0 0
        %1629 = vmatpush1.bf16.xpose.msra.mxu0 0
        %1630 = vmatprep.mubr.bf16.mxu0 0
        %1631 = vmatmul.mubr.bf16.gmra.mrb[0].mxu0 %v1593
        %v1632 = vpop.f32.mrb[0].mxu0
        %v1633 = vadd.f32 0.0, %v1632
        %v1634 = vpop.f32.mrb[0].mxu0
        %v1635 = vpop.f32.mrb[0].mxu0
        %v1636 = vadd.f32 0.0, %v1635
        %v1637 = vpop.f32.mrb[0].mxu0
        %1638 = vdwg.mxu0
        %v1639 = vmul.f32 %v1492, 0.35355338
        %v1640 = vmul.f32 %v1495, 0.35355338
        %v1641 = vmul.f32 %v1539, 0.35355338
        %v1642 = vmul.f32 %v1542, 0.35355338
        %v1643 = vmul.f32 %v1586, 0.35355338
        %v1644 = vmul.f32 %v1589, 0.35355338
        %v1645 = vmul.f32 %v1633, 0.35355338
        %v1646 = vmul.f32 %v1636, 0.35355338
        %v1651 = vlaneseq
        %v1652 = vshrl.u32 %v1651, 7
        %v1653 = vsub.s32 0, %v1652
        %v1654 = vrot.slane %v949, %v1653
        %v1655 = vlaneseq
        %v1656 = vshrl.u32 %v1655, 7
        %v1657 = vsub.s32 0, %v1656
        %v1658 = vrot.slane %v950, %v1657
        %v1659 = vlaneseq
        %v1660 = vshrl.u32 %v1659, 7
        %v1661 = vsub.s32 0, %v1660
        %v1662 = vrot.slane %v951, %v1661
        %v1663 = vlaneseq
        %v1664 = vshrl.u32 %v1663, 7
        %v1665 = vsub.s32 0, %v1664
        %v1666 = vrot.slane %v952, %v1665
        %v1671 = vadd.f32 %v1639, %v1654
        %v1672 = vadd.f32 %v1640, %v1654
        %v1673 = vadd.f32 %v1641, %v1658
        %v1674 = vadd.f32 %v1642, %v1658
        %v1675 = vadd.f32 %v1643, %v1662
        %v1676 = vadd.f32 %v1644, %v1662
        %v1677 = vadd.f32 %v1645, %v1666
        %v1678 = vadd.f32 %v1646, %v1666
        %vm1679 = vcmask 130048
        %v1680 = vsel %vm1679, %v1671, -inf
        %1681 = vmax.xlane.f32.xlu0 %v1680
        %v1682 = vpop.xlane.xlu0 %1681
        %v1683 = vsel %vm1679, %v1672, -inf
        %1684 = vmax.xlane.f32.xlu0 %v1683
        %v1685 = vpop.xlane.xlu0 %1684
        %v1686 = vsel %vm1679, %v1673, -inf
        %1687 = vmax.xlane.f32.xlu0 %v1686
        %v1688 = vpop.xlane.xlu0 %1687
        %v1689 = vsel %vm1679, %v1674, -inf
        %1690 = vmax.xlane.f32.xlu0 %v1689
        %v1691 = vpop.xlane.xlu0 %1690
        %v1692 = vsel %vm1679, %v1675, -inf
        %1693 = vmax.xlane.f32.xlu0 %v1692
        %v1694 = vpop.xlane.xlu0 %1693
        %v1695 = vsel %vm1679, %v1676, -inf
        %1696 = vmax.xlane.f32.xlu0 %v1695
        %v1697 = vpop.xlane.xlu0 %1696
        %v1698 = vsel %vm1679, %v1677, -inf
        %1699 = vmax.xlane.f32.xlu0 %v1698
        %v1700 = vpop.xlane.xlu0 %1699
        %v1701 = vsel %vm1679, %v1678, -inf
        %1702 = vmax.xlane.f32.xlu0 %v1701
        %v1703 = vpop.xlane.xlu0 %1702
        %v1704 = vsub.f32 %v1671, %v1682
        %v1705 = vsub.f32 %v1672, %v1685
        %v1706 = vsub.f32 %v1673, %v1688
        %v1707 = vsub.f32 %v1674, %v1691
        %v1708 = vsub.f32 %v1675, %v1694
        %v1709 = vsub.f32 %v1676, %v1697
        %v1710 = vsub.f32 %v1677, %v1700
        %v1711 = vsub.f32 %v1678, %v1703
        %v1712 = vmul.f32 %v1704, 1.442695
        %v1713 = vpow.pop %v1712
        %v1714 = vmul.f32 %v1705, 1.442695
        %v1715 = vpow.pop %v1714
        %v1716 = vmul.f32 %v1706, 1.442695
        %v1717 = vpow.pop %v1716
        %v1718 = vmul.f32 %v1707, 1.442695
        %v1719 = vpow.pop %v1718
        %v1720 = vmul.f32 %v1708, 1.442695
        %v1721 = vpow.pop %v1720
        %v1722 = vmul.f32 %v1709, 1.442695
        %v1723 = vpow.pop %v1722
        %v1724 = vmul.f32 %v1710, 1.442695
        %v1725 = vpow.pop %v1724
        %v1726 = vmul.f32 %v1711, 1.442695
        %v1727 = vpow.pop %v1726
        %v1728 = vsel %vm1679, %v1713, 0.0
        %1729 = vadd.xlane.f32.xlu0 %v1728
        %v1730 = vpop.xlane.xlu0 %1729
        %v1731 = vsel %vm1679, %v1715, 0.0
        %1732 = vadd.xlane.f32.xlu0 %v1731
        %v1733 = vpop.xlane.xlu0 %1732
        %v1734 = vsel %vm1679, %v1717, 0.0
        %1735 = vadd.xlane.f32.xlu0 %v1734
        %v1736 = vpop.xlane.xlu0 %1735
        %v1737 = vsel %vm1679, %v1719, 0.0
        %1738 = vadd.xlane.f32.xlu0 %v1737
        %v1739 = vpop.xlane.xlu0 %1738
        %v1740 = vsel %vm1679, %v1721, 0.0
        %1741 = vadd.xlane.f32.xlu0 %v1740
        %v1742 = vpop.xlane.xlu0 %1741
        %v1743 = vsel %vm1679, %v1723, 0.0
        %1744 = vadd.xlane.f32.xlu0 %v1743
        %v1745 = vpop.xlane.xlu0 %1744
        %v1746 = vsel %vm1679, %v1725, 0.0
        %1747 = vadd.xlane.f32.xlu0 %v1746
        %v1748 = vpop.xlane.xlu0 %1747
        %v1749 = vsel %vm1679, %v1727, 0.0
        %1750 = vadd.xlane.f32.xlu0 %v1749
        %v1751 = vpop.xlane.xlu0 %1750
        %v1752 = vrcp.pop %v1730
        %v1753 = vrcp.pop %v1733
        %v1754 = vrcp.pop %v1736
        %v1755 = vrcp.pop %v1739
        %v1756 = vrcp.pop %v1742
        %v1757 = vrcp.pop %v1745
        %v1758 = vrcp.pop %v1748
        %v1759 = vrcp.pop %v1751
        %v1760 = vmul.f32 %v1713, %v1752
        %v1761 = vmul.f32 %v1715, %v1753
        %v1762 = vmul.f32 %v1717, %v1754
        %v1763 = vmul.f32 %v1719, %v1755
        %v1764 = vmul.f32 %v1721, %v1756
        %v1765 = vmul.f32 %v1723, %v1757
        %v1766 = vmul.f32 %v1725, %v1758
        %v1767 = vmul.f32 %v1727, %v1759
        %v1768 = vpack.c.bf16 %v1761, %v1760
        %v1769 = vpack.c.bf16 %v1763, %v1762
        %v1770 = vpack.c.bf16 %v1765, %v1764
        %v1771 = vpack.c.bf16 %v1767, %v1766
        %v1773 = vsel %vm1679, %v1768, 0
        %1775 = vmatprep.subr.bf16.mxu0 0
        %1776 = vmatpush1.bf16.msra.mxu0 %v1446
        %1777 = vmatprep.subr.bf16.mxu0 0
        %1778 = vmatpush1.bf16.msra.mxu0 0
        %1779 = vmatprep.subr.bf16.mxu0 0
        %1780 = vmatpush1.bf16.msra.mxu0 0
        %1781 = vmatprep.subr.bf16.mxu0 0
        %1782 = vmatpush1.bf16.msra.mxu0 0
        %1783 = vmatprep.subr.bf16.mxu0 0
        %1784 = vmatpush1.bf16.msra.mxu0 0
        %1785 = vmatprep.subr.bf16.mxu0 0
        %1786 = vmatpush1.bf16.msra.mxu0 0
        %1787 = vmatprep.subr.bf16.mxu0 0
        %1788 = vmatpush1.bf16.msra.mxu0 0
        %1789 = vmatprep.subr.bf16.mxu0 0
        %1790 = vmatpush1.bf16.msra.mxu0 0
        %1791 = vmatprep.subr.bf16.mxu0 0
        %1792 = vmatpush1.bf16.msra.mxu0 0
        %1793 = vmatprep.subr.bf16.mxu0 0
        %1794 = vmatpush1.bf16.msra.mxu0 0
        %1795 = vmatprep.subr.bf16.mxu0 0
        %1796 = vmatpush1.bf16.msra.mxu0 0
        %1797 = vmatprep.subr.bf16.mxu0 0
        %1798 = vmatpush1.bf16.msra.mxu0 0
        %1799 = vmatprep.subr.bf16.mxu0 0
        %1800 = vmatpush1.bf16.msra.mxu0 0
        %1801 = vmatprep.subr.bf16.mxu0 0
        %1802 = vmatpush1.bf16.msra.mxu0 0
        %1803 = vmatprep.subr.bf16.mxu0 0
        %1804 = vmatpush1.bf16.msra.mxu0 0
        %1805 = vmatprep.subr.bf16.mxu0 0
        %1806 = vmatpush1.bf16.msra.mxu0 0
        %1807 = vmatprep.mubr.bf16.mxu0 0
        %1808 = vmatmul.mubr.bf16.gmra.mrb[0].mxu0 %v1773
        %v1809 = vpop.f32.mrb[0].mxu0
        %v1810 = vadd.f32 0.0, %v1809
        %v1811 = vpop.f32.mrb[0].mxu0
        %v1812 = vpop.f32.mrb[0].mxu0
        %v1813 = vadd.f32 0.0, %v1812
        %v1814 = vpop.f32.mrb[0].mxu0
        %1815 = vdwg.mxu0
        %v1817 = vsel %vm1679, %v1769, 0
        %1819 = vmatprep.subr.bf16.mxu0 0
        %1820 = vmatpush1.bf16.msra.mxu0 %v1447
        %1821 = vmatprep.subr.bf16.mxu0 0
        %1822 = vmatpush1.bf16.msra.mxu0 0
        %1823 = vmatprep.subr.bf16.mxu0 0
        %1824 = vmatpush1.bf16.msra.mxu0 0
        %1825 = vmatprep.subr.bf16.mxu0 0
        %1826 = vmatpush1.bf16.msra.mxu0 0
        %1827 = vmatprep.subr.bf16.mxu0 0
        %1828 = vmatpush1.bf16.msra.mxu0 0
        %1829 = vmatprep.subr.bf16.mxu0 0
        %1830 = vmatpush1.bf16.msra.mxu0 0
        %1831 = vmatprep.subr.bf16.mxu0 0
        %1832 = vmatpush1.bf16.msra.mxu0 0
        %1833 = vmatprep.subr.bf16.mxu0 0
        %1834 = vmatpush1.bf16.msra.mxu0 0
        %1835 = vmatprep.subr.bf16.mxu0 0
        %1836 = vmatpush1.bf16.msra.mxu0 0
        %1837 = vmatprep.subr.bf16.mxu0 0
        %1838 = vmatpush1.bf16.msra.mxu0 0
        %1839 = vmatprep.subr.bf16.mxu0 0
        %1840 = vmatpush1.bf16.msra.mxu0 0
        %1841 = vmatprep.subr.bf16.mxu0 0
        %1842 = vmatpush1.bf16.msra.mxu0 0
        %1843 = vmatprep.subr.bf16.mxu0 0
        %1844 = vmatpush1.bf16.msra.mxu0 0
        %1845 = vmatprep.subr.bf16.mxu0 0
        %1846 = vmatpush1.bf16.msra.mxu0 0
        %1847 = vmatprep.subr.bf16.mxu0 0
        %1848 = vmatpush1.bf16.msra.mxu0 0
        %1849 = vmatprep.subr.bf16.mxu0 0
        %1850 = vmatpush1.bf16.msra.mxu0 0
        %1851 = vmatprep.mubr.bf16.mxu0 0
        %1852 = vmatmul.mubr.bf16.gmra.mrb[0].mxu0 %v1817
        %v1853 = vpop.f32.mrb[0].mxu0
        %v1854 = vadd.f32 0.0, %v1853
        %v1855 = vpop.f32.mrb[0].mxu0
        %v1856 = vpop.f32.mrb[0].mxu0
        %v1857 = vadd.f32 0.0, %v1856
        %v1858 = vpop.f32.mrb[0].mxu0
        %1859 = vdwg.mxu0
        %v1861 = vsel %vm1679, %v1770, 0
        %1863 = vmatprep.subr.bf16.mxu0 0
        %1864 = vmatpush1.bf16.msra.mxu0 %v1448
        %1865 = vmatprep.subr.bf16.mxu0 0
        %1866 = vmatpush1.bf16.msra.mxu0 0
        %1867 = vmatprep.subr.bf16.mxu0 0
        %1868 = vmatpush1.bf16.msra.mxu0 0
        %1869 = vmatprep.subr.bf16.mxu0 0
        %1870 = vmatpush1.bf16.msra.mxu0 0
        %1871 = vmatprep.subr.bf16.mxu0 0
        %1872 = vmatpush1.bf16.msra.mxu0 0
        %1873 = vmatprep.subr.bf16.mxu0 0
        %1874 = vmatpush1.bf16.msra.mxu0 0
        %1875 = vmatprep.subr.bf16.mxu0 0
        %1876 = vmatpush1.bf16.msra.mxu0 0
        %1877 = vmatprep.subr.bf16.mxu0 0
        %1878 = vmatpush1.bf16.msra.mxu0 0
        %1879 = vmatprep.subr.bf16.mxu0 0
        %1880 = vmatpush1.bf16.msra.mxu0 0
        %1881 = vmatprep.subr.bf16.mxu0 0
        %1882 = vmatpush1.bf16.msra.mxu0 0
        %1883 = vmatprep.subr.bf16.mxu0 0
        %1884 = vmatpush1.bf16.msra.mxu0 0
        %1885 = vmatprep.subr.bf16.mxu0 0
        %1886 = vmatpush1.bf16.msra.mxu0 0
        %1887 = vmatprep.subr.bf16.mxu0 0
        %1888 = vmatpush1.bf16.msra.mxu0 0
        %1889 = vmatprep.subr.bf16.mxu0 0
        %1890 = vmatpush1.bf16.msra.mxu0 0
        %1891 = vmatprep.subr.bf16.mxu0 0
        %1892 = vmatpush1.bf16.msra.mxu0 0
        %1893 = vmatprep.subr.bf16.mxu0 0
        %1894 = vmatpush1.bf16.msra.mxu0 0
        %1895 = vmatprep.mubr.bf16.mxu0 0
        %1896 = vmatmul.mubr.bf16.gmra.mrb[0].mxu0 %v1861
        %v1897 = vpop.f32.mrb[0].mxu0
        %v1898 = vadd.f32 0.0, %v1897
        %v1899 = vpop.f32.mrb[0].mxu0
        %v1900 = vpop.f32.mrb[0].mxu0
        %v1901 = vadd.f32 0.0, %v1900
        %v1902 = vpop.f32.mrb[0].mxu0
        %1903 = vdwg.mxu0
        %v1905 = vsel %vm1679, %v1771, 0
        %1907 = vmatprep.subr.bf16.mxu0 0
        %1908 = vmatpush1.bf16.msra.mxu0 %v1449
        %1909 = vmatprep.subr.bf16.mxu0 0
        %1910 = vmatpush1.bf16.msra.mxu0 0
        %1911 = vmatprep.subr.bf16.mxu0 0
        %1912 = vmatpush1.bf16.msra.mxu0 0
        %1913 = vmatprep.subr.bf16.mxu0 0
        %1914 = vmatpush1.bf16.msra.mxu0 0
        %1915 = vmatprep.subr.bf16.mxu0 0
        %1916 = vmatpush1.bf16.msra.mxu0 0
        %1917 = vmatprep.subr.bf16.mxu0 0
        %1918 = vmatpush1.bf16.msra.mxu0 0
        %1919 = vmatprep.subr.bf16.mxu0 0
        %1920 = vmatpush1.bf16.msra.mxu0 0
        %1921 = vmatprep.subr.bf16.mxu0 0
        %1922 = vmatpush1.bf16.msra.mxu0 0
        %1923 = vmatprep.subr.bf16.mxu0 0
        %1924 = vmatpush1.bf16.msra.mxu0 0
        %1925 = vmatprep.subr.bf16.mxu0 0
        %1926 = vmatpush1.bf16.msra.mxu0 0
        %1927 = vmatprep.subr.bf16.mxu0 0
        %1928 = vmatpush1.bf16.msra.mxu0 0
        %1929 = vmatprep.subr.bf16.mxu0 0
        %1930 = vmatpush1.bf16.msra.mxu0 0
        %1931 = vmatprep.subr.bf16.mxu0 0
        %1932 = vmatpush1.bf16.msra.mxu0 0
        %1933 = vmatprep.subr.bf16.mxu0 0
        %1934 = vmatpush1.bf16.msra.mxu0 0
        %1935 = vmatprep.subr.bf16.mxu0 0
        %1936 = vmatpush1.bf16.msra.mxu0 0
        %1937 = vmatprep.subr.bf16.mxu0 0
        %1938 = vmatpush1.bf16.msra.mxu0 0
        %1939 = vmatprep.mubr.bf16.mxu0 0
        %1940 = vmatmul.mubr.bf16.gmra.mrb[0].mxu0 %v1905
        %v1941 = vpop.f32.mrb[0].mxu0
        %v1942 = vadd.f32 0.0, %v1941
        %v1943 = vpop.f32.mrb[0].mxu0
        %v1944 = vpop.f32.mrb[0].mxu0
        %v1945 = vadd.f32 0.0, %v1944
        %v1946 = vpop.f32.mrb[0].mxu0
        %1947 = vdwg.mxu0
        %1949 = vrot.lane.b32.xlu0 %v1438, 120
        %v1950 = vpop.permute.xlu0 %1949
        %1952 = vrot.lane.b32.xlu0 %v1442, 120
        %v1953 = vpop.permute.xlu0 %1952
        %v1955 = vsel %vm1450, %v1950, 0
        %v1958 = vsel %vm1450, %v1953, 0
        %1960 = vmatprep.subr.bf16.mxu0 0
        %1961 = vmatpush1.bf16.xpose.msra.mxu0 %v1958
        %1962 = vmatprep.subr.bf16.mxu0 0
        %1963 = vmatpush1.bf16.xpose.msra.mxu0 0
        %1964 = vmatprep.subr.bf16.mxu0 0
        %1965 = vmatpush1.bf16.xpose.msra.mxu0 0
        %1966 = vmatprep.subr.bf16.mxu0 0
        %1967 = vmatpush1.bf16.xpose.msra.mxu0 0
        %1968 = vmatprep.subr.bf16.mxu0 0
        %1969 = vmatpush1.bf16.xpose.msra.mxu0 0
        %1970 = vmatprep.subr.bf16.mxu0 0
        %1971 = vmatpush1.bf16.xpose.msra.mxu0 0
        %1972 = vmatprep.subr.bf16.mxu0 0
        %1973 = vmatpush1.bf16.xpose.msra.mxu0 0
        %1974 = vmatprep.subr.bf16.mxu0 0
        %1975 = vmatpush1.bf16.xpose.msra.mxu0 0
        %1976 = vmatprep.subr.bf16.mxu0 0
        %1977 = vmatpush1.bf16.xpose.msra.mxu0 0
        %1978 = vmatprep.subr.bf16.mxu0 0
        %1979 = vmatpush1.bf16.xpose.msra.mxu0 0
        %1980 = vmatprep.subr.bf16.mxu0 0
        %1981 = vmatpush1.bf16.xpose.msra.mxu0 0
        %1982 = vmatprep.subr.bf16.mxu0 0
        %1983 = vmatpush1.bf16.xpose.msra.mxu0 0
        %1984 = vmatprep.subr.bf16.mxu0 0
        %1985 = vmatpush1.bf16.xpose.msra.mxu0 0
        %1986 = vmatprep.subr.bf16.mxu0 0
        %1987 = vmatpush1.bf16.xpose.msra.mxu0 0
        %1988 = vmatprep.subr.bf16.mxu0 0
        %1989 = vmatpush1.bf16.xpose.msra.mxu0 0
        %1990 = vmatprep.subr.bf16.mxu0 0
        %1991 = vmatpush1.bf16.xpose.msra.mxu0 0
        %1992 = vmatprep.mubr.bf16.mxu0 0
        %1993 = vmatmul.mubr.bf16.gmra.mrb[0].mxu0 %v1955
        %v1994 = vpop.f32.mrb[0].mxu0
        %v1995 = vadd.f32 0.0, %v1994
        %v1996 = vpop.f32.mrb[0].mxu0
        %v1997 = vpop.f32.mrb[0].mxu0
        %v1998 = vadd.f32 0.0, %v1997
        %v1999 = vpop.f32.mrb[0].mxu0
        %2000 = vdwg.mxu0
        %2002 = vrot.lane.b32.xlu0 %v1439, 120
        %v2003 = vpop.permute.xlu0 %2002
        %2005 = vrot.lane.b32.xlu0 %v1443, 120
        %v2006 = vpop.permute.xlu0 %2005
        %v2008 = vsel %vm1450, %v2003, 0
        %v2011 = vsel %vm1450, %v2006, 0
        %2013 = vmatprep.subr.bf16.mxu0 0
        %2014 = vmatpush1.bf16.xpose.msra.mxu0 %v2011
        %2015 = vmatprep.subr.bf16.mxu0 0
        %2016 = vmatpush1.bf16.xpose.msra.mxu0 0
        %2017 = vmatprep.subr.bf16.mxu0 0
        %2018 = vmatpush1.bf16.xpose.msra.mxu0 0
        %2019 = vmatprep.subr.bf16.mxu0 0
        %2020 = vmatpush1.bf16.xpose.msra.mxu0 0
        %2021 = vmatprep.subr.bf16.mxu0 0
        %2022 = vmatpush1.bf16.xpose.msra.mxu0 0
        %2023 = vmatprep.subr.bf16.mxu0 0
        %2024 = vmatpush1.bf16.xpose.msra.mxu0 0
        %2025 = vmatprep.subr.bf16.mxu0 0
        %2026 = vmatpush1.bf16.xpose.msra.mxu0 0
        %2027 = vmatprep.subr.bf16.mxu0 0
        %2028 = vmatpush1.bf16.xpose.msra.mxu0 0
        %2029 = vmatprep.subr.bf16.mxu0 0
        %2030 = vmatpush1.bf16.xpose.msra.mxu0 0
        %2031 = vmatprep.subr.bf16.mxu0 0
        %2032 = vmatpush1.bf16.xpose.msra.mxu0 0
        %2033 = vmatprep.subr.bf16.mxu0 0
        %2034 = vmatpush1.bf16.xpose.msra.mxu0 0
        %2035 = vmatprep.subr.bf16.mxu0 0
        %2036 = vmatpush1.bf16.xpose.msra.mxu0 0
        %2037 = vmatprep.subr.bf16.mxu0 0
        %2038 = vmatpush1.bf16.xpose.msra.mxu0 0
        %2039 = vmatprep.subr.bf16.mxu0 0
        %2040 = vmatpush1.bf16.xpose.msra.mxu0 0
        %2041 = vmatprep.subr.bf16.mxu0 0
        %2042 = vmatpush1.bf16.xpose.msra.mxu0 0
        %2043 = vmatprep.subr.bf16.mxu0 0
        %2044 = vmatpush1.bf16.xpose.msra.mxu0 0
        %2045 = vmatprep.mubr.bf16.mxu0 0
        %2046 = vmatmul.mubr.bf16.gmra.mrb[0].mxu0 %v2008
        %v2047 = vpop.f32.mrb[0].mxu0
        %v2048 = vadd.f32 0.0, %v2047
        %v2049 = vpop.f32.mrb[0].mxu0
        %v2050 = vpop.f32.mrb[0].mxu0
        %v2051 = vadd.f32 0.0, %v2050
        %v2052 = vpop.f32.mrb[0].mxu0
        %2053 = vdwg.mxu0
        %2055 = vrot.lane.b32.xlu0 %v1440, 120
        %v2056 = vpop.permute.xlu0 %2055
        %2058 = vrot.lane.b32.xlu0 %v1444, 120
        %v2059 = vpop.permute.xlu0 %2058
        %v2061 = vsel %vm1450, %v2056, 0
        %v2064 = vsel %vm1450, %v2059, 0
        %2066 = vmatprep.subr.bf16.mxu0 0
        %2067 = vmatpush1.bf16.xpose.msra.mxu0 %v2064
        %2068 = vmatprep.subr.bf16.mxu0 0
        %2069 = vmatpush1.bf16.xpose.msra.mxu0 0
        %2070 = vmatprep.subr.bf16.mxu0 0
        %2071 = vmatpush1.bf16.xpose.msra.mxu0 0
        %2072 = vmatprep.subr.bf16.mxu0 0
        %2073 = vmatpush1.bf16.xpose.msra.mxu0 0
        %2074 = vmatprep.subr.bf16.mxu0 0
        %2075 = vmatpush1.bf16.xpose.msra.mxu0 0
        %2076 = vmatprep.subr.bf16.mxu0 0
        %2077 = vmatpush1.bf16.xpose.msra.mxu0 0
        %2078 = vmatprep.subr.bf16.mxu0 0
        %2079 = vmatpush1.bf16.xpose.msra.mxu0 0
        %2080 = vmatprep.subr.bf16.mxu0 0
        %2081 = vmatpush1.bf16.xpose.msra.mxu0 0
        %2082 = vmatprep.subr.bf16.mxu0 0
        %2083 = vmatpush1.bf16.xpose.msra.mxu0 0
        %2084 = vmatprep.subr.bf16.mxu0 0
        %2085 = vmatpush1.bf16.xpose.msra.mxu0 0
        %2086 = vmatprep.subr.bf16.mxu0 0
        %2087 = vmatpush1.bf16.xpose.msra.mxu0 0
        %2088 = vmatprep.subr.bf16.mxu0 0
        %2089 = vmatpush1.bf16.xpose.msra.mxu0 0
        %2090 = vmatprep.subr.bf16.mxu0 0
        %2091 = vmatpush1.bf16.xpose.msra.mxu0 0
        %2092 = vmatprep.subr.bf16.mxu0 0
        %2093 = vmatpush1.bf16.xpose.msra.mxu0 0
        %2094 = vmatprep.subr.bf16.mxu0 0
        %2095 = vmatpush1.bf16.xpose.msra.mxu0 0
        %2096 = vmatprep.subr.bf16.mxu0 0
        %2097 = vmatpush1.bf16.xpose.msra.mxu0 0
        %2098 = vmatprep.mubr.bf16.mxu0 0
        %2099 = vmatmul.mubr.bf16.gmra.mrb[0].mxu0 %v2061
        %v2100 = vpop.f32.mrb[0].mxu0
        %v2101 = vadd.f32 0.0, %v2100
        %v2102 = vpop.f32.mrb[0].mxu0
        %v2103 = vpop.f32.mrb[0].mxu0
        %v2104 = vadd.f32 0.0, %v2103
        %v2105 = vpop.f32.mrb[0].mxu0
        %2106 = vdwg.mxu0
        %2108 = vrot.lane.b32.xlu0 %v1441, 120
        %v2109 = vpop.permute.xlu0 %2108
        %2111 = vrot.lane.b32.xlu0 %v1445, 120
        %v2112 = vpop.permute.xlu0 %2111
        %v2114 = vsel %vm1450, %v2109, 0
        %v2117 = vsel %vm1450, %v2112, 0
        %2119 = vmatprep.subr.bf16.mxu0 0
        %2120 = vmatpush1.bf16.xpose.msra.mxu0 %v2117
        %2121 = vmatprep.subr.bf16.mxu0 0
        %2122 = vmatpush1.bf16.xpose.msra.mxu0 0
        %2123 = vmatprep.subr.bf16.mxu0 0
        %2124 = vmatpush1.bf16.xpose.msra.mxu0 0
        %2125 = vmatprep.subr.bf16.mxu0 0
        %2126 = vmatpush1.bf16.xpose.msra.mxu0 0
        %2127 = vmatprep.subr.bf16.mxu0 0
        %2128 = vmatpush1.bf16.xpose.msra.mxu0 0
        %2129 = vmatprep.subr.bf16.mxu0 0
        %2130 = vmatpush1.bf16.xpose.msra.mxu0 0
        %2131 = vmatprep.subr.bf16.mxu0 0
        %2132 = vmatpush1.bf16.xpose.msra.mxu0 0
        %2133 = vmatprep.subr.bf16.mxu0 0
        %2134 = vmatpush1.bf16.xpose.msra.mxu0 0
        %2135 = vmatprep.subr.bf16.mxu0 0
        %2136 = vmatpush1.bf16.xpose.msra.mxu0 0
        %2137 = vmatprep.subr.bf16.mxu0 0
        %2138 = vmatpush1.bf16.xpose.msra.mxu0 0
        %2139 = vmatprep.subr.bf16.mxu0 0
        %2140 = vmatpush1.bf16.xpose.msra.mxu0 0
        %2141 = vmatprep.subr.bf16.mxu0 0
        %2142 = vmatpush1.bf16.xpose.msra.mxu0 0
        %2143 = vmatprep.subr.bf16.mxu0 0
        %2144 = vmatpush1.bf16.xpose.msra.mxu0 0
        %2145 = vmatprep.subr.bf16.mxu0 0
        %2146 = vmatpush1.bf16.xpose.msra.mxu0 0
        %2147 = vmatprep.subr.bf16.mxu0 0
        %2148 = vmatpush1.bf16.xpose.msra.mxu0 0
        %2149 = vmatprep.subr.bf16.mxu0 0
        %2150 = vmatpush1.bf16.xpose.msra.mxu0 0
        %2151 = vmatprep.mubr.bf16.mxu0 0
        %2152 = vmatmul.mubr.bf16.gmra.mrb[0].mxu0 %v2114
        %v2153 = vpop.f32.mrb[0].mxu0
        %v2154 = vadd.f32 0.0, %v2153
        %v2155 = vpop.f32.mrb[0].mxu0
        %v2156 = vpop.f32.mrb[0].mxu0
        %v2157 = vadd.f32 0.0, %v2156
        %v2158 = vpop.f32.mrb[0].mxu0
        %2159 = vdwg.mxu0
        %v2160 = vmul.f32 %v1995, 0.35355338
        %v2161 = vmul.f32 %v1998, 0.35355338
        %v2162 = vmul.f32 %v2048, 0.35355338
        %v2163 = vmul.f32 %v2051, 0.35355338
        %v2164 = vmul.f32 %v2101, 0.35355338
        %v2165 = vmul.f32 %v2104, 0.35355338
        %v2166 = vmul.f32 %v2154, 0.35355338
        %v2167 = vmul.f32 %v2157, 0.35355338
        %v2168 = vadd.f32 %v2160, %v1654
        %v2169 = vadd.f32 %v2161, %v1654
        %v2170 = vadd.f32 %v2162, %v1658
        %v2171 = vadd.f32 %v2163, %v1658
        %v2172 = vadd.f32 %v2164, %v1662
        %v2173 = vadd.f32 %v2165, %v1662
        %v2174 = vadd.f32 %v2166, %v1666
        %v2175 = vadd.f32 %v2167, %v1666
        %v2176 = vsel %vm1679, %v2168, -inf
        %2177 = vmax.xlane.f32.xlu0 %v2176
        %v2178 = vpop.xlane.xlu0 %2177
        %v2179 = vsel %vm1679, %v2169, -inf
        %2180 = vmax.xlane.f32.xlu0 %v2179
        %v2181 = vpop.xlane.xlu0 %2180
        %v2182 = vsel %vm1679, %v2170, -inf
        %2183 = vmax.xlane.f32.xlu0 %v2182
        %v2184 = vpop.xlane.xlu0 %2183
        %v2185 = vsel %vm1679, %v2171, -inf
        %2186 = vmax.xlane.f32.xlu0 %v2185
        %v2187 = vpop.xlane.xlu0 %2186
        %v2188 = vsel %vm1679, %v2172, -inf
        %2189 = vmax.xlane.f32.xlu0 %v2188
        %v2190 = vpop.xlane.xlu0 %2189
        %v2191 = vsel %vm1679, %v2173, -inf
        %2192 = vmax.xlane.f32.xlu0 %v2191
        %v2193 = vpop.xlane.xlu0 %2192
        %v2194 = vsel %vm1679, %v2174, -inf
        %2195 = vmax.xlane.f32.xlu0 %v2194
        %v2196 = vpop.xlane.xlu0 %2195
        %v2197 = vsel %vm1679, %v2175, -inf
        %2198 = vmax.xlane.f32.xlu0 %v2197
        %v2199 = vpop.xlane.xlu0 %2198
        %v2200 = vsub.f32 %v2168, %v2178
        %v2201 = vsub.f32 %v2169, %v2181
        %v2202 = vsub.f32 %v2170, %v2184
        %v2203 = vsub.f32 %v2171, %v2187
        %v2204 = vsub.f32 %v2172, %v2190
        %v2205 = vsub.f32 %v2173, %v2193
        %v2206 = vsub.f32 %v2174, %v2196
        %v2207 = vsub.f32 %v2175, %v2199
        %v2208 = vmul.f32 %v2200, 1.442695
        %v2209 = vpow.pop %v2208
        %v2210 = vmul.f32 %v2201, 1.442695
        %v2211 = vpow.pop %v2210
        %v2212 = vmul.f32 %v2202, 1.442695
        %v2213 = vpow.pop %v2212
        %v2214 = vmul.f32 %v2203, 1.442695
        %v2215 = vpow.pop %v2214
        %v2216 = vmul.f32 %v2204, 1.442695
        %v2217 = vpow.pop %v2216
        %v2218 = vmul.f32 %v2205, 1.442695
        %v2219 = vpow.pop %v2218
        %v2220 = vmul.f32 %v2206, 1.442695
        %v2221 = vpow.pop %v2220
        %v2222 = vmul.f32 %v2207, 1.442695
        %v2223 = vpow.pop %v2222
        %v2224 = vsel %vm1679, %v2209, 0.0
        %2225 = vadd.xlane.f32.xlu0 %v2224
        %v2226 = vpop.xlane.xlu0 %2225
        %v2227 = vsel %vm1679, %v2211, 0.0
        %2228 = vadd.xlane.f32.xlu0 %v2227
        %v2229 = vpop.xlane.xlu0 %2228
        %v2230 = vsel %vm1679, %v2213, 0.0
        %2231 = vadd.xlane.f32.xlu0 %v2230
        %v2232 = vpop.xlane.xlu0 %2231
        %v2233 = vsel %vm1679, %v2215, 0.0
        %2234 = vadd.xlane.f32.xlu0 %v2233
        %v2235 = vpop.xlane.xlu0 %2234
        %v2236 = vsel %vm1679, %v2217, 0.0
        %2237 = vadd.xlane.f32.xlu0 %v2236
        %v2238 = vpop.xlane.xlu0 %2237
        %v2239 = vsel %vm1679, %v2219, 0.0
        %2240 = vadd.xlane.f32.xlu0 %v2239
        %v2241 = vpop.xlane.xlu0 %2240
        %v2242 = vsel %vm1679, %v2221, 0.0
        %2243 = vadd.xlane.f32.xlu0 %v2242
        %v2244 = vpop.xlane.xlu0 %2243
        %v2245 = vsel %vm1679, %v2223, 0.0
        %2246 = vadd.xlane.f32.xlu0 %v2245
        %v2247 = vpop.xlane.xlu0 %2246
        %v2248 = vrcp.pop %v2226
        %v2249 = vrcp.pop %v2229
        %v2250 = vrcp.pop %v2232
        %v2251 = vrcp.pop %v2235
        %v2252 = vrcp.pop %v2238
        %v2253 = vrcp.pop %v2241
        %v2254 = vrcp.pop %v2244
        %v2255 = vrcp.pop %v2247
        %v2256 = vmul.f32 %v2209, %v2248
        %v2257 = vmul.f32 %v2211, %v2249
        %v2258 = vmul.f32 %v2213, %v2250
        %v2259 = vmul.f32 %v2215, %v2251
        %v2260 = vmul.f32 %v2217, %v2252
        %v2261 = vmul.f32 %v2219, %v2253
        %v2262 = vmul.f32 %v2221, %v2254
        %v2263 = vmul.f32 %v2223, %v2255
        %v2264 = vpack.c.bf16 %v2257, %v2256
        %v2265 = vpack.c.bf16 %v2259, %v2258
        %v2266 = vpack.c.bf16 %v2261, %v2260
        %v2267 = vpack.c.bf16 %v2263, %v2262
        %2269 = vrot.lane.b32.xlu0 %v1446, 120
        %v2270 = vpop.permute.xlu0 %2269
        %v2273 = vsel %vm1679, %v2264, 0
        %2275 = vmatprep.subr.bf16.mxu0 0
        %2276 = vmatpush1.bf16.msra.mxu0 %v2270
        %2277 = vmatprep.subr.bf16.mxu0 0
        %2278 = vmatpush1.bf16.msra.mxu0 0
        %2279 = vmatprep.subr.bf16.mxu0 0
        %2280 = vmatpush1.bf16.msra.mxu0 0
        %2281 = vmatprep.subr.bf16.mxu0 0
        %2282 = vmatpush1.bf16.msra.mxu0 0
        %2283 = vmatprep.subr.bf16.mxu0 0
        %2284 = vmatpush1.bf16.msra.mxu0 0
        %2285 = vmatprep.subr.bf16.mxu0 0
        %2286 = vmatpush1.bf16.msra.mxu0 0
        %2287 = vmatprep.subr.bf16.mxu0 0
        %2288 = vmatpush1.bf16.msra.mxu0 0
        %2289 = vmatprep.subr.bf16.mxu0 0
        %2290 = vmatpush1.bf16.msra.mxu0 0
        %2291 = vmatprep.subr.bf16.mxu0 0
        %2292 = vmatpush1.bf16.msra.mxu0 0
        %2293 = vmatprep.subr.bf16.mxu0 0
        %2294 = vmatpush1.bf16.msra.mxu0 0
        %2295 = vmatprep.subr.bf16.mxu0 0
        %2296 = vmatpush1.bf16.msra.mxu0 0
        %2297 = vmatprep.subr.bf16.mxu0 0
        %2298 = vmatpush1.bf16.msra.mxu0 0
        %2299 = vmatprep.subr.bf16.mxu0 0
        %2300 = vmatpush1.bf16.msra.mxu0 0
        %2301 = vmatprep.subr.bf16.mxu0 0
        %2302 = vmatpush1.bf16.msra.mxu0 0
        %2303 = vmatprep.subr.bf16.mxu0 0
        %2304 = vmatpush1.bf16.msra.mxu0 0
        %2305 = vmatprep.subr.bf16.mxu0 0
        %2306 = vmatpush1.bf16.msra.mxu0 0
        %2307 = vmatprep.mubr.bf16.mxu0 0
        %2308 = vmatmul.mubr.bf16.gmra.mrb[0].mxu0 %v2273
        %v2309 = vpop.f32.mrb[0].mxu0
        %v2310 = vadd.f32 0.0, %v2309
        %v2311 = vpop.f32.mrb[0].mxu0
        %v2312 = vpop.f32.mrb[0].mxu0
        %v2313 = vadd.f32 0.0, %v2312
        %v2314 = vpop.f32.mrb[0].mxu0
        %2315 = vdwg.mxu0
        %2317 = vrot.lane.b32.xlu0 %v1447, 120
        %v2318 = vpop.permute.xlu0 %2317
        %v2321 = vsel %vm1679, %v2265, 0
        %2323 = vmatprep.subr.bf16.mxu0 0
        %2324 = vmatpush1.bf16.msra.mxu0 %v2318
        %2325 = vmatprep.subr.bf16.mxu0 0
        %2326 = vmatpush1.bf16.msra.mxu0 0
        %2327 = vmatprep.subr.bf16.mxu0 0
        %2328 = vmatpush1.bf16.msra.mxu0 0
        %2329 = vmatprep.subr.bf16.mxu0 0
        %2330 = vmatpush1.bf16.msra.mxu0 0
        %2331 = vmatprep.subr.bf16.mxu0 0
        %2332 = vmatpush1.bf16.msra.mxu0 0
        %2333 = vmatprep.subr.bf16.mxu0 0
        %2334 = vmatpush1.bf16.msra.mxu0 0
        %2335 = vmatprep.subr.bf16.mxu0 0
        %2336 = vmatpush1.bf16.msra.mxu0 0
        %2337 = vmatprep.subr.bf16.mxu0 0
        %2338 = vmatpush1.bf16.msra.mxu0 0
        %2339 = vmatprep.subr.bf16.mxu0 0
        %2340 = vmatpush1.bf16.msra.mxu0 0
        %2341 = vmatprep.subr.bf16.mxu0 0
        %2342 = vmatpush1.bf16.msra.mxu0 0
        %2343 = vmatprep.subr.bf16.mxu0 0
        %2344 = vmatpush1.bf16.msra.mxu0 0
        %2345 = vmatprep.subr.bf16.mxu0 0
        %2346 = vmatpush1.bf16.msra.mxu0 0
        %2347 = vmatprep.subr.bf16.mxu0 0
        %2348 = vmatpush1.bf16.msra.mxu0 0
        %2349 = vmatprep.subr.bf16.mxu0 0
        %2350 = vmatpush1.bf16.msra.mxu0 0
        %2351 = vmatprep.subr.bf16.mxu0 0
        %2352 = vmatpush1.bf16.msra.mxu0 0
        %2353 = vmatprep.subr.bf16.mxu0 0
        %2354 = vmatpush1.bf16.msra.mxu0 0
        %2355 = vmatprep.mubr.bf16.mxu0 0
        %2356 = vmatmul.mubr.bf16.gmra.mrb[0].mxu0 %v2321
        %v2357 = vpop.f32.mrb[0].mxu0
        %v2358 = vadd.f32 0.0, %v2357
        %v2359 = vpop.f32.mrb[0].mxu0
        %v2360 = vpop.f32.mrb[0].mxu0
        %v2361 = vadd.f32 0.0, %v2360
        %v2362 = vpop.f32.mrb[0].mxu0
        %2363 = vdwg.mxu0
        %2365 = vrot.lane.b32.xlu0 %v1448, 120
        %v2366 = vpop.permute.xlu0 %2365
        %v2369 = vsel %vm1679, %v2266, 0
        %2371 = vmatprep.subr.bf16.mxu0 0
        %2372 = vmatpush1.bf16.msra.mxu0 %v2366
        %2373 = vmatprep.subr.bf16.mxu0 0
        %2374 = vmatpush1.bf16.msra.mxu0 0
        %2375 = vmatprep.subr.bf16.mxu0 0
        %2376 = vmatpush1.bf16.msra.mxu0 0
        %2377 = vmatprep.subr.bf16.mxu0 0
        %2378 = vmatpush1.bf16.msra.mxu0 0
        %2379 = vmatprep.subr.bf16.mxu0 0
        %2380 = vmatpush1.bf16.msra.mxu0 0
        %2381 = vmatprep.subr.bf16.mxu0 0
        %2382 = vmatpush1.bf16.msra.mxu0 0
        %2383 = vmatprep.subr.bf16.mxu0 0
        %2384 = vmatpush1.bf16.msra.mxu0 0
        %2385 = vmatprep.subr.bf16.mxu0 0
        %2386 = vmatpush1.bf16.msra.mxu0 0
        %2387 = vmatprep.subr.bf16.mxu0 0
        %2388 = vmatpush1.bf16.msra.mxu0 0
        %2389 = vmatprep.subr.bf16.mxu0 0
        %2390 = vmatpush1.bf16.msra.mxu0 0
        %2391 = vmatprep.subr.bf16.mxu0 0
        %2392 = vmatpush1.bf16.msra.mxu0 0
        %2393 = vmatprep.subr.bf16.mxu0 0
        %2394 = vmatpush1.bf16.msra.mxu0 0
        %2395 = vmatprep.subr.bf16.mxu0 0
        %2396 = vmatpush1.bf16.msra.mxu0 0
        %2397 = vmatprep.subr.bf16.mxu0 0
        %2398 = vmatpush1.bf16.msra.mxu0 0
        %2399 = vmatprep.subr.bf16.mxu0 0
        %2400 = vmatpush1.bf16.msra.mxu0 0
        %2401 = vmatprep.subr.bf16.mxu0 0
        %2402 = vmatpush1.bf16.msra.mxu0 0
        %2403 = vmatprep.mubr.bf16.mxu0 0
        %2404 = vmatmul.mubr.bf16.gmra.mrb[0].mxu0 %v2369
        %v2405 = vpop.f32.mrb[0].mxu0
        %v2406 = vadd.f32 0.0, %v2405
        %v2407 = vpop.f32.mrb[0].mxu0
        %v2408 = vpop.f32.mrb[0].mxu0
        %v2409 = vadd.f32 0.0, %v2408
        %v2410 = vpop.f32.mrb[0].mxu0
        %2411 = vdwg.mxu0
        %2413 = vrot.lane.b32.xlu0 %v1449, 120
        %v2414 = vpop.permute.xlu0 %2413
        %v2417 = vsel %vm1679, %v2267, 0
        %2419 = vmatprep.subr.bf16.mxu0 0
        %2420 = vmatpush1.bf16.msra.mxu0 %v2414
        %2421 = vmatprep.subr.bf16.mxu0 0
        %2422 = vmatpush1.bf16.msra.mxu0 0
        %2423 = vmatprep.subr.bf16.mxu0 0
        %2424 = vmatpush1.bf16.msra.mxu0 0
        %2425 = vmatprep.subr.bf16.mxu0 0
        %2426 = vmatpush1.bf16.msra.mxu0 0
        %2427 = vmatprep.subr.bf16.mxu0 0
        %2428 = vmatpush1.bf16.msra.mxu0 0
        %2429 = vmatprep.subr.bf16.mxu0 0
        %2430 = vmatpush1.bf16.msra.mxu0 0
        %2431 = vmatprep.subr.bf16.mxu0 0
        %2432 = vmatpush1.bf16.msra.mxu0 0
        %2433 = vmatprep.subr.bf16.mxu0 0
        %2434 = vmatpush1.bf16.msra.mxu0 0
        %2435 = vmatprep.subr.bf16.mxu0 0
        %2436 = vmatpush1.bf16.msra.mxu0 0
        %2437 = vmatprep.subr.bf16.mxu0 0
        %2438 = vmatpush1.bf16.msra.mxu0 0
        %2439 = vmatprep.subr.bf16.mxu0 0
        %2440 = vmatpush1.bf16.msra.mxu0 0
        %2441 = vmatprep.subr.bf16.mxu0 0
        %2442 = vmatpush1.bf16.msra.mxu0 0
        %2443 = vmatprep.subr.bf16.mxu0 0
        %2444 = vmatpush1.bf16.msra.mxu0 0
        %2445 = vmatprep.subr.bf16.mxu0 0
        %2446 = vmatpush1.bf16.msra.mxu0 0
        %2447 = vmatprep.subr.bf16.mxu0 0
        %2448 = vmatpush1.bf16.msra.mxu0 0
        %2449 = vmatprep.subr.bf16.mxu0 0
        %2450 = vmatpush1.bf16.msra.mxu0 0
        %2451 = vmatprep.mubr.bf16.mxu0 0
        %2452 = vmatmul.mubr.bf16.gmra.mrb[0].mxu0 %v2417
        %v2453 = vpop.f32.mrb[0].mxu0
        %v2454 = vadd.f32 0.0, %v2453
        %v2455 = vpop.f32.mrb[0].mxu0
        %v2456 = vpop.f32.mrb[0].mxu0
        %v2457 = vadd.f32 0.0, %v2456
        %v2458 = vpop.f32.mrb[0].mxu0
        %2459 = vdwg.mxu0
        %2460 = vrot.lane.b32.xlu0 %v1438, 112
        %v2461 = vpop.permute.xlu0 %2460
        %2462 = vrot.lane.b32.xlu0 %v1442, 112
        %v2463 = vpop.permute.xlu0 %2462
        %v2465 = vsel %vm1450, %v2461, 0
        %v2468 = vsel %vm1450, %v2463, 0
        %2470 = vmatprep.subr.bf16.mxu0 0
        %2471 = vmatpush1.bf16.xpose.msra.mxu0 %v2468
        %2472 = vmatprep.subr.bf16.mxu0 0
        %2473 = vmatpush1.bf16.xpose.msra.mxu0 0
        %2474 = vmatprep.subr.bf16.mxu0 0
        %2475 = vmatpush1.bf16.xpose.msra.mxu0 0
        %2476 = vmatprep.subr.bf16.mxu0 0
        %2477 = vmatpush1.bf16.xpose.msra.mxu0 0
        %2478 = vmatprep.subr.bf16.mxu0 0
        %2479 = vmatpush1.bf16.xpose.msra.mxu0 0
        %2480 = vmatprep.subr.bf16.mxu0 0
        %2481 = vmatpush1.bf16.xpose.msra.mxu0 0
        %2482 = vmatprep.subr.bf16.mxu0 0
        %2483 = vmatpush1.bf16.xpose.msra.mxu0 0
        %2484 = vmatprep.subr.bf16.mxu0 0
        %2485 = vmatpush1.bf16.xpose.msra.mxu0 0
        %2486 = vmatprep.subr.bf16.mxu0 0
        %2487 = vmatpush1.bf16.xpose.msra.mxu0 0
        %2488 = vmatprep.subr.bf16.mxu0 0
        %2489 = vmatpush1.bf16.xpose.msra.mxu0 0
        %2490 = vmatprep.subr.bf16.mxu0 0
        %2491 = vmatpush1.bf16.xpose.msra.mxu0 0
        %2492 = vmatprep.subr.bf16.mxu0 0
        %2493 = vmatpush1.bf16.xpose.msra.mxu0 0
        %2494 = vmatprep.subr.bf16.mxu0 0
        %2495 = vmatpush1.bf16.xpose.msra.mxu0 0
        %2496 = vmatprep.subr.bf16.mxu0 0
        %2497 = vmatpush1.bf16.xpose.msra.mxu0 0
        %2498 = vmatprep.subr.bf16.mxu0 0
        %2499 = vmatpush1.bf16.xpose.msra.mxu0 0
        %2500 = vmatprep.subr.bf16.mxu0 0
        %2501 = vmatpush1.bf16.xpose.msra.mxu0 0
        %2502 = vmatprep.mubr.bf16.mxu0 0
        %2503 = vmatmul.mubr.bf16.gmra.mrb[0].mxu0 %v2465
        %v2504 = vpop.f32.mrb[0].mxu0
        %v2505 = vadd.f32 0.0, %v2504
        %v2506 = vpop.f32.mrb[0].mxu0
        %v2507 = vpop.f32.mrb[0].mxu0
        %v2508 = vadd.f32 0.0, %v2507
        %v2509 = vpop.f32.mrb[0].mxu0
        %2510 = vdwg.mxu0
        %2511 = vrot.lane.b32.xlu0 %v1439, 112
        %v2512 = vpop.permute.xlu0 %2511
        %2513 = vrot.lane.b32.xlu0 %v1443, 112
        %v2514 = vpop.permute.xlu0 %2513
        %v2516 = vsel %vm1450, %v2512, 0
        %v2519 = vsel %vm1450, %v2514, 0
        %2521 = vmatprep.subr.bf16.mxu0 0
        %2522 = vmatpush1.bf16.xpose.msra.mxu0 %v2519
        %2523 = vmatprep.subr.bf16.mxu0 0
        %2524 = vmatpush1.bf16.xpose.msra.mxu0 0
        %2525 = vmatprep.subr.bf16.mxu0 0
        %2526 = vmatpush1.bf16.xpose.msra.mxu0 0
        %2527 = vmatprep.subr.bf16.mxu0 0
        %2528 = vmatpush1.bf16.xpose.msra.mxu0 0
        %2529 = vmatprep.subr.bf16.mxu0 0
        %2530 = vmatpush1.bf16.xpose.msra.mxu0 0
        %2531 = vmatprep.subr.bf16.mxu0 0
        %2532 = vmatpush1.bf16.xpose.msra.mxu0 0
        %2533 = vmatprep.subr.bf16.mxu0 0
        %2534 = vmatpush1.bf16.xpose.msra.mxu0 0
        %2535 = vmatprep.subr.bf16.mxu0 0
        %2536 = vmatpush1.bf16.xpose.msra.mxu0 0
        %2537 = vmatprep.subr.bf16.mxu0 0
        %2538 = vmatpush1.bf16.xpose.msra.mxu0 0
        %2539 = vmatprep.subr.bf16.mxu0 0
        %2540 = vmatpush1.bf16.xpose.msra.mxu0 0
        %2541 = vmatprep.subr.bf16.mxu0 0
        %2542 = vmatpush1.bf16.xpose.msra.mxu0 0
        %2543 = vmatprep.subr.bf16.mxu0 0
        %2544 = vmatpush1.bf16.xpose.msra.mxu0 0
        %2545 = vmatprep.subr.bf16.mxu0 0
        %2546 = vmatpush1.bf16.xpose.msra.mxu0 0
        %2547 = vmatprep.subr.bf16.mxu0 0
        %2548 = vmatpush1.bf16.xpose.msra.mxu0 0
        %2549 = vmatprep.subr.bf16.mxu0 0
        %2550 = vmatpush1.bf16.xpose.msra.mxu0 0
        %2551 = vmatprep.subr.bf16.mxu0 0
        %2552 = vmatpush1.bf16.xpose.msra.mxu0 0
        %2553 = vmatprep.mubr.bf16.mxu0 0
        %2554 = vmatmul.mubr.bf16.gmra.mrb[0].mxu0 %v2516
        %v2555 = vpop.f32.mrb[0].mxu0
        %v2556 = vadd.f32 0.0, %v2555
        %v2557 = vpop.f32.mrb[0].mxu0
        %v2558 = vpop.f32.mrb[0].mxu0
        %v2559 = vadd.f32 0.0, %v2558
        %v2560 = vpop.f32.mrb[0].mxu0
        %2561 = vdwg.mxu0
        %2562 = vrot.lane.b32.xlu0 %v1440, 112
        %v2563 = vpop.permute.xlu0 %2562
        %2564 = vrot.lane.b32.xlu0 %v1444, 112
        %v2565 = vpop.permute.xlu0 %2564
        %v2567 = vsel %vm1450, %v2563, 0
        %v2570 = vsel %vm1450, %v2565, 0
        %2572 = vmatprep.subr.bf16.mxu0 0
        %2573 = vmatpush1.bf16.xpose.msra.mxu0 %v2570
        %2574 = vmatprep.subr.bf16.mxu0 0
        %2575 = vmatpush1.bf16.xpose.msra.mxu0 0
        %2576 = vmatprep.subr.bf16.mxu0 0
        %2577 = vmatpush1.bf16.xpose.msra.mxu0 0
        %2578 = vmatprep.subr.bf16.mxu0 0
        %2579 = vmatpush1.bf16.xpose.msra.mxu0 0
        %2580 = vmatprep.subr.bf16.mxu0 0
        %2581 = vmatpush1.bf16.xpose.msra.mxu0 0
        %2582 = vmatprep.subr.bf16.mxu0 0
        %2583 = vmatpush1.bf16.xpose.msra.mxu0 0
        %2584 = vmatprep.subr.bf16.mxu0 0
        %2585 = vmatpush1.bf16.xpose.msra.mxu0 0
        %2586 = vmatprep.subr.bf16.mxu0 0
        %2587 = vmatpush1.bf16.xpose.msra.mxu0 0
        %2588 = vmatprep.subr.bf16.mxu0 0
        %2589 = vmatpush1.bf16.xpose.msra.mxu0 0
        %2590 = vmatprep.subr.bf16.mxu0 0
        %2591 = vmatpush1.bf16.xpose.msra.mxu0 0
        %2592 = vmatprep.subr.bf16.mxu0 0
        %2593 = vmatpush1.bf16.xpose.msra.mxu0 0
        %2594 = vmatprep.subr.bf16.mxu0 0
        %2595 = vmatpush1.bf16.xpose.msra.mxu0 0
        %2596 = vmatprep.subr.bf16.mxu0 0
        %2597 = vmatpush1.bf16.xpose.msra.mxu0 0
        %2598 = vmatprep.subr.bf16.mxu0 0
        %2599 = vmatpush1.bf16.xpose.msra.mxu0 0
        %2600 = vmatprep.subr.bf16.mxu0 0
        %2601 = vmatpush1.bf16.xpose.msra.mxu0 0
        %2602 = vmatprep.subr.bf16.mxu0 0
        %2603 = vmatpush1.bf16.xpose.msra.mxu0 0
        %2604 = vmatprep.mubr.bf16.mxu0 0
        %2605 = vmatmul.mubr.bf16.gmra.mrb[0].mxu0 %v2567
        %v2606 = vpop.f32.mrb[0].mxu0
        %v2607 = vadd.f32 0.0, %v2606
        %v2608 = vpop.f32.mrb[0].mxu0
        %v2609 = vpop.f32.mrb[0].mxu0
        %v2610 = vadd.f32 0.0, %v2609
        %v2611 = vpop.f32.mrb[0].mxu0
        %2612 = vdwg.mxu0
        %2613 = vrot.lane.b32.xlu0 %v1441, 112
        %v2614 = vpop.permute.xlu0 %2613
        %2615 = vrot.lane.b32.xlu0 %v1445, 112
        %v2616 = vpop.permute.xlu0 %2615
        %v2618 = vsel %vm1450, %v2614, 0
        %v2621 = vsel %vm1450, %v2616, 0
        %2623 = vmatprep.subr.bf16.mxu0 0
        %2624 = vmatpush1.bf16.xpose.msra.mxu0 %v2621
        %2625 = vmatprep.subr.bf16.mxu0 0
        %2626 = vmatpush1.bf16.xpose.msra.mxu0 0
        %2627 = vmatprep.subr.bf16.mxu0 0
        %2628 = vmatpush1.bf16.xpose.msra.mxu0 0
        %2629 = vmatprep.subr.bf16.mxu0 0
        %2630 = vmatpush1.bf16.xpose.msra.mxu0 0
        %2631 = vmatprep.subr.bf16.mxu0 0
        %2632 = vmatpush1.bf16.xpose.msra.mxu0 0
        %2633 = vmatprep.subr.bf16.mxu0 0
        %2634 = vmatpush1.bf16.xpose.msra.mxu0 0
        %2635 = vmatprep.subr.bf16.mxu0 0
        %2636 = vmatpush1.bf16.xpose.msra.mxu0 0
        %2637 = vmatprep.subr.bf16.mxu0 0
        %2638 = vmatpush1.bf16.xpose.msra.mxu0 0
        %2639 = vmatprep.subr.bf16.mxu0 0
        %2640 = vmatpush1.bf16.xpose.msra.mxu0 0
        %2641 = vmatprep.subr.bf16.mxu0 0
        %2642 = vmatpush1.bf16.xpose.msra.mxu0 0
        %2643 = vmatprep.subr.bf16.mxu0 0
        %2644 = vmatpush1.bf16.xpose.msra.mxu0 0
        %2645 = vmatprep.subr.bf16.mxu0 0
        %2646 = vmatpush1.bf16.xpose.msra.mxu0 0
        %2647 = vmatprep.subr.bf16.mxu0 0
        %2648 = vmatpush1.bf16.xpose.msra.mxu0 0
        %2649 = vmatprep.subr.bf16.mxu0 0
        %2650 = vmatpush1.bf16.xpose.msra.mxu0 0
        %2651 = vmatprep.subr.bf16.mxu0 0
        %2652 = vmatpush1.bf16.xpose.msra.mxu0 0
        %2653 = vmatprep.subr.bf16.mxu0 0
        %2654 = vmatpush1.bf16.xpose.msra.mxu0 0
        %2655 = vmatprep.mubr.bf16.mxu0 0
        %2656 = vmatmul.mubr.bf16.gmra.mrb[0].mxu0 %v2618
        %v2657 = vpop.f32.mrb[0].mxu0
        %v2658 = vadd.f32 0.0, %v2657
        %v2659 = vpop.f32.mrb[0].mxu0
        %v2660 = vpop.f32.mrb[0].mxu0
        %v2661 = vadd.f32 0.0, %v2660
        %v2662 = vpop.f32.mrb[0].mxu0
        %2663 = vdwg.mxu0
        %v2664 = vmul.f32 %v2505, 0.35355338
        %v2665 = vmul.f32 %v2508, 0.35355338
        %v2666 = vmul.f32 %v2556, 0.35355338
        %v2667 = vmul.f32 %v2559, 0.35355338
        %v2668 = vmul.f32 %v2607, 0.35355338
        %v2669 = vmul.f32 %v2610, 0.35355338
        %v2670 = vmul.f32 %v2658, 0.35355338
        %v2671 = vmul.f32 %v2661, 0.35355338
        %v2672 = vadd.f32 %v2664, %v1654
        %v2673 = vadd.f32 %v2665, %v1654
        %v2674 = vadd.f32 %v2666, %v1658
        %v2675 = vadd.f32 %v2667, %v1658
        %v2676 = vadd.f32 %v2668, %v1662
        %v2677 = vadd.f32 %v2669, %v1662
        %v2678 = vadd.f32 %v2670, %v1666
        %v2679 = vadd.f32 %v2671, %v1666
        %v2680 = vsel %vm1679, %v2672, -inf
        %2681 = vmax.xlane.f32.xlu0 %v2680
        %v2682 = vpop.xlane.xlu0 %2681
        %v2683 = vsel %vm1679, %v2673, -inf
        %2684 = vmax.xlane.f32.xlu0 %v2683
        %v2685 = vpop.xlane.xlu0 %2684
        %v2686 = vsel %vm1679, %v2674, -inf
        %2687 = vmax.xlane.f32.xlu0 %v2686
        %v2688 = vpop.xlane.xlu0 %2687
        %v2689 = vsel %vm1679, %v2675, -inf
        %2690 = vmax.xlane.f32.xlu0 %v2689
        %v2691 = vpop.xlane.xlu0 %2690
        %v2692 = vsel %vm1679, %v2676, -inf
        %2693 = vmax.xlane.f32.xlu0 %v2692
        %v2694 = vpop.xlane.xlu0 %2693
        %v2695 = vsel %vm1679, %v2677, -inf
        %2696 = vmax.xlane.f32.xlu0 %v2695
        %v2697 = vpop.xlane.xlu0 %2696
        %v2698 = vsel %vm1679, %v2678, -inf
        %2699 = vmax.xlane.f32.xlu0 %v2698
        %v2700 = vpop.xlane.xlu0 %2699
        %v2701 = vsel %vm1679, %v2679, -inf
        %2702 = vmax.xlane.f32.xlu0 %v2701
        %v2703 = vpop.xlane.xlu0 %2702
        %v2704 = vsub.f32 %v2672, %v2682
        %v2705 = vsub.f32 %v2673, %v2685
        %v2706 = vsub.f32 %v2674, %v2688
        %v2707 = vsub.f32 %v2675, %v2691
        %v2708 = vsub.f32 %v2676, %v2694
        %v2709 = vsub.f32 %v2677, %v2697
        %v2710 = vsub.f32 %v2678, %v2700
        %v2711 = vsub.f32 %v2679, %v2703
        %v2712 = vmul.f32 %v2704, 1.442695
        %v2713 = vpow.pop %v2712
        %v2714 = vmul.f32 %v2705, 1.442695
        %v2715 = vpow.pop %v2714
        %v2716 = vmul.f32 %v2706, 1.442695
        %v2717 = vpow.pop %v2716
        %v2718 = vmul.f32 %v2707, 1.442695
        %v2719 = vpow.pop %v2718
        %v2720 = vmul.f32 %v2708, 1.442695
        %v2721 = vpow.pop %v2720
        %v2722 = vmul.f32 %v2709, 1.442695
        %v2723 = vpow.pop %v2722
        %v2724 = vmul.f32 %v2710, 1.442695
        %v2725 = vpow.pop %v2724
        %v2726 = vmul.f32 %v2711, 1.442695
        %v2727 = vpow.pop %v2726
        %v2728 = vsel %vm1679, %v2713, 0.0
        %2729 = vadd.xlane.f32.xlu0 %v2728
        %v2730 = vpop.xlane.xlu0 %2729
        %v2731 = vsel %vm1679, %v2715, 0.0
        %2732 = vadd.xlane.f32.xlu0 %v2731
        %v2733 = vpop.xlane.xlu0 %2732
        %v2734 = vsel %vm1679, %v2717, 0.0
        %2735 = vadd.xlane.f32.xlu0 %v2734
        %v2736 = vpop.xlane.xlu0 %2735
        %v2737 = vsel %vm1679, %v2719, 0.0
        %2738 = vadd.xlane.f32.xlu0 %v2737
        %v2739 = vpop.xlane.xlu0 %2738
        %v2740 = vsel %vm1679, %v2721, 0.0
        %2741 = vadd.xlane.f32.xlu0 %v2740
        %v2742 = vpop.xlane.xlu0 %2741
        %v2743 = vsel %vm1679, %v2723, 0.0
        %2744 = vadd.xlane.f32.xlu0 %v2743
        %v2745 = vpop.xlane.xlu0 %2744
        %v2746 = vsel %vm1679, %v2725, 0.0
        %2747 = vadd.xlane.f32.xlu0 %v2746
        %v2748 = vpop.xlane.xlu0 %2747
        %v2749 = vsel %vm1679, %v2727, 0.0
        %2750 = vadd.xlane.f32.xlu0 %v2749
        %v2751 = vpop.xlane.xlu0 %2750
        %v2752 = vrcp.pop %v2730
        %v2753 = vrcp.pop %v2733
        %v2754 = vrcp.pop %v2736
        %v2755 = vrcp.pop %v2739
        %v2756 = vrcp.pop %v2742
        %v2757 = vrcp.pop %v2745
        %v2758 = vrcp.pop %v2748
        %v2759 = vrcp.pop %v2751
        %v2760 = vmul.f32 %v2713, %v2752
        %v2761 = vmul.f32 %v2715, %v2753
        %v2762 = vmul.f32 %v2717, %v2754
        %v2763 = vmul.f32 %v2719, %v2755
        %v2764 = vmul.f32 %v2721, %v2756
        %v2765 = vmul.f32 %v2723, %v2757
        %v2766 = vmul.f32 %v2725, %v2758
        %v2767 = vmul.f32 %v2727, %v2759
        %v2768 = vpack.c.bf16 %v2761, %v2760
        %v2769 = vpack.c.bf16 %v2763, %v2762
        %v2770 = vpack.c.bf16 %v2765, %v2764
        %v2771 = vpack.c.bf16 %v2767, %v2766
        %2772 = vrot.lane.b32.xlu0 %v1446, 112
        %v2773 = vpop.permute.xlu0 %2772
        %v2776 = vsel %vm1679, %v2768, 0
        %2778 = vmatprep.subr.bf16.mxu0 0
        %2779 = vmatpush1.bf16.msra.mxu0 %v2773
        %2780 = vmatprep.subr.bf16.mxu0 0
        %2781 = vmatpush1.bf16.msra.mxu0 0
        %2782 = vmatprep.subr.bf16.mxu0 0
        %2783 = vmatpush1.bf16.msra.mxu0 0
        %2784 = vmatprep.subr.bf16.mxu0 0
        %2785 = vmatpush1.bf16.msra.mxu0 0
        %2786 = vmatprep.subr.bf16.mxu0 0
        %2787 = vmatpush1.bf16.msra.mxu0 0
        %2788 = vmatprep.subr.bf16.mxu0 0
        %2789 = vmatpush1.bf16.msra.mxu0 0
        %2790 = vmatprep.subr.bf16.mxu0 0
        %2791 = vmatpush1.bf16.msra.mxu0 0
        %2792 = vmatprep.subr.bf16.mxu0 0
        %2793 = vmatpush1.bf16.msra.mxu0 0
        %2794 = vmatprep.subr.bf16.mxu0 0
        %2795 = vmatpush1.bf16.msra.mxu0 0
        %2796 = vmatprep.subr.bf16.mxu0 0
        %2797 = vmatpush1.bf16.msra.mxu0 0
        %2798 = vmatprep.subr.bf16.mxu0 0
        %2799 = vmatpush1.bf16.msra.mxu0 0
        %2800 = vmatprep.subr.bf16.mxu0 0
        %2801 = vmatpush1.bf16.msra.mxu0 0
        %2802 = vmatprep.subr.bf16.mxu0 0
        %2803 = vmatpush1.bf16.msra.mxu0 0
        %2804 = vmatprep.subr.bf16.mxu0 0
        %2805 = vmatpush1.bf16.msra.mxu0 0
        %2806 = vmatprep.subr.bf16.mxu0 0
        %2807 = vmatpush1.bf16.msra.mxu0 0
        %2808 = vmatprep.subr.bf16.mxu0 0
        %2809 = vmatpush1.bf16.msra.mxu0 0
        %2810 = vmatprep.mubr.bf16.mxu0 0
        %2811 = vmatmul.mubr.bf16.gmra.mrb[0].mxu0 %v2776
        %v2812 = vpop.f32.mrb[0].mxu0
        %v2813 = vadd.f32 0.0, %v2812
        %v2814 = vpop.f32.mrb[0].mxu0
        %v2815 = vpop.f32.mrb[0].mxu0
        %v2816 = vadd.f32 0.0, %v2815
        %v2817 = vpop.f32.mrb[0].mxu0
        %2818 = vdwg.mxu0
        %2819 = vrot.lane.b32.xlu0 %v1447, 112
        %v2820 = vpop.permute.xlu0 %2819
        %v2823 = vsel %vm1679, %v2769, 0
        %2825 = vmatprep.subr.bf16.mxu0 0
        %2826 = vmatpush1.bf16.msra.mxu0 %v2820
        %2827 = vmatprep.subr.bf16.mxu0 0
        %2828 = vmatpush1.bf16.msra.mxu0 0
        %2829 = vmatprep.subr.bf16.mxu0 0
        %2830 = vmatpush1.bf16.msra.mxu0 0
        %2831 = vmatprep.subr.bf16.mxu0 0
        %2832 = vmatpush1.bf16.msra.mxu0 0
        %2833 = vmatprep.subr.bf16.mxu0 0
        %2834 = vmatpush1.bf16.msra.mxu0 0
        %2835 = vmatprep.subr.bf16.mxu0 0
        %2836 = vmatpush1.bf16.msra.mxu0 0
        %2837 = vmatprep.subr.bf16.mxu0 0
        %2838 = vmatpush1.bf16.msra.mxu0 0
        %2839 = vmatprep.subr.bf16.mxu0 0
        %2840 = vmatpush1.bf16.msra.mxu0 0
        %2841 = vmatprep.subr.bf16.mxu0 0
        %2842 = vmatpush1.bf16.msra.mxu0 0
        %2843 = vmatprep.subr.bf16.mxu0 0
        %2844 = vmatpush1.bf16.msra.mxu0 0
        %2845 = vmatprep.subr.bf16.mxu0 0
        %2846 = vmatpush1.bf16.msra.mxu0 0
        %2847 = vmatprep.subr.bf16.mxu0 0
        %2848 = vmatpush1.bf16.msra.mxu0 0
        %2849 = vmatprep.subr.bf16.mxu0 0
        %2850 = vmatpush1.bf16.msra.mxu0 0
        %2851 = vmatprep.subr.bf16.mxu0 0
        %2852 = vmatpush1.bf16.msra.mxu0 0
        %2853 = vmatprep.subr.bf16.mxu0 0
        %2854 = vmatpush1.bf16.msra.mxu0 0
        %2855 = vmatprep.subr.bf16.mxu0 0
        %2856 = vmatpush1.bf16.msra.mxu0 0
        %2857 = vmatprep.mubr.bf16.mxu0 0
        %2858 = vmatmul.mubr.bf16.gmra.mrb[0].mxu0 %v2823
        %v2859 = vpop.f32.mrb[0].mxu0
        %v2860 = vadd.f32 0.0, %v2859
        %v2861 = vpop.f32.mrb[0].mxu0
        %v2862 = vpop.f32.mrb[0].mxu0
        %v2863 = vadd.f32 0.0, %v2862
        %v2864 = vpop.f32.mrb[0].mxu0
        %2865 = vdwg.mxu0
        %2866 = vrot.lane.b32.xlu0 %v1448, 112
        %v2867 = vpop.permute.xlu0 %2866
        %v2870 = vsel %vm1679, %v2770, 0
        %2872 = vmatprep.subr.bf16.mxu0 0
        %2873 = vmatpush1.bf16.msra.mxu0 %v2867
        %2874 = vmatprep.subr.bf16.mxu0 0
        %2875 = vmatpush1.bf16.msra.mxu0 0
        %2876 = vmatprep.subr.bf16.mxu0 0
        %2877 = vmatpush1.bf16.msra.mxu0 0
        %2878 = vmatprep.subr.bf16.mxu0 0
        %2879 = vmatpush1.bf16.msra.mxu0 0
        %2880 = vmatprep.subr.bf16.mxu0 0
        %2881 = vmatpush1.bf16.msra.mxu0 0
        %2882 = vmatprep.subr.bf16.mxu0 0
        %2883 = vmatpush1.bf16.msra.mxu0 0
        %2884 = vmatprep.subr.bf16.mxu0 0
        %2885 = vmatpush1.bf16.msra.mxu0 0
        %2886 = vmatprep.subr.bf16.mxu0 0
        %2887 = vmatpush1.bf16.msra.mxu0 0
        %2888 = vmatprep.subr.bf16.mxu0 0
        %2889 = vmatpush1.bf16.msra.mxu0 0
        %2890 = vmatprep.subr.bf16.mxu0 0
        %2891 = vmatpush1.bf16.msra.mxu0 0
        %2892 = vmatprep.subr.bf16.mxu0 0
        %2893 = vmatpush1.bf16.msra.mxu0 0
        %2894 = vmatprep.subr.bf16.mxu0 0
        %2895 = vmatpush1.bf16.msra.mxu0 0
        %2896 = vmatprep.subr.bf16.mxu0 0
        %2897 = vmatpush1.bf16.msra.mxu0 0
        %2898 = vmatprep.subr.bf16.mxu0 0
        %2899 = vmatpush1.bf16.msra.mxu0 0
        %2900 = vmatprep.subr.bf16.mxu0 0
        %2901 = vmatpush1.bf16.msra.mxu0 0
        %2902 = vmatprep.subr.bf16.mxu0 0
        %2903 = vmatpush1.bf16.msra.mxu0 0
        %2904 = vmatprep.mubr.bf16.mxu0 0
        %2905 = vmatmul.mubr.bf16.gmra.mrb[0].mxu0 %v2870
        %v2906 = vpop.f32.mrb[0].mxu0
        %v2907 = vadd.f32 0.0, %v2906
        %v2908 = vpop.f32.mrb[0].mxu0
        %v2909 = vpop.f32.mrb[0].mxu0
        %v2910 = vadd.f32 0.0, %v2909
        %v2911 = vpop.f32.mrb[0].mxu0
        %2912 = vdwg.mxu0
        %2913 = vrot.lane.b32.xlu0 %v1449, 112
        %v2914 = vpop.permute.xlu0 %2913
        %v2917 = vsel %vm1679, %v2771, 0
        %2919 = vmatprep.subr.bf16.mxu0 0
        %2920 = vmatpush1.bf16.msra.mxu0 %v2914
        %2921 = vmatprep.subr.bf16.mxu0 0
        %2922 = vmatpush1.bf16.msra.mxu0 0
        %2923 = vmatprep.subr.bf16.mxu0 0
        %2924 = vmatpush1.bf16.msra.mxu0 0
        %2925 = vmatprep.subr.bf16.mxu0 0
        %2926 = vmatpush1.bf16.msra.mxu0 0
        %2927 = vmatprep.subr.bf16.mxu0 0
        %2928 = vmatpush1.bf16.msra.mxu0 0
        %2929 = vmatprep.subr.bf16.mxu0 0
        %2930 = vmatpush1.bf16.msra.mxu0 0
        %2931 = vmatprep.subr.bf16.mxu0 0
        %2932 = vmatpush1.bf16.msra.mxu0 0
        %2933 = vmatprep.subr.bf16.mxu0 0
        %2934 = vmatpush1.bf16.msra.mxu0 0
        %2935 = vmatprep.subr.bf16.mxu0 0
        %2936 = vmatpush1.bf16.msra.mxu0 0
        %2937 = vmatprep.subr.bf16.mxu0 0
        %2938 = vmatpush1.bf16.msra.mxu0 0
        %2939 = vmatprep.subr.bf16.mxu0 0
        %2940 = vmatpush1.bf16.msra.mxu0 0
        %2941 = vmatprep.subr.bf16.mxu0 0
        %2942 = vmatpush1.bf16.msra.mxu0 0
        %2943 = vmatprep.subr.bf16.mxu0 0
        %2944 = vmatpush1.bf16.msra.mxu0 0
        %2945 = vmatprep.subr.bf16.mxu0 0
        %2946 = vmatpush1.bf16.msra.mxu0 0
        %2947 = vmatprep.subr.bf16.mxu0 0
        %2948 = vmatpush1.bf16.msra.mxu0 0
        %2949 = vmatprep.subr.bf16.mxu0 0
        %2950 = vmatpush1.bf16.msra.mxu0 0
        %2951 = vmatprep.mubr.bf16.mxu0 0
        %2952 = vmatmul.mubr.bf16.gmra.mrb[0].mxu0 %v2917
        %v2953 = vpop.f32.mrb[0].mxu0
        %v2954 = vadd.f32 0.0, %v2953
        %v2955 = vpop.f32.mrb[0].mxu0
        %v2956 = vpop.f32.mrb[0].mxu0
        %v2957 = vadd.f32 0.0, %v2956
        %v2958 = vpop.f32.mrb[0].mxu0
        %2959 = vdwg.mxu0
        %2960 = vrot.lane.b32.xlu0 %v1438, 104
        %v2961 = vpop.permute.xlu0 %2960
        %2962 = vrot.lane.b32.xlu0 %v1442, 104
        %v2963 = vpop.permute.xlu0 %2962
        %v2965 = vsel %vm1450, %v2961, 0
        %v2968 = vsel %vm1450, %v2963, 0
        %2970 = vmatprep.subr.bf16.mxu0 0
        %2971 = vmatpush1.bf16.xpose.msra.mxu0 %v2968
        %2972 = vmatprep.subr.bf16.mxu0 0
        %2973 = vmatpush1.bf16.xpose.msra.mxu0 0
        %2974 = vmatprep.subr.bf16.mxu0 0
        %2975 = vmatpush1.bf16.xpose.msra.mxu0 0
        %2976 = vmatprep.subr.bf16.mxu0 0
        %2977 = vmatpush1.bf16.xpose.msra.mxu0 0
        %2978 = vmatprep.subr.bf16.mxu0 0
        %2979 = vmatpush1.bf16.xpose.msra.mxu0 0
        %2980 = vmatprep.subr.bf16.mxu0 0
        %2981 = vmatpush1.bf16.xpose.msra.mxu0 0
        %2982 = vmatprep.subr.bf16.mxu0 0
        %2983 = vmatpush1.bf16.xpose.msra.mxu0 0
        %2984 = vmatprep.subr.bf16.mxu0 0
        %2985 = vmatpush1.bf16.xpose.msra.mxu0 0
        %2986 = vmatprep.subr.bf16.mxu0 0
        %2987 = vmatpush1.bf16.xpose.msra.mxu0 0
        %2988 = vmatprep.subr.bf16.mxu0 0
        %2989 = vmatpush1.bf16.xpose.msra.mxu0 0
        %2990 = vmatprep.subr.bf16.mxu0 0
        %2991 = vmatpush1.bf16.xpose.msra.mxu0 0
        %2992 = vmatprep.subr.bf16.mxu0 0
        %2993 = vmatpush1.bf16.xpose.msra.mxu0 0
        %2994 = vmatprep.subr.bf16.mxu0 0
        %2995 = vmatpush1.bf16.xpose.msra.mxu0 0
        %2996 = vmatprep.subr.bf16.mxu0 0
        %2997 = vmatpush1.bf16.xpose.msra.mxu0 0
        %2998 = vmatprep.subr.bf16.mxu0 0
        %2999 = vmatpush1.bf16.xpose.msra.mxu0 0
        %3000 = vmatprep.subr.bf16.mxu0 0
        %3001 = vmatpush1.bf16.xpose.msra.mxu0 0
        %3002 = vmatprep.mubr.bf16.mxu0 0
        %3003 = vmatmul.mubr.bf16.gmra.mrb[0].mxu0 %v2965
        %v3004 = vpop.f32.mrb[0].mxu0
        %v3005 = vadd.f32 0.0, %v3004
        %v3006 = vpop.f32.mrb[0].mxu0
        %v3007 = vpop.f32.mrb[0].mxu0
        %v3008 = vadd.f32 0.0, %v3007
        %v3009 = vpop.f32.mrb[0].mxu0
        %3010 = vdwg.mxu0
        %3011 = vrot.lane.b32.xlu0 %v1439, 104
        %v3012 = vpop.permute.xlu0 %3011
        %3013 = vrot.lane.b32.xlu0 %v1443, 104
        %v3014 = vpop.permute.xlu0 %3013
        %v3016 = vsel %vm1450, %v3012, 0
        %v3019 = vsel %vm1450, %v3014, 0
        %3021 = vmatprep.subr.bf16.mxu0 0
        %3022 = vmatpush1.bf16.xpose.msra.mxu0 %v3019
        %3023 = vmatprep.subr.bf16.mxu0 0
        %3024 = vmatpush1.bf16.xpose.msra.mxu0 0
        %3025 = vmatprep.subr.bf16.mxu0 0
        %3026 = vmatpush1.bf16.xpose.msra.mxu0 0
        %3027 = vmatprep.subr.bf16.mxu0 0
        %3028 = vmatpush1.bf16.xpose.msra.mxu0 0
        %3029 = vmatprep.subr.bf16.mxu0 0
        %3030 = vmatpush1.bf16.xpose.msra.mxu0 0
        %3031 = vmatprep.subr.bf16.mxu0 0
        %3032 = vmatpush1.bf16.xpose.msra.mxu0 0
        %3033 = vmatprep.subr.bf16.mxu0 0
        %3034 = vmatpush1.bf16.xpose.msra.mxu0 0
        %3035 = vmatprep.subr.bf16.mxu0 0
        %3036 = vmatpush1.bf16.xpose.msra.mxu0 0
        %3037 = vmatprep.subr.bf16.mxu0 0
        %3038 = vmatpush1.bf16.xpose.msra.mxu0 0
        %3039 = vmatprep.subr.bf16.mxu0 0
        %3040 = vmatpush1.bf16.xpose.msra.mxu0 0
        %3041 = vmatprep.subr.bf16.mxu0 0
        %3042 = vmatpush1.bf16.xpose.msra.mxu0 0
        %3043 = vmatprep.subr.bf16.mxu0 0
        %3044 = vmatpush1.bf16.xpose.msra.mxu0 0
        %3045 = vmatprep.subr.bf16.mxu0 0
        %3046 = vmatpush1.bf16.xpose.msra.mxu0 0
        %3047 = vmatprep.subr.bf16.mxu0 0
        %3048 = vmatpush1.bf16.xpose.msra.mxu0 0
        %3049 = vmatprep.subr.bf16.mxu0 0
        %3050 = vmatpush1.bf16.xpose.msra.mxu0 0
        %3051 = vmatprep.subr.bf16.mxu0 0
        %3052 = vmatpush1.bf16.xpose.msra.mxu0 0
        %3053 = vmatprep.mubr.bf16.mxu0 0
        %3054 = vmatmul.mubr.bf16.gmra.mrb[0].mxu0 %v3016
        %v3055 = vpop.f32.mrb[0].mxu0
        %v3056 = vadd.f32 0.0, %v3055
        %v3057 = vpop.f32.mrb[0].mxu0
        %v3058 = vpop.f32.mrb[0].mxu0
        %v3059 = vadd.f32 0.0, %v3058
        %v3060 = vpop.f32.mrb[0].mxu0
        %3061 = vdwg.mxu0
        %3062 = vrot.lane.b32.xlu0 %v1440, 104
        %v3063 = vpop.permute.xlu0 %3062
        %3064 = vrot.lane.b32.xlu0 %v1444, 104
        %v3065 = vpop.permute.xlu0 %3064
        %v3067 = vsel %vm1450, %v3063, 0
        %v3070 = vsel %vm1450, %v3065, 0
        %3072 = vmatprep.subr.bf16.mxu0 0
        %3073 = vmatpush1.bf16.xpose.msra.mxu0 %v3070
        %3074 = vmatprep.subr.bf16.mxu0 0
        %3075 = vmatpush1.bf16.xpose.msra.mxu0 0
        %3076 = vmatprep.subr.bf16.mxu0 0
        %3077 = vmatpush1.bf16.xpose.msra.mxu0 0
        %3078 = vmatprep.subr.bf16.mxu0 0
        %3079 = vmatpush1.bf16.xpose.msra.mxu0 0
        %3080 = vmatprep.subr.bf16.mxu0 0
        %3081 = vmatpush1.bf16.xpose.msra.mxu0 0
        %3082 = vmatprep.subr.bf16.mxu0 0
        %3083 = vmatpush1.bf16.xpose.msra.mxu0 0
        %3084 = vmatprep.subr.bf16.mxu0 0
        %3085 = vmatpush1.bf16.xpose.msra.mxu0 0
        %3086 = vmatprep.subr.bf16.mxu0 0
        %3087 = vmatpush1.bf16.xpose.msra.mxu0 0
        %3088 = vmatprep.subr.bf16.mxu0 0
        %3089 = vmatpush1.bf16.xpose.msra.mxu0 0
        %3090 = vmatprep.subr.bf16.mxu0 0
        %3091 = vmatpush1.bf16.xpose.msra.mxu0 0
        %3092 = vmatprep.subr.bf16.mxu0 0
        %3093 = vmatpush1.bf16.xpose.msra.mxu0 0
        %3094 = vmatprep.subr.bf16.mxu0 0
        %3095 = vmatpush1.bf16.xpose.msra.mxu0 0
        %3096 = vmatprep.subr.bf16.mxu0 0
        %3097 = vmatpush1.bf16.xpose.msra.mxu0 0
        %3098 = vmatprep.subr.bf16.mxu0 0
        %3099 = vmatpush1.bf16.xpose.msra.mxu0 0
        %3100 = vmatprep.subr.bf16.mxu0 0
        %3101 = vmatpush1.bf16.xpose.msra.mxu0 0
        %3102 = vmatprep.subr.bf16.mxu0 0
        %3103 = vmatpush1.bf16.xpose.msra.mxu0 0
        %3104 = vmatprep.mubr.bf16.mxu0 0
        %3105 = vmatmul.mubr.bf16.gmra.mrb[0].mxu0 %v3067
        %v3106 = vpop.f32.mrb[0].mxu0
        %v3107 = vadd.f32 0.0, %v3106
        %v3108 = vpop.f32.mrb[0].mxu0
        %v3109 = vpop.f32.mrb[0].mxu0
        %v3110 = vadd.f32 0.0, %v3109
        %v3111 = vpop.f32.mrb[0].mxu0
        %3112 = vdwg.mxu0
        %3113 = vrot.lane.b32.xlu0 %v1441, 104
        %v3114 = vpop.permute.xlu0 %3113
        %3115 = vrot.lane.b32.xlu0 %v1445, 104
        %v3116 = vpop.permute.xlu0 %3115
        %v3118 = vsel %vm1450, %v3114, 0
        %v3121 = vsel %vm1450, %v3116, 0
        %3123 = vmatprep.subr.bf16.mxu0 0
        %3124 = vmatpush1.bf16.xpose.msra.mxu0 %v3121
        %3125 = vmatprep.subr.bf16.mxu0 0
        %3126 = vmatpush1.bf16.xpose.msra.mxu0 0
        %3127 = vmatprep.subr.bf16.mxu0 0
        %3128 = vmatpush1.bf16.xpose.msra.mxu0 0
        %3129 = vmatprep.subr.bf16.mxu0 0
        %3130 = vmatpush1.bf16.xpose.msra.mxu0 0
        %3131 = vmatprep.subr.bf16.mxu0 0
        %3132 = vmatpush1.bf16.xpose.msra.mxu0 0
        %3133 = vmatprep.subr.bf16.mxu0 0
        %3134 = vmatpush1.bf16.xpose.msra.mxu0 0
        %3135 = vmatprep.subr.bf16.mxu0 0
        %3136 = vmatpush1.bf16.xpose.msra.mxu0 0
        %3137 = vmatprep.subr.bf16.mxu0 0
        %3138 = vmatpush1.bf16.xpose.msra.mxu0 0
        %3139 = vmatprep.subr.bf16.mxu0 0
        %3140 = vmatpush1.bf16.xpose.msra.mxu0 0
        %3141 = vmatprep.subr.bf16.mxu0 0
        %3142 = vmatpush1.bf16.xpose.msra.mxu0 0
        %3143 = vmatprep.subr.bf16.mxu0 0
        %3144 = vmatpush1.bf16.xpose.msra.mxu0 0
        %3145 = vmatprep.subr.bf16.mxu0 0
        %3146 = vmatpush1.bf16.xpose.msra.mxu0 0
        %3147 = vmatprep.subr.bf16.mxu0 0
        %3148 = vmatpush1.bf16.xpose.msra.mxu0 0
        %3149 = vmatprep.subr.bf16.mxu0 0
        %3150 = vmatpush1.bf16.xpose.msra.mxu0 0
        %3151 = vmatprep.subr.bf16.mxu0 0
        %3152 = vmatpush1.bf16.xpose.msra.mxu0 0
        %3153 = vmatprep.subr.bf16.mxu0 0
        %3154 = vmatpush1.bf16.xpose.msra.mxu0 0
        %3155 = vmatprep.mubr.bf16.mxu0 0
        %3156 = vmatmul.mubr.bf16.gmra.mrb[0].mxu0 %v3118
        %v3157 = vpop.f32.mrb[0].mxu0
        %v3158 = vadd.f32 0.0, %v3157
        %v3159 = vpop.f32.mrb[0].mxu0
        %v3160 = vpop.f32.mrb[0].mxu0
        %v3161 = vadd.f32 0.0, %v3160
        %v3162 = vpop.f32.mrb[0].mxu0
        %3163 = vdwg.mxu0
        %v3164 = vmul.f32 %v3005, 0.35355338
        %v3165 = vmul.f32 %v3008, 0.35355338
        %v3166 = vmul.f32 %v3056, 0.35355338
        %v3167 = vmul.f32 %v3059, 0.35355338
        %v3168 = vmul.f32 %v3107, 0.35355338
        %v3169 = vmul.f32 %v3110, 0.35355338
        %v3170 = vmul.f32 %v3158, 0.35355338
        %v3171 = vmul.f32 %v3161, 0.35355338
        %v3172 = vadd.f32 %v3164, %v1654
        %v3173 = vadd.f32 %v3165, %v1654
        %v3174 = vadd.f32 %v3166, %v1658
        %v3175 = vadd.f32 %v3167, %v1658
        %v3176 = vadd.f32 %v3168, %v1662
        %v3177 = vadd.f32 %v3169, %v1662
        %v3178 = vadd.f32 %v3170, %v1666
        %v3179 = vadd.f32 %v3171, %v1666
        %v3180 = vsel %vm1679, %v3172, -inf
        %3181 = vmax.xlane.f32.xlu0 %v3180
        %v3182 = vpop.xlane.xlu0 %3181
        %v3183 = vsel %vm1679, %v3173, -inf
        %3184 = vmax.xlane.f32.xlu0 %v3183
        %v3185 = vpop.xlane.xlu0 %3184
        %v3186 = vsel %vm1679, %v3174, -inf
        %3187 = vmax.xlane.f32.xlu0 %v3186
        %v3188 = vpop.xlane.xlu0 %3187
        %v3189 = vsel %vm1679, %v3175, -inf
        %3190 = vmax.xlane.f32.xlu0 %v3189
        %v3191 = vpop.xlane.xlu0 %3190
        %v3192 = vsel %vm1679, %v3176, -inf
        %3193 = vmax.xlane.f32.xlu0 %v3192
        %v3194 = vpop.xlane.xlu0 %3193
        %v3195 = vsel %vm1679, %v3177, -inf
        %3196 = vmax.xlane.f32.xlu0 %v3195
        %v3197 = vpop.xlane.xlu0 %3196
        %v3198 = vsel %vm1679, %v3178, -inf
        %3199 = vmax.xlane.f32.xlu0 %v3198
        %v3200 = vpop.xlane.xlu0 %3199
        %v3201 = vsel %vm1679, %v3179, -inf
        %3202 = vmax.xlane.f32.xlu0 %v3201
        %v3203 = vpop.xlane.xlu0 %3202
        %v3204 = vsub.f32 %v3172, %v3182
        %v3205 = vsub.f32 %v3173, %v3185
        %v3206 = vsub.f32 %v3174, %v3188
        %v3207 = vsub.f32 %v3175, %v3191
        %v3208 = vsub.f32 %v3176, %v3194
        %v3209 = vsub.f32 %v3177, %v3197
        %v3210 = vsub.f32 %v3178, %v3200
        %v3211 = vsub.f32 %v3179, %v3203
        %v3212 = vmul.f32 %v3204, 1.442695
        %v3213 = vpow.pop %v3212
        %v3214 = vmul.f32 %v3205, 1.442695
        %v3215 = vpow.pop %v3214
        %v3216 = vmul.f32 %v3206, 1.442695
        %v3217 = vpow.pop %v3216
        %v3218 = vmul.f32 %v3207, 1.442695
        %v3219 = vpow.pop %v3218
        %v3220 = vmul.f32 %v3208, 1.442695
        %v3221 = vpow.pop %v3220
        %v3222 = vmul.f32 %v3209, 1.442695
        %v3223 = vpow.pop %v3222
        %v3224 = vmul.f32 %v3210, 1.442695
        %v3225 = vpow.pop %v3224
        %v3226 = vmul.f32 %v3211, 1.442695
        %v3227 = vpow.pop %v3226
        %v3228 = vsel %vm1679, %v3213, 0.0
        %3229 = vadd.xlane.f32.xlu0 %v3228
        %v3230 = vpop.xlane.xlu0 %3229
        %v3231 = vsel %vm1679, %v3215, 0.0
        %3232 = vadd.xlane.f32.xlu0 %v3231
        %v3233 = vpop.xlane.xlu0 %3232
        %v3234 = vsel %vm1679, %v3217, 0.0
        %3235 = vadd.xlane.f32.xlu0 %v3234
        %v3236 = vpop.xlane.xlu0 %3235
        %v3237 = vsel %vm1679, %v3219, 0.0
        %3238 = vadd.xlane.f32.xlu0 %v3237
        %v3239 = vpop.xlane.xlu0 %3238
        %v3240 = vsel %vm1679, %v3221, 0.0
        %3241 = vadd.xlane.f32.xlu0 %v3240
        %v3242 = vpop.xlane.xlu0 %3241
        %v3243 = vsel %vm1679, %v3223, 0.0
        %3244 = vadd.xlane.f32.xlu0 %v3243
        %v3245 = vpop.xlane.xlu0 %3244
        %v3246 = vsel %vm1679, %v3225, 0.0
        %3247 = vadd.xlane.f32.xlu0 %v3246
        %v3248 = vpop.xlane.xlu0 %3247
        %v3249 = vsel %vm1679, %v3227, 0.0
        %3250 = vadd.xlane.f32.xlu0 %v3249
        %v3251 = vpop.xlane.xlu0 %3250
        %v3252 = vrcp.pop %v3230
        %v3253 = vrcp.pop %v3233
        %v3254 = vrcp.pop %v3236
        %v3255 = vrcp.pop %v3239
        %v3256 = vrcp.pop %v3242
        %v3257 = vrcp.pop %v3245
        %v3258 = vrcp.pop %v3248
        %v3259 = vrcp.pop %v3251
        %v3260 = vmul.f32 %v3213, %v3252
        %v3261 = vmul.f32 %v3215, %v3253
        %v3262 = vmul.f32 %v3217, %v3254
        %v3263 = vmul.f32 %v3219, %v3255
        %v3264 = vmul.f32 %v3221, %v3256
        %v3265 = vmul.f32 %v3223, %v3257
        %v3266 = vmul.f32 %v3225, %v3258
        %v3267 = vmul.f32 %v3227, %v3259
        %v3268 = vpack.c.bf16 %v3261, %v3260
        %v3269 = vpack.c.bf16 %v3263, %v3262
        %v3270 = vpack.c.bf16 %v3265, %v3264
        %v3271 = vpack.c.bf16 %v3267, %v3266
        %3272 = vrot.lane.b32.xlu0 %v1446, 104
        %v3273 = vpop.permute.xlu0 %3272
        %v3276 = vsel %vm1679, %v3268, 0
        %3278 = vmatprep.subr.bf16.mxu0 0
        %3279 = vmatpush1.bf16.msra.mxu0 %v3273
        %3280 = vmatprep.subr.bf16.mxu0 0
        %3281 = vmatpush1.bf16.msra.mxu0 0
        %3282 = vmatprep.subr.bf16.mxu0 0
        %3283 = vmatpush1.bf16.msra.mxu0 0
        %3284 = vmatprep.subr.bf16.mxu0 0
        %3285 = vmatpush1.bf16.msra.mxu0 0
        %3286 = vmatprep.subr.bf16.mxu0 0
        %3287 = vmatpush1.bf16.msra.mxu0 0
        %3288 = vmatprep.subr.bf16.mxu0 0
        %3289 = vmatpush1.bf16.msra.mxu0 0
        %3290 = vmatprep.subr.bf16.mxu0 0
        %3291 = vmatpush1.bf16.msra.mxu0 0
        %3292 = vmatprep.subr.bf16.mxu0 0
        %3293 = vmatpush1.bf16.msra.mxu0 0
        %3294 = vmatprep.subr.bf16.mxu0 0
        %3295 = vmatpush1.bf16.msra.mxu0 0
        %3296 = vmatprep.subr.bf16.mxu0 0
        %3297 = vmatpush1.bf16.msra.mxu0 0
        %3298 = vmatprep.subr.bf16.mxu0 0
        %3299 = vmatpush1.bf16.msra.mxu0 0
        %3300 = vmatprep.subr.bf16.mxu0 0
        %3301 = vmatpush1.bf16.msra.mxu0 0
        %3302 = vmatprep.subr.bf16.mxu0 0
        %3303 = vmatpush1.bf16.msra.mxu0 0
        %3304 = vmatprep.subr.bf16.mxu0 0
        %3305 = vmatpush1.bf16.msra.mxu0 0
        %3306 = vmatprep.subr.bf16.mxu0 0
        %3307 = vmatpush1.bf16.msra.mxu0 0
        %3308 = vmatprep.subr.bf16.mxu0 0
        %3309 = vmatpush1.bf16.msra.mxu0 0
        %3310 = vmatprep.mubr.bf16.mxu0 0
        %3311 = vmatmul.mubr.bf16.gmra.mrb[0].mxu0 %v3276
        %v3312 = vpop.f32.mrb[0].mxu0
        %v3313 = vadd.f32 0.0, %v3312
        %v3314 = vpop.f32.mrb[0].mxu0
        %v3315 = vpop.f32.mrb[0].mxu0
        %v3316 = vadd.f32 0.0, %v3315
        %v3317 = vpop.f32.mrb[0].mxu0
        %3318 = vdwg.mxu0
        %3319 = vrot.lane.b32.xlu0 %v1447, 104
        %v3320 = vpop.permute.xlu0 %3319
        %v3323 = vsel %vm1679, %v3269, 0
        %3325 = vmatprep.subr.bf16.mxu0 0
        %3326 = vmatpush1.bf16.msra.mxu0 %v3320
        %3327 = vmatprep.subr.bf16.mxu0 0
        %3328 = vmatpush1.bf16.msra.mxu0 0
        %3329 = vmatprep.subr.bf16.mxu0 0
        %3330 = vmatpush1.bf16.msra.mxu0 0
        %3331 = vmatprep.subr.bf16.mxu0 0
        %3332 = vmatpush1.bf16.msra.mxu0 0
        %3333 = vmatprep.subr.bf16.mxu0 0
        %3334 = vmatpush1.bf16.msra.mxu0 0
        %3335 = vmatprep.subr.bf16.mxu0 0
        %3336 = vmatpush1.bf16.msra.mxu0 0
        %3337 = vmatprep.subr.bf16.mxu0 0
        %3338 = vmatpush1.bf16.msra.mxu0 0
        %3339 = vmatprep.subr.bf16.mxu0 0
        %3340 = vmatpush1.bf16.msra.mxu0 0
        %3341 = vmatprep.subr.bf16.mxu0 0
        %3342 = vmatpush1.bf16.msra.mxu0 0
        %3343 = vmatprep.subr.bf16.mxu0 0
        %3344 = vmatpush1.bf16.msra.mxu0 0
        %3345 = vmatprep.subr.bf16.mxu0 0
        %3346 = vmatpush1.bf16.msra.mxu0 0
        %3347 = vmatprep.subr.bf16.mxu0 0
        %3348 = vmatpush1.bf16.msra.mxu0 0
        %3349 = vmatprep.subr.bf16.mxu0 0
        %3350 = vmatpush1.bf16.msra.mxu0 0
        %3351 = vmatprep.subr.bf16.mxu0 0
        %3352 = vmatpush1.bf16.msra.mxu0 0
        %3353 = vmatprep.subr.bf16.mxu0 0
        %3354 = vmatpush1.bf16.msra.mxu0 0
        %3355 = vmatprep.subr.bf16.mxu0 0
        %3356 = vmatpush1.bf16.msra.mxu0 0
        %3357 = vmatprep.mubr.bf16.mxu0 0
        %3358 = vmatmul.mubr.bf16.gmra.mrb[0].mxu0 %v3323
        %v3359 = vpop.f32.mrb[0].mxu0
        %v3360 = vadd.f32 0.0, %v3359
        %v3361 = vpop.f32.mrb[0].mxu0
        %v3362 = vpop.f32.mrb[0].mxu0
        %v3363 = vadd.f32 0.0, %v3362
        %v3364 = vpop.f32.mrb[0].mxu0
        %3365 = vdwg.mxu0
        %3366 = vrot.lane.b32.xlu0 %v1448, 104
        %v3367 = vpop.permute.xlu0 %3366
        %v3370 = vsel %vm1679, %v3270, 0
        %3372 = vmatprep.subr.bf16.mxu0 0
        %3373 = vmatpush1.bf16.msra.mxu0 %v3367
        %3374 = vmatprep.subr.bf16.mxu0 0
        %3375 = vmatpush1.bf16.msra.mxu0 0
        %3376 = vmatprep.subr.bf16.mxu0 0
        %3377 = vmatpush1.bf16.msra.mxu0 0
        %3378 = vmatprep.subr.bf16.mxu0 0
        %3379 = vmatpush1.bf16.msra.mxu0 0
        %3380 = vmatprep.subr.bf16.mxu0 0
        %3381 = vmatpush1.bf16.msra.mxu0 0
        %3382 = vmatprep.subr.bf16.mxu0 0
        %3383 = vmatpush1.bf16.msra.mxu0 0
        %3384 = vmatprep.subr.bf16.mxu0 0
        %3385 = vmatpush1.bf16.msra.mxu0 0
        %3386 = vmatprep.subr.bf16.mxu0 0
        %3387 = vmatpush1.bf16.msra.mxu0 0
        %3388 = vmatprep.subr.bf16.mxu0 0
        %3389 = vmatpush1.bf16.msra.mxu0 0
        %3390 = vmatprep.subr.bf16.mxu0 0
        %3391 = vmatpush1.bf16.msra.mxu0 0
        %3392 = vmatprep.subr.bf16.mxu0 0
        %3393 = vmatpush1.bf16.msra.mxu0 0
        %3394 = vmatprep.subr.bf16.mxu0 0
        %3395 = vmatpush1.bf16.msra.mxu0 0
        %3396 = vmatprep.subr.bf16.mxu0 0
        %3397 = vmatpush1.bf16.msra.mxu0 0
        %3398 = vmatprep.subr.bf16.mxu0 0
        %3399 = vmatpush1.bf16.msra.mxu0 0
        %3400 = vmatprep.subr.bf16.mxu0 0
        %3401 = vmatpush1.bf16.msra.mxu0 0
        %3402 = vmatprep.subr.bf16.mxu0 0
        %3403 = vmatpush1.bf16.msra.mxu0 0
        %3404 = vmatprep.mubr.bf16.mxu0 0
        %3405 = vmatmul.mubr.bf16.gmra.mrb[0].mxu0 %v3370
        %v3406 = vpop.f32.mrb[0].mxu0
        %v3407 = vadd.f32 0.0, %v3406
        %v3408 = vpop.f32.mrb[0].mxu0
        %v3409 = vpop.f32.mrb[0].mxu0
        %v3410 = vadd.f32 0.0, %v3409
        %v3411 = vpop.f32.mrb[0].mxu0
        %3412 = vdwg.mxu0
        %3413 = vrot.lane.b32.xlu0 %v1449, 104
        %v3414 = vpop.permute.xlu0 %3413
        %v3417 = vsel %vm1679, %v3271, 0
        %3419 = vmatprep.subr.bf16.mxu0 0
        %3420 = vmatpush1.bf16.msra.mxu0 %v3414
        %3421 = vmatprep.subr.bf16.mxu0 0
        %3422 = vmatpush1.bf16.msra.mxu0 0
        %3423 = vmatprep.subr.bf16.mxu0 0
        %3424 = vmatpush1.bf16.msra.mxu0 0
        %3425 = vmatprep.subr.bf16.mxu0 0
        %3426 = vmatpush1.bf16.msra.mxu0 0
        %3427 = vmatprep.subr.bf16.mxu0 0
        %3428 = vmatpush1.bf16.msra.mxu0 0
        %3429 = vmatprep.subr.bf16.mxu0 0
        %3430 = vmatpush1.bf16.msra.mxu0 0
        %3431 = vmatprep.subr.bf16.mxu0 0
        %3432 = vmatpush1.bf16.msra.mxu0 0
        %3433 = vmatprep.subr.bf16.mxu0 0
        %3434 = vmatpush1.bf16.msra.mxu0 0
        %3435 = vmatprep.subr.bf16.mxu0 0
        %3436 = vmatpush1.bf16.msra.mxu0 0
        %3437 = vmatprep.subr.bf16.mxu0 0
        %3438 = vmatpush1.bf16.msra.mxu0 0
        %3439 = vmatprep.subr.bf16.mxu0 0
        %3440 = vmatpush1.bf16.msra.mxu0 0
        %3441 = vmatprep.subr.bf16.mxu0 0
        %3442 = vmatpush1.bf16.msra.mxu0 0
        %3443 = vmatprep.subr.bf16.mxu0 0
        %3444 = vmatpush1.bf16.msra.mxu0 0
        %3445 = vmatprep.subr.bf16.mxu0 0
        %3446 = vmatpush1.bf16.msra.mxu0 0
        %3447 = vmatprep.subr.bf16.mxu0 0
        %3448 = vmatpush1.bf16.msra.mxu0 0
        %3449 = vmatprep.subr.bf16.mxu0 0
        %3450 = vmatpush1.bf16.msra.mxu0 0
        %3451 = vmatprep.mubr.bf16.mxu0 0
        %3452 = vmatmul.mubr.bf16.gmra.mrb[0].mxu0 %v3417
        %v3453 = vpop.f32.mrb[0].mxu0
        %v3454 = vadd.f32 0.0, %v3453
        %v3455 = vpop.f32.mrb[0].mxu0
        %v3456 = vpop.f32.mrb[0].mxu0
        %v3457 = vadd.f32 0.0, %v3456
        %v3458 = vpop.f32.mrb[0].mxu0
        %3459 = vdwg.mxu0
        %3468 = vrot.lane.b32.xlu0 %v2310, 8
        %v3469 = vpop.permute.xlu0 %3468
        %3470 = vrot.lane.b32.xlu0 %v2313, 8
        %v3471 = vpop.permute.xlu0 %3470
        %3472 = vrot.lane.b32.xlu0 %v2358, 8
        %v3473 = vpop.permute.xlu0 %3472
        %3474 = vrot.lane.b32.xlu0 %v2361, 8
        %v3475 = vpop.permute.xlu0 %3474
        %3476 = vrot.lane.b32.xlu0 %v2406, 8
        %v3477 = vpop.permute.xlu0 %3476
        %3478 = vrot.lane.b32.xlu0 %v2409, 8
        %v3479 = vpop.permute.xlu0 %3478
        %3480 = vrot.lane.b32.xlu0 %v2454, 8
        %v3481 = vpop.permute.xlu0 %3480
        %3482 = vrot.lane.b32.xlu0 %v2457, 8
        %v3483 = vpop.permute.xlu0 %3482
        %3500 = vrot.lane.b32.xlu0 %v2813, 16
        %v3501 = vpop.permute.xlu0 %3500
        %3502 = vrot.lane.b32.xlu0 %v2816, 16
        %v3503 = vpop.permute.xlu0 %3502
        %3504 = vrot.lane.b32.xlu0 %v2860, 16
        %v3505 = vpop.permute.xlu0 %3504
        %3506 = vrot.lane.b32.xlu0 %v2863, 16
        %v3507 = vpop.permute.xlu0 %3506
        %3508 = vrot.lane.b32.xlu0 %v2907, 16
        %v3509 = vpop.permute.xlu0 %3508
        %3510 = vrot.lane.b32.xlu0 %v2910, 16
        %v3511 = vpop.permute.xlu0 %3510
        %3512 = vrot.lane.b32.xlu0 %v2954, 16
        %v3513 = vpop.permute.xlu0 %3512
        %3514 = vrot.lane.b32.xlu0 %v2957, 16
        %v3515 = vpop.permute.xlu0 %3514
        %3532 = vrot.lane.b32.xlu0 %v3313, 24
        %v3533 = vpop.permute.xlu0 %3532
        %3534 = vrot.lane.b32.xlu0 %v3316, 24
        %v3535 = vpop.permute.xlu0 %3534
        %3536 = vrot.lane.b32.xlu0 %v3360, 24
        %v3537 = vpop.permute.xlu0 %3536
        %3538 = vrot.lane.b32.xlu0 %v3363, 24
        %v3539 = vpop.permute.xlu0 %3538
        %3540 = vrot.lane.b32.xlu0 %v3407, 24
        %v3541 = vpop.permute.xlu0 %3540
        %3542 = vrot.lane.b32.xlu0 %v3410, 24
        %v3543 = vpop.permute.xlu0 %3542
        %3544 = vrot.lane.b32.xlu0 %v3454, 24
        %v3545 = vpop.permute.xlu0 %3544
        %3546 = vrot.lane.b32.xlu0 %v3457, 24
        %v3547 = vpop.permute.xlu0 %3546
        %v3556 = vsel %vm1450, %v1810, %v3469
        %v3557 = vsel %vm1450, %v1813, %v3471
        %v3558 = vsel %vm1450, %v1854, %v3473
        %v3559 = vsel %vm1450, %v1857, %v3475
        %v3560 = vsel %vm1450, %v1898, %v3477
        %v3561 = vsel %vm1450, %v1901, %v3479
        %v3562 = vsel %vm1450, %v1942, %v3481
        %v3563 = vsel %vm1450, %v1945, %v3483
        %v3564 = vsel %vm1679, %v3556, %v3501
        %v3565 = vsel %vm1679, %v3557, %v3503
        %v3566 = vsel %vm1679, %v3558, %v3505
        %v3567 = vsel %vm1679, %v3559, %v3507
        %v3568 = vsel %vm1679, %v3560, %v3509
        %v3569 = vsel %vm1679, %v3561, %v3511
        %v3570 = vsel %vm1679, %v3562, %v3513
        %v3571 = vsel %vm1679, %v3563, %v3515
        %vm3572 = vcmask 195584
        %v3573 = vsel %vm3572, %v3564, %v3533
        %v3574 = vsel %vm3572, %v3565, %v3535
        %v3575 = vsel %vm3572, %v3566, %v3537
        %v3576 = vsel %vm3572, %v3567, %v3539
        %v3577 = vsel %vm3572, %v3568, %v3541
        %v3578 = vsel %vm3572, %v3569, %v3543
        %v3579 = vsel %vm3572, %v3570, %v3545
        %v3580 = vsel %vm3572, %v3571, %v3547
        %v3581 = vpack.c.bf16 %v3574, %v3573
        %v3582 = vpack.c.bf16 %v3576, %v3575
        %v3583 = vpack.c.bf16 %v3578, %v3577
        %v3584 = vpack.c.bf16 %v3580, %v3579
        %v3586 = vlaneseq
        %v3587 = vshrl.u32 %v3586, 7
        %v3588 = vsub.s32 0, %v3587
        %v3589 = vrot.slane %v1154, %v3588
        %v3595 = vunpack.c.l.b16 %v1150
        %v3596 = vunpack.c.l.b16 %v1151
        %v3597 = vunpack.c.l.b16 %v1152
        %v3598 = vunpack.c.l.b16 %v1153
        %v3599 = vpack.c.b16 %v3596, %v3595
        %v3600 = vpack.c.b16 %v3598, %v3597
        %v3604 = vsel %vm959, %v3581, 0
        %v3607 = vsel %vm959, %v3582, 0
        %v3610 = vsel %vm959, %v3583, 0
        %v3613 = vsel %vm959, %v3584, 0
        %3615 = vmatprep.subr.bf16.mxu0 0
        %3616 = vmatpush1.bf16.msra.mxu0 %v3599
        %3617 = vmatprep.subr.bf16.mxu0 0
        %3618 = vmatpush1.bf16.msra.mxu0 %v3600
        %3619 = vmatprep.subr.bf16.mxu0 0
        %3620 = vmatpush1.bf16.msra.mxu0 0
        %3621 = vmatprep.subr.bf16.mxu0 0
        %3622 = vmatpush1.bf16.msra.mxu0 0
        %3623 = vmatprep.subr.bf16.mxu0 0
        %3624 = vmatpush1.bf16.msra.mxu0 0
        %3625 = vmatprep.subr.bf16.mxu0 0
        %3626 = vmatpush1.bf16.msra.mxu0 0
        %3627 = vmatprep.subr.bf16.mxu0 0
        %3628 = vmatpush1.bf16.msra.mxu0 0
        %3629 = vmatprep.subr.bf16.mxu0 0
        %3630 = vmatpush1.bf16.msra.mxu0 0
        %3631 = vmatprep.subr.bf16.mxu0 0
        %3632 = vmatpush1.bf16.msra.mxu0 0
        %3633 = vmatprep.subr.bf16.mxu0 0
        %3634 = vmatpush1.bf16.msra.mxu0 0
        %3635 = vmatprep.subr.bf16.mxu0 0
        %3636 = vmatpush1.bf16.msra.mxu0 0
        %3637 = vmatprep.subr.bf16.mxu0 0
        %3638 = vmatpush1.bf16.msra.mxu0 0
        %3639 = vmatprep.subr.bf16.mxu0 0
        %3640 = vmatpush1.bf16.msra.mxu0 0
        %3641 = vmatprep.subr.bf16.mxu0 0
        %3642 = vmatpush1.bf16.msra.mxu0 0
        %3643 = vmatprep.subr.bf16.mxu0 0
        %3644 = vmatpush1.bf16.msra.mxu0 0
        %3645 = vmatprep.subr.bf16.mxu0 0
        %3646 = vmatpush1.bf16.msra.mxu0 0
        %3647 = vmatprep.mubr.bf16.mxu0 0
        %3648 = vmatmul.mubr.bf16.gmra.mrb[0].mxu0 %v3604
        %v3649 = vpop.f32.mrb[0].mxu0
        %v3650 = vadd.f32 %v3589, %v3649
        %v3651 = vpop.f32.mrb[0].mxu0
        %v3652 = vpop.f32.mrb[0].mxu0
        %v3653 = vadd.f32 %v3589, %v3652
        %v3654 = vpop.f32.mrb[0].mxu0
        %3655 = vmatprep.mubr.bf16.mxu0 0
        %3656 = vmatmul.mubr.bf16.gmra.mrb[0].mxu0 %v3607
        %v3657 = vpop.f32.mrb[0].mxu0
        %v3658 = vadd.f32 %v3589, %v3657
        %v3659 = vpop.f32.mrb[0].mxu0
        %v3660 = vpop.f32.mrb[0].mxu0
        %v3661 = vadd.f32 %v3589, %v3660
        %v3662 = vpop.f32.mrb[0].mxu0
        %3663 = vmatprep.mubr.bf16.mxu0 0
        %3664 = vmatmul.mubr.bf16.gmra.mrb[0].mxu0 %v3610
        %v3665 = vpop.f32.mrb[0].mxu0
        %v3666 = vadd.f32 %v3589, %v3665
        %v3667 = vpop.f32.mrb[0].mxu0
        %v3668 = vpop.f32.mrb[0].mxu0
        %v3669 = vadd.f32 %v3589, %v3668
        %v3670 = vpop.f32.mrb[0].mxu0
        %3671 = vmatprep.mubr.bf16.mxu0 0
        %3672 = vmatmul.mubr.bf16.gmra.mrb[0].mxu0 %v3613
        %v3673 = vpop.f32.mrb[0].mxu0
        %v3674 = vadd.f32 %v3589, %v3673
        %v3675 = vpop.f32.mrb[0].mxu0
        %v3676 = vpop.f32.mrb[0].mxu0
        %v3677 = vadd.f32 %v3589, %v3676
        %v3678 = vpop.f32.mrb[0].mxu0
        %3679 = vdwg.mxu0
        %v3680 = vadd.f32 %v3650, %v1127
        %v3681 = vadd.f32 %v3653, %v1131
        %v3682 = vadd.f32 %v3658, %v1128
        %v3683 = vadd.f32 %v3661, %v1132
        %v3684 = vadd.f32 %v3666, %v1129
        %v3685 = vadd.f32 %v3669, %v1133
        %v3686 = vadd.f32 %v3674, %v1130
        %v3687 = vadd.f32 %v3677, %v1134
        %v3688 = vsel %vm959, %v3680, 0.0
        %3689 = vadd.xlane.f32.xlu0 %v3688
        %v3690 = vpop.xlane.xlu0 %3689
        %v3691 = vsel %vm959, %v3681, 0.0
        %3692 = vadd.xlane.f32.xlu0 %v3691
        %v3693 = vpop.xlane.xlu0 %3692
        %v3694 = vsel %vm959, %v3682, 0.0
        %3695 = vadd.xlane.f32.xlu0 %v3694
        %v3696 = vpop.xlane.xlu0 %3695
        %v3697 = vsel %vm959, %v3683, 0.0
        %3698 = vadd.xlane.f32.xlu0 %v3697
        %v3699 = vpop.xlane.xlu0 %3698
        %v3700 = vsel %vm959, %v3684, 0.0
        %3701 = vadd.xlane.f32.xlu0 %v3700
        %v3702 = vpop.xlane.xlu0 %3701
        %v3703 = vsel %vm959, %v3685, 0.0
        %3704 = vadd.xlane.f32.xlu0 %v3703
        %v3705 = vpop.xlane.xlu0 %3704
        %v3706 = vsel %vm959, %v3686, 0.0
        %3707 = vadd.xlane.f32.xlu0 %v3706
        %v3708 = vpop.xlane.xlu0 %3707
        %v3709 = vsel %vm959, %v3687, 0.0
        %3710 = vadd.xlane.f32.xlu0 %v3709
        %v3711 = vpop.xlane.xlu0 %3710
        %v3712 = vmul.f32 %v3690, %v972
        %v3713 = vmul.f32 %v3693, %v972
        %v3714 = vmul.f32 %v3696, %v972
        %v3715 = vmul.f32 %v3699, %v972
        %v3716 = vmul.f32 %v3702, %v972
        %v3717 = vmul.f32 %v3705, %v972
        %v3718 = vmul.f32 %v3708, %v972
        %v3719 = vmul.f32 %v3711, %v972
        %v3720 = vsub.f32 %v3680, %v3712
        %v3721 = vsub.f32 %v3681, %v3713
        %v3722 = vsub.f32 %v3682, %v3714
        %v3723 = vsub.f32 %v3683, %v3715
        %v3724 = vsub.f32 %v3684, %v3716
        %v3725 = vsub.f32 %v3685, %v3717
        %v3726 = vsub.f32 %v3686, %v3718
        %v3727 = vsub.f32 %v3687, %v3719
        %v3728 = vmul.f32 %v3720, %v3720
        %v3729 = vmul.f32 %v3721, %v3721
        %v3730 = vmul.f32 %v3722, %v3722
        %v3731 = vmul.f32 %v3723, %v3723
        %v3732 = vmul.f32 %v3724, %v3724
        %v3733 = vmul.f32 %v3725, %v3725
        %v3734 = vmul.f32 %v3726, %v3726
        %v3735 = vmul.f32 %v3727, %v3727
        %v3736 = vsel %vm959, %v3728, 0.0
        %3737 = vadd.xlane.f32.xlu0 %v3736
        %v3738 = vpop.xlane.xlu0 %3737
        %v3739 = vsel %vm959, %v3729, 0.0
        %3740 = vadd.xlane.f32.xlu0 %v3739
        %v3741 = vpop.xlane.xlu0 %3740
        %v3742 = vsel %vm959, %v3730, 0.0
        %3743 = vadd.xlane.f32.xlu0 %v3742
        %v3744 = vpop.xlane.xlu0 %3743
        %v3745 = vsel %vm959, %v3731, 0.0
        %3746 = vadd.xlane.f32.xlu0 %v3745
        %v3747 = vpop.xlane.xlu0 %3746
        %v3748 = vsel %vm959, %v3732, 0.0
        %3749 = vadd.xlane.f32.xlu0 %v3748
        %v3750 = vpop.xlane.xlu0 %3749
        %v3751 = vsel %vm959, %v3733, 0.0
        %3752 = vadd.xlane.f32.xlu0 %v3751
        %v3753 = vpop.xlane.xlu0 %3752
        %v3754 = vsel %vm959, %v3734, 0.0
        %3755 = vadd.xlane.f32.xlu0 %v3754
        %v3756 = vpop.xlane.xlu0 %3755
        %v3757 = vsel %vm959, %v3735, 0.0
        %3758 = vadd.xlane.f32.xlu0 %v3757
        %v3759 = vpop.xlane.xlu0 %3758
        %v3760 = vmul.f32 %v3738, %v972
        %v3761 = vmul.f32 %v3741, %v972
        %v3762 = vmul.f32 %v3744, %v972
        %v3763 = vmul.f32 %v3747, %v972
        %v3764 = vmul.f32 %v3750, %v972
        %v3765 = vmul.f32 %v3753, %v972
        %v3766 = vmul.f32 %v3756, %v972
        %v3767 = vmul.f32 %v3759, %v972
        %v3768 = vadd.f32 %v3760, 1e-12
        %v3769 = vadd.f32 %v3761, 1e-12
        %v3770 = vadd.f32 %v3762, 1e-12
        %v3771 = vadd.f32 %v3763, 1e-12
        %v3772 = vadd.f32 %v3764, 1e-12
        %v3773 = vadd.f32 %v3765, 1e-12
        %v3774 = vadd.f32 %v3766, 1e-12
        %v3775 = vadd.f32 %v3767, 1e-12
        %v3776 = vrsqrt.pop %v3768
        %v3777 = vrsqrt.pop %v3769
        %v3778 = vrsqrt.pop %v3770
        %v3779 = vrsqrt.pop %v3771
        %v3780 = vrsqrt.pop %v3772
        %v3781 = vrsqrt.pop %v3773
        %v3782 = vrsqrt.pop %v3774
        %v3783 = vrsqrt.pop %v3775
        %v3784 = vmul.f32 %v3720, %v3776
        %v3785 = vmul.f32 %v3721, %v3777
        %v3786 = vmul.f32 %v3722, %v3778
        %v3787 = vmul.f32 %v3723, %v3779
        %v3788 = vmul.f32 %v3724, %v3780
        %v3789 = vmul.f32 %v3725, %v3781
        %v3790 = vmul.f32 %v3726, %v3782
        %v3791 = vmul.f32 %v3727, %v3783
        %v3793 = vlaneseq
        %v3794 = vshrl.u32 %v3793, 7
        %v3795 = vsub.s32 0, %v3794
        %v3796 = vrot.slane %v1155, %v3795
        %v3798 = vmul.f32 %v3784, %v3796
        %v3799 = vmul.f32 %v3785, %v3796
        %v3800 = vmul.f32 %v3786, %v3796
        %v3801 = vmul.f32 %v3787, %v3796
        %v3802 = vmul.f32 %v3788, %v3796
        %v3803 = vmul.f32 %v3789, %v3796
        %v3804 = vmul.f32 %v3790, %v3796
        %v3805 = vmul.f32 %v3791, %v3796
        %v3807 = vlaneseq
        %v3808 = vshrl.u32 %v3807, 7
        %v3809 = vsub.s32 0, %v3808
        %v3810 = vrot.slane %v1156, %v3809
        %v3812 = vadd.f32 %v3798, %v3810
        %v3813 = vadd.f32 %v3799, %v3810
        %v3814 = vadd.f32 %v3800, %v3810
        %v3815 = vadd.f32 %v3801, %v3810
        %v3816 = vadd.f32 %v3802, %v3810
        %v3817 = vadd.f32 %v3803, %v3810
        %v3818 = vadd.f32 %v3804, %v3810
        %v3819 = vadd.f32 %v3805, %v3810
        %v3820 = vpack.c.bf16 %v3813, %v3812
        %v3821 = vpack.c.bf16 %v3815, %v3814
        %v3822 = vpack.c.bf16 %v3817, %v3816
        %v3823 = vpack.c.bf16 %v3819, %v3818
        %v3825 = vlaneseq
        %v3826 = vshrl.u32 %v3825, 7
        %v3827 = vsub.s32 0, %v3826
        %v3828 = vrot.slane %v1161, %v3827
        %v3834 = vunpack.c.l.b16 %v1157
        %v3835 = vunpack.c.l.b16 %v1158
        %v3836 = vunpack.c.l.b16 %v1159
        %v3837 = vunpack.c.l.b16 %v1160
        %v3838 = vpack.c.b16 %v3835, %v3834
        %v3839 = vpack.c.b16 %v3837, %v3836
        %v3843 = vsel %vm959, %v3820, 0
        %v3846 = vsel %vm959, %v3821, 0
        %v3849 = vsel %vm959, %v3822, 0
        %v3852 = vsel %vm959, %v3823, 0
        %3854 = vmatprep.subr.bf16.mxu0 0
        %3855 = vmatpush1.bf16.msra.mxu0 %v3838
        %3856 = vmatprep.subr.bf16.mxu0 0
        %3857 = vmatpush1.bf16.msra.mxu0 %v3839
        %3858 = vmatprep.subr.bf16.mxu0 0
        %3859 = vmatpush1.bf16.msra.mxu0 0
        %3860 = vmatprep.subr.bf16.mxu0 0
        %3861 = vmatpush1.bf16.msra.mxu0 0
        %3862 = vmatprep.subr.bf16.mxu0 0
        %3863 = vmatpush1.bf16.msra.mxu0 0
        %3864 = vmatprep.subr.bf16.mxu0 0
        %3865 = vmatpush1.bf16.msra.mxu0 0
        %3866 = vmatprep.subr.bf16.mxu0 0
        %3867 = vmatpush1.bf16.msra.mxu0 0
        %3868 = vmatprep.subr.bf16.mxu0 0
        %3869 = vmatpush1.bf16.msra.mxu0 0
        %3870 = vmatprep.subr.bf16.mxu0 0
        %3871 = vmatpush1.bf16.msra.mxu0 0
        %3872 = vmatprep.subr.bf16.mxu0 0
        %3873 = vmatpush1.bf16.msra.mxu0 0
        %3874 = vmatprep.subr.bf16.mxu0 0
        %3875 = vmatpush1.bf16.msra.mxu0 0
        %3876 = vmatprep.subr.bf16.mxu0 0
        %3877 = vmatpush1.bf16.msra.mxu0 0
        %3878 = vmatprep.subr.bf16.mxu0 0
        %3879 = vmatpush1.bf16.msra.mxu0 0
        %3880 = vmatprep.subr.bf16.mxu0 0
        %3881 = vmatpush1.bf16.msra.mxu0 0
        %3882 = vmatprep.subr.bf16.mxu0 0
        %3883 = vmatpush1.bf16.msra.mxu0 0
        %3884 = vmatprep.subr.bf16.mxu0 0
        %3885 = vmatpush1.bf16.msra.mxu0 0
        %3886 = vmatprep.mubr.bf16.mxu0 0
        %3887 = vmatmul.mubr.bf16.gmra.mrb[0].mxu0 %v3843
        %v3888 = vpop.f32.mrb[0].mxu0
        %v3889 = vadd.f32 %v3828, %v3888
        %v3890 = vpop.f32.mrb[0].mxu0
        %v3891 = vpop.f32.mrb[0].mxu0
        %v3892 = vadd.f32 %v3828, %v3891
        %v3893 = vpop.f32.mrb[0].mxu0
        %3894 = vmatprep.mubr.bf16.mxu0 0
        %3895 = vmatmul.mubr.bf16.gmra.mrb[0].mxu0 %v3846
        %v3896 = vpop.f32.mrb[0].mxu0
        %v3897 = vadd.f32 %v3828, %v3896
        %v3898 = vpop.f32.mrb[0].mxu0
        %v3899 = vpop.f32.mrb[0].mxu0
        %v3900 = vadd.f32 %v3828, %v3899
        %v3901 = vpop.f32.mrb[0].mxu0
        %3902 = vmatprep.mubr.bf16.mxu0 0
        %3903 = vmatmul.mubr.bf16.gmra.mrb[0].mxu0 %v3849
        %v3904 = vpop.f32.mrb[0].mxu0
        %v3905 = vadd.f32 %v3828, %v3904
        %v3906 = vpop.f32.mrb[0].mxu0
        %v3907 = vpop.f32.mrb[0].mxu0
        %v3908 = vadd.f32 %v3828, %v3907
        %v3909 = vpop.f32.mrb[0].mxu0
        %3910 = vmatprep.mubr.bf16.mxu0 0
        %3911 = vmatmul.mubr.bf16.gmra.mrb[0].mxu0 %v3852
        %v3912 = vpop.f32.mrb[0].mxu0
        %v3913 = vadd.f32 %v3828, %v3912
        %v3914 = vpop.f32.mrb[0].mxu0
        %v3915 = vpop.f32.mrb[0].mxu0
        %v3916 = vadd.f32 %v3828, %v3915
        %v3917 = vpop.f32.mrb[0].mxu0
        %3918 = vdwg.mxu0
        %v3919 = vmax.f32 %v3889, 0.0
        %v3920 = vmax.f32 %v3892, 0.0
        %v3921 = vmax.f32 %v3897, 0.0
        %v3922 = vmax.f32 %v3900, 0.0
        %v3923 = vmax.f32 %v3905, 0.0
        %v3924 = vmax.f32 %v3908, 0.0
        %v3925 = vmax.f32 %v3913, 0.0
        %v3926 = vmax.f32 %v3916, 0.0
        %v3927 = vpack.c.bf16 %v3920, %v3919
        %v3928 = vpack.c.bf16 %v3922, %v3921
        %v3929 = vpack.c.bf16 %v3924, %v3923
        %v3930 = vpack.c.bf16 %v3926, %v3925
        %v3932 = vlaneseq
        %v3933 = vshrl.u32 %v3932, 7
        %v3934 = vsub.s32 0, %v3933
        %v3935 = vrot.slane %v1170, %v3934
        %v3945 = vunpack.c.l.b16 %v1162
        %v3946 = vunpack.c.l.b16 %v1163
        %v3947 = vunpack.c.l.b16 %v1164
        %v3948 = vunpack.c.l.b16 %v1165
        %v3949 = vunpack.c.l.b16 %v1166
        %v3950 = vunpack.c.l.b16 %v1167
        %v3951 = vunpack.c.l.b16 %v1168
        %v3952 = vunpack.c.l.b16 %v1169
        %v3953 = vpack.c.b16 %v3946, %v3945
        %v3954 = vpack.c.b16 %v3948, %v3947
        %v3955 = vpack.c.b16 %v3950, %v3949
        %v3956 = vpack.c.b16 %v3952, %v3951
        %vm3961 = vcmask 523264
        %v3963 = vsel %vm3961, %v3927, 0
        %v3966 = vsel %vm3961, %v3928, 0
        %v3969 = vsel %vm3961, %v3929, 0
        %v3972 = vsel %vm3961, %v3930, 0
        %3974 = vmatprep.subr.bf16.mxu0 0
        %3975 = vmatpush1.bf16.msra.mxu0 %v3953
        %3976 = vmatprep.subr.bf16.mxu0 0
        %3977 = vmatpush1.bf16.msra.mxu0 %v3954
        %3978 = vmatprep.subr.bf16.mxu0 0
        %3979 = vmatpush1.bf16.msra.mxu0 %v3955
        %3980 = vmatprep.subr.bf16.mxu0 0
        %3981 = vmatpush1.bf16.msra.mxu0 %v3956
        %3982 = vmatprep.subr.bf16.mxu0 0
        %3983 = vmatpush1.bf16.msra.mxu0 0
        %3984 = vmatprep.subr.bf16.mxu0 0
        %3985 = vmatpush1.bf16.msra.mxu0 0
        %3986 = vmatprep.subr.bf16.mxu0 0
        %3987 = vmatpush1.bf16.msra.mxu0 0
        %3988 = vmatprep.subr.bf16.mxu0 0
        %3989 = vmatpush1.bf16.msra.mxu0 0
        %3990 = vmatprep.subr.bf16.mxu0 0
        %3991 = vmatpush1.bf16.msra.mxu0 0
        %3992 = vmatprep.subr.bf16.mxu0 0
        %3993 = vmatpush1.bf16.msra.mxu0 0
        %3994 = vmatprep.subr.bf16.mxu0 0
        %3995 = vmatpush1.bf16.msra.mxu0 0
        %3996 = vmatprep.subr.bf16.mxu0 0
        %3997 = vmatpush1.bf16.msra.mxu0 0
        %3998 = vmatprep.subr.bf16.mxu0 0
        %3999 = vmatpush1.bf16.msra.mxu0 0
        %4000 = vmatprep.subr.bf16.mxu0 0
        %4001 = vmatpush1.bf16.msra.mxu0 0
        %4002 = vmatprep.subr.bf16.mxu0 0
        %4003 = vmatpush1.bf16.msra.mxu0 0
        %4004 = vmatprep.subr.bf16.mxu0 0
        %4005 = vmatpush1.bf16.msra.mxu0 0
        %4006 = vmatprep.mubr.bf16.mxu0 0
        %4007 = vmatmul.mubr.bf16.gmra.mrb[0].mxu0 %v3963
        %v4008 = vpop.f32.mrb[0].mxu0
        %v4009 = vadd.f32 %v3935, %v4008
        %v4010 = vpop.f32.mrb[0].mxu0
        %v4011 = vpop.f32.mrb[0].mxu0
        %v4012 = vadd.f32 %v3935, %v4011
        %v4013 = vpop.f32.mrb[0].mxu0
        %4014 = vmatprep.mubr.bf16.mxu0 0
        %4015 = vmatmul.mubr.bf16.gmra.mrb[0].mxu0 %v3966
        %v4016 = vpop.f32.mrb[0].mxu0
        %v4017 = vadd.f32 %v3935, %v4016
        %v4018 = vpop.f32.mrb[0].mxu0
        %v4019 = vpop.f32.mrb[0].mxu0
        %v4020 = vadd.f32 %v3935, %v4019
        %v4021 = vpop.f32.mrb[0].mxu0
        %4022 = vmatprep.mubr.bf16.mxu0 0
        %4023 = vmatmul.mubr.bf16.gmra.mrb[0].mxu0 %v3969
        %v4024 = vpop.f32.mrb[0].mxu0
        %v4025 = vadd.f32 %v3935, %v4024
        %v4026 = vpop.f32.mrb[0].mxu0
        %v4027 = vpop.f32.mrb[0].mxu0
        %v4028 = vadd.f32 %v3935, %v4027
        %v4029 = vpop.f32.mrb[0].mxu0
        %4030 = vmatprep.mubr.bf16.mxu0 0
        %4031 = vmatmul.mubr.bf16.gmra.mrb[0].mxu0 %v3972
        %v4032 = vpop.f32.mrb[0].mxu0
        %v4033 = vadd.f32 %v3935, %v4032
        %v4034 = vpop.f32.mrb[0].mxu0
        %v4035 = vpop.f32.mrb[0].mxu0
        %v4036 = vadd.f32 %v3935, %v4035
        %v4037 = vpop.f32.mrb[0].mxu0
        %4038 = vdwg.mxu0
        %v4039 = vadd.f32 %v4009, %v3812
        %v4040 = vadd.f32 %v4012, %v3813
        %v4041 = vadd.f32 %v4017, %v3814
        %v4042 = vadd.f32 %v4020, %v3815
        %v4043 = vadd.f32 %v4025, %v3816
        %v4044 = vadd.f32 %v4028, %v3817
        %v4045 = vadd.f32 %v4033, %v3818
        %v4046 = vadd.f32 %v4036, %v3819
        %v4047 = vsel %vm959, %v4039, 0.0
        %4048 = vadd.xlane.f32.xlu0 %v4047
        %v4049 = vpop.xlane.xlu0 %4048
        %v4050 = vsel %vm959, %v4040, 0.0
        %4051 = vadd.xlane.f32.xlu0 %v4050
        %v4052 = vpop.xlane.xlu0 %4051
        %v4053 = vsel %vm959, %v4041, 0.0
        %4054 = vadd.xlane.f32.xlu0 %v4053
        %v4055 = vpop.xlane.xlu0 %4054
        %v4056 = vsel %vm959, %v4042, 0.0
        %4057 = vadd.xlane.f32.xlu0 %v4056
        %v4058 = vpop.xlane.xlu0 %4057
        %v4059 = vsel %vm959, %v4043, 0.0
        %4060 = vadd.xlane.f32.xlu0 %v4059
        %v4061 = vpop.xlane.xlu0 %4060
        %v4062 = vsel %vm959, %v4044, 0.0
        %4063 = vadd.xlane.f32.xlu0 %v4062
        %v4064 = vpop.xlane.xlu0 %4063
        %v4065 = vsel %vm959, %v4045, 0.0
        %4066 = vadd.xlane.f32.xlu0 %v4065
        %v4067 = vpop.xlane.xlu0 %4066
        %v4068 = vsel %vm959, %v4046, 0.0
        %4069 = vadd.xlane.f32.xlu0 %v4068
        %v4070 = vpop.xlane.xlu0 %4069
        %v4071 = vmul.f32 %v4049, %v972
        %v4072 = vmul.f32 %v4052, %v972
        %v4073 = vmul.f32 %v4055, %v972
        %v4074 = vmul.f32 %v4058, %v972
        %v4075 = vmul.f32 %v4061, %v972
        %v4076 = vmul.f32 %v4064, %v972
        %v4077 = vmul.f32 %v4067, %v972
        %v4078 = vmul.f32 %v4070, %v972
        %v4079 = vsub.f32 %v4039, %v4071
        %v4080 = vsub.f32 %v4040, %v4072
        %v4081 = vsub.f32 %v4041, %v4073
        %v4082 = vsub.f32 %v4042, %v4074
        %v4083 = vsub.f32 %v4043, %v4075
        %v4084 = vsub.f32 %v4044, %v4076
        %v4085 = vsub.f32 %v4045, %v4077
        %v4086 = vsub.f32 %v4046, %v4078
        %v4087 = vmul.f32 %v4079, %v4079
        %v4088 = vmul.f32 %v4080, %v4080
        %v4089 = vmul.f32 %v4081, %v4081
        %v4090 = vmul.f32 %v4082, %v4082
        %v4091 = vmul.f32 %v4083, %v4083
        %v4092 = vmul.f32 %v4084, %v4084
        %v4093 = vmul.f32 %v4085, %v4085
        %v4094 = vmul.f32 %v4086, %v4086
        %v4095 = vsel %vm959, %v4087, 0.0
        %4096 = vadd.xlane.f32.xlu0 %v4095
        %v4097 = vpop.xlane.xlu0 %4096
        %v4098 = vsel %vm959, %v4088, 0.0
        %4099 = vadd.xlane.f32.xlu0 %v4098
        %v4100 = vpop.xlane.xlu0 %4099
        %v4101 = vsel %vm959, %v4089, 0.0
        %4102 = vadd.xlane.f32.xlu0 %v4101
        %v4103 = vpop.xlane.xlu0 %4102
        %v4104 = vsel %vm959, %v4090, 0.0
        %4105 = vadd.xlane.f32.xlu0 %v4104
        %v4106 = vpop.xlane.xlu0 %4105
        %v4107 = vsel %vm959, %v4091, 0.0
        %4108 = vadd.xlane.f32.xlu0 %v4107
        %v4109 = vpop.xlane.xlu0 %4108
        %v4110 = vsel %vm959, %v4092, 0.0
        %4111 = vadd.xlane.f32.xlu0 %v4110
        %v4112 = vpop.xlane.xlu0 %4111
        %v4113 = vsel %vm959, %v4093, 0.0
        %4114 = vadd.xlane.f32.xlu0 %v4113
        %v4115 = vpop.xlane.xlu0 %4114
        %v4116 = vsel %vm959, %v4094, 0.0
        %4117 = vadd.xlane.f32.xlu0 %v4116
        %v4118 = vpop.xlane.xlu0 %4117
        %v4119 = vmul.f32 %v4097, %v972
        %v4120 = vmul.f32 %v4100, %v972
        %v4121 = vmul.f32 %v4103, %v972
        %v4122 = vmul.f32 %v4106, %v972
        %v4123 = vmul.f32 %v4109, %v972
        %v4124 = vmul.f32 %v4112, %v972
        %v4125 = vmul.f32 %v4115, %v972
        %v4126 = vmul.f32 %v4118, %v972
        %v4127 = vadd.f32 %v4119, 1e-12
        %v4128 = vadd.f32 %v4120, 1e-12
        %v4129 = vadd.f32 %v4121, 1e-12
        %v4130 = vadd.f32 %v4122, 1e-12
        %v4131 = vadd.f32 %v4123, 1e-12
        %v4132 = vadd.f32 %v4124, 1e-12
        %v4133 = vadd.f32 %v4125, 1e-12
        %v4134 = vadd.f32 %v4126, 1e-12
        %v4135 = vrsqrt.pop %v4127
        %v4136 = vrsqrt.pop %v4128
        %v4137 = vrsqrt.pop %v4129
        %v4138 = vrsqrt.pop %v4130
        %v4139 = vrsqrt.pop %v4131
        %v4140 = vrsqrt.pop %v4132
        %v4141 = vrsqrt.pop %v4133
        %v4142 = vrsqrt.pop %v4134
        %v4143 = vmul.f32 %v4079, %v4135
        %v4144 = vmul.f32 %v4080, %v4136
        %v4145 = vmul.f32 %v4081, %v4137
        %v4146 = vmul.f32 %v4082, %v4138
        %v4147 = vmul.f32 %v4083, %v4139
        %v4148 = vmul.f32 %v4084, %v4140
        %v4149 = vmul.f32 %v4085, %v4141
        %v4150 = vmul.f32 %v4086, %v4142
        %v4152 = vlaneseq
        %v4153 = vshrl.u32 %v4152, 7
        %v4154 = vsub.s32 0, %v4153
        %v4155 = vrot.slane %v1171, %v4154
        %v4157 = vmul.f32 %v4143, %v4155
        %v4158 = vmul.f32 %v4144, %v4155
        %v4159 = vmul.f32 %v4145, %v4155
        %v4160 = vmul.f32 %v4146, %v4155
        %v4161 = vmul.f32 %v4147, %v4155
        %v4162 = vmul.f32 %v4148, %v4155
        %v4163 = vmul.f32 %v4149, %v4155
        %v4164 = vmul.f32 %v4150, %v4155
        %v4166 = vlaneseq
        %v4167 = vshrl.u32 %v4166, 7
        %v4168 = vsub.s32 0, %v4167
        %v4169 = vrot.slane %v1172, %v4168
        %v4171 = vadd.f32 %v4157, %v4169
        %v4172 = vadd.f32 %v4158, %v4169
        %v4173 = vadd.f32 %v4159, %v4169
        %v4174 = vadd.f32 %v4160, %v4169
        %v4175 = vadd.f32 %v4161, %v4169
        %v4176 = vadd.f32 %v4162, %v4169
        %v4177 = vadd.f32 %v4163, %v4169
        %v4178 = vadd.f32 %v4164, %v4169
        %s4179 = scalar_lea.vmem %s7, 16
        %v4180 = vld [vmem:[%s4179] sm:$0xf]
        %v4181 = vld [vmem:[%s4179 + $0x4] sm:$0xf]
        %v4182 = vld [vmem:[%s4179 + $0x8] sm:$0xf]
        %v4183 = vld [vmem:[%s4179 + $0xc] sm:$0xf]
        %s4184 = scalar_lea.vmem [#allocation13], 1
        %v4185 = vld [vmem:[%s4184] sm:$0x1]
        %s4186 = scalar_lea.vmem %s9, 16
        %v4187 = vld [vmem:[%s4186] sm:$0xf]
        %v4188 = vld [vmem:[%s4186 + $0x4] sm:$0xf]
        %v4189 = vld [vmem:[%s4186 + $0x8] sm:$0xf]
        %v4190 = vld [vmem:[%s4186 + $0xc] sm:$0xf]
        %s4191 = scalar_lea.vmem [#allocation14], 1
        %v4192 = vld [vmem:[%s4191] sm:$0x1]
        %s4193 = scalar_lea.vmem [#allocation16], 16
        %v4194 = vld [vmem:[%s4193] sm:$0xf]
        %v4195 = vld [vmem:[%s4193 + $0x4] sm:$0xf]
        %v4196 = vld [vmem:[%s4193 + $0x8] sm:$0xf]
        %v4197 = vld [vmem:[%s4193 + $0xc] sm:$0xf]
        %s4198 = scalar_lea.vmem [#allocation17], 1
        %v4199 = vld [vmem:[%s4198] sm:$0x1]
        %s4200 = scalar_lea.vmem [#allocation19], 16
        %v4201 = vld [vmem:[%s4200] sm:$0xf]
        %v4202 = vld [vmem:[%s4200 + $0x4] sm:$0xf]
        %v4203 = vld [vmem:[%s4200 + $0x8] sm:$0xf]
        %v4204 = vld [vmem:[%s4200 + $0xc] sm:$0xf]
        %s4205 = scalar_lea.vmem [#allocation20], 1
        %v4206 = vld [vmem:[%s4205] sm:$0x1]
        %s4207 = scalar_lea.vmem [#allocation22], 1
        %v4208 = vld [vmem:[%s4207] sm:$0x1]
        %s4209 = scalar_lea.vmem [#allocation23], 1
        %v4210 = vld [vmem:[%s4209] sm:$0x1]
        %s4211 = scalar_lea.vmem [#allocation25], 16
        %v4212 = vld [vmem:[%s4211] sm:$0xf]
        %v4213 = vld [vmem:[%s4211 + $0x4] sm:$0xf]
        %v4214 = vld [vmem:[%s4211 + $0x8] sm:$0xf]
        %v4215 = vld [vmem:[%s4211 + $0xc] sm:$0xf]
        %s4216 = scalar_lea.vmem %s18, 1
        %v4217 = vld [vmem:[%s4216] sm:$0x1]
        %s4218 = scalar_lea.vmem %s19, 32
        %v4219 = vld [vmem:[%s4218] sm:$0xf]
        %v4220 = vld [vmem:[%s4218 + $0x4] sm:$0xf]
        %v4221 = vld [vmem:[%s4218 + $0x8] sm:$0xf]
        %v4222 = vld [vmem:[%s4218 + $0xc] sm:$0xf]
        %v4223 = vld [vmem:[%s4218 + $0x10] sm:$0xf]
        %v4224 = vld [vmem:[%s4218 + $0x14] sm:$0xf]
        %v4225 = vld [vmem:[%s4218 + $0x18] sm:$0xf]
        %v4226 = vld [vmem:[%s4218 + $0x1c] sm:$0xf]
        %s4227 = scalar_lea.vmem %s20, 1
        %v4228 = vld [vmem:[%s4227] sm:$0x1]
        %s4229 = scalar_lea.vmem %s21, 1
        %v4230 = vld [vmem:[%s4229] sm:$0x1]
        %s4231 = scalar_lea.vmem %s22, 1
        %v4232 = vld [vmem:[%s4231] sm:$0x1]
        %v4233 = vpack.c.bf16 %v4172, %v4171
        %v4234 = vpack.c.bf16 %v4174, %v4173
        %v4235 = vpack.c.bf16 %v4176, %v4175
        %v4236 = vpack.c.bf16 %v4178, %v4177
        %v4238 = vlaneseq
        %v4239 = vshrl.u32 %v4238, 7
        %v4240 = vsub.s32 0, %v4239
        %v4241 = vrot.slane %v4192, %v4240
        %v4247 = vunpack.c.l.b16 %v4187
        %v4248 = vunpack.c.l.b16 %v4188
        %v4249 = vunpack.c.l.b16 %v4189
        %v4250 = vunpack.c.l.b16 %v4190
        %v4251 = vpack.c.b16 %v4248, %v4247
        %v4252 = vpack.c.b16 %v4250, %v4249
        %v4256 = vsel %vm959, %v4233, 0
        %v4259 = vsel %vm959, %v4234, 0
        %v4262 = vsel %vm959, %v4235, 0
        %v4265 = vsel %vm959, %v4236, 0
        %4267 = vmatprep.subr.bf16.mxu0 0
        %4268 = vmatpush1.bf16.msra.mxu0 %v4251
        %4269 = vmatprep.subr.bf16.mxu0 0
        %4270 = vmatpush1.bf16.msra.mxu0 %v4252
        %4271 = vmatprep.subr.bf16.mxu0 0
        %4272 = vmatpush1.bf16.msra.mxu0 0
        %4273 = vmatprep.subr.bf16.mxu0 0
        %4274 = vmatpush1.bf16.msra.mxu0 0
        %4275 = vmatprep.subr.bf16.mxu0 0
        %4276 = vmatpush1.bf16.msra.mxu0 0
        %4277 = vmatprep.subr.bf16.mxu0 0
        %4278 = vmatpush1.bf16.msra.mxu0 0
        %4279 = vmatprep.subr.bf16.mxu0 0
        %4280 = vmatpush1.bf16.msra.mxu0 0
        %4281 = vmatprep.subr.bf16.mxu0 0
        %4282 = vmatpush1.bf16.msra.mxu0 0
        %4283 = vmatprep.subr.bf16.mxu0 0
        %4284 = vmatpush1.bf16.msra.mxu0 0
        %4285 = vmatprep.subr.bf16.mxu0 0
        %4286 = vmatpush1.bf16.msra.mxu0 0
        %4287 = vmatprep.subr.bf16.mxu0 0
        %4288 = vmatpush1.bf16.msra.mxu0 0
        %4289 = vmatprep.subr.bf16.mxu0 0
        %4290 = vmatpush1.bf16.msra.mxu0 0
        %4291 = vmatprep.subr.bf16.mxu0 0
        %4292 = vmatpush1.bf16.msra.mxu0 0
        %4293 = vmatprep.subr.bf16.mxu0 0
        %4294 = vmatpush1.bf16.msra.mxu0 0
        %4295 = vmatprep.subr.bf16.mxu0 0
        %4296 = vmatpush1.bf16.msra.mxu0 0
        %4297 = vmatprep.subr.bf16.mxu0 0
        %4298 = vmatpush1.bf16.msra.mxu0 0
        %4299 = vmatprep.mubr.bf16.mxu0 0
        %4300 = vmatmul.mubr.bf16.gmra.mrb[0].mxu0 %v4256
        %v4301 = vpop.f32.mrb[0].mxu0
        %v4302 = vadd.f32 %v4241, %v4301
        %v4303 = vpop.f32.mrb[0].mxu0
        %v4304 = vpop.f32.mrb[0].mxu0
        %v4305 = vadd.f32 %v4241, %v4304
        %v4306 = vpop.f32.mrb[0].mxu0
        %4307 = vmatprep.mubr.bf16.mxu0 0
        %4308 = vmatmul.mubr.bf16.gmra.mrb[0].mxu0 %v4259
        %v4309 = vpop.f32.mrb[0].mxu0
        %v4310 = vadd.f32 %v4241, %v4309
        %v4311 = vpop.f32.mrb[0].mxu0
        %v4312 = vpop.f32.mrb[0].mxu0
        %v4313 = vadd.f32 %v4241, %v4312
        %v4314 = vpop.f32.mrb[0].mxu0
        %4315 = vmatprep.mubr.bf16.mxu0 0
        %4316 = vmatmul.mubr.bf16.gmra.mrb[0].mxu0 %v4262
        %v4317 = vpop.f32.mrb[0].mxu0
        %v4318 = vadd.f32 %v4241, %v4317
        %v4319 = vpop.f32.mrb[0].mxu0
        %v4320 = vpop.f32.mrb[0].mxu0
        %v4321 = vadd.f32 %v4241, %v4320
        %v4322 = vpop.f32.mrb[0].mxu0
        %4323 = vmatprep.mubr.bf16.mxu0 0
        %4324 = vmatmul.mubr.bf16.gmra.mrb[0].mxu0 %v4265
        %v4325 = vpop.f32.mrb[0].mxu0
        %v4326 = vadd.f32 %v4241, %v4325
        %v4327 = vpop.f32.mrb[0].mxu0
        %v4328 = vpop.f32.mrb[0].mxu0
        %v4329 = vadd.f32 %v4241, %v4328
        %v4330 = vpop.f32.mrb[0].mxu0
        %4331 = vdwg.mxu0
        %v4333 = vlaneseq
        %v4334 = vshrl.u32 %v4333, 7
        %v4335 = vsub.s32 0, %v4334
        %v4336 = vrot.slane %v4199, %v4335
        %v4342 = vunpack.c.l.b16 %v4194
        %v4343 = vunpack.c.l.b16 %v4195
        %v4344 = vunpack.c.l.b16 %v4196
        %v4345 = vunpack.c.l.b16 %v4197
        %v4346 = vpack.c.b16 %v4343, %v4342
        %v4347 = vpack.c.b16 %v4345, %v4344
        %4350 = vmatprep.subr.bf16.mxu0 0
        %4351 = vmatpush1.bf16.msra.mxu0 %v4346
        %4352 = vmatprep.subr.bf16.mxu0 0
        %4353 = vmatpush1.bf16.msra.mxu0 %v4347
        %4354 = vmatprep.subr.bf16.mxu0 0
        %4355 = vmatpush1.bf16.msra.mxu0 0
        %4356 = vmatprep.subr.bf16.mxu0 0
        %4357 = vmatpush1.bf16.msra.mxu0 0
        %4358 = vmatprep.subr.bf16.mxu0 0
        %4359 = vmatpush1.bf16.msra.mxu0 0
        %4360 = vmatprep.subr.bf16.mxu0 0
        %4361 = vmatpush1.bf16.msra.mxu0 0
        %4362 = vmatprep.subr.bf16.mxu0 0
        %4363 = vmatpush1.bf16.msra.mxu0 0
        %4364 = vmatprep.subr.bf16.mxu0 0
        %4365 = vmatpush1.bf16.msra.mxu0 0
        %4366 = vmatprep.subr.bf16.mxu0 0
        %4367 = vmatpush1.bf16.msra.mxu0 0
        %4368 = vmatprep.subr.bf16.mxu0 0
        %4369 = vmatpush1.bf16.msra.mxu0 0
        %4370 = vmatprep.subr.bf16.mxu0 0
        %4371 = vmatpush1.bf16.msra.mxu0 0
        %4372 = vmatprep.subr.bf16.mxu0 0
        %4373 = vmatpush1.bf16.msra.mxu0 0
        %4374 = vmatprep.subr.bf16.mxu0 0
        %4375 = vmatpush1.bf16.msra.mxu0 0
        %4376 = vmatprep.subr.bf16.mxu0 0
        %4377 = vmatpush1.bf16.msra.mxu0 0
        %4378 = vmatprep.subr.bf16.mxu0 0
        %4379 = vmatpush1.bf16.msra.mxu0 0
        %4380 = vmatprep.subr.bf16.mxu0 0
        %4381 = vmatpush1.bf16.msra.mxu0 0
        %4382 = vmatprep.mubr.bf16.mxu0 0
        %4383 = vmatmul.mubr.bf16.gmra.mrb[0].mxu0 %v4256
        %v4384 = vpop.f32.mrb[0].mxu0
        %v4385 = vadd.f32 %v4336, %v4384
        %v4386 = vpop.f32.mrb[0].mxu0
        %v4387 = vpop.f32.mrb[0].mxu0
        %v4388 = vadd.f32 %v4336, %v4387
        %v4389 = vpop.f32.mrb[0].mxu0
        %4390 = vmatprep.mubr.bf16.mxu0 0
        %4391 = vmatmul.mubr.bf16.gmra.mrb[0].mxu0 %v4259
        %v4392 = vpop.f32.mrb[0].mxu0
        %v4393 = vadd.f32 %v4336, %v4392
        %v4394 = vpop.f32.mrb[0].mxu0
        %v4395 = vpop.f32.mrb[0].mxu0
        %v4396 = vadd.f32 %v4336, %v4395
        %v4397 = vpop.f32.mrb[0].mxu0
        %4398 = vmatprep.mubr.bf16.mxu0 0
        %4399 = vmatmul.mubr.bf16.gmra.mrb[0].mxu0 %v4262
        %v4400 = vpop.f32.mrb[0].mxu0
        %v4401 = vadd.f32 %v4336, %v4400
        %v4402 = vpop.f32.mrb[0].mxu0
        %v4403 = vpop.f32.mrb[0].mxu0
        %v4404 = vadd.f32 %v4336, %v4403
        %v4405 = vpop.f32.mrb[0].mxu0
        %4406 = vmatprep.mubr.bf16.mxu0 0
        %4407 = vmatmul.mubr.bf16.gmra.mrb[0].mxu0 %v4265
        %v4408 = vpop.f32.mrb[0].mxu0
        %v4409 = vadd.f32 %v4336, %v4408
        %v4410 = vpop.f32.mrb[0].mxu0
        %v4411 = vpop.f32.mrb[0].mxu0
        %v4412 = vadd.f32 %v4336, %v4411
        %v4413 = vpop.f32.mrb[0].mxu0
        %4414 = vdwg.mxu0
        %v4415 = vpack.c.bf16 %v4171, %v4171
        %v4416 = vpack.c.bf16 %v4173, %v4173
        %v4417 = vpack.c.bf16 %v4175, %v4175
        %v4418 = vpack.c.bf16 %v4177, %v4177
        %v4420 = vlaneseq
        %v4421 = vshrl.u32 %v4420, 7
        %v4422 = vsub.s32 0, %v4421
        %v4423 = vrot.slane %v4185, %v4422
        %v4429 = vunpack.c.l.b16 %v4415
        %v4430 = vunpack.c.l.b16 %v4416
        %v4431 = vunpack.c.l.b16 %v4417
        %v4432 = vunpack.c.l.b16 %v4418
        %v4433 = vrot.slane %v4430, 7
        %vm4434 = vcmask 1041409
        %v4435 = vsel %vm4434, %v4433, %v4429
        %v4436 = vrot.slane %v4431, 6
        %vm4437 = vcmask 1042434
        %v4438 = vsel %vm4437, %v4436, %v4435
        %v4439 = vrot.slane %v4432, 5
        %vm4440 = vcmask 1043459
        %v4441 = vsel %vm4440, %v4439, %v4438
        %v4442 = vpack.c.b16 %v4441, %v4441
        %v4447 = vunpack.c.l.b16 %v4180
        %v4448 = vunpack.c.l.b16 %v4181
        %v4449 = vunpack.c.l.b16 %v4182
        %v4450 = vunpack.c.l.b16 %v4183
        %v4451 = vpack.c.b16 %v4448, %v4447
        %v4452 = vpack.c.b16 %v4450, %v4449
        %v4456 = vsel %vm959, %v4442, 0
        %4458 = vmatprep.subr.bf16.mxu0 0
        %4459 = vmatpush1.bf16.msra.mxu0 %v4451
        %4460 = vmatprep.subr.bf16.mxu0 0
        %4461 = vmatpush1.bf16.msra.mxu0 %v4452
        %4462 = vmatprep.subr.bf16.mxu0 0
        %4463 = vmatpush1.bf16.msra.mxu0 0
        %4464 = vmatprep.subr.bf16.mxu0 0
        %4465 = vmatpush1.bf16.msra.mxu0 0
        %4466 = vmatprep.subr.bf16.mxu0 0
        %4467 = vmatpush1.bf16.msra.mxu0 0
        %4468 = vmatprep.subr.bf16.mxu0 0
        %4469 = vmatpush1.bf16.msra.mxu0 0
        %4470 = vmatprep.subr.bf16.mxu0 0
        %4471 = vmatpush1.bf16.msra.mxu0 0
        %4472 = vmatprep.subr.bf16.mxu0 0
        %4473 = vmatpush1.bf16.msra.mxu0 0
        %4474 = vmatprep.subr.bf16.mxu0 0
        %4475 = vmatpush1.bf16.msra.mxu0 0
        %4476 = vmatprep.subr.bf16.mxu0 0
        %4477 = vmatpush1.bf16.msra.mxu0 0
        %4478 = vmatprep.subr.bf16.mxu0 0
        %4479 = vmatpush1.bf16.msra.mxu0 0
        %4480 = vmatprep.subr.bf16.mxu0 0
        %4481 = vmatpush1.bf16.msra.mxu0 0
        %4482 = vmatprep.subr.bf16.mxu0 0
        %4483 = vmatpush1.bf16.msra.mxu0 0
        %4484 = vmatprep.subr.bf16.mxu0 0
        %4485 = vmatpush1.bf16.msra.mxu0 0
        %4486 = vmatprep.subr.bf16.mxu0 0
        %4487 = vmatpush1.bf16.msra.mxu0 0
        %4488 = vmatprep.subr.bf16.mxu0 0
        %4489 = vmatpush1.bf16.msra.mxu0 0
        %4490 = vmatprep.mubr.bf16.mxu0 0
        %4491 = vmatmul.mubr.bf16.gmra.mrb[0].mxu0 %v4456
        %v4492 = vpop.f32.mrb[0].mxu0
        %v4493 = vadd.f32 %v4423, %v4492
        %v4494 = vpop.f32.mrb[0].mxu0
        %v4495 = vpop.f32.mrb[0].mxu0
        %v4496 = vpop.f32.mrb[0].mxu0
        %4497 = vdwg.mxu0
        %v4500 = vunpack.c.l.s4 1966171168
        %v4501 = vunpack.c.0.s8 %v4500
        %v4502 = vlaneseq
        %v4503 = vshrl.u32 %v4502, 7
        %v4504 = vsub.s32 %v4501, %v4503
        %v4505 = vrot.slane %v4493, %v4504
        %v4506 = vcombine.high %v4505, %v4505
        %v4508 = vunpack.c.l.s4 1966171168
        %v4509 = vunpack.c.0.s8 %v4508
        %v4510 = vlaneseq
        %v4511 = vshrl.u32 %v4510, 7
        %v4512 = vsub.s32 %v4509, %v4511
        %v4513 = vrot.slane %v4505, %v4512
        %v4515 = vunpack.c.l.s4 1966171168
        %v4516 = vunpack.c.0.s8 %v4515
        %v4517 = vlaneseq
        %v4518 = vshrl.u32 %v4517, 7
        %v4519 = vsub.s32 %v4516, %v4518
        %v4520 = vrot.slane %v4506, %v4519
        %v4521 = vcombine.high %v4513, %v4513
        %v4522 = vcombine.high %v4520, %v4520
        %v4527 = vpack.c.bf16 %v4513, %v4513
        %v4528 = vpack.c.bf16 %v4520, %v4520
        %v4529 = vpack.c.bf16 %v4521, %v4521
        %v4530 = vpack.c.bf16 %v4522, %v4522
        %v4531 = vpack.c.bf16 %v4305, %v4302
        %v4532 = vpack.c.bf16 %v4313, %v4310
        %v4533 = vpack.c.bf16 %v4321, %v4318
        %v4534 = vpack.c.bf16 %v4329, %v4326
        %v4535 = vpack.c.bf16 %v4388, %v4385
        %v4536 = vpack.c.bf16 %v4396, %v4393
        %v4537 = vpack.c.bf16 %v4404, %v4401
        %v4538 = vpack.c.bf16 %v4412, %v4409
        %v4540 = vsel %vm1450, %v4527, 0
        %v4543 = vsel %vm1450, %v4531, 0
        %4545 = vmatprep.subr.bf16.mxu0 0
        %4546 = vmatpush1.bf16.xpose.msra.mxu0 %v4543
        %4547 = vmatprep.subr.bf16.mxu0 0
        %4548 = vmatpush1.bf16.xpose.msra.mxu0 0
        %4549 = vmatprep.subr.bf16.mxu0 0
        %4550 = vmatpush1.bf16.xpose.msra.mxu0 0
        %4551 = vmatprep.subr.bf16.mxu0 0
        %4552 = vmatpush1.bf16.xpose.msra.mxu0 0
        %4553 = vmatprep.subr.bf16.mxu0 0
        %4554 = vmatpush1.bf16.xpose.msra.mxu0 0
        %4555 = vmatprep.subr.bf16.mxu0 0
        %4556 = vmatpush1.bf16.xpose.msra.mxu0 0
        %4557 = vmatprep.subr.bf16.mxu0 0
        %4558 = vmatpush1.bf16.xpose.msra.mxu0 0
        %4559 = vmatprep.subr.bf16.mxu0 0
        %4560 = vmatpush1.bf16.xpose.msra.mxu0 0
        %4561 = vmatprep.subr.bf16.mxu0 0
        %4562 = vmatpush1.bf16.xpose.msra.mxu0 0
        %4563 = vmatprep.subr.bf16.mxu0 0
        %4564 = vmatpush1.bf16.xpose.msra.mxu0 0
        %4565 = vmatprep.subr.bf16.mxu0 0
        %4566 = vmatpush1.bf16.xpose.msra.mxu0 0
        %4567 = vmatprep.subr.bf16.mxu0 0
        %4568 = vmatpush1.bf16.xpose.msra.mxu0 0
        %4569 = vmatprep.subr.bf16.mxu0 0
        %4570 = vmatpush1.bf16.xpose.msra.mxu0 0
        %4571 = vmatprep.subr.bf16.mxu0 0
        %4572 = vmatpush1.bf16.xpose.msra.mxu0 0
        %4573 = vmatprep.subr.bf16.mxu0 0
        %4574 = vmatpush1.bf16.xpose.msra.mxu0 0
        %4575 = vmatprep.subr.bf16.mxu0 0
        %4576 = vmatpush1.bf16.xpose.msra.mxu0 0
        %4577 = vmatprep.mubr.bf16.mxu0 0
        %4578 = vmatmul.mubr.bf16.gmra.mrb[0].mxu0 %v4540
        %v4579 = vpop.f32.mrb[0].mxu0
        %v4580 = vadd.f32 0.0, %v4579
        %v4581 = vpop.f32.mrb[0].mxu0
        %v4582 = vpop.f32.mrb[0].mxu0
        %v4583 = vpop.f32.mrb[0].mxu0
        %4584 = vdwg.mxu0
        %v4586 = vsel %vm1450, %v4528, 0
        %v4589 = vsel %vm1450, %v4532, 0
        %4591 = vmatprep.subr.bf16.mxu0 0
        %4592 = vmatpush1.bf16.xpose.msra.mxu0 %v4589
        %4593 = vmatprep.subr.bf16.mxu0 0
        %4594 = vmatpush1.bf16.xpose.msra.mxu0 0
        %4595 = vmatprep.subr.bf16.mxu0 0
        %4596 = vmatpush1.bf16.xpose.msra.mxu0 0
        %4597 = vmatprep.subr.bf16.mxu0 0
        %4598 = vmatpush1.bf16.xpose.msra.mxu0 0
        %4599 = vmatprep.subr.bf16.mxu0 0
        %4600 = vmatpush1.bf16.xpose.msra.mxu0 0
        %4601 = vmatprep.subr.bf16.mxu0 0
        %4602 = vmatpush1.bf16.xpose.msra.mxu0 0
        %4603 = vmatprep.subr.bf16.mxu0 0
        %4604 = vmatpush1.bf16.xpose.msra.mxu0 0
        %4605 = vmatprep.subr.bf16.mxu0 0
        %4606 = vmatpush1.bf16.xpose.msra.mxu0 0
        %4607 = vmatprep.subr.bf16.mxu0 0
        %4608 = vmatpush1.bf16.xpose.msra.mxu0 0
        %4609 = vmatprep.subr.bf16.mxu0 0
        %4610 = vmatpush1.bf16.xpose.msra.mxu0 0
        %4611 = vmatprep.subr.bf16.mxu0 0
        %4612 = vmatpush1.bf16.xpose.msra.mxu0 0
        %4613 = vmatprep.subr.bf16.mxu0 0
        %4614 = vmatpush1.bf16.xpose.msra.mxu0 0
        %4615 = vmatprep.subr.bf16.mxu0 0
        %4616 = vmatpush1.bf16.xpose.msra.mxu0 0
        %4617 = vmatprep.subr.bf16.mxu0 0
        %4618 = vmatpush1.bf16.xpose.msra.mxu0 0
        %4619 = vmatprep.subr.bf16.mxu0 0
        %4620 = vmatpush1.bf16.xpose.msra.mxu0 0
        %4621 = vmatprep.subr.bf16.mxu0 0
        %4622 = vmatpush1.bf16.xpose.msra.mxu0 0
        %4623 = vmatprep.mubr.bf16.mxu0 0
        %4624 = vmatmul.mubr.bf16.gmra.mrb[0].mxu0 %v4586
        %v4625 = vpop.f32.mrb[0].mxu0
        %v4626 = vadd.f32 0.0, %v4625
        %v4627 = vpop.f32.mrb[0].mxu0
        %v4628 = vpop.f32.mrb[0].mxu0
        %v4629 = vpop.f32.mrb[0].mxu0
        %4630 = vdwg.mxu0
        %v4632 = vsel %vm1450, %v4529, 0
        %v4635 = vsel %vm1450, %v4533, 0
        %4637 = vmatprep.subr.bf16.mxu0 0
        %4638 = vmatpush1.bf16.xpose.msra.mxu0 %v4635
        %4639 = vmatprep.subr.bf16.mxu0 0
        %4640 = vmatpush1.bf16.xpose.msra.mxu0 0
        %4641 = vmatprep.subr.bf16.mxu0 0
        %4642 = vmatpush1.bf16.xpose.msra.mxu0 0
        %4643 = vmatprep.subr.bf16.mxu0 0
        %4644 = vmatpush1.bf16.xpose.msra.mxu0 0
        %4645 = vmatprep.subr.bf16.mxu0 0
        %4646 = vmatpush1.bf16.xpose.msra.mxu0 0
        %4647 = vmatprep.subr.bf16.mxu0 0
        %4648 = vmatpush1.bf16.xpose.msra.mxu0 0
        %4649 = vmatprep.subr.bf16.mxu0 0
        %4650 = vmatpush1.bf16.xpose.msra.mxu0 0
        %4651 = vmatprep.subr.bf16.mxu0 0
        %4652 = vmatpush1.bf16.xpose.msra.mxu0 0
        %4653 = vmatprep.subr.bf16.mxu0 0
        %4654 = vmatpush1.bf16.xpose.msra.mxu0 0
        %4655 = vmatprep.subr.bf16.mxu0 0
        %4656 = vmatpush1.bf16.xpose.msra.mxu0 0
        %4657 = vmatprep.subr.bf16.mxu0 0
        %4658 = vmatpush1.bf16.xpose.msra.mxu0 0
        %4659 = vmatprep.subr.bf16.mxu0 0
        %4660 = vmatpush1.bf16.xpose.msra.mxu0 0
        %4661 = vmatprep.subr.bf16.mxu0 0
        %4662 = vmatpush1.bf16.xpose.msra.mxu0 0
        %4663 = vmatprep.subr.bf16.mxu0 0
        %4664 = vmatpush1.bf16.xpose.msra.mxu0 0
        %4665 = vmatprep.subr.bf16.mxu0 0
        %4666 = vmatpush1.bf16.xpose.msra.mxu0 0
        %4667 = vmatprep.subr.bf16.mxu0 0
        %4668 = vmatpush1.bf16.xpose.msra.mxu0 0
        %4669 = vmatprep.mubr.bf16.mxu0 0
        %4670 = vmatmul.mubr.bf16.gmra.mrb[0].mxu0 %v4632
        %v4671 = vpop.f32.mrb[0].mxu0
        %v4672 = vadd.f32 0.0, %v4671
        %v4673 = vpop.f32.mrb[0].mxu0
        %v4674 = vpop.f32.mrb[0].mxu0
        %v4675 = vpop.f32.mrb[0].mxu0
        %4676 = vdwg.mxu0
        %v4678 = vsel %vm1450, %v4530, 0
        %v4681 = vsel %vm1450, %v4534, 0
        %4683 = vmatprep.subr.bf16.mxu0 0
        %4684 = vmatpush1.bf16.xpose.msra.mxu0 %v4681
        %4685 = vmatprep.subr.bf16.mxu0 0
        %4686 = vmatpush1.bf16.xpose.msra.mxu0 0
        %4687 = vmatprep.subr.bf16.mxu0 0
        %4688 = vmatpush1.bf16.xpose.msra.mxu0 0
        %4689 = vmatprep.subr.bf16.mxu0 0
        %4690 = vmatpush1.bf16.xpose.msra.mxu0 0
        %4691 = vmatprep.subr.bf16.mxu0 0
        %4692 = vmatpush1.bf16.xpose.msra.mxu0 0
        %4693 = vmatprep.subr.bf16.mxu0 0
        %4694 = vmatpush1.bf16.xpose.msra.mxu0 0
        %4695 = vmatprep.subr.bf16.mxu0 0
        %4696 = vmatpush1.bf16.xpose.msra.mxu0 0
        %4697 = vmatprep.subr.bf16.mxu0 0
        %4698 = vmatpush1.bf16.xpose.msra.mxu0 0
        %4699 = vmatprep.subr.bf16.mxu0 0
        %4700 = vmatpush1.bf16.xpose.msra.mxu0 0
        %4701 = vmatprep.subr.bf16.mxu0 0
        %4702 = vmatpush1.bf16.xpose.msra.mxu0 0
        %4703 = vmatprep.subr.bf16.mxu0 0
        %4704 = vmatpush1.bf16.xpose.msra.mxu0 0
        %4705 = vmatprep.subr.bf16.mxu0 0
        %4706 = vmatpush1.bf16.xpose.msra.mxu0 0
        %4707 = vmatprep.subr.bf16.mxu0 0
        %4708 = vmatpush1.bf16.xpose.msra.mxu0 0
        %4709 = vmatprep.subr.bf16.mxu0 0
        %4710 = vmatpush1.bf16.xpose.msra.mxu0 0
        %4711 = vmatprep.subr.bf16.mxu0 0
        %4712 = vmatpush1.bf16.xpose.msra.mxu0 0
        %4713 = vmatprep.subr.bf16.mxu0 0
        %4714 = vmatpush1.bf16.xpose.msra.mxu0 0
        %4715 = vmatprep.mubr.bf16.mxu0 0
        %4716 = vmatmul.mubr.bf16.gmra.mrb[0].mxu0 %v4678
        %v4717 = vpop.f32.mrb[0].mxu0
        %v4718 = vadd.f32 0.0, %v4717
        %v4719 = vpop.f32.mrb[0].mxu0
        %v4720 = vpop.f32.mrb[0].mxu0
        %v4721 = vpop.f32.mrb[0].mxu0
        %4722 = vdwg.mxu0
        %v4723 = vmul.f32 %v4580, 0.35355338
        %v4724 = vmul.f32 %v4626, 0.35355338
        %v4725 = vmul.f32 %v4672, 0.35355338
        %v4726 = vmul.f32 %v4718, 0.35355338
        %v4727 = vadd.f32 %v4723, %v949
        %v4728 = vadd.f32 %v4724, %v950
        %v4729 = vadd.f32 %v4725, %v951
        %v4730 = vadd.f32 %v4726, %v952
        %vm4731 = vcmask 122880
        %v4732 = vsel %vm4731, %v4727, -inf
        %4733 = vmax.xlane.f32.xlu0 %v4732
        %v4734 = vpop.xlane.xlu0 %4733
        %v4735 = vsel %vm4731, %v4728, -inf
        %4736 = vmax.xlane.f32.xlu0 %v4735
        %v4737 = vpop.xlane.xlu0 %4736
        %v4738 = vsel %vm4731, %v4729, -inf
        %4739 = vmax.xlane.f32.xlu0 %v4738
        %v4740 = vpop.xlane.xlu0 %4739
        %v4741 = vsel %vm4731, %v4730, -inf
        %4742 = vmax.xlane.f32.xlu0 %v4741
        %v4743 = vpop.xlane.xlu0 %4742
        %v4744 = vsub.f32 %v4727, %v4734
        %v4745 = vsub.f32 %v4728, %v4737
        %v4746 = vsub.f32 %v4729, %v4740
        %v4747 = vsub.f32 %v4730, %v4743
        %v4748 = vmul.f32 %v4744, 1.442695
        %v4749 = vpow.pop %v4748
        %v4750 = vmul.f32 %v4745, 1.442695
        %v4751 = vpow.pop %v4750
        %v4752 = vmul.f32 %v4746, 1.442695
        %v4753 = vpow.pop %v4752
        %v4754 = vmul.f32 %v4747, 1.442695
        %v4755 = vpow.pop %v4754
        %v4756 = vsel %vm4731, %v4749, 0.0
        %4757 = vadd.xlane.f32.xlu0 %v4756
        %v4758 = vpop.xlane.xlu0 %4757
        %v4759 = vsel %vm4731, %v4751, 0.0
        %4760 = vadd.xlane.f32.xlu0 %v4759
        %v4761 = vpop.xlane.xlu0 %4760
        %v4762 = vsel %vm4731, %v4753, 0.0
        %4763 = vadd.xlane.f32.xlu0 %v4762
        %v4764 = vpop.xlane.xlu0 %4763
        %v4765 = vsel %vm4731, %v4755, 0.0
        %4766 = vadd.xlane.f32.xlu0 %v4765
        %v4767 = vpop.xlane.xlu0 %4766
        %v4768 = vrcp.pop %v4758
        %v4769 = vrcp.pop %v4761
        %v4770 = vrcp.pop %v4764
        %v4771 = vrcp.pop %v4767
        %v4772 = vmul.f32 %v4749, %v4768
        %v4773 = vmul.f32 %v4751, %v4769
        %v4774 = vmul.f32 %v4753, %v4770
        %v4775 = vmul.f32 %v4755, %v4771
        %v4776 = vpack.c.bf16 %v4772, %v4772
        %v4777 = vpack.c.bf16 %v4773, %v4773
        %v4778 = vpack.c.bf16 %v4774, %v4774
        %v4779 = vpack.c.bf16 %v4775, %v4775
        %v4781 = vsel %vm1679, %v4776, 0
        %4783 = vmatprep.subr.bf16.mxu0 0
        %4784 = vmatpush1.bf16.msra.mxu0 %v4535
        %4785 = vmatprep.subr.bf16.mxu0 0
        %4786 = vmatpush1.bf16.msra.mxu0 0
        %4787 = vmatprep.subr.bf16.mxu0 0
        %4788 = vmatpush1.bf16.msra.mxu0 0
        %4789 = vmatprep.subr.bf16.mxu0 0
        %4790 = vmatpush1.bf16.msra.mxu0 0
        %4791 = vmatprep.subr.bf16.mxu0 0
        %4792 = vmatpush1.bf16.msra.mxu0 0
        %4793 = vmatprep.subr.bf16.mxu0 0
        %4794 = vmatpush1.bf16.msra.mxu0 0
        %4795 = vmatprep.subr.bf16.mxu0 0
        %4796 = vmatpush1.bf16.msra.mxu0 0
        %4797 = vmatprep.subr.bf16.mxu0 0
        %4798 = vmatpush1.bf16.msra.mxu0 0
        %4799 = vmatprep.subr.bf16.mxu0 0
        %4800 = vmatpush1.bf16.msra.mxu0 0
        %4801 = vmatprep.subr.bf16.mxu0 0
        %4802 = vmatpush1.bf16.msra.mxu0 0
        %4803 = vmatprep.subr.bf16.mxu0 0
        %4804 = vmatpush1.bf16.msra.mxu0 0
        %4805 = vmatprep.subr.bf16.mxu0 0
        %4806 = vmatpush1.bf16.msra.mxu0 0
        %4807 = vmatprep.subr.bf16.mxu0 0
        %4808 = vmatpush1.bf16.msra.mxu0 0
        %4809 = vmatprep.subr.bf16.mxu0 0
        %4810 = vmatpush1.bf16.msra.mxu0 0
        %4811 = vmatprep.subr.bf16.mxu0 0
        %4812 = vmatpush1.bf16.msra.mxu0 0
        %4813 = vmatprep.subr.bf16.mxu0 0
        %4814 = vmatpush1.bf16.msra.mxu0 0
        %4815 = vmatprep.mubr.bf16.mxu0 0
        %4816 = vmatmul.mubr.bf16.gmra.mrb[0].mxu0 %v4781
        %v4817 = vpop.f32.mrb[0].mxu0
        %v4818 = vadd.f32 0.0, %v4817
        %v4819 = vpop.f32.mrb[0].mxu0
        %v4820 = vpop.f32.mrb[0].mxu0
        %v4821 = vpop.f32.mrb[0].mxu0
        %4822 = vdwg.mxu0
        %v4824 = vsel %vm1679, %v4777, 0
        %4826 = vmatprep.subr.bf16.mxu0 0
        %4827 = vmatpush1.bf16.msra.mxu0 %v4536
        %4828 = vmatprep.subr.bf16.mxu0 0
        %4829 = vmatpush1.bf16.msra.mxu0 0
        %4830 = vmatprep.subr.bf16.mxu0 0
        %4831 = vmatpush1.bf16.msra.mxu0 0
        %4832 = vmatprep.subr.bf16.mxu0 0
        %4833 = vmatpush1.bf16.msra.mxu0 0
        %4834 = vmatprep.subr.bf16.mxu0 0
        %4835 = vmatpush1.bf16.msra.mxu0 0
        %4836 = vmatprep.subr.bf16.mxu0 0
        %4837 = vmatpush1.bf16.msra.mxu0 0
        %4838 = vmatprep.subr.bf16.mxu0 0
        %4839 = vmatpush1.bf16.msra.mxu0 0
        %4840 = vmatprep.subr.bf16.mxu0 0
        %4841 = vmatpush1.bf16.msra.mxu0 0
        %4842 = vmatprep.subr.bf16.mxu0 0
        %4843 = vmatpush1.bf16.msra.mxu0 0
        %4844 = vmatprep.subr.bf16.mxu0 0
        %4845 = vmatpush1.bf16.msra.mxu0 0
        %4846 = vmatprep.subr.bf16.mxu0 0
        %4847 = vmatpush1.bf16.msra.mxu0 0
        %4848 = vmatprep.subr.bf16.mxu0 0
        %4849 = vmatpush1.bf16.msra.mxu0 0
        %4850 = vmatprep.subr.bf16.mxu0 0
        %4851 = vmatpush1.bf16.msra.mxu0 0
        %4852 = vmatprep.subr.bf16.mxu0 0
        %4853 = vmatpush1.bf16.msra.mxu0 0
        %4854 = vmatprep.subr.bf16.mxu0 0
        %4855 = vmatpush1.bf16.msra.mxu0 0
        %4856 = vmatprep.subr.bf16.mxu0 0
        %4857 = vmatpush1.bf16.msra.mxu0 0
        %4858 = vmatprep.mubr.bf16.mxu0 0
        %4859 = vmatmul.mubr.bf16.gmra.mrb[0].mxu0 %v4824
        %v4860 = vpop.f32.mrb[0].mxu0
        %v4861 = vadd.f32 0.0, %v4860
        %v4862 = vpop.f32.mrb[0].mxu0
        %v4863 = vpop.f32.mrb[0].mxu0
        %v4864 = vpop.f32.mrb[0].mxu0
        %4865 = vdwg.mxu0
        %v4867 = vsel %vm1679, %v4778, 0
        %4869 = vmatprep.subr.bf16.mxu0 0
        %4870 = vmatpush1.bf16.msra.mxu0 %v4537
        %4871 = vmatprep.subr.bf16.mxu0 0
        %4872 = vmatpush1.bf16.msra.mxu0 0
        %4873 = vmatprep.subr.bf16.mxu0 0
        %4874 = vmatpush1.bf16.msra.mxu0 0
        %4875 = vmatprep.subr.bf16.mxu0 0
        %4876 = vmatpush1.bf16.msra.mxu0 0
        %4877 = vmatprep.subr.bf16.mxu0 0
        %4878 = vmatpush1.bf16.msra.mxu0 0
        %4879 = vmatprep.subr.bf16.mxu0 0
        %4880 = vmatpush1.bf16.msra.mxu0 0
        %4881 = vmatprep.subr.bf16.mxu0 0
        %4882 = vmatpush1.bf16.msra.mxu0 0
        %4883 = vmatprep.subr.bf16.mxu0 0
        %4884 = vmatpush1.bf16.msra.mxu0 0
        %4885 = vmatprep.subr.bf16.mxu0 0
        %4886 = vmatpush1.bf16.msra.mxu0 0
        %4887 = vmatprep.subr.bf16.mxu0 0
        %4888 = vmatpush1.bf16.msra.mxu0 0
        %4889 = vmatprep.subr.bf16.mxu0 0
        %4890 = vmatpush1.bf16.msra.mxu0 0
        %4891 = vmatprep.subr.bf16.mxu0 0
        %4892 = vmatpush1.bf16.msra.mxu0 0
        %4893 = vmatprep.subr.bf16.mxu0 0
        %4894 = vmatpush1.bf16.msra.mxu0 0
        %4895 = vmatprep.subr.bf16.mxu0 0
        %4896 = vmatpush1.bf16.msra.mxu0 0
        %4897 = vmatprep.subr.bf16.mxu0 0
        %4898 = vmatpush1.bf16.msra.mxu0 0
        %4899 = vmatprep.subr.bf16.mxu0 0
        %4900 = vmatpush1.bf16.msra.mxu0 0
        %4901 = vmatprep.mubr.bf16.mxu0 0
        %4902 = vmatmul.mubr.bf16.gmra.mrb[0].mxu0 %v4867
        %v4903 = vpop.f32.mrb[0].mxu0
        %v4904 = vadd.f32 0.0, %v4903
        %v4905 = vpop.f32.mrb[0].mxu0
        %v4906 = vpop.f32.mrb[0].mxu0
        %v4907 = vpop.f32.mrb[0].mxu0
        %4908 = vdwg.mxu0
        %v4910 = vsel %vm1679, %v4779, 0
        %4912 = vmatprep.subr.bf16.mxu0 0
        %4913 = vmatpush1.bf16.msra.mxu0 %v4538
        %4914 = vmatprep.subr.bf16.mxu0 0
        %4915 = vmatpush1.bf16.msra.mxu0 0
        %4916 = vmatprep.subr.bf16.mxu0 0
        %4917 = vmatpush1.bf16.msra.mxu0 0
        %4918 = vmatprep.subr.bf16.mxu0 0
        %4919 = vmatpush1.bf16.msra.mxu0 0
        %4920 = vmatprep.subr.bf16.mxu0 0
        %4921 = vmatpush1.bf16.msra.mxu0 0
        %4922 = vmatprep.subr.bf16.mxu0 0
        %4923 = vmatpush1.bf16.msra.mxu0 0
        %4924 = vmatprep.subr.bf16.mxu0 0
        %4925 = vmatpush1.bf16.msra.mxu0 0
        %4926 = vmatprep.subr.bf16.mxu0 0
        %4927 = vmatpush1.bf16.msra.mxu0 0
        %4928 = vmatprep.subr.bf16.mxu0 0
        %4929 = vmatpush1.bf16.msra.mxu0 0
        %4930 = vmatprep.subr.bf16.mxu0 0
        %4931 = vmatpush1.bf16.msra.mxu0 0
        %4932 = vmatprep.subr.bf16.mxu0 0
        %4933 = vmatpush1.bf16.msra.mxu0 0
        %4934 = vmatprep.subr.bf16.mxu0 0
        %4935 = vmatpush1.bf16.msra.mxu0 0
        %4936 = vmatprep.subr.bf16.mxu0 0
        %4937 = vmatpush1.bf16.msra.mxu0 0
        %4938 = vmatprep.subr.bf16.mxu0 0
        %4939 = vmatpush1.bf16.msra.mxu0 0
        %4940 = vmatprep.subr.bf16.mxu0 0
        %4941 = vmatpush1.bf16.msra.mxu0 0
        %4942 = vmatprep.subr.bf16.mxu0 0
        %4943 = vmatpush1.bf16.msra.mxu0 0
        %4944 = vmatprep.mubr.bf16.mxu0 0
        %4945 = vmatmul.mubr.bf16.gmra.mrb[0].mxu0 %v4910
        %v4946 = vpop.f32.mrb[0].mxu0
        %v4947 = vadd.f32 0.0, %v4946
        %v4948 = vpop.f32.mrb[0].mxu0
        %v4949 = vpop.f32.mrb[0].mxu0
        %v4950 = vpop.f32.mrb[0].mxu0
        %4951 = vdwg.mxu0
        %4953 = vrot.lane.b32.xlu0 %v4527, 120
        %v4954 = vpop.permute.xlu0 %4953
        %4956 = vrot.lane.b32.xlu0 %v4531, 120
        %v4957 = vpop.permute.xlu0 %4956
        %v4959 = vsel %vm1450, %v4954, 0
        %v4962 = vsel %vm1450, %v4957, 0
        %4964 = vmatprep.subr.bf16.mxu0 0
        %4965 = vmatpush1.bf16.xpose.msra.mxu0 %v4962
        %4966 = vmatprep.subr.bf16.mxu0 0
        %4967 = vmatpush1.bf16.xpose.msra.mxu0 0
        %4968 = vmatprep.subr.bf16.mxu0 0
        %4969 = vmatpush1.bf16.xpose.msra.mxu0 0
        %4970 = vmatprep.subr.bf16.mxu0 0
        %4971 = vmatpush1.bf16.xpose.msra.mxu0 0
        %4972 = vmatprep.subr.bf16.mxu0 0
        %4973 = vmatpush1.bf16.xpose.msra.mxu0 0
        %4974 = vmatprep.subr.bf16.mxu0 0
        %4975 = vmatpush1.bf16.xpose.msra.mxu0 0
        %4976 = vmatprep.subr.bf16.mxu0 0
        %4977 = vmatpush1.bf16.xpose.msra.mxu0 0
        %4978 = vmatprep.subr.bf16.mxu0 0
        %4979 = vmatpush1.bf16.xpose.msra.mxu0 0
        %4980 = vmatprep.subr.bf16.mxu0 0
        %4981 = vmatpush1.bf16.xpose.msra.mxu0 0
        %4982 = vmatprep.subr.bf16.mxu0 0
        %4983 = vmatpush1.bf16.xpose.msra.mxu0 0
        %4984 = vmatprep.subr.bf16.mxu0 0
        %4985 = vmatpush1.bf16.xpose.msra.mxu0 0
        %4986 = vmatprep.subr.bf16.mxu0 0
        %4987 = vmatpush1.bf16.xpose.msra.mxu0 0
        %4988 = vmatprep.subr.bf16.mxu0 0
        %4989 = vmatpush1.bf16.xpose.msra.mxu0 0
        %4990 = vmatprep.subr.bf16.mxu0 0
        %4991 = vmatpush1.bf16.xpose.msra.mxu0 0
        %4992 = vmatprep.subr.bf16.mxu0 0
        %4993 = vmatpush1.bf16.xpose.msra.mxu0 0
        %4994 = vmatprep.subr.bf16.mxu0 0
        %4995 = vmatpush1.bf16.xpose.msra.mxu0 0
        %4996 = vmatprep.mubr.bf16.mxu0 0
        %4997 = vmatmul.mubr.bf16.gmra.mrb[0].mxu0 %v4959
        %v4998 = vpop.f32.mrb[0].mxu0
        %v4999 = vadd.f32 0.0, %v4998
        %v5000 = vpop.f32.mrb[0].mxu0
        %v5001 = vpop.f32.mrb[0].mxu0
        %v5002 = vpop.f32.mrb[0].mxu0
        %5003 = vdwg.mxu0
        %5005 = vrot.lane.b32.xlu0 %v4528, 120
        %v5006 = vpop.permute.xlu0 %5005
        %5008 = vrot.lane.b32.xlu0 %v4532, 120
        %v5009 = vpop.permute.xlu0 %5008
        %v5011 = vsel %vm1450, %v5006, 0
        %v5014 = vsel %vm1450, %v5009, 0
        %5016 = vmatprep.subr.bf16.mxu0 0
        %5017 = vmatpush1.bf16.xpose.msra.mxu0 %v5014
        %5018 = vmatprep.subr.bf16.mxu0 0
        %5019 = vmatpush1.bf16.xpose.msra.mxu0 0
        %5020 = vmatprep.subr.bf16.mxu0 0
        %5021 = vmatpush1.bf16.xpose.msra.mxu0 0
        %5022 = vmatprep.subr.bf16.mxu0 0
        %5023 = vmatpush1.bf16.xpose.msra.mxu0 0
        %5024 = vmatprep.subr.bf16.mxu0 0
        %5025 = vmatpush1.bf16.xpose.msra.mxu0 0
        %5026 = vmatprep.subr.bf16.mxu0 0
        %5027 = vmatpush1.bf16.xpose.msra.mxu0 0
        %5028 = vmatprep.subr.bf16.mxu0 0
        %5029 = vmatpush1.bf16.xpose.msra.mxu0 0
        %5030 = vmatprep.subr.bf16.mxu0 0
        %5031 = vmatpush1.bf16.xpose.msra.mxu0 0
        %5032 = vmatprep.subr.bf16.mxu0 0
        %5033 = vmatpush1.bf16.xpose.msra.mxu0 0
        %5034 = vmatprep.subr.bf16.mxu0 0
        %5035 = vmatpush1.bf16.xpose.msra.mxu0 0
        %5036 = vmatprep.subr.bf16.mxu0 0
        %5037 = vmatpush1.bf16.xpose.msra.mxu0 0
        %5038 = vmatprep.subr.bf16.mxu0 0
        %5039 = vmatpush1.bf16.xpose.msra.mxu0 0
        %5040 = vmatprep.subr.bf16.mxu0 0
        %5041 = vmatpush1.bf16.xpose.msra.mxu0 0
        %5042 = vmatprep.subr.bf16.mxu0 0
        %5043 = vmatpush1.bf16.xpose.msra.mxu0 0
        %5044 = vmatprep.subr.bf16.mxu0 0
        %5045 = vmatpush1.bf16.xpose.msra.mxu0 0
        %5046 = vmatprep.subr.bf16.mxu0 0
        %5047 = vmatpush1.bf16.xpose.msra.mxu0 0
        %5048 = vmatprep.mubr.bf16.mxu0 0
        %5049 = vmatmul.mubr.bf16.gmra.mrb[0].mxu0 %v5011
        %v5050 = vpop.f32.mrb[0].mxu0
        %v5051 = vadd.f32 0.0, %v5050
        %v5052 = vpop.f32.mrb[0].mxu0
        %v5053 = vpop.f32.mrb[0].mxu0
        %v5054 = vpop.f32.mrb[0].mxu0
        %5055 = vdwg.mxu0
        %5057 = vrot.lane.b32.xlu0 %v4529, 120
        %v5058 = vpop.permute.xlu0 %5057
        %5060 = vrot.lane.b32.xlu0 %v4533, 120
        %v5061 = vpop.permute.xlu0 %5060
        %v5063 = vsel %vm1450, %v5058, 0
        %v5066 = vsel %vm1450, %v5061, 0
        %5068 = vmatprep.subr.bf16.mxu0 0
        %5069 = vmatpush1.bf16.xpose.msra.mxu0 %v5066
        %5070 = vmatprep.subr.bf16.mxu0 0
        %5071 = vmatpush1.bf16.xpose.msra.mxu0 0
        %5072 = vmatprep.subr.bf16.mxu0 0
        %5073 = vmatpush1.bf16.xpose.msra.mxu0 0
        %5074 = vmatprep.subr.bf16.mxu0 0
        %5075 = vmatpush1.bf16.xpose.msra.mxu0 0
        %5076 = vmatprep.subr.bf16.mxu0 0
        %5077 = vmatpush1.bf16.xpose.msra.mxu0 0
        %5078 = vmatprep.subr.bf16.mxu0 0
        %5079 = vmatpush1.bf16.xpose.msra.mxu0 0
        %5080 = vmatprep.subr.bf16.mxu0 0
        %5081 = vmatpush1.bf16.xpose.msra.mxu0 0
        %5082 = vmatprep.subr.bf16.mxu0 0
        %5083 = vmatpush1.bf16.xpose.msra.mxu0 0
        %5084 = vmatprep.subr.bf16.mxu0 0
        %5085 = vmatpush1.bf16.xpose.msra.mxu0 0
        %5086 = vmatprep.subr.bf16.mxu0 0
        %5087 = vmatpush1.bf16.xpose.msra.mxu0 0
        %5088 = vmatprep.subr.bf16.mxu0 0
        %5089 = vmatpush1.bf16.xpose.msra.mxu0 0
        %5090 = vmatprep.subr.bf16.mxu0 0
        %5091 = vmatpush1.bf16.xpose.msra.mxu0 0
        %5092 = vmatprep.subr.bf16.mxu0 0
        %5093 = vmatpush1.bf16.xpose.msra.mxu0 0
        %5094 = vmatprep.subr.bf16.mxu0 0
        %5095 = vmatpush1.bf16.xpose.msra.mxu0 0
        %5096 = vmatprep.subr.bf16.mxu0 0
        %5097 = vmatpush1.bf16.xpose.msra.mxu0 0
        %5098 = vmatprep.subr.bf16.mxu0 0
        %5099 = vmatpush1.bf16.xpose.msra.mxu0 0
        %5100 = vmatprep.mubr.bf16.mxu0 0
        %5101 = vmatmul.mubr.bf16.gmra.mrb[0].mxu0 %v5063
        %v5102 = vpop.f32.mrb[0].mxu0
        %v5103 = vadd.f32 0.0, %v5102
        %v5104 = vpop.f32.mrb[0].mxu0
        %v5105 = vpop.f32.mrb[0].mxu0
        %v5106 = vpop.f32.mrb[0].mxu0
        %5107 = vdwg.mxu0
        %5109 = vrot.lane.b32.xlu0 %v4530, 120
        %v5110 = vpop.permute.xlu0 %5109
        %5112 = vrot.lane.b32.xlu0 %v4534, 120
        %v5113 = vpop.permute.xlu0 %5112
        %v5115 = vsel %vm1450, %v5110, 0
        %v5118 = vsel %vm1450, %v5113, 0
        %5120 = vmatprep.subr.bf16.mxu0 0
        %5121 = vmatpush1.bf16.xpose.msra.mxu0 %v5118
        %5122 = vmatprep.subr.bf16.mxu0 0
        %5123 = vmatpush1.bf16.xpose.msra.mxu0 0
        %5124 = vmatprep.subr.bf16.mxu0 0
        %5125 = vmatpush1.bf16.xpose.msra.mxu0 0
        %5126 = vmatprep.subr.bf16.mxu0 0
        %5127 = vmatpush1.bf16.xpose.msra.mxu0 0
        %5128 = vmatprep.subr.bf16.mxu0 0
        %5129 = vmatpush1.bf16.xpose.msra.mxu0 0
        %5130 = vmatprep.subr.bf16.mxu0 0
        %5131 = vmatpush1.bf16.xpose.msra.mxu0 0
        %5132 = vmatprep.subr.bf16.mxu0 0
        %5133 = vmatpush1.bf16.xpose.msra.mxu0 0
        %5134 = vmatprep.subr.bf16.mxu0 0
        %5135 = vmatpush1.bf16.xpose.msra.mxu0 0
        %5136 = vmatprep.subr.bf16.mxu0 0
        %5137 = vmatpush1.bf16.xpose.msra.mxu0 0
        %5138 = vmatprep.subr.bf16.mxu0 0
        %5139 = vmatpush1.bf16.xpose.msra.mxu0 0
        %5140 = vmatprep.subr.bf16.mxu0 0
        %5141 = vmatpush1.bf16.xpose.msra.mxu0 0
        %5142 = vmatprep.subr.bf16.mxu0 0
        %5143 = vmatpush1.bf16.xpose.msra.mxu0 0
        %5144 = vmatprep.subr.bf16.mxu0 0
        %5145 = vmatpush1.bf16.xpose.msra.mxu0 0
        %5146 = vmatprep.subr.bf16.mxu0 0
        %5147 = vmatpush1.bf16.xpose.msra.mxu0 0
        %5148 = vmatprep.subr.bf16.mxu0 0
        %5149 = vmatpush1.bf16.xpose.msra.mxu0 0
        %5150 = vmatprep.subr.bf16.mxu0 0
        %5151 = vmatpush1.bf16.xpose.msra.mxu0 0
        %5152 = vmatprep.mubr.bf16.mxu0 0
        %5153 = vmatmul.mubr.bf16.gmra.mrb[0].mxu0 %v5115
        %v5154 = vpop.f32.mrb[0].mxu0
        %v5155 = vadd.f32 0.0, %v5154
        %v5156 = vpop.f32.mrb[0].mxu0
        %v5157 = vpop.f32.mrb[0].mxu0
        %v5158 = vpop.f32.mrb[0].mxu0
        %5159 = vdwg.mxu0
        %v5160 = vmul.f32 %v4999, 0.35355338
        %v5161 = vmul.f32 %v5051, 0.35355338
        %v5162 = vmul.f32 %v5103, 0.35355338
        %v5163 = vmul.f32 %v5155, 0.35355338
        %v5164 = vadd.f32 %v5160, %v949
        %v5165 = vadd.f32 %v5161, %v950
        %v5166 = vadd.f32 %v5162, %v951
        %v5167 = vadd.f32 %v5163, %v952
        %v5168 = vsel %vm4731, %v5164, -inf
        %5169 = vmax.xlane.f32.xlu0 %v5168
        %v5170 = vpop.xlane.xlu0 %5169
        %v5171 = vsel %vm4731, %v5165, -inf
        %5172 = vmax.xlane.f32.xlu0 %v5171
        %v5173 = vpop.xlane.xlu0 %5172
        %v5174 = vsel %vm4731, %v5166, -inf
        %5175 = vmax.xlane.f32.xlu0 %v5174
        %v5176 = vpop.xlane.xlu0 %5175
        %v5177 = vsel %vm4731, %v5167, -inf
        %5178 = vmax.xlane.f32.xlu0 %v5177
        %v5179 = vpop.xlane.xlu0 %5178
        %v5180 = vsub.f32 %v5164, %v5170
        %v5181 = vsub.f32 %v5165, %v5173
        %v5182 = vsub.f32 %v5166, %v5176
        %v5183 = vsub.f32 %v5167, %v5179
        %v5184 = vmul.f32 %v5180, 1.442695
        %v5185 = vpow.pop %v5184
        %v5186 = vmul.f32 %v5181, 1.442695
        %v5187 = vpow.pop %v5186
        %v5188 = vmul.f32 %v5182, 1.442695
        %v5189 = vpow.pop %v5188
        %v5190 = vmul.f32 %v5183, 1.442695
        %v5191 = vpow.pop %v5190
        %v5192 = vsel %vm4731, %v5185, 0.0
        %5193 = vadd.xlane.f32.xlu0 %v5192
        %v5194 = vpop.xlane.xlu0 %5193
        %v5195 = vsel %vm4731, %v5187, 0.0
        %5196 = vadd.xlane.f32.xlu0 %v5195
        %v5197 = vpop.xlane.xlu0 %5196
        %v5198 = vsel %vm4731, %v5189, 0.0
        %5199 = vadd.xlane.f32.xlu0 %v5198
        %v5200 = vpop.xlane.xlu0 %5199
        %v5201 = vsel %vm4731, %v5191, 0.0
        %5202 = vadd.xlane.f32.xlu0 %v5201
        %v5203 = vpop.xlane.xlu0 %5202
        %v5204 = vrcp.pop %v5194
        %v5205 = vrcp.pop %v5197
        %v5206 = vrcp.pop %v5200
        %v5207 = vrcp.pop %v5203
        %v5208 = vmul.f32 %v5185, %v5204
        %v5209 = vmul.f32 %v5187, %v5205
        %v5210 = vmul.f32 %v5189, %v5206
        %v5211 = vmul.f32 %v5191, %v5207
        %v5212 = vpack.c.bf16 %v5208, %v5208
        %v5213 = vpack.c.bf16 %v5209, %v5209
        %v5214 = vpack.c.bf16 %v5210, %v5210
        %v5215 = vpack.c.bf16 %v5211, %v5211
        %5217 = vrot.lane.b32.xlu0 %v4535, 120
        %v5218 = vpop.permute.xlu0 %5217
        %v5221 = vsel %vm1679, %v5212, 0
        %5223 = vmatprep.subr.bf16.mxu0 0
        %5224 = vmatpush1.bf16.msra.mxu0 %v5218
        %5225 = vmatprep.subr.bf16.mxu0 0
        %5226 = vmatpush1.bf16.msra.mxu0 0
        %5227 = vmatprep.subr.bf16.mxu0 0
        %5228 = vmatpush1.bf16.msra.mxu0 0
        %5229 = vmatprep.subr.bf16.mxu0 0
        %5230 = vmatpush1.bf16.msra.mxu0 0
        %5231 = vmatprep.subr.bf16.mxu0 0
        %5232 = vmatpush1.bf16.msra.mxu0 0
        %5233 = vmatprep.subr.bf16.mxu0 0
        %5234 = vmatpush1.bf16.msra.mxu0 0
        %5235 = vmatprep.subr.bf16.mxu0 0
        %5236 = vmatpush1.bf16.msra.mxu0 0
        %5237 = vmatprep.subr.bf16.mxu0 0
        %5238 = vmatpush1.bf16.msra.mxu0 0
        %5239 = vmatprep.subr.bf16.mxu0 0
        %5240 = vmatpush1.bf16.msra.mxu0 0
        %5241 = vmatprep.subr.bf16.mxu0 0
        %5242 = vmatpush1.bf16.msra.mxu0 0
        %5243 = vmatprep.subr.bf16.mxu0 0
        %5244 = vmatpush1.bf16.msra.mxu0 0
        %5245 = vmatprep.subr.bf16.mxu0 0
        %5246 = vmatpush1.bf16.msra.mxu0 0
        %5247 = vmatprep.subr.bf16.mxu0 0
        %5248 = vmatpush1.bf16.msra.mxu0 0
        %5249 = vmatprep.subr.bf16.mxu0 0
        %5250 = vmatpush1.bf16.msra.mxu0 0
        %5251 = vmatprep.subr.bf16.mxu0 0
        %5252 = vmatpush1.bf16.msra.mxu0 0
        %5253 = vmatprep.subr.bf16.mxu0 0
        %5254 = vmatpush1.bf16.msra.mxu0 0
        %5255 = vmatprep.mubr.bf16.mxu0 0
        %5256 = vmatmul.mubr.bf16.gmra.mrb[0].mxu0 %v5221
        %v5257 = vpop.f32.mrb[0].mxu0
        %v5258 = vadd.f32 0.0, %v5257
        %v5259 = vpop.f32.mrb[0].mxu0
        %v5260 = vpop.f32.mrb[0].mxu0
        %v5261 = vpop.f32.mrb[0].mxu0
        %5262 = vdwg.mxu0
        %5264 = vrot.lane.b32.xlu0 %v4536, 120
        %v5265 = vpop.permute.xlu0 %5264
        %v5268 = vsel %vm1679, %v5213, 0
        %5270 = vmatprep.subr.bf16.mxu0 0
        %5271 = vmatpush1.bf16.msra.mxu0 %v5265
        %5272 = vmatprep.subr.bf16.mxu0 0
        %5273 = vmatpush1.bf16.msra.mxu0 0
        %5274 = vmatprep.subr.bf16.mxu0 0
        %5275 = vmatpush1.bf16.msra.mxu0 0
        %5276 = vmatprep.subr.bf16.mxu0 0
        %5277 = vmatpush1.bf16.msra.mxu0 0
        %5278 = vmatprep.subr.bf16.mxu0 0
        %5279 = vmatpush1.bf16.msra.mxu0 0
        %5280 = vmatprep.subr.bf16.mxu0 0
        %5281 = vmatpush1.bf16.msra.mxu0 0
        %5282 = vmatprep.subr.bf16.mxu0 0
        %5283 = vmatpush1.bf16.msra.mxu0 0
        %5284 = vmatprep.subr.bf16.mxu0 0
        %5285 = vmatpush1.bf16.msra.mxu0 0
        %5286 = vmatprep.subr.bf16.mxu0 0
        %5287 = vmatpush1.bf16.msra.mxu0 0
        %5288 = vmatprep.subr.bf16.mxu0 0
        %5289 = vmatpush1.bf16.msra.mxu0 0
        %5290 = vmatprep.subr.bf16.mxu0 0
        %5291 = vmatpush1.bf16.msra.mxu0 0
        %5292 = vmatprep.subr.bf16.mxu0 0
        %5293 = vmatpush1.bf16.msra.mxu0 0
        %5294 = vmatprep.subr.bf16.mxu0 0
        %5295 = vmatpush1.bf16.msra.mxu0 0
        %5296 = vmatprep.subr.bf16.mxu0 0
        %5297 = vmatpush1.bf16.msra.mxu0 0
        %5298 = vmatprep.subr.bf16.mxu0 0
        %5299 = vmatpush1.bf16.msra.mxu0 0
        %5300 = vmatprep.subr.bf16.mxu0 0
        %5301 = vmatpush1.bf16.msra.mxu0 0
        %5302 = vmatprep.mubr.bf16.mxu0 0
        %5303 = vmatmul.mubr.bf16.gmra.mrb[0].mxu0 %v5268
        %v5304 = vpop.f32.mrb[0].mxu0
        %v5305 = vadd.f32 0.0, %v5304
        %v5306 = vpop.f32.mrb[0].mxu0
        %v5307 = vpop.f32.mrb[0].mxu0
        %v5308 = vpop.f32.mrb[0].mxu0
        %5309 = vdwg.mxu0
        %5311 = vrot.lane.b32.xlu0 %v4537, 120
        %v5312 = vpop.permute.xlu0 %5311
        %v5315 = vsel %vm1679, %v5214, 0
        %5317 = vmatprep.subr.bf16.mxu0 0
        %5318 = vmatpush1.bf16.msra.mxu0 %v5312
        %5319 = vmatprep.subr.bf16.mxu0 0
        %5320 = vmatpush1.bf16.msra.mxu0 0
        %5321 = vmatprep.subr.bf16.mxu0 0
        %5322 = vmatpush1.bf16.msra.mxu0 0
        %5323 = vmatprep.subr.bf16.mxu0 0
        %5324 = vmatpush1.bf16.msra.mxu0 0
        %5325 = vmatprep.subr.bf16.mxu0 0
        %5326 = vmatpush1.bf16.msra.mxu0 0
        %5327 = vmatprep.subr.bf16.mxu0 0
        %5328 = vmatpush1.bf16.msra.mxu0 0
        %5329 = vmatprep.subr.bf16.mxu0 0
        %5330 = vmatpush1.bf16.msra.mxu0 0
        %5331 = vmatprep.subr.bf16.mxu0 0
        %5332 = vmatpush1.bf16.msra.mxu0 0
        %5333 = vmatprep.subr.bf16.mxu0 0
        %5334 = vmatpush1.bf16.msra.mxu0 0
        %5335 = vmatprep.subr.bf16.mxu0 0
        %5336 = vmatpush1.bf16.msra.mxu0 0
        %5337 = vmatprep.subr.bf16.mxu0 0
        %5338 = vmatpush1.bf16.msra.mxu0 0
        %5339 = vmatprep.subr.bf16.mxu0 0
        %5340 = vmatpush1.bf16.msra.mxu0 0
        %5341 = vmatprep.subr.bf16.mxu0 0
        %5342 = vmatpush1.bf16.msra.mxu0 0
        %5343 = vmatprep.subr.bf16.mxu0 0
        %5344 = vmatpush1.bf16.msra.mxu0 0
        %5345 = vmatprep.subr.bf16.mxu0 0
        %5346 = vmatpush1.bf16.msra.mxu0 0
        %5347 = vmatprep.subr.bf16.mxu0 0
        %5348 = vmatpush1.bf16.msra.mxu0 0
        %5349 = vmatprep.mubr.bf16.mxu0 0
        %5350 = vmatmul.mubr.bf16.gmra.mrb[0].mxu0 %v5315
        %v5351 = vpop.f32.mrb[0].mxu0
        %v5352 = vadd.f32 0.0, %v5351
        %v5353 = vpop.f32.mrb[0].mxu0
        %v5354 = vpop.f32.mrb[0].mxu0
        %v5355 = vpop.f32.mrb[0].mxu0
        %5356 = vdwg.mxu0
        %5358 = vrot.lane.b32.xlu0 %v4538, 120
        %v5359 = vpop.permute.xlu0 %5358
        %v5362 = vsel %vm1679, %v5215, 0
        %5364 = vmatprep.subr.bf16.mxu0 0
        %5365 = vmatpush1.bf16.msra.mxu0 %v5359
        %5366 = vmatprep.subr.bf16.mxu0 0
        %5367 = vmatpush1.bf16.msra.mxu0 0
        %5368 = vmatprep.subr.bf16.mxu0 0
        %5369 = vmatpush1.bf16.msra.mxu0 0
        %5370 = vmatprep.subr.bf16.mxu0 0
        %5371 = vmatpush1.bf16.msra.mxu0 0
        %5372 = vmatprep.subr.bf16.mxu0 0
        %5373 = vmatpush1.bf16.msra.mxu0 0
        %5374 = vmatprep.subr.bf16.mxu0 0
        %5375 = vmatpush1.bf16.msra.mxu0 0
        %5376 = vmatprep.subr.bf16.mxu0 0
        %5377 = vmatpush1.bf16.msra.mxu0 0
        %5378 = vmatprep.subr.bf16.mxu0 0
        %5379 = vmatpush1.bf16.msra.mxu0 0
        %5380 = vmatprep.subr.bf16.mxu0 0
        %5381 = vmatpush1.bf16.msra.mxu0 0
        %5382 = vmatprep.subr.bf16.mxu0 0
        %5383 = vmatpush1.bf16.msra.mxu0 0
        %5384 = vmatprep.subr.bf16.mxu0 0
        %5385 = vmatpush1.bf16.msra.mxu0 0
        %5386 = vmatprep.subr.bf16.mxu0 0
        %5387 = vmatpush1.bf16.msra.mxu0 0
        %5388 = vmatprep.subr.bf16.mxu0 0
        %5389 = vmatpush1.bf16.msra.mxu0 0
        %5390 = vmatprep.subr.bf16.mxu0 0
        %5391 = vmatpush1.bf16.msra.mxu0 0
        %5392 = vmatprep.subr.bf16.mxu0 0
        %5393 = vmatpush1.bf16.msra.mxu0 0
        %5394 = vmatprep.subr.bf16.mxu0 0
        %5395 = vmatpush1.bf16.msra.mxu0 0
        %5396 = vmatprep.mubr.bf16.mxu0 0
        %5397 = vmatmul.mubr.bf16.gmra.mrb[0].mxu0 %v5362
        %v5398 = vpop.f32.mrb[0].mxu0
        %v5399 = vadd.f32 0.0, %v5398
        %v5400 = vpop.f32.mrb[0].mxu0
        %v5401 = vpop.f32.mrb[0].mxu0
        %v5402 = vpop.f32.mrb[0].mxu0
        %5403 = vdwg.mxu0
        %5404 = vrot.lane.b32.xlu0 %v4527, 112
        %v5405 = vpop.permute.xlu0 %5404
        %5406 = vrot.lane.b32.xlu0 %v4531, 112
        %v5407 = vpop.permute.xlu0 %5406
        %v5409 = vsel %vm1450, %v5405, 0
        %v5412 = vsel %vm1450, %v5407, 0
        %5414 = vmatprep.subr.bf16.mxu0 0
        %5415 = vmatpush1.bf16.xpose.msra.mxu0 %v5412
        %5416 = vmatprep.subr.bf16.mxu0 0
        %5417 = vmatpush1.bf16.xpose.msra.mxu0 0
        %5418 = vmatprep.subr.bf16.mxu0 0
        %5419 = vmatpush1.bf16.xpose.msra.mxu0 0
        %5420 = vmatprep.subr.bf16.mxu0 0
        %5421 = vmatpush1.bf16.xpose.msra.mxu0 0
        %5422 = vmatprep.subr.bf16.mxu0 0
        %5423 = vmatpush1.bf16.xpose.msra.mxu0 0
        %5424 = vmatprep.subr.bf16.mxu0 0
        %5425 = vmatpush1.bf16.xpose.msra.mxu0 0
        %5426 = vmatprep.subr.bf16.mxu0 0
        %5427 = vmatpush1.bf16.xpose.msra.mxu0 0
        %5428 = vmatprep.subr.bf16.mxu0 0
        %5429 = vmatpush1.bf16.xpose.msra.mxu0 0
        %5430 = vmatprep.subr.bf16.mxu0 0
        %5431 = vmatpush1.bf16.xpose.msra.mxu0 0
        %5432 = vmatprep.subr.bf16.mxu0 0
        %5433 = vmatpush1.bf16.xpose.msra.mxu0 0
        %5434 = vmatprep.subr.bf16.mxu0 0
        %5435 = vmatpush1.bf16.xpose.msra.mxu0 0
        %5436 = vmatprep.subr.bf16.mxu0 0
        %5437 = vmatpush1.bf16.xpose.msra.mxu0 0
        %5438 = vmatprep.subr.bf16.mxu0 0
        %5439 = vmatpush1.bf16.xpose.msra.mxu0 0
        %5440 = vmatprep.subr.bf16.mxu0 0
        %5441 = vmatpush1.bf16.xpose.msra.mxu0 0
        %5442 = vmatprep.subr.bf16.mxu0 0
        %5443 = vmatpush1.bf16.xpose.msra.mxu0 0
        %5444 = vmatprep.subr.bf16.mxu0 0
        %5445 = vmatpush1.bf16.xpose.msra.mxu0 0
        %5446 = vmatprep.mubr.bf16.mxu0 0
        %5447 = vmatmul.mubr.bf16.gmra.mrb[0].mxu0 %v5409
        %v5448 = vpop.f32.mrb[0].mxu0
        %v5449 = vadd.f32 0.0, %v5448
        %v5450 = vpop.f32.mrb[0].mxu0
        %v5451 = vpop.f32.mrb[0].mxu0
        %v5452 = vpop.f32.mrb[0].mxu0
        %5453 = vdwg.mxu0
        %5454 = vrot.lane.b32.xlu0 %v4528, 112
        %v5455 = vpop.permute.xlu0 %5454
        %5456 = vrot.lane.b32.xlu0 %v4532, 112
        %v5457 = vpop.permute.xlu0 %5456
        %v5459 = vsel %vm1450, %v5455, 0
        %v5462 = vsel %vm1450, %v5457, 0
        %5464 = vmatprep.subr.bf16.mxu0 0
        %5465 = vmatpush1.bf16.xpose.msra.mxu0 %v5462
        %5466 = vmatprep.subr.bf16.mxu0 0
        %5467 = vmatpush1.bf16.xpose.msra.mxu0 0
        %5468 = vmatprep.subr.bf16.mxu0 0
        %5469 = vmatpush1.bf16.xpose.msra.mxu0 0
        %5470 = vmatprep.subr.bf16.mxu0 0
        %5471 = vmatpush1.bf16.xpose.msra.mxu0 0
        %5472 = vmatprep.subr.bf16.mxu0 0
        %5473 = vmatpush1.bf16.xpose.msra.mxu0 0
        %5474 = vmatprep.subr.bf16.mxu0 0
        %5475 = vmatpush1.bf16.xpose.msra.mxu0 0
        %5476 = vmatprep.subr.bf16.mxu0 0
        %5477 = vmatpush1.bf16.xpose.msra.mxu0 0
        %5478 = vmatprep.subr.bf16.mxu0 0
        %5479 = vmatpush1.bf16.xpose.msra.mxu0 0
        %5480 = vmatprep.subr.bf16.mxu0 0
        %5481 = vmatpush1.bf16.xpose.msra.mxu0 0
        %5482 = vmatprep.subr.bf16.mxu0 0
        %5483 = vmatpush1.bf16.xpose.msra.mxu0 0
        %5484 = vmatprep.subr.bf16.mxu0 0
        %5485 = vmatpush1.bf16.xpose.msra.mxu0 0
        %5486 = vmatprep.subr.bf16.mxu0 0
        %5487 = vmatpush1.bf16.xpose.msra.mxu0 0
        %5488 = vmatprep.subr.bf16.mxu0 0
        %5489 = vmatpush1.bf16.xpose.msra.mxu0 0
        %5490 = vmatprep.subr.bf16.mxu0 0
        %5491 = vmatpush1.bf16.xpose.msra.mxu0 0
        %5492 = vmatprep.subr.bf16.mxu0 0
        %5493 = vmatpush1.bf16.xpose.msra.mxu0 0
        %5494 = vmatprep.subr.bf16.mxu0 0
        %5495 = vmatpush1.bf16.xpose.msra.mxu0 0
        %5496 = vmatprep.mubr.bf16.mxu0 0
        %5497 = vmatmul.mubr.bf16.gmra.mrb[0].mxu0 %v5459
        %v5498 = vpop.f32.mrb[0].mxu0
        %v5499 = vadd.f32 0.0, %v5498
        %v5500 = vpop.f32.mrb[0].mxu0
        %v5501 = vpop.f32.mrb[0].mxu0
        %v5502 = vpop.f32.mrb[0].mxu0
        %5503 = vdwg.mxu0
        %5504 = vrot.lane.b32.xlu0 %v4529, 112
        %v5505 = vpop.permute.xlu0 %5504
        %5506 = vrot.lane.b32.xlu0 %v4533, 112
        %v5507 = vpop.permute.xlu0 %5506
        %v5509 = vsel %vm1450, %v5505, 0
        %v5512 = vsel %vm1450, %v5507, 0
        %5514 = vmatprep.subr.bf16.mxu0 0
        %5515 = vmatpush1.bf16.xpose.msra.mxu0 %v5512
        %5516 = vmatprep.subr.bf16.mxu0 0
        %5517 = vmatpush1.bf16.xpose.msra.mxu0 0
        %5518 = vmatprep.subr.bf16.mxu0 0
        %5519 = vmatpush1.bf16.xpose.msra.mxu0 0
        %5520 = vmatprep.subr.bf16.mxu0 0
        %5521 = vmatpush1.bf16.xpose.msra.mxu0 0
        %5522 = vmatprep.subr.bf16.mxu0 0
        %5523 = vmatpush1.bf16.xpose.msra.mxu0 0
        %5524 = vmatprep.subr.bf16.mxu0 0
        %5525 = vmatpush1.bf16.xpose.msra.mxu0 0
        %5526 = vmatprep.subr.bf16.mxu0 0
        %5527 = vmatpush1.bf16.xpose.msra.mxu0 0
        %5528 = vmatprep.subr.bf16.mxu0 0
        %5529 = vmatpush1.bf16.xpose.msra.mxu0 0
        %5530 = vmatprep.subr.bf16.mxu0 0
        %5531 = vmatpush1.bf16.xpose.msra.mxu0 0
        %5532 = vmatprep.subr.bf16.mxu0 0
        %5533 = vmatpush1.bf16.xpose.msra.mxu0 0
        %5534 = vmatprep.subr.bf16.mxu0 0
        %5535 = vmatpush1.bf16.xpose.msra.mxu0 0
        %5536 = vmatprep.subr.bf16.mxu0 0
        %5537 = vmatpush1.bf16.xpose.msra.mxu0 0
        %5538 = vmatprep.subr.bf16.mxu0 0
        %5539 = vmatpush1.bf16.xpose.msra.mxu0 0
        %5540 = vmatprep.subr.bf16.mxu0 0
        %5541 = vmatpush1.bf16.xpose.msra.mxu0 0
        %5542 = vmatprep.subr.bf16.mxu0 0
        %5543 = vmatpush1.bf16.xpose.msra.mxu0 0
        %5544 = vmatprep.subr.bf16.mxu0 0
        %5545 = vmatpush1.bf16.xpose.msra.mxu0 0
        %5546 = vmatprep.mubr.bf16.mxu0 0
        %5547 = vmatmul.mubr.bf16.gmra.mrb[0].mxu0 %v5509
        %v5548 = vpop.f32.mrb[0].mxu0
        %v5549 = vadd.f32 0.0, %v5548
        %v5550 = vpop.f32.mrb[0].mxu0
        %v5551 = vpop.f32.mrb[0].mxu0
        %v5552 = vpop.f32.mrb[0].mxu0
        %5553 = vdwg.mxu0
        %5554 = vrot.lane.b32.xlu0 %v4530, 112
        %v5555 = vpop.permute.xlu0 %5554
        %5556 = vrot.lane.b32.xlu0 %v4534, 112
        %v5557 = vpop.permute.xlu0 %5556
        %v5559 = vsel %vm1450, %v5555, 0
        %v5562 = vsel %vm1450, %v5557, 0
        %5564 = vmatprep.subr.bf16.mxu0 0
        %5565 = vmatpush1.bf16.xpose.msra.mxu0 %v5562
        %5566 = vmatprep.subr.bf16.mxu0 0
        %5567 = vmatpush1.bf16.xpose.msra.mxu0 0
        %5568 = vmatprep.subr.bf16.mxu0 0
        %5569 = vmatpush1.bf16.xpose.msra.mxu0 0
        %5570 = vmatprep.subr.bf16.mxu0 0
        %5571 = vmatpush1.bf16.xpose.msra.mxu0 0
        %5572 = vmatprep.subr.bf16.mxu0 0
        %5573 = vmatpush1.bf16.xpose.msra.mxu0 0
        %5574 = vmatprep.subr.bf16.mxu0 0
        %5575 = vmatpush1.bf16.xpose.msra.mxu0 0
        %5576 = vmatprep.subr.bf16.mxu0 0
        %5577 = vmatpush1.bf16.xpose.msra.mxu0 0
        %5578 = vmatprep.subr.bf16.mxu0 0
        %5579 = vmatpush1.bf16.xpose.msra.mxu0 0
        %5580 = vmatprep.subr.bf16.mxu0 0
        %5581 = vmatpush1.bf16.xpose.msra.mxu0 0
        %5582 = vmatprep.subr.bf16.mxu0 0
        %5583 = vmatpush1.bf16.xpose.msra.mxu0 0
        %5584 = vmatprep.subr.bf16.mxu0 0
        %5585 = vmatpush1.bf16.xpose.msra.mxu0 0
        %5586 = vmatprep.subr.bf16.mxu0 0
        %5587 = vmatpush1.bf16.xpose.msra.mxu0 0
        %5588 = vmatprep.subr.bf16.mxu0 0
        %5589 = vmatpush1.bf16.xpose.msra.mxu0 0
        %5590 = vmatprep.subr.bf16.mxu0 0
        %5591 = vmatpush1.bf16.xpose.msra.mxu0 0
        %5592 = vmatprep.subr.bf16.mxu0 0
        %5593 = vmatpush1.bf16.xpose.msra.mxu0 0
        %5594 = vmatprep.subr.bf16.mxu0 0
        %5595 = vmatpush1.bf16.xpose.msra.mxu0 0
        %5596 = vmatprep.mubr.bf16.mxu0 0
        %5597 = vmatmul.mubr.bf16.gmra.mrb[0].mxu0 %v5559
        %v5598 = vpop.f32.mrb[0].mxu0
        %v5599 = vadd.f32 0.0, %v5598
        %v5600 = vpop.f32.mrb[0].mxu0
        %v5601 = vpop.f32.mrb[0].mxu0
        %v5602 = vpop.f32.mrb[0].mxu0
        %5603 = vdwg.mxu0
        %v5604 = vmul.f32 %v5449, 0.35355338
        %v5605 = vmul.f32 %v5499, 0.35355338
        %v5606 = vmul.f32 %v5549, 0.35355338
        %v5607 = vmul.f32 %v5599, 0.35355338
        %v5608 = vadd.f32 %v5604, %v949
        %v5609 = vadd.f32 %v5605, %v950
        %v5610 = vadd.f32 %v5606, %v951
        %v5611 = vadd.f32 %v5607, %v952
        %v5612 = vsel %vm4731, %v5608, -inf
        %5613 = vmax.xlane.f32.xlu0 %v5612
        %v5614 = vpop.xlane.xlu0 %5613
        %v5615 = vsel %vm4731, %v5609, -inf
        %5616 = vmax.xlane.f32.xlu0 %v5615
        %v5617 = vpop.xlane.xlu0 %5616
        %v5618 = vsel %vm4731, %v5610, -inf
        %5619 = vmax.xlane.f32.xlu0 %v5618
        %v5620 = vpop.xlane.xlu0 %5619
        %v5621 = vsel %vm4731, %v5611, -inf
        %5622 = vmax.xlane.f32.xlu0 %v5621
        %v5623 = vpop.xlane.xlu0 %5622
        %v5624 = vsub.f32 %v5608, %v5614
        %v5625 = vsub.f32 %v5609, %v5617
        %v5626 = vsub.f32 %v5610, %v5620
        %v5627 = vsub.f32 %v5611, %v5623
        %v5628 = vmul.f32 %v5624, 1.442695
        %v5629 = vpow.pop %v5628
        %v5630 = vmul.f32 %v5625, 1.442695
        %v5631 = vpow.pop %v5630
        %v5632 = vmul.f32 %v5626, 1.442695
        %v5633 = vpow.pop %v5632
        %v5634 = vmul.f32 %v5627, 1.442695
        %v5635 = vpow.pop %v5634
        %v5636 = vsel %vm4731, %v5629, 0.0
        %5637 = vadd.xlane.f32.xlu0 %v5636
        %v5638 = vpop.xlane.xlu0 %5637
        %v5639 = vsel %vm4731, %v5631, 0.0
        %5640 = vadd.xlane.f32.xlu0 %v5639
        %v5641 = vpop.xlane.xlu0 %5640
        %v5642 = vsel %vm4731, %v5633, 0.0
        %5643 = vadd.xlane.f32.xlu0 %v5642
        %v5644 = vpop.xlane.xlu0 %5643
        %v5645 = vsel %vm4731, %v5635, 0.0
        %5646 = vadd.xlane.f32.xlu0 %v5645
        %v5647 = vpop.xlane.xlu0 %5646
        %v5648 = vrcp.pop %v5638
        %v5649 = vrcp.pop %v5641
        %v5650 = vrcp.pop %v5644
        %v5651 = vrcp.pop %v5647
        %v5652 = vmul.f32 %v5629, %v5648
        %v5653 = vmul.f32 %v5631, %v5649
        %v5654 = vmul.f32 %v5633, %v5650
        %v5655 = vmul.f32 %v5635, %v5651
        %v5656 = vpack.c.bf16 %v5652, %v5652
        %v5657 = vpack.c.bf16 %v5653, %v5653
        %v5658 = vpack.c.bf16 %v5654, %v5654
        %v5659 = vpack.c.bf16 %v5655, %v5655
        %5660 = vrot.lane.b32.xlu0 %v4535, 112
        %v5661 = vpop.permute.xlu0 %5660
        %v5664 = vsel %vm1679, %v5656, 0
        %5666 = vmatprep.subr.bf16.mxu0 0
        %5667 = vmatpush1.bf16.msra.mxu0 %v5661
        %5668 = vmatprep.subr.bf16.mxu0 0
        %5669 = vmatpush1.bf16.msra.mxu0 0
        %5670 = vmatprep.subr.bf16.mxu0 0
        %5671 = vmatpush1.bf16.msra.mxu0 0
        %5672 = vmatprep.subr.bf16.mxu0 0
        %5673 = vmatpush1.bf16.msra.mxu0 0
        %5674 = vmatprep.subr.bf16.mxu0 0
        %5675 = vmatpush1.bf16.msra.mxu0 0
        %5676 = vmatprep.subr.bf16.mxu0 0
        %5677 = vmatpush1.bf16.msra.mxu0 0
        %5678 = vmatprep.subr.bf16.mxu0 0
        %5679 = vmatpush1.bf16.msra.mxu0 0
        %5680 = vmatprep.subr.bf16.mxu0 0
        %5681 = vmatpush1.bf16.msra.mxu0 0
        %5682 = vmatprep.subr.bf16.mxu0 0
        %5683 = vmatpush1.bf16.msra.mxu0 0
        %5684 = vmatprep.subr.bf16.mxu0 0
        %5685 = vmatpush1.bf16.msra.mxu0 0
        %5686 = vmatprep.subr.bf16.mxu0 0
        %5687 = vmatpush1.bf16.msra.mxu0 0
        %5688 = vmatprep.subr.bf16.mxu0 0
        %5689 = vmatpush1.bf16.msra.mxu0 0
        %5690 = vmatprep.subr.bf16.mxu0 0
        %5691 = vmatpush1.bf16.msra.mxu0 0
        %5692 = vmatprep.subr.bf16.mxu0 0
        %5693 = vmatpush1.bf16.msra.mxu0 0
        %5694 = vmatprep.subr.bf16.mxu0 0
        %5695 = vmatpush1.bf16.msra.mxu0 0
        %5696 = vmatprep.subr.bf16.mxu0 0
        %5697 = vmatpush1.bf16.msra.mxu0 0
        %5698 = vmatprep.mubr.bf16.mxu0 0
        %5699 = vmatmul.mubr.bf16.gmra.mrb[0].mxu0 %v5664
        %v5700 = vpop.f32.mrb[0].mxu0
        %v5701 = vadd.f32 0.0, %v5700
        %v5702 = vpop.f32.mrb[0].mxu0
        %v5703 = vpop.f32.mrb[0].mxu0
        %v5704 = vpop.f32.mrb[0].mxu0
        %5705 = vdwg.mxu0
        %5706 = vrot.lane.b32.xlu0 %v4536, 112
        %v5707 = vpop.permute.xlu0 %5706
        %v5710 = vsel %vm1679, %v5657, 0
        %5712 = vmatprep.subr.bf16.mxu0 0
        %5713 = vmatpush1.bf16.msra.mxu0 %v5707
        %5714 = vmatprep.subr.bf16.mxu0 0
        %5715 = vmatpush1.bf16.msra.mxu0 0
        %5716 = vmatprep.subr.bf16.mxu0 0
        %5717 = vmatpush1.bf16.msra.mxu0 0
        %5718 = vmatprep.subr.bf16.mxu0 0
        %5719 = vmatpush1.bf16.msra.mxu0 0
        %5720 = vmatprep.subr.bf16.mxu0 0
        %5721 = vmatpush1.bf16.msra.mxu0 0
        %5722 = vmatprep.subr.bf16.mxu0 0
        %5723 = vmatpush1.bf16.msra.mxu0 0
        %5724 = vmatprep.subr.bf16.mxu0 0
        %5725 = vmatpush1.bf16.msra.mxu0 0
        %5726 = vmatprep.subr.bf16.mxu0 0
        %5727 = vmatpush1.bf16.msra.mxu0 0
        %5728 = vmatprep.subr.bf16.mxu0 0
        %5729 = vmatpush1.bf16.msra.mxu0 0
        %5730 = vmatprep.subr.bf16.mxu0 0
        %5731 = vmatpush1.bf16.msra.mxu0 0
        %5732 = vmatprep.subr.bf16.mxu0 0
        %5733 = vmatpush1.bf16.msra.mxu0 0
        %5734 = vmatprep.subr.bf16.mxu0 0
        %5735 = vmatpush1.bf16.msra.mxu0 0
        %5736 = vmatprep.subr.bf16.mxu0 0
        %5737 = vmatpush1.bf16.msra.mxu0 0
        %5738 = vmatprep.subr.bf16.mxu0 0
        %5739 = vmatpush1.bf16.msra.mxu0 0
        %5740 = vmatprep.subr.bf16.mxu0 0
        %5741 = vmatpush1.bf16.msra.mxu0 0
        %5742 = vmatprep.subr.bf16.mxu0 0
        %5743 = vmatpush1.bf16.msra.mxu0 0
        %5744 = vmatprep.mubr.bf16.mxu0 0
        %5745 = vmatmul.mubr.bf16.gmra.mrb[0].mxu0 %v5710
        %v5746 = vpop.f32.mrb[0].mxu0
        %v5747 = vadd.f32 0.0, %v5746
        %v5748 = vpop.f32.mrb[0].mxu0
        %v5749 = vpop.f32.mrb[0].mxu0
        %v5750 = vpop.f32.mrb[0].mxu0
        %5751 = vdwg.mxu0
        %5752 = vrot.lane.b32.xlu0 %v4537, 112
        %v5753 = vpop.permute.xlu0 %5752
        %v5756 = vsel %vm1679, %v5658, 0
        %5758 = vmatprep.subr.bf16.mxu0 0
        %5759 = vmatpush1.bf16.msra.mxu0 %v5753
        %5760 = vmatprep.subr.bf16.mxu0 0
        %5761 = vmatpush1.bf16.msra.mxu0 0
        %5762 = vmatprep.subr.bf16.mxu0 0
        %5763 = vmatpush1.bf16.msra.mxu0 0
        %5764 = vmatprep.subr.bf16.mxu0 0
        %5765 = vmatpush1.bf16.msra.mxu0 0
        %5766 = vmatprep.subr.bf16.mxu0 0
        %5767 = vmatpush1.bf16.msra.mxu0 0
        %5768 = vmatprep.subr.bf16.mxu0 0
        %5769 = vmatpush1.bf16.msra.mxu0 0
        %5770 = vmatprep.subr.bf16.mxu0 0
        %5771 = vmatpush1.bf16.msra.mxu0 0
        %5772 = vmatprep.subr.bf16.mxu0 0
        %5773 = vmatpush1.bf16.msra.mxu0 0
        %5774 = vmatprep.subr.bf16.mxu0 0
        %5775 = vmatpush1.bf16.msra.mxu0 0
        %5776 = vmatprep.subr.bf16.mxu0 0
        %5777 = vmatpush1.bf16.msra.mxu0 0
        %5778 = vmatprep.subr.bf16.mxu0 0
        %5779 = vmatpush1.bf16.msra.mxu0 0
        %5780 = vmatprep.subr.bf16.mxu0 0
        %5781 = vmatpush1.bf16.msra.mxu0 0
        %5782 = vmatprep.subr.bf16.mxu0 0
        %5783 = vmatpush1.bf16.msra.mxu0 0
        %5784 = vmatprep.subr.bf16.mxu0 0
        %5785 = vmatpush1.bf16.msra.mxu0 0
        %5786 = vmatprep.subr.bf16.mxu0 0
        %5787 = vmatpush1.bf16.msra.mxu0 0
        %5788 = vmatprep.subr.bf16.mxu0 0
        %5789 = vmatpush1.bf16.msra.mxu0 0
        %5790 = vmatprep.mubr.bf16.mxu0 0
        %5791 = vmatmul.mubr.bf16.gmra.mrb[0].mxu0 %v5756
        %v5792 = vpop.f32.mrb[0].mxu0
        %v5793 = vadd.f32 0.0, %v5792
        %v5794 = vpop.f32.mrb[0].mxu0
        %v5795 = vpop.f32.mrb[0].mxu0
        %v5796 = vpop.f32.mrb[0].mxu0
        %5797 = vdwg.mxu0
        %5798 = vrot.lane.b32.xlu0 %v4538, 112
        %v5799 = vpop.permute.xlu0 %5798
        %v5802 = vsel %vm1679, %v5659, 0
        %5804 = vmatprep.subr.bf16.mxu0 0
        %5805 = vmatpush1.bf16.msra.mxu0 %v5799
        %5806 = vmatprep.subr.bf16.mxu0 0
        %5807 = vmatpush1.bf16.msra.mxu0 0
        %5808 = vmatprep.subr.bf16.mxu0 0
        %5809 = vmatpush1.bf16.msra.mxu0 0
        %5810 = vmatprep.subr.bf16.mxu0 0
        %5811 = vmatpush1.bf16.msra.mxu0 0
        %5812 = vmatprep.subr.bf16.mxu0 0
        %5813 = vmatpush1.bf16.msra.mxu0 0
        %5814 = vmatprep.subr.bf16.mxu0 0
        %5815 = vmatpush1.bf16.msra.mxu0 0
        %5816 = vmatprep.subr.bf16.mxu0 0
        %5817 = vmatpush1.bf16.msra.mxu0 0
        %5818 = vmatprep.subr.bf16.mxu0 0
        %5819 = vmatpush1.bf16.msra.mxu0 0
        %5820 = vmatprep.subr.bf16.mxu0 0
        %5821 = vmatpush1.bf16.msra.mxu0 0
        %5822 = vmatprep.subr.bf16.mxu0 0
        %5823 = vmatpush1.bf16.msra.mxu0 0
        %5824 = vmatprep.subr.bf16.mxu0 0
        %5825 = vmatpush1.bf16.msra.mxu0 0
        %5826 = vmatprep.subr.bf16.mxu0 0
        %5827 = vmatpush1.bf16.msra.mxu0 0
        %5828 = vmatprep.subr.bf16.mxu0 0
        %5829 = vmatpush1.bf16.msra.mxu0 0
        %5830 = vmatprep.subr.bf16.mxu0 0
        %5831 = vmatpush1.bf16.msra.mxu0 0
        %5832 = vmatprep.subr.bf16.mxu0 0
        %5833 = vmatpush1.bf16.msra.mxu0 0
        %5834 = vmatprep.subr.bf16.mxu0 0
        %5835 = vmatpush1.bf16.msra.mxu0 0
        %5836 = vmatprep.mubr.bf16.mxu0 0
        %5837 = vmatmul.mubr.bf16.gmra.mrb[0].mxu0 %v5802
        %v5838 = vpop.f32.mrb[0].mxu0
        %v5839 = vadd.f32 0.0, %v5838
        %v5840 = vpop.f32.mrb[0].mxu0
        %v5841 = vpop.f32.mrb[0].mxu0
        %v5842 = vpop.f32.mrb[0].mxu0
        %5843 = vdwg.mxu0
        %5844 = vrot.lane.b32.xlu0 %v4527, 104
        %v5845 = vpop.permute.xlu0 %5844
        %5846 = vrot.lane.b32.xlu0 %v4531, 104
        %v5847 = vpop.permute.xlu0 %5846
        %v5849 = vsel %vm1450, %v5845, 0
        %v5852 = vsel %vm1450, %v5847, 0
        %5854 = vmatprep.subr.bf16.mxu0 0
        %5855 = vmatpush1.bf16.xpose.msra.mxu0 %v5852
        %5856 = vmatprep.subr.bf16.mxu0 0
        %5857 = vmatpush1.bf16.xpose.msra.mxu0 0
        %5858 = vmatprep.subr.bf16.mxu0 0
        %5859 = vmatpush1.bf16.xpose.msra.mxu0 0
        %5860 = vmatprep.subr.bf16.mxu0 0
        %5861 = vmatpush1.bf16.xpose.msra.mxu0 0
        %5862 = vmatprep.subr.bf16.mxu0 0
        %5863 = vmatpush1.bf16.xpose.msra.mxu0 0
        %5864 = vmatprep.subr.bf16.mxu0 0
        %5865 = vmatpush1.bf16.xpose.msra.mxu0 0
        %5866 = vmatprep.subr.bf16.mxu0 0
        %5867 = vmatpush1.bf16.xpose.msra.mxu0 0
        %5868 = vmatprep.subr.bf16.mxu0 0
        %5869 = vmatpush1.bf16.xpose.msra.mxu0 0
        %5870 = vmatprep.subr.bf16.mxu0 0
        %5871 = vmatpush1.bf16.xpose.msra.mxu0 0
        %5872 = vmatprep.subr.bf16.mxu0 0
        %5873 = vmatpush1.bf16.xpose.msra.mxu0 0
        %5874 = vmatprep.subr.bf16.mxu0 0
        %5875 = vmatpush1.bf16.xpose.msra.mxu0 0
        %5876 = vmatprep.subr.bf16.mxu0 0
        %5877 = vmatpush1.bf16.xpose.msra.mxu0 0
        %5878 = vmatprep.subr.bf16.mxu0 0
        %5879 = vmatpush1.bf16.xpose.msra.mxu0 0
        %5880 = vmatprep.subr.bf16.mxu0 0
        %5881 = vmatpush1.bf16.xpose.msra.mxu0 0
        %5882 = vmatprep.subr.bf16.mxu0 0
        %5883 = vmatpush1.bf16.xpose.msra.mxu0 0
        %5884 = vmatprep.subr.bf16.mxu0 0
        %5885 = vmatpush1.bf16.xpose.msra.mxu0 0
        %5886 = vmatprep.mubr.bf16.mxu0 0
        %5887 = vmatmul.mubr.bf16.gmra.mrb[0].mxu0 %v5849
        %v5888 = vpop.f32.mrb[0].mxu0
        %v5889 = vadd.f32 0.0, %v5888
        %v5890 = vpop.f32.mrb[0].mxu0
        %v5891 = vpop.f32.mrb[0].mxu0
        %v5892 = vpop.f32.mrb[0].mxu0
        %5893 = vdwg.mxu0
        %5894 = vrot.lane.b32.xlu0 %v4528, 104
        %v5895 = vpop.permute.xlu0 %5894
        %5896 = vrot.lane.b32.xlu0 %v4532, 104
        %v5897 = vpop.permute.xlu0 %5896
        %v5899 = vsel %vm1450, %v5895, 0
        %v5902 = vsel %vm1450, %v5897, 0
        %5904 = vmatprep.subr.bf16.mxu0 0
        %5905 = vmatpush1.bf16.xpose.msra.mxu0 %v5902
        %5906 = vmatprep.subr.bf16.mxu0 0
        %5907 = vmatpush1.bf16.xpose.msra.mxu0 0
        %5908 = vmatprep.subr.bf16.mxu0 0
        %5909 = vmatpush1.bf16.xpose.msra.mxu0 0
        %5910 = vmatprep.subr.bf16.mxu0 0
        %5911 = vmatpush1.bf16.xpose.msra.mxu0 0
        %5912 = vmatprep.subr.bf16.mxu0 0
        %5913 = vmatpush1.bf16.xpose.msra.mxu0 0
        %5914 = vmatprep.subr.bf16.mxu0 0
        %5915 = vmatpush1.bf16.xpose.msra.mxu0 0
        %5916 = vmatprep.subr.bf16.mxu0 0
        %5917 = vmatpush1.bf16.xpose.msra.mxu0 0
        %5918 = vmatprep.subr.bf16.mxu0 0
        %5919 = vmatpush1.bf16.xpose.msra.mxu0 0
        %5920 = vmatprep.subr.bf16.mxu0 0
        %5921 = vmatpush1.bf16.xpose.msra.mxu0 0
        %5922 = vmatprep.subr.bf16.mxu0 0
        %5923 = vmatpush1.bf16.xpose.msra.mxu0 0
        %5924 = vmatprep.subr.bf16.mxu0 0
        %5925 = vmatpush1.bf16.xpose.msra.mxu0 0
        %5926 = vmatprep.subr.bf16.mxu0 0
        %5927 = vmatpush1.bf16.xpose.msra.mxu0 0
        %5928 = vmatprep.subr.bf16.mxu0 0
        %5929 = vmatpush1.bf16.xpose.msra.mxu0 0
        %5930 = vmatprep.subr.bf16.mxu0 0
        %5931 = vmatpush1.bf16.xpose.msra.mxu0 0
        %5932 = vmatprep.subr.bf16.mxu0 0
        %5933 = vmatpush1.bf16.xpose.msra.mxu0 0
        %5934 = vmatprep.subr.bf16.mxu0 0
        %5935 = vmatpush1.bf16.xpose.msra.mxu0 0
        %5936 = vmatprep.mubr.bf16.mxu0 0
        %5937 = vmatmul.mubr.bf16.gmra.mrb[0].mxu0 %v5899
        %v5938 = vpop.f32.mrb[0].mxu0
        %v5939 = vadd.f32 0.0, %v5938
        %v5940 = vpop.f32.mrb[0].mxu0
        %v5941 = vpop.f32.mrb[0].mxu0
        %v5942 = vpop.f32.mrb[0].mxu0
        %5943 = vdwg.mxu0
        %5944 = vrot.lane.b32.xlu0 %v4529, 104
        %v5945 = vpop.permute.xlu0 %5944
        %5946 = vrot.lane.b32.xlu0 %v4533, 104
        %v5947 = vpop.permute.xlu0 %5946
        %v5949 = vsel %vm1450, %v5945, 0
        %v5952 = vsel %vm1450, %v5947, 0
        %5954 = vmatprep.subr.bf16.mxu0 0
        %5955 = vmatpush1.bf16.xpose.msra.mxu0 %v5952
        %5956 = vmatprep.subr.bf16.mxu0 0
        %5957 = vmatpush1.bf16.xpose.msra.mxu0 0
        %5958 = vmatprep.subr.bf16.mxu0 0
        %5959 = vmatpush1.bf16.xpose.msra.mxu0 0
        %5960 = vmatprep.subr.bf16.mxu0 0
        %5961 = vmatpush1.bf16.xpose.msra.mxu0 0
        %5962 = vmatprep.subr.bf16.mxu0 0
        %5963 = vmatpush1.bf16.xpose.msra.mxu0 0
        %5964 = vmatprep.subr.bf16.mxu0 0
        %5965 = vmatpush1.bf16.xpose.msra.mxu0 0
        %5966 = vmatprep.subr.bf16.mxu0 0
        %5967 = vmatpush1.bf16.xpose.msra.mxu0 0
        %5968 = vmatprep.subr.bf16.mxu0 0
        %5969 = vmatpush1.bf16.xpose.msra.mxu0 0
        %5970 = vmatprep.subr.bf16.mxu0 0
        %5971 = vmatpush1.bf16.xpose.msra.mxu0 0
        %5972 = vmatprep.subr.bf16.mxu0 0
        %5973 = vmatpush1.bf16.xpose.msra.mxu0 0
        %5974 = vmatprep.subr.bf16.mxu0 0
        %5975 = vmatpush1.bf16.xpose.msra.mxu0 0
        %5976 = vmatprep.subr.bf16.mxu0 0
        %5977 = vmatpush1.bf16.xpose.msra.mxu0 0
        %5978 = vmatprep.subr.bf16.mxu0 0
        %5979 = vmatpush1.bf16.xpose.msra.mxu0 0
        %5980 = vmatprep.subr.bf16.mxu0 0
        %5981 = vmatpush1.bf16.xpose.msra.mxu0 0
        %5982 = vmatprep.subr.bf16.mxu0 0
        %5983 = vmatpush1.bf16.xpose.msra.mxu0 0
        %5984 = vmatprep.subr.bf16.mxu0 0
        %5985 = vmatpush1.bf16.xpose.msra.mxu0 0
        %5986 = vmatprep.mubr.bf16.mxu0 0
        %5987 = vmatmul.mubr.bf16.gmra.mrb[0].mxu0 %v5949
        %v5988 = vpop.f32.mrb[0].mxu0
        %v5989 = vadd.f32 0.0, %v5988
        %v5990 = vpop.f32.mrb[0].mxu0
        %v5991 = vpop.f32.mrb[0].mxu0
        %v5992 = vpop.f32.mrb[0].mxu0
        %5993 = vdwg.mxu0
        %5994 = vrot.lane.b32.xlu0 %v4530, 104
        %v5995 = vpop.permute.xlu0 %5994
        %5996 = vrot.lane.b32.xlu0 %v4534, 104
        %v5997 = vpop.permute.xlu0 %5996
        %v5999 = vsel %vm1450, %v5995, 0
        %v6002 = vsel %vm1450, %v5997, 0
        %6004 = vmatprep.subr.bf16.mxu0 0
        %6005 = vmatpush1.bf16.xpose.msra.mxu0 %v6002
        %6006 = vmatprep.subr.bf16.mxu0 0
        %6007 = vmatpush1.bf16.xpose.msra.mxu0 0
        %6008 = vmatprep.subr.bf16.mxu0 0
        %6009 = vmatpush1.bf16.xpose.msra.mxu0 0
        %6010 = vmatprep.subr.bf16.mxu0 0
        %6011 = vmatpush1.bf16.xpose.msra.mxu0 0
        %6012 = vmatprep.subr.bf16.mxu0 0
        %6013 = vmatpush1.bf16.xpose.msra.mxu0 0
        %6014 = vmatprep.subr.bf16.mxu0 0
        %6015 = vmatpush1.bf16.xpose.msra.mxu0 0
        %6016 = vmatprep.subr.bf16.mxu0 0
        %6017 = vmatpush1.bf16.xpose.msra.mxu0 0
        %6018 = vmatprep.subr.bf16.mxu0 0
        %6019 = vmatpush1.bf16.xpose.msra.mxu0 0
        %6020 = vmatprep.subr.bf16.mxu0 0
        %6021 = vmatpush1.bf16.xpose.msra.mxu0 0
        %6022 = vmatprep.subr.bf16.mxu0 0
        %6023 = vmatpush1.bf16.xpose.msra.mxu0 0
        %6024 = vmatprep.subr.bf16.mxu0 0
        %6025 = vmatpush1.bf16.xpose.msra.mxu0 0
        %6026 = vmatprep.subr.bf16.mxu0 0
        %6027 = vmatpush1.bf16.xpose.msra.mxu0 0
        %6028 = vmatprep.subr.bf16.mxu0 0
        %6029 = vmatpush1.bf16.xpose.msra.mxu0 0
        %6030 = vmatprep.subr.bf16.mxu0 0
        %6031 = vmatpush1.bf16.xpose.msra.mxu0 0
        %6032 = vmatprep.subr.bf16.mxu0 0
        %6033 = vmatpush1.bf16.xpose.msra.mxu0 0
        %6034 = vmatprep.subr.bf16.mxu0 0
        %6035 = vmatpush1.bf16.xpose.msra.mxu0 0
        %6036 = vmatprep.mubr.bf16.mxu0 0
        %6037 = vmatmul.mubr.bf16.gmra.mrb[0].mxu0 %v5999
        %v6038 = vpop.f32.mrb[0].mxu0
        %v6039 = vadd.f32 0.0, %v6038
        %v6040 = vpop.f32.mrb[0].mxu0
        %v6041 = vpop.f32.mrb[0].mxu0
        %v6042 = vpop.f32.mrb[0].mxu0
        %6043 = vdwg.mxu0
        %v6044 = vmul.f32 %v5889, 0.35355338
        %v6045 = vmul.f32 %v5939, 0.35355338
        %v6046 = vmul.f32 %v5989, 0.35355338
        %v6047 = vmul.f32 %v6039, 0.35355338
        %v6048 = vadd.f32 %v6044, %v949
        %v6049 = vadd.f32 %v6045, %v950
        %v6050 = vadd.f32 %v6046, %v951
        %v6051 = vadd.f32 %v6047, %v952
        %v6052 = vsel %vm4731, %v6048, -inf
        %6053 = vmax.xlane.f32.xlu0 %v6052
        %v6054 = vpop.xlane.xlu0 %6053
        %v6055 = vsel %vm4731, %v6049, -inf
        %6056 = vmax.xlane.f32.xlu0 %v6055
        %v6057 = vpop.xlane.xlu0 %6056
        %v6058 = vsel %vm4731, %v6050, -inf
        %6059 = vmax.xlane.f32.xlu0 %v6058
        %v6060 = vpop.xlane.xlu0 %6059
        %v6061 = vsel %vm4731, %v6051, -inf
        %6062 = vmax.xlane.f32.xlu0 %v6061
        %v6063 = vpop.xlane.xlu0 %6062
        %v6064 = vsub.f32 %v6048, %v6054
        %v6065 = vsub.f32 %v6049, %v6057
        %v6066 = vsub.f32 %v6050, %v6060
        %v6067 = vsub.f32 %v6051, %v6063
        %v6068 = vmul.f32 %v6064, 1.442695
        %v6069 = vpow.pop %v6068
        %v6070 = vmul.f32 %v6065, 1.442695
        %v6071 = vpow.pop %v6070
        %v6072 = vmul.f32 %v6066, 1.442695
        %v6073 = vpow.pop %v6072
        %v6074 = vmul.f32 %v6067, 1.442695
        %v6075 = vpow.pop %v6074
        %v6076 = vsel %vm4731, %v6069, 0.0
        %6077 = vadd.xlane.f32.xlu0 %v6076
        %v6078 = vpop.xlane.xlu0 %6077
        %v6079 = vsel %vm4731, %v6071, 0.0
        %6080 = vadd.xlane.f32.xlu0 %v6079
        %v6081 = vpop.xlane.xlu0 %6080
        %v6082 = vsel %vm4731, %v6073, 0.0
        %6083 = vadd.xlane.f32.xlu0 %v6082
        %v6084 = vpop.xlane.xlu0 %6083
        %v6085 = vsel %vm4731, %v6075, 0.0
        %6086 = vadd.xlane.f32.xlu0 %v6085
        %v6087 = vpop.xlane.xlu0 %6086
        %v6088 = vrcp.pop %v6078
        %v6089 = vrcp.pop %v6081
        %v6090 = vrcp.pop %v6084
        %v6091 = vrcp.pop %v6087
        %v6092 = vmul.f32 %v6069, %v6088
        %v6093 = vmul.f32 %v6071, %v6089
        %v6094 = vmul.f32 %v6073, %v6090
        %v6095 = vmul.f32 %v6075, %v6091
        %v6096 = vpack.c.bf16 %v6092, %v6092
        %v6097 = vpack.c.bf16 %v6093, %v6093
        %v6098 = vpack.c.bf16 %v6094, %v6094
        %v6099 = vpack.c.bf16 %v6095, %v6095
        %6100 = vrot.lane.b32.xlu0 %v4535, 104
        %v6101 = vpop.permute.xlu0 %6100
        %v6104 = vsel %vm1679, %v6096, 0
        %6106 = vmatprep.subr.bf16.mxu0 0
        %6107 = vmatpush1.bf16.msra.mxu0 %v6101
        %6108 = vmatprep.subr.bf16.mxu0 0
        %6109 = vmatpush1.bf16.msra.mxu0 0
        %6110 = vmatprep.subr.bf16.mxu0 0
        %6111 = vmatpush1.bf16.msra.mxu0 0
        %6112 = vmatprep.subr.bf16.mxu0 0
        %6113 = vmatpush1.bf16.msra.mxu0 0
        %6114 = vmatprep.subr.bf16.mxu0 0
        %6115 = vmatpush1.bf16.msra.mxu0 0
        %6116 = vmatprep.subr.bf16.mxu0 0
        %6117 = vmatpush1.bf16.msra.mxu0 0
        %6118 = vmatprep.subr.bf16.mxu0 0
        %6119 = vmatpush1.bf16.msra.mxu0 0
        %6120 = vmatprep.subr.bf16.mxu0 0
        %6121 = vmatpush1.bf16.msra.mxu0 0
        %6122 = vmatprep.subr.bf16.mxu0 0
        %6123 = vmatpush1.bf16.msra.mxu0 0
        %6124 = vmatprep.subr.bf16.mxu0 0
        %6125 = vmatpush1.bf16.msra.mxu0 0
        %6126 = vmatprep.subr.bf16.mxu0 0
        %6127 = vmatpush1.bf16.msra.mxu0 0
        %6128 = vmatprep.subr.bf16.mxu0 0
        %6129 = vmatpush1.bf16.msra.mxu0 0
        %6130 = vmatprep.subr.bf16.mxu0 0
        %6131 = vmatpush1.bf16.msra.mxu0 0
        %6132 = vmatprep.subr.bf16.mxu0 0
        %6133 = vmatpush1.bf16.msra.mxu0 0
        %6134 = vmatprep.subr.bf16.mxu0 0
        %6135 = vmatpush1.bf16.msra.mxu0 0
        %6136 = vmatprep.subr.bf16.mxu0 0
        %6137 = vmatpush1.bf16.msra.mxu0 0
        %6138 = vmatprep.mubr.bf16.mxu0 0
        %6139 = vmatmul.mubr.bf16.gmra.mrb[0].mxu0 %v6104
        %v6140 = vpop.f32.mrb[0].mxu0
        %v6141 = vadd.f32 0.0, %v6140
        %v6142 = vpop.f32.mrb[0].mxu0
        %v6143 = vpop.f32.mrb[0].mxu0
        %v6144 = vpop.f32.mrb[0].mxu0
        %6145 = vdwg.mxu0
        %6146 = vrot.lane.b32.xlu0 %v4536, 104
        %v6147 = vpop.permute.xlu0 %6146
        %v6150 = vsel %vm1679, %v6097, 0
        %6152 = vmatprep.subr.bf16.mxu0 0
        %6153 = vmatpush1.bf16.msra.mxu0 %v6147
        %6154 = vmatprep.subr.bf16.mxu0 0
        %6155 = vmatpush1.bf16.msra.mxu0 0
        %6156 = vmatprep.subr.bf16.mxu0 0
        %6157 = vmatpush1.bf16.msra.mxu0 0
        %6158 = vmatprep.subr.bf16.mxu0 0
        %6159 = vmatpush1.bf16.msra.mxu0 0
        %6160 = vmatprep.subr.bf16.mxu0 0
        %6161 = vmatpush1.bf16.msra.mxu0 0
        %6162 = vmatprep.subr.bf16.mxu0 0
        %6163 = vmatpush1.bf16.msra.mxu0 0
        %6164 = vmatprep.subr.bf16.mxu0 0
        %6165 = vmatpush1.bf16.msra.mxu0 0
        %6166 = vmatprep.subr.bf16.mxu0 0
        %6167 = vmatpush1.bf16.msra.mxu0 0
        %6168 = vmatprep.subr.bf16.mxu0 0
        %6169 = vmatpush1.bf16.msra.mxu0 0
        %6170 = vmatprep.subr.bf16.mxu0 0
        %6171 = vmatpush1.bf16.msra.mxu0 0
        %6172 = vmatprep.subr.bf16.mxu0 0
        %6173 = vmatpush1.bf16.msra.mxu0 0
        %6174 = vmatprep.subr.bf16.mxu0 0
        %6175 = vmatpush1.bf16.msra.mxu0 0
        %6176 = vmatprep.subr.bf16.mxu0 0
        %6177 = vmatpush1.bf16.msra.mxu0 0
        %6178 = vmatprep.subr.bf16.mxu0 0
        %6179 = vmatpush1.bf16.msra.mxu0 0
        %6180 = vmatprep.subr.bf16.mxu0 0
        %6181 = vmatpush1.bf16.msra.mxu0 0
        %6182 = vmatprep.subr.bf16.mxu0 0
        %6183 = vmatpush1.bf16.msra.mxu0 0
        %6184 = vmatprep.mubr.bf16.mxu0 0
        %6185 = vmatmul.mubr.bf16.gmra.mrb[0].mxu0 %v6150
        %v6186 = vpop.f32.mrb[0].mxu0
        %v6187 = vadd.f32 0.0, %v6186
        %v6188 = vpop.f32.mrb[0].mxu0
        %v6189 = vpop.f32.mrb[0].mxu0
        %v6190 = vpop.f32.mrb[0].mxu0
        %6191 = vdwg.mxu0
        %6192 = vrot.lane.b32.xlu0 %v4537, 104
        %v6193 = vpop.permute.xlu0 %6192
        %v6196 = vsel %vm1679, %v6098, 0
        %6198 = vmatprep.subr.bf16.mxu0 0
        %6199 = vmatpush1.bf16.msra.mxu0 %v6193
        %6200 = vmatprep.subr.bf16.mxu0 0
        %6201 = vmatpush1.bf16.msra.mxu0 0
        %6202 = vmatprep.subr.bf16.mxu0 0
        %6203 = vmatpush1.bf16.msra.mxu0 0
        %6204 = vmatprep.subr.bf16.mxu0 0
        %6205 = vmatpush1.bf16.msra.mxu0 0
        %6206 = vmatprep.subr.bf16.mxu0 0
        %6207 = vmatpush1.bf16.msra.mxu0 0
        %6208 = vmatprep.subr.bf16.mxu0 0
        %6209 = vmatpush1.bf16.msra.mxu0 0
        %6210 = vmatprep.subr.bf16.mxu0 0
        %6211 = vmatpush1.bf16.msra.mxu0 0
        %6212 = vmatprep.subr.bf16.mxu0 0
        %6213 = vmatpush1.bf16.msra.mxu0 0
        %6214 = vmatprep.subr.bf16.mxu0 0
        %6215 = vmatpush1.bf16.msra.mxu0 0
        %6216 = vmatprep.subr.bf16.mxu0 0
        %6217 = vmatpush1.bf16.msra.mxu0 0
        %6218 = vmatprep.subr.bf16.mxu0 0
        %6219 = vmatpush1.bf16.msra.mxu0 0
        %6220 = vmatprep.subr.bf16.mxu0 0
        %6221 = vmatpush1.bf16.msra.mxu0 0
        %6222 = vmatprep.subr.bf16.mxu0 0
        %6223 = vmatpush1.bf16.msra.mxu0 0
        %6224 = vmatprep.subr.bf16.mxu0 0
        %6225 = vmatpush1.bf16.msra.mxu0 0
        %6226 = vmatprep.subr.bf16.mxu0 0
        %6227 = vmatpush1.bf16.msra.mxu0 0
        %6228 = vmatprep.subr.bf16.mxu0 0
        %6229 = vmatpush1.bf16.msra.mxu0 0
        %6230 = vmatprep.mubr.bf16.mxu0 0
        %6231 = vmatmul.mubr.bf16.gmra.mrb[0].mxu0 %v6196
        %v6232 = vpop.f32.mrb[0].mxu0
        %v6233 = vadd.f32 0.0, %v6232
        %v6234 = vpop.f32.mrb[0].mxu0
        %v6235 = vpop.f32.mrb[0].mxu0
        %v6236 = vpop.f32.mrb[0].mxu0
        %6237 = vdwg.mxu0
        %6238 = vrot.lane.b32.xlu0 %v4538, 104
        %v6239 = vpop.permute.xlu0 %6238
        %v6242 = vsel %vm1679, %v6099, 0
        %6244 = vmatprep.subr.bf16.mxu0 0
        %6245 = vmatpush1.bf16.msra.mxu0 %v6239
        %6246 = vmatprep.subr.bf16.mxu0 0
        %6247 = vmatpush1.bf16.msra.mxu0 0
        %6248 = vmatprep.subr.bf16.mxu0 0
        %6249 = vmatpush1.bf16.msra.mxu0 0
        %6250 = vmatprep.subr.bf16.mxu0 0
        %6251 = vmatpush1.bf16.msra.mxu0 0
        %6252 = vmatprep.subr.bf16.mxu0 0
        %6253 = vmatpush1.bf16.msra.mxu0 0
        %6254 = vmatprep.subr.bf16.mxu0 0
        %6255 = vmatpush1.bf16.msra.mxu0 0
        %6256 = vmatprep.subr.bf16.mxu0 0
        %6257 = vmatpush1.bf16.msra.mxu0 0
        %6258 = vmatprep.subr.bf16.mxu0 0
        %6259 = vmatpush1.bf16.msra.mxu0 0
        %6260 = vmatprep.subr.bf16.mxu0 0
        %6261 = vmatpush1.bf16.msra.mxu0 0
        %6262 = vmatprep.subr.bf16.mxu0 0
        %6263 = vmatpush1.bf16.msra.mxu0 0
        %6264 = vmatprep.subr.bf16.mxu0 0
        %6265 = vmatpush1.bf16.msra.mxu0 0
        %6266 = vmatprep.subr.bf16.mxu0 0
        %6267 = vmatpush1.bf16.msra.mxu0 0
        %6268 = vmatprep.subr.bf16.mxu0 0
        %6269 = vmatpush1.bf16.msra.mxu0 0
        %6270 = vmatprep.subr.bf16.mxu0 0
        %6271 = vmatpush1.bf16.msra.mxu0 0
        %6272 = vmatprep.subr.bf16.mxu0 0
        %6273 = vmatpush1.bf16.msra.mxu0 0
        %6274 = vmatprep.subr.bf16.mxu0 0
        %6275 = vmatpush1.bf16.msra.mxu0 0
        %6276 = vmatprep.mubr.bf16.mxu0 0
        %6277 = vmatmul.mubr.bf16.gmra.mrb[0].mxu0 %v6242
        %v6278 = vpop.f32.mrb[0].mxu0
        %v6279 = vadd.f32 0.0, %v6278
        %v6280 = vpop.f32.mrb[0].mxu0
        %v6281 = vpop.f32.mrb[0].mxu0
        %v6282 = vpop.f32.mrb[0].mxu0
        %6283 = vdwg.mxu0
        %6288 = vrot.lane.b32.xlu0 %v5258, 8
        %v6289 = vpop.permute.xlu0 %6288
        %6290 = vrot.lane.b32.xlu0 %v5305, 8
        %v6291 = vpop.permute.xlu0 %6290
        %6292 = vrot.lane.b32.xlu0 %v5352, 8
        %v6293 = vpop.permute.xlu0 %6292
        %6294 = vrot.lane.b32.xlu0 %v5399, 8
        %v6295 = vpop.permute.xlu0 %6294
        %6304 = vrot.lane.b32.xlu0 %v5701, 16
        %v6305 = vpop.permute.xlu0 %6304
        %6306 = vrot.lane.b32.xlu0 %v5747, 16
        %v6307 = vpop.permute.xlu0 %6306
        %6308 = vrot.lane.b32.xlu0 %v5793, 16
        %v6309 = vpop.permute.xlu0 %6308
        %6310 = vrot.lane.b32.xlu0 %v5839, 16
        %v6311 = vpop.permute.xlu0 %6310
        %6320 = vrot.lane.b32.xlu0 %v6141, 24
        %v6321 = vpop.permute.xlu0 %6320
        %6322 = vrot.lane.b32.xlu0 %v6187, 24
        %v6323 = vpop.permute.xlu0 %6322
        %6324 = vrot.lane.b32.xlu0 %v6233, 24
        %v6325 = vpop.permute.xlu0 %6324
        %6326 = vrot.lane.b32.xlu0 %v6279, 24
        %v6327 = vpop.permute.xlu0 %6326
        %v6332 = vsel %vm1450, %v4818, %v6289
        %v6333 = vsel %vm1450, %v4861, %v6291
        %v6334 = vsel %vm1450, %v4904, %v6293
        %v6335 = vsel %vm1450, %v4947, %v6295
        %v6336 = vsel %vm1679, %v6332, %v6305
        %v6337 = vsel %vm1679, %v6333, %v6307
        %v6338 = vsel %vm1679, %v6334, %v6309
        %v6339 = vsel %vm1679, %v6335, %v6311
        %v6340 = vsel %vm3572, %v6336, %v6321
        %v6341 = vsel %vm3572, %v6337, %v6323
        %v6342 = vsel %vm3572, %v6338, %v6325
        %v6343 = vsel %vm3572, %v6339, %v6327
        %v6344 = vpack.c.bf16 %v6340, %v6340
        %v6345 = vpack.c.bf16 %v6341, %v6341
        %v6346 = vpack.c.bf16 %v6342, %v6342
        %v6347 = vpack.c.bf16 %v6343, %v6343
        %v6349 = vlaneseq
        %v6350 = vshrl.u32 %v6349, 7
        %v6351 = vsub.s32 0, %v6350
        %v6352 = vrot.slane %v4206, %v6351
        %v6358 = vunpack.c.l.b16 %v6344
        %v6359 = vunpack.c.l.b16 %v6345
        %v6360 = vunpack.c.l.b16 %v6346
        %v6361 = vunpack.c.l.b16 %v6347
        %v6362 = vrot.slane %v6359, 7
        %v6363 = vsel %vm4434, %v6362, %v6358
        %v6364 = vrot.slane %v6360, 6
        %v6365 = vsel %vm4437, %v6364, %v6363
        %v6366 = vrot.slane %v6361, 5
        %v6367 = vsel %vm4440, %v6366, %v6365
        %v6368 = vpack.c.b16 %v6367, %v6367
        %v6373 = vunpack.c.l.b16 %v4201
        %v6374 = vunpack.c.l.b16 %v4202
        %v6375 = vunpack.c.l.b16 %v4203
        %v6376 = vunpack.c.l.b16 %v4204
        %v6377 = vpack.c.b16 %v6374, %v6373
        %v6378 = vpack.c.b16 %v6376, %v6375
        %v6382 = vsel %vm959, %v6368, 0
        %6384 = vmatprep.subr.bf16.mxu0 0
        %6385 = vmatpush1.bf16.msra.mxu0 %v6377
        %6386 = vmatprep.subr.bf16.mxu0 0
        %6387 = vmatpush1.bf16.msra.mxu0 %v6378
        %6388 = vmatprep.subr.bf16.mxu0 0
        %6389 = vmatpush1.bf16.msra.mxu0 0
        %6390 = vmatprep.subr.bf16.mxu0 0
        %6391 = vmatpush1.bf16.msra.mxu0 0
        %6392 = vmatprep.subr.bf16.mxu0 0
        %6393 = vmatpush1.bf16.msra.mxu0 0
        %6394 = vmatprep.subr.bf16.mxu0 0
        %6395 = vmatpush1.bf16.msra.mxu0 0
        %6396 = vmatprep.subr.bf16.mxu0 0
        %6397 = vmatpush1.bf16.msra.mxu0 0
        %6398 = vmatprep.subr.bf16.mxu0 0
        %6399 = vmatpush1.bf16.msra.mxu0 0
        %6400 = vmatprep.subr.bf16.mxu0 0
        %6401 = vmatpush1.bf16.msra.mxu0 0
        %6402 = vmatprep.subr.bf16.mxu0 0
        %6403 = vmatpush1.bf16.msra.mxu0 0
        %6404 = vmatprep.subr.bf16.mxu0 0
        %6405 = vmatpush1.bf16.msra.mxu0 0
        %6406 = vmatprep.subr.bf16.mxu0 0
        %6407 = vmatpush1.bf16.msra.mxu0 0
        %6408 = vmatprep.subr.bf16.mxu0 0
        %6409 = vmatpush1.bf16.msra.mxu0 0
        %6410 = vmatprep.subr.bf16.mxu0 0
        %6411 = vmatpush1.bf16.msra.mxu0 0
        %6412 = vmatprep.subr.bf16.mxu0 0
        %6413 = vmatpush1.bf16.msra.mxu0 0
        %6414 = vmatprep.subr.bf16.mxu0 0
        %6415 = vmatpush1.bf16.msra.mxu0 0
        %6416 = vmatprep.mubr.bf16.mxu0 0
        %6417 = vmatmul.mubr.bf16.gmra.mrb[0].mxu0 %v6382
        %v6418 = vpop.f32.mrb[0].mxu0
        %v6419 = vadd.f32 %v6352, %v6418
        %v6420 = vpop.f32.mrb[0].mxu0
        %v6421 = vpop.f32.mrb[0].mxu0
        %v6422 = vpop.f32.mrb[0].mxu0
        %6423 = vdwg.mxu0
        %v6428 = vrot.slane %v4173, 7
        %v6429 = vsel %vm4434, %v6428, %v4171
        %v6430 = vrot.slane %v4175, 6
        %v6431 = vsel %vm4437, %v6430, %v6429
        %v6432 = vrot.slane %v4177, 5
        %v6433 = vsel %vm4440, %v6432, %v6431
        %v6435 = vadd.f32 %v6419, %v6433
        %vm6436 = vcmask 257024
        %v6437 = vsel %vm6436, %v6435, 0.0
        %6438 = vadd.xlane.f32.xlu0 %v6437
        %v6439 = vpop.xlane.xlu0 %6438
        %v6440 = vmul.f32 %v6439, %v972
        %v6441 = vsub.f32 %v6435, %v6440
        %v6442 = vmul.f32 %v6441, %v6441
        %v6443 = vsel %vm6436, %v6442, 0.0
        %6444 = vadd.xlane.f32.xlu0 %v6443
        %v6445 = vpop.xlane.xlu0 %6444
        %v6446 = vmul.f32 %v6445, %v972
        %v6447 = vadd.f32 %v6446, 1e-12
        %v6448 = vrsqrt.pop %v6447
        %v6449 = vmul.f32 %v6441, %v6448
        %v6451 = vlaneseq
        %v6452 = vshrl.u32 %v6451, 7
        %v6453 = vsub.s32 0, %v6452
        %v6454 = vrot.slane %v4208, %v6453
        %v6456 = vmul.f32 %v6449, %v6454
        %v6458 = vlaneseq
        %v6459 = vshrl.u32 %v6458, 7
        %v6460 = vsub.s32 0, %v6459
        %v6461 = vrot.slane %v4210, %v6460
        %v6463 = vadd.f32 %v6456, %v6461
        %v6464 = vpack.c.bf16 %v6463, %v6463
        %v6466 = vlaneseq
        %v6467 = vshrl.u32 %v6466, 7
        %v6468 = vsub.s32 0, %v6467
        %v6469 = vrot.slane %v4217, %v6468
        %v6475 = vunpack.c.l.b16 %v4212
        %v6476 = vunpack.c.l.b16 %v4213
        %v6477 = vunpack.c.l.b16 %v4214
        %v6478 = vunpack.c.l.b16 %v4215
        %v6479 = vpack.c.b16 %v6476, %v6475
        %v6480 = vpack.c.b16 %v6478, %v6477
        %v6484 = vsel %vm959, %v6464, 0
        %6486 = vmatprep.subr.bf16.mxu0 0
        %6487 = vmatpush1.bf16.msra.mxu0 %v6479
        %6488 = vmatprep.subr.bf16.mxu0 0
        %6489 = vmatpush1.bf16.msra.mxu0 %v6480
        %6490 = vmatprep.subr.bf16.mxu0 0
        %6491 = vmatpush1.bf16.msra.mxu0 0
        %6492 = vmatprep.subr.bf16.mxu0 0
        %6493 = vmatpush1.bf16.msra.mxu0 0
        %6494 = vmatprep.subr.bf16.mxu0 0
        %6495 = vmatpush1.bf16.msra.mxu0 0
        %6496 = vmatprep.subr.bf16.mxu0 0
        %6497 = vmatpush1.bf16.msra.mxu0 0
        %6498 = vmatprep.subr.bf16.mxu0 0
        %6499 = vmatpush1.bf16.msra.mxu0 0
        %6500 = vmatprep.subr.bf16.mxu0 0
        %6501 = vmatpush1.bf16.msra.mxu0 0
        %6502 = vmatprep.subr.bf16.mxu0 0
        %6503 = vmatpush1.bf16.msra.mxu0 0
        %6504 = vmatprep.subr.bf16.mxu0 0
        %6505 = vmatpush1.bf16.msra.mxu0 0
        %6506 = vmatprep.subr.bf16.mxu0 0
        %6507 = vmatpush1.bf16.msra.mxu0 0
        %6508 = vmatprep.subr.bf16.mxu0 0
        %6509 = vmatpush1.bf16.msra.mxu0 0
        %6510 = vmatprep.subr.bf16.mxu0 0
        %6511 = vmatpush1.bf16.msra.mxu0 0
        %6512 = vmatprep.subr.bf16.mxu0 0
        %6513 = vmatpush1.bf16.msra.mxu0 0
        %6514 = vmatprep.subr.bf16.mxu0 0
        %6515 = vmatpush1.bf16.msra.mxu0 0
        %6516 = vmatprep.subr.bf16.mxu0 0
        %6517 = vmatpush1.bf16.msra.mxu0 0
        %6518 = vmatprep.mubr.bf16.mxu0 0
        %6519 = vmatmul.mubr.bf16.gmra.mrb[0].mxu0 %v6484
        %v6520 = vpop.f32.mrb[0].mxu0
        %v6521 = vadd.f32 %v6469, %v6520
        %v6522 = vpop.f32.mrb[0].mxu0
        %v6523 = vpop.f32.mrb[0].mxu0
        %v6524 = vpop.f32.mrb[0].mxu0
        %6525 = vdwg.mxu0
        %v6526 = vmax.f32 %v6521, 0.0
        %v6527 = vpack.c.bf16 %v6526, %v6526
        %v6529 = vlaneseq
        %v6530 = vshrl.u32 %v6529, 7
        %v6531 = vsub.s32 0, %v6530
        %v6532 = vrot.slane %v4228, %v6531
        %v6542 = vunpack.c.l.b16 %v4219
        %v6543 = vunpack.c.l.b16 %v4220
        %v6544 = vunpack.c.l.b16 %v4221
        %v6545 = vunpack.c.l.b16 %v4222
        %v6546 = vunpack.c.l.b16 %v4223
        %v6547 = vunpack.c.l.b16 %v4224
        %v6548 = vunpack.c.l.b16 %v4225
        %v6549 = vunpack.c.l.b16 %v4226
        %v6550 = vpack.c.b16 %v6543, %v6542
        %v6551 = vpack.c.b16 %v6545, %v6544
        %v6552 = vpack.c.b16 %v6547, %v6546
        %v6553 = vpack.c.b16 %v6549, %v6548
        %v6559 = vsel %vm3961, %v6527, 0
        %6561 = vmatprep.subr.bf16.mxu0 0
        %6562 = vmatpush1.bf16.msra.mxu0 %v6550
        %6563 = vmatprep.subr.bf16.mxu0 0
        %6564 = vmatpush1.bf16.msra.mxu0 %v6551
        %6565 = vmatprep.subr.bf16.mxu0 0
        %6566 = vmatpush1.bf16.msra.mxu0 %v6552
        %6567 = vmatprep.subr.bf16.mxu0 0
        %6568 = vmatpush1.bf16.msra.mxu0 %v6553
        %6569 = vmatprep.subr.bf16.mxu0 0
        %6570 = vmatpush1.bf16.msra.mxu0 0
        %6571 = vmatprep.subr.bf16.mxu0 0
        %6572 = vmatpush1.bf16.msra.mxu0 0
        %6573 = vmatprep.subr.bf16.mxu0 0
        %6574 = vmatpush1.bf16.msra.mxu0 0
        %6575 = vmatprep.subr.bf16.mxu0 0
        %6576 = vmatpush1.bf16.msra.mxu0 0
        %6577 = vmatprep.subr.bf16.mxu0 0
        %6578 = vmatpush1.bf16.msra.mxu0 0
        %6579 = vmatprep.subr.bf16.mxu0 0
        %6580 = vmatpush1.bf16.msra.mxu0 0
        %6581 = vmatprep.subr.bf16.mxu0 0
        %6582 = vmatpush1.bf16.msra.mxu0 0
        %6583 = vmatprep.subr.bf16.mxu0 0
        %6584 = vmatpush1.bf16.msra.mxu0 0
        %6585 = vmatprep.subr.bf16.mxu0 0
        %6586 = vmatpush1.bf16.msra.mxu0 0
        %6587 = vmatprep.subr.bf16.mxu0 0
        %6588 = vmatpush1.bf16.msra.mxu0 0
        %6589 = vmatprep.subr.bf16.mxu0 0
        %6590 = vmatpush1.bf16.msra.mxu0 0
        %6591 = vmatprep.subr.bf16.mxu0 0
        %6592 = vmatpush1.bf16.msra.mxu0 0
        %6593 = vmatprep.mubr.bf16.mxu0 0
        %6594 = vmatmul.mubr.bf16.gmra.mrb[0].mxu0 %v6559
        %v6595 = vpop.f32.mrb[0].mxu0
        %v6596 = vadd.f32 %v6532, %v6595
        %v6597 = vpop.f32.mrb[0].mxu0
        %v6598 = vpop.f32.mrb[0].mxu0
        %v6599 = vpop.f32.mrb[0].mxu0
        %6600 = vdwg.mxu0
        %v6601 = vadd.f32 %v6596, %v6463
        %v6602 = vsel %vm6436, %v6601, 0.0
        %6603 = vadd.xlane.f32.xlu0 %v6602
        %v6604 = vpop.xlane.xlu0 %6603
        %v6605 = vmul.f32 %v6604, %v972
        %v6606 = vsub.f32 %v6601, %v6605
        %v6607 = vmul.f32 %v6606, %v6606
        %v6608 = vsel %vm6436, %v6607, 0.0
        %6609 = vadd.xlane.f32.xlu0 %v6608
        %v6610 = vpop.xlane.xlu0 %6609
        %v6611 = vmul.f32 %v6610, %v972
        %v6612 = vadd.f32 %v6611, 1e-12
        %v6613 = vrsqrt.pop %v6612
        %v6614 = vmul.f32 %v6606, %v6613
        %v6616 = vlaneseq
        %v6617 = vshrl.u32 %v6616, 7
        %v6618 = vsub.s32 0, %v6617
        %v6619 = vrot.slane %v4230, %v6618
        %v6621 = vmul.f32 %v6614, %v6619
        %v6623 = vlaneseq
        %v6624 = vshrl.u32 %v6623, 7
        %v6625 = vsub.s32 0, %v6624
        %v6626 = vrot.slane %v4232, %v6625
        %v6628 = vadd.f32 %v6621, %v6626
        %v6631 = vunpack.c.l.s4 1966171168
        %v6632 = vunpack.c.0.s8 %v6631
        %v6633 = vlaneseq
        %v6634 = vshrl.u32 %v6633, 7
        %v6635 = vsub.s32 %v6632, %v6634
        %v6636 = vrot.slane %v6628, %v6635
        %v6637 = vcombine.high %v6636, %v6636
        %v6639 = vunpack.c.l.s4 1966171168
        %v6640 = vunpack.c.0.s8 %v6639
        %v6641 = vlaneseq
        %v6642 = vshrl.u32 %v6641, 7
        %v6643 = vsub.s32 %v6640, %v6642
        %v6644 = vrot.slane %v6636, %v6643
        %v6646 = vunpack.c.l.s4 1966171168
        %v6647 = vunpack.c.0.s8 %v6646
        %v6648 = vlaneseq
        %v6649 = vshrl.u32 %v6648, 7
        %v6650 = vsub.s32 %v6647, %v6649
        %v6651 = vrot.slane %v6637, %v6650
        %v6652 = vcombine.high %v6644, %v6644
        %v6653 = vcombine.high %v6651, %v6651
        %vm6658 = vcmask 253952
        %6659 = vst.msk [vmem:[%s939] sm:$0x1] %vm6658, %v6644
        %6660 = vst.msk [vmem:[%s939 + $0x1] sm:$0x1] %vm6658, %v6651
        %6661 = vst.msk [vmem:[%s939 + $0x2] sm:$0x1] %vm6658, %v6652
        %6662 = vst.msk [vmem:[%s939 + $0x3] sm:$0x1] %vm6658, %v6653
        %s6663 = sand.u32 %s548, 1
        %s6664 = scalar_lea.sflag [#allocation4], %s6663
        %s6665 = sand.u32 %s548, 1
        %s6666 = smul.addr %s6665, 4
        %s6667 = scalar_lea.vmem [#allocation26], %s6666
        // Predicated region
        $region173: #{tpu_custom_call.1} parent=111 // pred_check
          %p6668 = pneg %p558
        $region174: #{tpu_custom_call.1} parent=111 // pred_check_branch
          %6670 = sbr.rel (%p6668) target = $region176
        $region175: #{tpu_custom_call.1} parent=111 // pred_region
          %s6671 = smul.u32 4, %s47
          %s6673 = ssub.s32 64, 64
          %6674 = vsyncadd %s6664, %s6673
          %s6675 = smul.addr %s6671, 16
          %s6676 = scalar_lea.hbm %s23, %s6675
          %s6677 = sshll.u32 %s6667, 4
          %s6678 = int_to_ptr.vmem [resolvable:$true] %s6677
          %6683 = dma.vmem_to_hbm [thread:$0]  %s6678, 64, %s6676, %s6664, 16, 16, 1
        $region176: #{tpu_custom_call.1} parent=111 // pred_fallthru
          _
      $region112: #{tpu_custom_call.1} parent=5 // pred_fallthru
        _
      %p6684 = scmp.le.s32.totalorder 2, %s42
      // Predicated region
      $region177: #{tpu_custom_call.1} parent=5 // pred_check
        %p6685 = pneg %p6684
      $region178: #{tpu_custom_call.1} parent=5 // pred_check_branch
        %6687 = sbr.rel (%p6685) target = $region180
      $region179: #{tpu_custom_call.1} parent=5 // pred_region
        %s6688 = ssub.s32 %s42, 2
        // Predicated region
        $region181: #{tpu_custom_call.1} parent=179 // pred_check
          %p6689 = pneg %p564
        $region182: #{tpu_custom_call.1} parent=179 // pred_check_branch
          %6691 = sbr.rel (%p6689) target = $region184
        $region183: #{tpu_custom_call.1} parent=179 // pred_region
          %s6692 = sand.u32 %s549, 1
          %s6693 = scalar_lea.sflag [#allocation4], %s6692
          %s6694 = sand.u32 %s549, 1
          %s6695 = smul.addr %s6694, 4
          %s6696 = scalar_lea.vmem [#allocation26], %s6695
          %6697 = dma.done %s6693, 64
        $region184: #{tpu_custom_call.1} parent=179 // pred_fallthru
          _
      $region180: #{tpu_custom_call.1} parent=5 // pred_fallthru
        _
    $region6: #{tpu_custom_call.1} parent=1 // loop_footer
      %s46 = sadd.s32 1, %s42
    $region7: #{tpu_custom_call.1} parent=1 // loop_footer_branch
      %41 = sbr.rel target = $region3
    $region8: #{tpu_custom_call.1} parent=1 // loop_exit
      _
    %6698 = vsyncpa [#allocation3], 1
    %s6699 = scalar_lea.sflag [#allocation3], 1
    %6700 = vsyncpa %s6699, 1
    %6701 = vsyncpa [#allocation6], 1
    %6702 = vsyncpa [#allocation9], 1
    %6703 = vsyncpa [#allocation12], 1
    %6704 = vsyncpa [#allocation15], 1
    %6705 = vsyncpa [#allocation18], 1
    %6706 = vsyncpa [#allocation21], 1
    %6707 = vsyncpa [#allocation24], 1
    %6708 = vsyncpa [#allocation4], 1
    %s6709 = scalar_lea.sflag [#allocation4], 1
    %6710 = vsyncpa %s6709, 1

</llo_original>
